<compile_context>
chip_gen: v7x
topology: tpu7x:2x2x1
jax: 0.10.0
libtpu: 0.0.40
codegen_flags: <defaults>
</compile_context>

<pallas_src>
import functools

import jax
import jax.numpy as jnp
import numpy as np
from jax import lax
from jax.experimental import pallas as pl
from jax.experimental.pallas import tpu as pltpu


# Tap -> (parity, local s2d offset) mapping for the 3x3 conv evaluated at even output centers,
# in padded space-to-depth coordinates (1 s2d halo row on top, 1 s2d halo col on the left).
_PR = (1, 0, 1)   # row parity used by tap kh = 0, 1, 2
_DR = (0, 1, 1)   # local s2d-row offset for tap kh
_PC = (1, 0, 1)   # col parity used by tap kw
_DC = (0, 1, 1)   # local s2d-col offset for tap kw


# ----------------------------- Fused Pallas kernel -----------------------------

def _bottleneck_kernel(xm_ref, xe_ref, w1_ref, b1_ref, w2_ref, b2_ref,
                       w3_ref, b3_ref, wd_ref, bd_ref, o_ref, *, cin, mid, tb, wo):
    """One (batch, output-row-block) step of the fused BottleNeck forward.

    xm_ref: (1, tb, Wo+1, 4*Cin)  bf16  padded-s2d rows [b*tb, b*tb+tb)
    xe_ref: (1, 1,  Wo+1, 4*Cin)  bf16  halo s2d row b*tb+tb
    w1: (Cin, mid)  w2: (9, mid, mid)  w3: (mid, out)  wd: (Cin, out)   (all bf16)
    b*: (1, C) f32
    o_ref: (1, tb, Wo, out) bf16
    """
    b = pl.program_id(1)
    cb = wo + 1
    f32 = jnp.float32
    bf16 = jnp.bfloat16

    w1 = w1_ref[...]
    b1 = b1_ref[...]

    # conv2's zero padding lives in h1 space: parity pr=1 / pc=1 images are invalid at
    # global s2d row 0 / col 0 (original row/col -1).  Row 0 only exists in block b == 0,
    # so only those parities get masked (minor VPU cost for b > 0, correctness for b == 0).
    col_valid = lax.broadcasted_iota(jnp.int32, (1, cb, 1), 1) > 0
    row_valid = (b * tb + lax.broadcasted_iota(jnp.int32, (tb, 1, 1), 0)) > 0

    xm = xm_ref[0]                                  # (tb, cb, 4*cin) bf16
    xe = xe_ref[0]                                  # (1,  cb, 4*cin) bf16

    def conv1_2d(x2d):                              # (M, cin) bf16 -> (M, mid) f32, ReLU'd
        h = jnp.dot(x2d, w1, preferred_element_type=f32) + b1
        return jnp.maximum(h, 0.0)

    # ---- parity (0,0): raw rows are also the residual / downsample input ----
    x0 = jnp.concatenate([xm[:, :, 0:cin], xe[:, :, 0:cin]], axis=0)      # (tb+1, cb, cin)
    h1_0 = conv1_2d(x0.reshape((tb + 1) * cb, cin))
    h1_0 = h1_0.reshape(tb + 1, cb, mid).astype(bf16)                     # never needs a mask

    # ---- parities 1..3: conv1 on main rows and halo row separately; concat at h1 level ----
    h1s = [h1_0, None, None, None]
    for g in (1, 2, 3):
        pr, pc = g // 2, g % 2
        ch = slice(g * cin, (g + 1) * cin)
        hm = conv1_2d(xm[:, :, ch].reshape(tb * cb, cin)).reshape(tb, cb, mid)
        if pr:
            hm = jnp.where(row_valid, hm, 0.0)      # only actually masks in block b == 0
        if pc:
            hm = jnp.where(col_valid, hm, 0.0)
        he = conv1_2d(xe[:, :, ch].reshape(cb, cin)).reshape(1, cb, mid)
        if pc:
            he = jnp.where(col_valid, he, 0.0)      # halo row is never global row 0
        h1s[g] = jnp.concatenate([hm.astype(bf16), he.astype(bf16)], axis=0)   # (tb+1, cb, mid)

    # ---- conv2 (3x3 at even output centers): 9 accumulating tap matmuls, f32 accumulator ----
    acc = None
    for kh in range(3):
        for kw in range(3):
            g = _PR[kh] * 2 + _PC[kw]
            t = h1s[g][_DR[kh]:_DR[kh] + tb, _DC[kw]:_DC[kw] + wo, :].reshape(tb * wo, mid)
            p = jnp.dot(t, w2_ref[kh * 3 + kw], preferred_element_type=f32)
            acc = p if acc is None else acc + p
    h2 = jnp.maximum(acc + b2_ref[...], 0.0).astype(bf16)                 # (tb*wo, mid)

    # ---- conv3 (1x1 at even positions) + ReLU, then downsample 1x1 + residual add ----
    # NOTE: the module applies ReLU to conv3 BEFORE the residual add, so conv3 and the
    # downsample cannot be fused into a single matmul without changing semantics.
    y = jnp.dot(h2, w3_ref[...], preferred_element_type=f32) + b3_ref[...]
    y = jnp.maximum(y, 0.0)
    xres = x0[1:tb + 1, 1:cb, :].reshape(tb * wo, cin)                    # x at even rows/cols
    s = jnp.dot(xres, wd_ref[...], preferred_element_type=f32) + bd_ref[...]
    o_ref[0] = (y + s).reshape(tb, wo, -1).astype(o_ref.dtype)


# ----------------------------- Tiling / VMEM budgeting -----------------------------

def _chip_vmem_capacity_bytes():
    try:
        info = pltpu.get_tpu_info()
        cap = int(getattr(info, "vmem_capacity_bytes", 0))
        if cap > 0:
            return cap
    except Exception:
        pass
    return 64 * 1024 * 1024      # conservative fallback (v7x per-TC VMEM)


def _step_vmem_bytes(tb, wo, cin, mid, out_dim):
    """Inclusive per-step VMEM estimate (double-buffered IO, weights, h1, conv2 temps)."""
    rb, cb = tb + 1, wo + 1
    m_all, m_main, m_out = rb * cb, tb * cb, tb * wo
    xin = 2 * m_main * 4 * cin * 2                    # main input block (bf16), double buffered
    xhalo = 2 * cb * 4 * cin * 2                      # halo row, double buffered
    oblk = 2 * m_out * out_dim * 2                    # bf16 output block, double buffered
    wts = 2 * ((cin * mid + 9 * mid * mid + mid * out_dim + cin * out_dim) * 2
               + 2 * (mid + out_dim) * 4)
    h1 = m_all * cin * 2 + 4 * m_all * mid * 2 + m_all * mid * 4   # x0 + 4 h1 images + f32 tmp
    conv2 = m_out * mid * (4 + 2 + 4)                 # acc f32 + tap bf16 + tap product f32
    tail = m_out * (mid * 2 + cin * 2 + 2 * out_dim * 4)           # h2, xres, y, s
    return int(1.25 * (xin + xhalo + oblk + wts + h1 + conv2 + tail))


def _pick_row_block(ho, wo, cin, mid, out_dim, budget_bytes):
    """Largest row-block (<= Ho, need not divide Ho) whose working set fits the budget."""
    for t in range(ho, 0, -1):
        if _step_vmem_bytes(t, wo, cin, mid, out_dim) <= budget_bytes:
            return t
    return 1


# ----------------------------- Forward wrappers -----------------------------

def bottleneck_forward_nhwc(x, params, *, tb=None):
    """Fused BottleNeck forward. x: (N, H, W, Cin) f32/bf16 -> (N, H//2, W//2, Cout) bf16."""
    N, H, W, Cin = x.shape
    assert H % 2 == 0 and W % 2 == 0, "even spatial sizes only"   # TODO(synk): odd spatial
    Ho, Wo = H // 2, W // 2
    mid = params["w1"].shape[1]
    out_dim = params["w3"].shape[1]

    vmem_cap = _chip_vmem_capacity_bytes()
    if tb is None:
        tb = _pick_row_block(Ho, Wo, Cin, mid, out_dim, budget_bytes=vmem_cap // 4)
    tb = min(tb, Ho)
    nblk = pl.cdiv(Ho, tb)
    # Keep >= 2 grid steps so both TensorCores of a v7x chip get work under "parallel" axes.
    if N * nblk < 2 and Ho >= 2:
        tb = pl.cdiv(Ho, 2)
        nblk = pl.cdiv(Ho, tb)
    row_pad = nblk * tb - Ho

    # ONE fused XLA pass over x: zero halo (2 top / 2 left; bottom pad only for a partial last
    # block), space-to-depth to (N, nblk*tb+1, Wo+1, 4*Cin), bf16 cast.
    # xp[n, u, v, (2*pr+pc)*Cin + c] = x[n, 2*(u-1)+pr, 2*(v-1)+pc, c] (zero outside image).
    Hs = nblk * tb + 1
    xp = jnp.pad(x, ((0, 0), (2, 2 * row_pad), (2, 0), (0, 0)))
    xp = xp.reshape(N, Hs, 2, Wo + 1, 2, Cin).transpose(0, 1, 3, 2, 4, 5)
    xp = xp.reshape(N, Hs, Wo + 1, 4 * Cin).astype(jnp.bfloat16)

    kern = functools.partial(_bottleneck_kernel, cin=Cin, mid=mid, tb=tb, wo=Wo)
    w_map2 = lambda n, b: (0, 0)
    w_map3 = lambda n, b: (0, 0, 0)

    out = pl.pallas_call(
        kern,
        out_shape=jax.ShapeDtypeStruct((N, nblk * tb, Wo, out_dim), jnp.bfloat16),
        grid=(N, nblk),
        in_specs=[
            pl.BlockSpec((1, tb, Wo + 1, 4 * Cin), lambda n, b: (n, b, 0, 0)),
            pl.BlockSpec((1, 1, Wo + 1, 4 * Cin), lambda n, b: (n, b * tb + tb, 0, 0)),
            pl.BlockSpec((Cin, mid), w_map2), pl.BlockSpec((1, mid), w_map2),
            pl.BlockSpec((9, mid, mid), w_map3), pl.BlockSpec((1, mid), w_map2),
            pl.BlockSpec((mid, out_dim), w_map2), pl.BlockSpec((1, out_dim), w_map2),
            pl.BlockSpec((Cin, out_dim), w_map2), pl.BlockSpec((1, out_dim), w_map2),
        ],
        out_specs=pl.BlockSpec((1, tb, Wo, out_dim), lambda n, b: (n, b, 0, 0)),
        compiler_params=pltpu.CompilerParams(
            dimension_semantics=("parallel", "parallel"),
            vmem_limit_bytes=(vmem_cap * 3) // 4),
    )(xp, xp,
      params["w1"], params["b1"], params["w2"], params["b2"],
      params["w3"], params["b3"], params["wd"], params["bd"])

    if row_pad:
        out = out[:, :Ho]          # only when tb does not divide Ho
    return out


def bottleneck_forward_nchw(x_nchw, params, *, tb=None):
    """Drop-in NCHW wrapper (layout conversion outside the performance-critical path)."""
    out = bottleneck_forward_nhwc(jnp.transpose(x_nchw, (0, 2, 3, 1)), params, tb=tb)
    return jnp.transpose(out, (0, 3, 1, 2))


# ----------------------------- Params & reference -----------------------------

def init_params(key, in_dim, mid_dim, out_dim):
    ks = jax.random.split(key, 8)

    def u(k, shape, fan_in):
        bound = 1.0 / np.sqrt(fan_in)
        return jax.random.uniform(k, shape, jnp.float32, -bound, bound)

    # PyTorch Conv2d weight layout: (Cout, Cin, kh, kw)
    w1 = u(ks[0], (mid_dim, in_dim, 1, 1), in_dim)
    b1 = u(ks[1], (mid_dim,), in_dim)
    w2 = u(ks[2], (mid_dim, mid_dim, 3, 3), mid_dim * 9)
    b2 = u(ks[3], (mid_dim,), mid_dim * 9)
    w3 = u(ks[4], (out_dim, mid_dim, 1, 1), mid_dim)
    b3 = u(ks[5], (out_dim,), mid_dim)
    wd = u(ks[6], (out_dim, in_dim, 1, 1), in_dim)
    bd = u(ks[7], (out_dim,), in_dim)

    torch_params = dict(w1=w1, b1=b1, w2=w2, b2=b2, w3=w3, b3=b3, wd=wd, bd=bd)
    # Kernel layouts: 1x1 -> (Cin, Cout) bf16; 3x3 -> (9, Cin, Cout) bf16 stacked as
    # k = kh*3 + kw (matching the kernel's tap loop); biases (1, C) f32.
    kernel_params = dict(
        w1=jnp.transpose(w1[:, :, 0, 0]).astype(jnp.bfloat16), b1=b1[None, :],
        w2=jnp.transpose(w2, (2, 3, 1, 0)).reshape(9, mid_dim, mid_dim).astype(jnp.bfloat16),
        b2=b2[None, :],
        w3=jnp.transpose(w3[:, :, 0, 0]).astype(jnp.bfloat16), b3=b3[None, :],
        wd=jnp.transpose(wd[:, :, 0, 0]).astype(jnp.bfloat16), bd=bd[None, :],
    )
    return torch_params, kernel_params


def reference_forward(x, tp):
    """Pure-JAX/XLA reference mirroring the PyTorch module (activation_fn = ReLU), NCHW."""
    dn = ("NCHW", "OIHW", "NCHW")

    def conv(inp, w, stride, pad):
        return lax.conv_general_dilated(inp, w, (stride, stride), pad,
                                        dimension_numbers=dn,
                                        precision=lax.Precision.HIGHEST)

    relu = lambda y: jnp.maximum(y, 0.0)
    h = relu(conv(x, tp["w1"], 1, "VALID") + tp["b1"][None, :, None, None])
    h = relu(conv(h, tp["w2"], 1, [(1, 1), (1, 1)]) + tp["b2"][None, :, None, None])
    h = relu(conv(h, tp["w3"], 2, "VALID") + tp["b3"][None, :, None, None])
    sample = conv(x, tp["wd"], 1, "VALID") + tp["bd"][None, :, None, None]
    # TODO(synk): the reference module's `out += sample` is shape-inconsistent for spatial > 1
    # (stride-2 bottleneck branch vs stride-1 downsample) and raises in PyTorch; here the
    # downsample branch is added at the spatially-corresponding (even) positions, which equals
    # giving the downsample conv stride 2 (the standard ResNet fix).  The kernel matches this.
    return h + sample[:, :, ::2, ::2]


# ----------------------------- Driver -----------------------------

if __name__ == "__main__":
    key = jax.random.PRNGKey(0)
    k_x, k_p = jax.random.split(key)

    N, IN_DIM, MID_DIM, OUT_DIM, H, W = 2, 4, 8, 16, 16, 16
    x_nhwc = jax.random.normal(k_x, (N, H, W, IN_DIM), jnp.float32)
    torch_params, kernel_params = init_params(k_p, IN_DIM, MID_DIM, OUT_DIM)

    fwd = jax.jit(lambda xx: bottleneck_forward_nhwc(xx, kernel_params))
    out = fwd(x_nhwc)
    jax.block_until_ready(out)

    x_nchw = jnp.transpose(x_nhwc, (0, 3, 1, 2))
    ref_nhwc = jnp.transpose(reference_forward(x_nchw, torch_params), (0, 2, 3, 1))

    assert out.shape == (N, H // 2, W // 2, OUT_DIM), out.shape
    # bf16 MXU operands + bf16 output vs f32 XLA reference -> loose tolerance.
    np.testing.assert_allclose(np.asarray(out, dtype=np.float32), np.asarray(ref_nhwc),
                               rtol=5e-2, atol=1e-1)

    print("KERNEL_OK")
</pallas_src>

<mosaic_0001>
module attributes {stable_mosaic.version = 11 : i64} {
  func.func @_bottleneck_kernel(%arg0: i32, %arg1: i32, %arg2: memref<1x8x9x16xbf16, #tpu.memory_space<vmem>>, %arg3: memref<1x1x9x16xbf16, #tpu.memory_space<vmem>>, %arg4: memref<4x8xbf16, #tpu.memory_space<vmem>>, %arg5: memref<1x8xf32, #tpu.memory_space<vmem>>, %arg6: memref<9x8x8xbf16, #tpu.memory_space<vmem>>, %arg7: memref<1x8xf32, #tpu.memory_space<vmem>>, %arg8: memref<8x16xbf16, #tpu.memory_space<vmem>>, %arg9: memref<1x16xf32, #tpu.memory_space<vmem>>, %arg10: memref<4x16xbf16, #tpu.memory_space<vmem>>, %arg11: memref<1x16xf32, #tpu.memory_space<vmem>>, %arg12: memref<1x8x8x16xbf16, #tpu.memory_space<vmem>>) attributes {dimension_semantics = [#tpu.dimension_semantics<parallel>, #tpu.dimension_semantics<parallel>], iteration_bounds = array<i64: 2, 1>, scalar_prefetch = 0 : i64, scratch_operands = 0 : i64, tpu.core_type = #tpu.core_type<tc>, window_params = [{transform_indices = @transform_0, window_bounds = array<i64: 1, 8, 9, 16>}, {transform_indices = @transform_1, window_bounds = array<i64: 1, 1, 9, 16>}, {pipeline_mode = #tpu.pipeline_mode<synchronous>, transform_indices = @transform_2, window_bounds = array<i64: 4, 8>}, {pipeline_mode = #tpu.pipeline_mode<synchronous>, transform_indices = @transform_3, window_bounds = array<i64: 1, 8>}, {pipeline_mode = #tpu.pipeline_mode<synchronous>, transform_indices = @transform_4, window_bounds = array<i64: 9, 8, 8>}, {pipeline_mode = #tpu.pipeline_mode<synchronous>, transform_indices = @transform_5, window_bounds = array<i64: 1, 8>}, {pipeline_mode = #tpu.pipeline_mode<synchronous>, transform_indices = @transform_6, window_bounds = array<i64: 8, 16>}, {pipeline_mode = #tpu.pipeline_mode<synchronous>, transform_indices = @transform_7, window_bounds = array<i64: 1, 16>}, {pipeline_mode = #tpu.pipeline_mode<synchronous>, transform_indices = @transform_8, window_bounds = array<i64: 4, 16>}, {pipeline_mode = #tpu.pipeline_mode<synchronous>, transform_indices = @transform_9, window_bounds = array<i64: 1, 16>}, {transform_indices = @transform_10, window_bounds = array<i64: 1, 8, 8, 16>}]} {
    %c0 = arith.constant 0 : index
    %c0_0 = arith.constant 0 : index
    %0 = vector.load %arg4[%c0, %c0_0] : memref<4x8xbf16, #tpu.memory_space<vmem>>, vector<4x8xbf16>
    %c0_1 = arith.constant 0 : index
    %c0_2 = arith.constant 0 : index
    %1 = vector.load %arg5[%c0_1, %c0_2] : memref<1x8xf32, #tpu.memory_space<vmem>>, vector<1x8xf32>
    %2 = tpu.iota {dimensions = array<i32: 1>} : vector<1x9x1xi32>
    %c0_i32 = arith.constant 0 : i32
    %3 = vector.broadcast %c0_i32 : i32 to vector<1x9x1xi32>
    %4 = arith.cmpi sgt, %2, %3 : vector<1x9x1xi32>
    %c8_i32 = arith.constant 8 : i32
    %5 = arith.muli %arg1, %c8_i32 : i32
    %6 = tpu.iota {dimensions = array<i32: 0>} : vector<8x1x1xi32>
    %7 = vector.broadcast %5 : i32 to vector<8x1x1xi32>
    %8 = arith.addi %7, %6 : vector<8x1x1xi32>
    %c0_i32_3 = arith.constant 0 : i32
    %9 = vector.broadcast %c0_i32_3 : i32 to vector<8x1x1xi32>
    %10 = arith.cmpi sgt, %8, %9 : vector<8x1x1xi32>
    %c0_4 = arith.constant 0 : index
    %c0_5 = arith.constant 0 : index
    %c0_6 = arith.constant 0 : index
    %c0_7 = arith.constant 0 : index
    %11 = vector.load %arg2[%c0_4, %c0_5, %c0_6, %c0_7] : memref<1x8x9x16xbf16, #tpu.memory_space<vmem>>, vector<1x8x9x16xbf16>
    %12 = vector.shape_cast %11 : vector<1x8x9x16xbf16> to vector<8x9x16xbf16>
    %c0_8 = arith.constant 0 : index
    %c0_9 = arith.constant 0 : index
    %c0_10 = arith.constant 0 : index
    %c0_11 = arith.constant 0 : index
    %13 = vector.load %arg3[%c0_8, %c0_9, %c0_10, %c0_11] : memref<1x1x9x16xbf16, #tpu.memory_space<vmem>>, vector<1x1x9x16xbf16>
    %14 = vector.shape_cast %13 : vector<1x1x9x16xbf16> to vector<1x9x16xbf16>
    %15 = vector.extract_strided_slice %12 {offsets = [0, 0, 0], sizes = [8, 9, 4], strides = [1, 1, 1]} : vector<8x9x16xbf16> to vector<8x9x4xbf16>
    %16 = vector.extract_strided_slice %14 {offsets = [0, 0, 0], sizes = [1, 9, 4], strides = [1, 1, 1]} : vector<1x9x16xbf16> to vector<1x9x4xbf16>
    %17 = tpu.concatenate %15, %16 in 0 : vector<8x9x4xbf16>, vector<1x9x4xbf16> -> vector<9x9x4xbf16>
    %18 = vector.shape_cast %17 : vector<9x9x4xbf16> to vector<81x4xbf16>
    %cst = arith.constant dense<0.000000e+00> : vector<81x8xf32>
    %19 = tpu.matmul %18, %0, %cst {dimension_numbers = #tpu.dot_dimension_numbers<[1], [0], [0], [1], [0, 0, 1, 1], [], []>} : vector<81x4xbf16>, vector<4x8xbf16>, vector<81x8xf32> -> vector<81x8xf32>
    %20 = vector.broadcast %1 : vector<1x8xf32> to vector<81x8xf32>
    %21 = arith.addf %19, %20 : vector<81x8xf32>
    %cst_12 = arith.constant 0.000000e+00 : f32
    %22 = vector.broadcast %cst_12 : f32 to vector<81x8xf32>
    %23 = arith.maximumf %21, %22 : vector<81x8xf32>
    %24 = vector.shape_cast %23 : vector<81x8xf32> to vector<9x9x8xf32>
    %25 = arith.truncf %24 : vector<9x9x8xf32> to vector<9x9x8xbf16>
    %26 = vector.extract_strided_slice %12 {offsets = [0, 0, 4], sizes = [8, 9, 4], strides = [1, 1, 1]} : vector<8x9x16xbf16> to vector<8x9x4xbf16>
    %27 = vector.shape_cast %26 : vector<8x9x4xbf16> to vector<72x4xbf16>
    %cst_13 = arith.constant dense<0.000000e+00> : vector<72x8xf32>
    %28 = tpu.matmul %27, %0, %cst_13 {dimension_numbers = #tpu.dot_dimension_numbers<[1], [0], [0], [1], [0, 0, 1, 1], [], []>} : vector<72x4xbf16>, vector<4x8xbf16>, vector<72x8xf32> -> vector<72x8xf32>
    %29 = vector.broadcast %1 : vector<1x8xf32> to vector<72x8xf32>
    %30 = arith.addf %28, %29 : vector<72x8xf32>
    %cst_14 = arith.constant 0.000000e+00 : f32
    %31 = vector.broadcast %cst_14 : f32 to vector<72x8xf32>
    %32 = arith.maximumf %30, %31 : vector<72x8xf32>
    %33 = vector.shape_cast %32 : vector<72x8xf32> to vector<8x9x8xf32>
    %cst_15 = arith.constant 0.000000e+00 : f32
    %34 = vector.shape_cast %4 : vector<1x9x1xi1> to vector<1x9x1xi1>
    %35 = vector.broadcast %34 : vector<1x9x1xi1> to vector<8x9x8xi1>
    %36 = vector.broadcast %cst_15 : f32 to vector<8x9x8xf32>
    %37 = arith.select %35, %33, %36 : vector<8x9x8xi1>, vector<8x9x8xf32>
    %38 = vector.extract_strided_slice %14 {offsets = [0, 0, 4], sizes = [1, 9, 4], strides = [1, 1, 1]} : vector<1x9x16xbf16> to vector<1x9x4xbf16>
    %39 = vector.shape_cast %38 : vector<1x9x4xbf16> to vector<9x4xbf16>
    %cst_16 = arith.constant dense<0.000000e+00> : vector<9x8xf32>
    %40 = tpu.matmul %39, %0, %cst_16 {dimension_numbers = #tpu.dot_dimension_numbers<[1], [0], [0], [1], [0, 0, 1, 1], [], []>} : vector<9x4xbf16>, vector<4x8xbf16>, vector<9x8xf32> -> vector<9x8xf32>
    %41 = vector.broadcast %1 : vector<1x8xf32> to vector<9x8xf32>
    %42 = arith.addf %40, %41 : vector<9x8xf32>
    %cst_17 = arith.constant 0.000000e+00 : f32
    %43 = vector.broadcast %cst_17 : f32 to vector<9x8xf32>
    %44 = arith.maximumf %42, %43 : vector<9x8xf32>
    %45 = vector.shape_cast %44 : vector<9x8xf32> to vector<1x9x8xf32>
    %cst_18 = arith.constant 0.000000e+00 : f32
    %46 = vector.shape_cast %4 : vector<1x9x1xi1> to vector<1x9x1xi1>
    %47 = vector.broadcast %46 : vector<1x9x1xi1> to vector<1x9x8xi1>
    %48 = vector.broadcast %cst_18 : f32 to vector<1x9x8xf32>
    %49 = arith.select %47, %45, %48 : vector<1x9x8xi1>, vector<1x9x8xf32>
    %50 = arith.truncf %37 : vector<8x9x8xf32> to vector<8x9x8xbf16>
    %51 = arith.truncf %49 : vector<1x9x8xf32> to vector<1x9x8xbf16>
    %52 = tpu.concatenate %50, %51 in 0 : vector<8x9x8xbf16>, vector<1x9x8xbf16> -> vector<9x9x8xbf16>
    %53 = vector.extract_strided_slice %12 {offsets = [0, 0, 8], sizes = [8, 9, 4], strides = [1, 1, 1]} : vector<8x9x16xbf16> to vector<8x9x4xbf16>
    %54 = vector.shape_cast %53 : vector<8x9x4xbf16> to vector<72x4xbf16>
    %cst_19 = arith.constant dense<0.000000e+00> : vector<72x8xf32>
    %55 = tpu.matmul %54, %0, %cst_19 {dimension_numbers = #tpu.dot_dimension_numbers<[1], [0], [0], [1], [0, 0, 1, 1], [], []>} : vector<72x4xbf16>, vector<4x8xbf16>, vector<72x8xf32> -> vector<72x8xf32>
    %56 = vector.broadcast %1 : vector<1x8xf32> to vector<72x8xf32>
    %57 = arith.addf %55, %56 : vector<72x8xf32>
    %cst_20 = arith.constant 0.000000e+00 : f32
    %58 = vector.broadcast %cst_20 : f32 to vector<72x8xf32>
    %59 = arith.maximumf %57, %58 : vector<72x8xf32>
    %60 = vector.shape_cast %59 : vector<72x8xf32> to vector<8x9x8xf32>
    %cst_21 = arith.constant 0.000000e+00 : f32
    %61 = vector.shape_cast %10 : vector<8x1x1xi1> to vector<8x1x1xi1>
    %62 = vector.broadcast %61 : vector<8x1x1xi1> to vector<8x9x8xi1>
    %63 = vector.broadcast %cst_21 : f32 to vector<8x9x8xf32>
    %64 = arith.select %62, %60, %63 : vector<8x9x8xi1>, vector<8x9x8xf32>
    %65 = vector.extract_strided_slice %14 {offsets = [0, 0, 8], sizes = [1, 9, 4], strides = [1, 1, 1]} : vector<1x9x16xbf16> to vector<1x9x4xbf16>
    %66 = vector.shape_cast %65 : vector<1x9x4xbf16> to vector<9x4xbf16>
    %cst_22 = arith.constant dense<0.000000e+00> : vector<9x8xf32>
    %67 = tpu.matmul %66, %0, %cst_22 {dimension_numbers = #tpu.dot_dimension_numbers<[1], [0], [0], [1], [0, 0, 1, 1], [], []>} : vector<9x4xbf16>, vector<4x8xbf16>, vector<9x8xf32> -> vector<9x8xf32>
    %68 = vector.broadcast %1 : vector<1x8xf32> to vector<9x8xf32>
    %69 = arith.addf %67, %68 : vector<9x8xf32>
    %cst_23 = arith.constant 0.000000e+00 : f32
    %70 = vector.broadcast %cst_23 : f32 to vector<9x8xf32>
    %71 = arith.maximumf %69, %70 : vector<9x8xf32>
    %72 = vector.shape_cast %71 : vector<9x8xf32> to vector<1x9x8xf32>
    %73 = arith.truncf %64 : vector<8x9x8xf32> to vector<8x9x8xbf16>
    %74 = arith.truncf %72 : vector<1x9x8xf32> to vector<1x9x8xbf16>
    %75 = tpu.concatenate %73, %74 in 0 : vector<8x9x8xbf16>, vector<1x9x8xbf16> -> vector<9x9x8xbf16>
    %76 = vector.extract_strided_slice %12 {offsets = [0, 0, 12], sizes = [8, 9, 4], strides = [1, 1, 1]} : vector<8x9x16xbf16> to vector<8x9x4xbf16>
    %77 = vector.shape_cast %76 : vector<8x9x4xbf16> to vector<72x4xbf16>
    %cst_24 = arith.constant dense<0.000000e+00> : vector<72x8xf32>
    %78 = tpu.matmul %77, %0, %cst_24 {dimension_numbers = #tpu.dot_dimension_numbers<[1], [0], [0], [1], [0, 0, 1, 1], [], []>} : vector<72x4xbf16>, vector<4x8xbf16>, vector<72x8xf32> -> vector<72x8xf32>
    %79 = vector.broadcast %1 : vector<1x8xf32> to vector<72x8xf32>
    %80 = arith.addf %78, %79 : vector<72x8xf32>
    %cst_25 = arith.constant 0.000000e+00 : f32
    %81 = vector.broadcast %cst_25 : f32 to vector<72x8xf32>
    %82 = arith.maximumf %80, %81 : vector<72x8xf32>
    %83 = vector.shape_cast %82 : vector<72x8xf32> to vector<8x9x8xf32>
    %cst_26 = arith.constant 0.000000e+00 : f32
    %84 = vector.shape_cast %10 : vector<8x1x1xi1> to vector<8x1x1xi1>
    %85 = vector.broadcast %84 : vector<8x1x1xi1> to vector<8x9x8xi1>
    %86 = vector.broadcast %cst_26 : f32 to vector<8x9x8xf32>
    %87 = arith.select %85, %83, %86 : vector<8x9x8xi1>, vector<8x9x8xf32>
    %cst_27 = arith.constant 0.000000e+00 : f32
    %88 = vector.shape_cast %4 : vector<1x9x1xi1> to vector<1x9x1xi1>
    %89 = vector.broadcast %88 : vector<1x9x1xi1> to vector<8x9x8xi1>
    %90 = vector.broadcast %cst_27 : f32 to vector<8x9x8xf32>
    %91 = arith.select %89, %87, %90 : vector<8x9x8xi1>, vector<8x9x8xf32>
    %92 = vector.extract_strided_slice %14 {offsets = [0, 0, 12], sizes = [1, 9, 4], strides = [1, 1, 1]} : vector<1x9x16xbf16> to vector<1x9x4xbf16>
    %93 = vector.shape_cast %92 : vector<1x9x4xbf16> to vector<9x4xbf16>
    %cst_28 = arith.constant dense<0.000000e+00> : vector<9x8xf32>
    %94 = tpu.matmul %93, %0, %cst_28 {dimension_numbers = #tpu.dot_dimension_numbers<[1], [0], [0], [1], [0, 0, 1, 1], [], []>} : vector<9x4xbf16>, vector<4x8xbf16>, vector<9x8xf32> -> vector<9x8xf32>
    %95 = vector.broadcast %1 : vector<1x8xf32> to vector<9x8xf32>
    %96 = arith.addf %94, %95 : vector<9x8xf32>
    %cst_29 = arith.constant 0.000000e+00 : f32
    %97 = vector.broadcast %cst_29 : f32 to vector<9x8xf32>
    %98 = arith.maximumf %96, %97 : vector<9x8xf32>
    %99 = vector.shape_cast %98 : vector<9x8xf32> to vector<1x9x8xf32>
    %cst_30 = arith.constant 0.000000e+00 : f32
    %100 = vector.shape_cast %4 : vector<1x9x1xi1> to vector<1x9x1xi1>
    %101 = vector.broadcast %100 : vector<1x9x1xi1> to vector<1x9x8xi1>
    %102 = vector.broadcast %cst_30 : f32 to vector<1x9x8xf32>
    %103 = arith.select %101, %99, %102 : vector<1x9x8xi1>, vector<1x9x8xf32>
    %104 = arith.truncf %91 : vector<8x9x8xf32> to vector<8x9x8xbf16>
    %105 = arith.truncf %103 : vector<1x9x8xf32> to vector<1x9x8xbf16>
    %106 = tpu.concatenate %104, %105 in 0 : vector<8x9x8xbf16>, vector<1x9x8xbf16> -> vector<9x9x8xbf16>
    %107 = vector.extract_strided_slice %106 {offsets = [0, 0, 0], sizes = [8, 8, 8], strides = [1, 1, 1]} : vector<9x9x8xbf16> to vector<8x8x8xbf16>
    %108 = vector.shape_cast %107 : vector<8x8x8xbf16> to vector<64x8xbf16>
    %c0_31 = arith.constant 0 : index
    %c0_32 = arith.constant 0 : index
    %c0_33 = arith.constant 0 : index
    %109 = vector.load %arg6[%c0_31, %c0_32, %c0_33] : memref<9x8x8xbf16, #tpu.memory_space<vmem>>, vector<1x8x8xbf16>
    %110 = vector.shape_cast %109 : vector<1x8x8xbf16> to vector<8x8xbf16>
    %cst_34 = arith.constant dense<0.000000e+00> : vector<64x8xf32>
    %111 = tpu.matmul %108, %110, %cst_34 {dimension_numbers = #tpu.dot_dimension_numbers<[1], [0], [0], [1], [0, 0, 1, 1], [], []>} : vector<64x8xbf16>, vector<8x8xbf16>, vector<64x8xf32> -> vector<64x8xf32>
    %112 = vector.extract_strided_slice %75 {offsets = [0, 1, 0], sizes = [8, 8, 8], strides = [1, 1, 1]} : vector<9x9x8xbf16> to vector<8x8x8xbf16>
    %113 = vector.shape_cast %112 : vector<8x8x8xbf16> to vector<64x8xbf16>
    %c1 = arith.constant 1 : index
    %c0_35 = arith.constant 0 : index
    %c0_36 = arith.constant 0 : index
    %114 = vector.load %arg6[%c1, %c0_35, %c0_36] : memref<9x8x8xbf16, #tpu.memory_space<vmem>>, vector<1x8x8xbf16>
    %115 = vector.shape_cast %114 : vector<1x8x8xbf16> to vector<8x8xbf16>
    %cst_37 = arith.constant dense<0.000000e+00> : vector<64x8xf32>
    %116 = tpu.matmul %113, %115, %cst_37 {dimension_numbers = #tpu.dot_dimension_numbers<[1], [0], [0], [1], [0, 0, 1, 1], [], []>} : vector<64x8xbf16>, vector<8x8xbf16>, vector<64x8xf32> -> vector<64x8xf32>
    %117 = arith.addf %111, %116 : vector<64x8xf32>
    %118 = vector.extract_strided_slice %106 {offsets = [0, 1, 0], sizes = [8, 8, 8], strides = [1, 1, 1]} : vector<9x9x8xbf16> to vector<8x8x8xbf16>
    %119 = vector.shape_cast %118 : vector<8x8x8xbf16> to vector<64x8xbf16>
    %c2 = arith.constant 2 : index
    %c0_38 = arith.constant 0 : index
    %c0_39 = arith.constant 0 : index
    %120 = vector.load %arg6[%c2, %c0_38, %c0_39] : memref<9x8x8xbf16, #tpu.memory_space<vmem>>, vector<1x8x8xbf16>
    %121 = vector.shape_cast %120 : vector<1x8x8xbf16> to vector<8x8xbf16>
    %cst_40 = arith.constant dense<0.000000e+00> : vector<64x8xf32>
    %122 = tpu.matmul %119, %121, %cst_40 {dimension_numbers = #tpu.dot_dimension_numbers<[1], [0], [0], [1], [0, 0, 1, 1], [], []>} : vector<64x8xbf16>, vector<8x8xbf16>, vector<64x8xf32> -> vector<64x8xf32>
    %123 = arith.addf %117, %122 : vector<64x8xf32>
    %124 = vector.extract_strided_slice %52 {offsets = [1, 0, 0], sizes = [8, 8, 8], strides = [1, 1, 1]} : vector<9x9x8xbf16> to vector<8x8x8xbf16>
    %125 = vector.shape_cast %124 : vector<8x8x8xbf16> to vector<64x8xbf16>
    %c3 = arith.constant 3 : index
    %c0_41 = arith.constant 0 : index
    %c0_42 = arith.constant 0 : index
    %126 = vector.load %arg6[%c3, %c0_41, %c0_42] : memref<9x8x8xbf16, #tpu.memory_space<vmem>>, vector<1x8x8xbf16>
    %127 = vector.shape_cast %126 : vector<1x8x8xbf16> to vector<8x8xbf16>
    %cst_43 = arith.constant dense<0.000000e+00> : vector<64x8xf32>
    %128 = tpu.matmul %125, %127, %cst_43 {dimension_numbers = #tpu.dot_dimension_numbers<[1], [0], [0], [1], [0, 0, 1, 1], [], []>} : vector<64x8xbf16>, vector<8x8xbf16>, vector<64x8xf32> -> vector<64x8xf32>
    %129 = arith.addf %123, %128 : vector<64x8xf32>
    %130 = vector.extract_strided_slice %25 {offsets = [1, 1, 0], sizes = [8, 8, 8], strides = [1, 1, 1]} : vector<9x9x8xbf16> to vector<8x8x8xbf16>
    %131 = vector.shape_cast %130 : vector<8x8x8xbf16> to vector<64x8xbf16>
    %c4 = arith.constant 4 : index
    %c0_44 = arith.constant 0 : index
    %c0_45 = arith.constant 0 : index
    %132 = vector.load %arg6[%c4, %c0_44, %c0_45] : memref<9x8x8xbf16, #tpu.memory_space<vmem>>, vector<1x8x8xbf16>
    %133 = vector.shape_cast %132 : vector<1x8x8xbf16> to vector<8x8xbf16>
    %cst_46 = arith.constant dense<0.000000e+00> : vector<64x8xf32>
    %134 = tpu.matmul %131, %133, %cst_46 {dimension_numbers = #tpu.dot_dimension_numbers<[1], [0], [0], [1], [0, 0, 1, 1], [], []>} : vector<64x8xbf16>, vector<8x8xbf16>, vector<64x8xf32> -> vector<64x8xf32>
    %135 = arith.addf %129, %134 : vector<64x8xf32>
    %136 = vector.extract_strided_slice %52 {offsets = [1, 1, 0], sizes = [8, 8, 8], strides = [1, 1, 1]} : vector<9x9x8xbf16> to vector<8x8x8xbf16>
    %137 = vector.shape_cast %136 : vector<8x8x8xbf16> to vector<64x8xbf16>
    %c5 = arith.constant 5 : index
    %c0_47 = arith.constant 0 : index
    %c0_48 = arith.constant 0 : index
    %138 = vector.load %arg6[%c5, %c0_47, %c0_48] : memref<9x8x8xbf16, #tpu.memory_space<vmem>>, vector<1x8x8xbf16>
    %139 = vector.shape_cast %138 : vector<1x8x8xbf16> to vector<8x8xbf16>
    %cst_49 = arith.constant dense<0.000000e+00> : vector<64x8xf32>
    %140 = tpu.matmul %137, %139, %cst_49 {dimension_numbers = #tpu.dot_dimension_numbers<[1], [0], [0], [1], [0, 0, 1, 1], [], []>} : vector<64x8xbf16>, vector<8x8xbf16>, vector<64x8xf32> -> vector<64x8xf32>
    %141 = arith.addf %135, %140 : vector<64x8xf32>
    %142 = vector.extract_strided_slice %106 {offsets = [1, 0, 0], sizes = [8, 8, 8], strides = [1, 1, 1]} : vector<9x9x8xbf16> to vector<8x8x8xbf16>
    %143 = vector.shape_cast %142 : vector<8x8x8xbf16> to vector<64x8xbf16>
    %c6 = arith.constant 6 : index
    %c0_50 = arith.constant 0 : index
    %c0_51 = arith.constant 0 : index
    %144 = vector.load %arg6[%c6, %c0_50, %c0_51] : memref<9x8x8xbf16, #tpu.memory_space<vmem>>, vector<1x8x8xbf16>
    %145 = vector.shape_cast %144 : vector<1x8x8xbf16> to vector<8x8xbf16>
    %cst_52 = arith.constant dense<0.000000e+00> : vector<64x8xf32>
    %146 = tpu.matmul %143, %145, %cst_52 {dimension_numbers = #tpu.dot_dimension_numbers<[1], [0], [0], [1], [0, 0, 1, 1], [], []>} : vector<64x8xbf16>, vector<8x8xbf16>, vector<64x8xf32> -> vector<64x8xf32>
    %147 = arith.addf %141, %146 : vector<64x8xf32>
    %148 = vector.extract_strided_slice %75 {offsets = [1, 1, 0], sizes = [8, 8, 8], strides = [1, 1, 1]} : vector<9x9x8xbf16> to vector<8x8x8xbf16>
    %149 = vector.shape_cast %148 : vector<8x8x8xbf16> to vector<64x8xbf16>
    %c7 = arith.constant 7 : index
    %c0_53 = arith.constant 0 : index
    %c0_54 = arith.constant 0 : index
    %150 = vector.load %arg6[%c7, %c0_53, %c0_54] : memref<9x8x8xbf16, #tpu.memory_space<vmem>>, vector<1x8x8xbf16>
    %151 = vector.shape_cast %150 : vector<1x8x8xbf16> to vector<8x8xbf16>
    %cst_55 = arith.constant dense<0.000000e+00> : vector<64x8xf32>
    %152 = tpu.matmul %149, %151, %cst_55 {dimension_numbers = #tpu.dot_dimension_numbers<[1], [0], [0], [1], [0, 0, 1, 1], [], []>} : vector<64x8xbf16>, vector<8x8xbf16>, vector<64x8xf32> -> vector<64x8xf32>
    %153 = arith.addf %147, %152 : vector<64x8xf32>
    %154 = vector.extract_strided_slice %106 {offsets = [1, 1, 0], sizes = [8, 8, 8], strides = [1, 1, 1]} : vector<9x9x8xbf16> to vector<8x8x8xbf16>
    %155 = vector.shape_cast %154 : vector<8x8x8xbf16> to vector<64x8xbf16>
    %c8 = arith.constant 8 : index
    %c0_56 = arith.constant 0 : index
    %c0_57 = arith.constant 0 : index
    %156 = vector.load %arg6[%c8, %c0_56, %c0_57] : memref<9x8x8xbf16, #tpu.memory_space<vmem>>, vector<1x8x8xbf16>
    %157 = vector.shape_cast %156 : vector<1x8x8xbf16> to vector<8x8xbf16>
    %cst_58 = arith.constant dense<0.000000e+00> : vector<64x8xf32>
    %158 = tpu.matmul %155, %157, %cst_58 {dimension_numbers = #tpu.dot_dimension_numbers<[1], [0], [0], [1], [0, 0, 1, 1], [], []>} : vector<64x8xbf16>, vector<8x8xbf16>, vector<64x8xf32> -> vector<64x8xf32>
    %159 = arith.addf %153, %158 : vector<64x8xf32>
    %c0_59 = arith.constant 0 : index
    %c0_60 = arith.constant 0 : index
    %160 = vector.load %arg7[%c0_59, %c0_60] : memref<1x8xf32, #tpu.memory_space<vmem>>, vector<1x8xf32>
    %161 = vector.broadcast %160 : vector<1x8xf32> to vector<64x8xf32>
    %162 = arith.addf %159, %161 : vector<64x8xf32>
    %cst_61 = arith.constant 0.000000e+00 : f32
    %163 = vector.broadcast %cst_61 : f32 to vector<64x8xf32>
    %164 = arith.maximumf %162, %163 : vector<64x8xf32>
    %165 = arith.truncf %164 : vector<64x8xf32> to vector<64x8xbf16>
    %c0_62 = arith.constant 0 : index
    %c0_63 = arith.constant 0 : index
    %166 = vector.load %arg8[%c0_62, %c0_63] : memref<8x16xbf16, #tpu.memory_space<vmem>>, vector<8x16xbf16>
    %cst_64 = arith.constant dense<0.000000e+00> : vector<64x16xf32>
    %167 = tpu.matmul %165, %166, %cst_64 {dimension_numbers = #tpu.dot_dimension_numbers<[1], [0], [0], [1], [0, 0, 1, 1], [], []>} : vector<64x8xbf16>, vector<8x16xbf16>, vector<64x16xf32> -> vector<64x16xf32>
    %c0_65 = arith.constant 0 : index
    %c0_66 = arith.constant 0 : index
    %168 = vector.load %arg9[%c0_65, %c0_66] : memref<1x16xf32, #tpu.memory_space<vmem>>, vector<1x16xf32>
    %169 = vector.broadcast %168 : vector<1x16xf32> to vector<64x16xf32>
    %170 = arith.addf %167, %169 : vector<64x16xf32>
    %cst_67 = arith.constant 0.000000e+00 : f32
    %171 = vector.broadcast %cst_67 : f32 to vector<64x16xf32>
    %172 = arith.maximumf %170, %171 : vector<64x16xf32>
    %173 = vector.extract_strided_slice %17 {offsets = [1, 1, 0], sizes = [8, 8, 4], strides = [1, 1, 1]} : vector<9x9x4xbf16> to vector<8x8x4xbf16>
    %174 = vector.shape_cast %173 : vector<8x8x4xbf16> to vector<64x4xbf16>
    %c0_68 = arith.constant 0 : index
    %c0_69 = arith.constant 0 : index
    %175 = vector.load %arg10[%c0_68, %c0_69] : memref<4x16xbf16, #tpu.memory_space<vmem>>, vector<4x16xbf16>
    %cst_70 = arith.constant dense<0.000000e+00> : vector<64x16xf32>
    %176 = tpu.matmul %174, %175, %cst_70 {dimension_numbers = #tpu.dot_dimension_numbers<[1], [0], [0], [1], [0, 0, 1, 1], [], []>} : vector<64x4xbf16>, vector<4x16xbf16>, vector<64x16xf32> -> vector<64x16xf32>
    %c0_71 = arith.constant 0 : index
    %c0_72 = arith.constant 0 : index
    %177 = vector.load %arg11[%c0_71, %c0_72] : memref<1x16xf32, #tpu.memory_space<vmem>>, vector<1x16xf32>
    %178 = vector.broadcast %177 : vector<1x16xf32> to vector<64x16xf32>
    %179 = arith.addf %176, %178 : vector<64x16xf32>
    %180 = arith.addf %172, %179 : vector<64x16xf32>
    %181 = vector.shape_cast %180 : vector<64x16xf32> to vector<8x8x16xf32>
    %182 = arith.truncf %181 : vector<8x8x16xf32> to vector<8x8x16xbf16>
    %c0_73 = arith.constant 0 : index
    %c0_74 = arith.constant 0 : index
    %c0_75 = arith.constant 0 : index
    %c0_76 = arith.constant 0 : index
    %183 = vector.load %arg12[%c0_73, %c0_74, %c0_75, %c0_76] : memref<1x8x8x16xbf16, #tpu.memory_space<vmem>>, vector<1x8x8x16xbf16>
    %184 = vector.shape_cast %183 : vector<1x8x8x16xbf16> to vector<8x8x16xbf16>
    %185 = vector.shape_cast %182 : vector<8x8x16xbf16> to vector<1x8x8x16xbf16>
    tpu.vector_store %arg12[%c0_73, %c0_74, %c0_75, %c0_76], %185 {strides = array<i32>} : memref<1x8x8x16xbf16, #tpu.memory_space<vmem>>, vector<1x8x8x16xbf16>,
    return
  }
  func.func @transform_0(%arg0: i32, %arg1: i32) -> (i32, i32, i32, i32) {
    %c0_i32 = arith.constant 0 : i32
    %c0_i32_0 = arith.constant 0 : i32
    %c0_i32_1 = arith.constant 0 : i32
    return %arg0, %arg1, %c0_i32, %c0_i32_0 : i32, i32, i32, i32
  }
  func.func @transform_1(%arg0: i32, %arg1: i32) -> (i32, i32, i32, i32) {
    %c8_i32 = arith.constant 8 : i32
    %0 = arith.muli %arg1, %c8_i32 : i32
    %c8_i32_0 = arith.constant 8 : i32
    %1 = arith.addi %0, %c8_i32_0 : i32
    %c0_i32 = arith.constant 0 : i32
    %c0_i32_1 = arith.constant 0 : i32
    %c0_i32_2 = arith.constant 0 : i32
    return %arg0, %1, %c0_i32, %c0_i32_1 : i32, i32, i32, i32
  }
  func.func @transform_2(%arg0: i32, %arg1: i32) -> (i32, i32) {
    %c0_i32 = arith.constant 0 : i32
    %c0_i32_0 = arith.constant 0 : i32
    %c0_i32_1 = arith.constant 0 : i32
    return %c0_i32, %c0_i32_0 : i32, i32
  }
  func.func @transform_3(%arg0: i32, %arg1: i32) -> (i32, i32) {
    %c0_i32 = arith.constant 0 : i32
    %c0_i32_0 = arith.constant 0 : i32
    %c0_i32_1 = arith.constant 0 : i32
    return %c0_i32, %c0_i32_0 : i32, i32
  }
  func.func @transform_4(%arg0: i32, %arg1: i32) -> (i32, i32, i32) {
    %c0_i32 = arith.constant 0 : i32
    %c0_i32_0 = arith.constant 0 : i32
    %c0_i32_1 = arith.constant 0 : i32
    %c0_i32_2 = arith.constant 0 : i32
    return %c0_i32, %c0_i32_0, %c0_i32_1 : i32, i32, i32
  }
  func.func @transform_5(%arg0: i32, %arg1: i32) -> (i32, i32) {
    %c0_i32 = arith.constant 0 : i32
    %c0_i32_0 = arith.constant 0 : i32
    %c0_i32_1 = arith.constant 0 : i32
    return %c0_i32, %c0_i32_0 : i32, i32
  }
  func.func @transform_6(%arg0: i32, %arg1: i32) -> (i32, i32) {
    %c0_i32 = arith.constant 0 : i32
    %c0_i32_0 = arith.constant 0 : i32
    %c0_i32_1 = arith.constant 0 : i32
    return %c0_i32, %c0_i32_0 : i32, i32
  }
  func.func @transform_7(%arg0: i32, %arg1: i32) -> (i32, i32) {
    %c0_i32 = arith.constant 0 : i32
    %c0_i32_0 = arith.constant 0 : i32
    %c0_i32_1 = arith.constant 0 : i32
    return %c0_i32, %c0_i32_0 : i32, i32
  }
  func.func @transform_8(%arg0: i32, %arg1: i32) -> (i32, i32) {
    %c0_i32 = arith.constant 0 : i32
    %c0_i32_0 = arith.constant 0 : i32
    %c0_i32_1 = arith.constant 0 : i32
    return %c0_i32, %c0_i32_0 : i32, i32
  }
  func.func @transform_9(%arg0: i32, %arg1: i32) -> (i32, i32) {
    %c0_i32 = arith.constant 0 : i32
    %c0_i32_0 = arith.constant 0 : i32
    %c0_i32_1 = arith.constant 0 : i32
    return %c0_i32, %c0_i32_0 : i32, i32
  }
  func.func @transform_10(%arg0: i32, %arg1: i32) -> (i32, i32, i32, i32) {
    %c0_i32 = arith.constant 0 : i32
    %c0_i32_0 = arith.constant 0 : i32
    %c0_i32_1 = arith.constant 0 : i32
    return %arg0, %arg1, %c0_i32, %c0_i32_0 : i32, i32, i32, i32
  }
}

</mosaic_0001>

<llo_original>
// kernel: _lambda_.1
$region0: #{_lambda_.1}
  #allocation0 [shape = 'u32[]', space=smem, size = 0x4, offset = 0x4, fixed_abs, tag = 'smem constant byte address 0x4 - core index']
  #allocation1 [shape = 'u32[144,128]{1,0:T(1,128)}', space=vmem, size = 0x12000, scoped, tag = 'internal scratch']
  %s0 = inlined_call_operand.vmem [shape: bf16[2,9,9,16], index: 0, kind: input, shape index: {}, may-alias: {0,1}]
  %s1 = inlined_call_operand.vmem [shape: bf16[2,9,9,16], index: 1, kind: input, shape index: {}, may-alias: {0,1}]
  %s2 = inlined_call_operand.vmem [shape: bf16[4,8], index: 2, kind: input, shape index: {}]
  %s3 = inlined_call_operand.vmem [shape: f32[1,8], index: 3, kind: input, shape index: {}]
  %s4 = inlined_call_operand.vmem [shape: bf16[9,8,8], index: 4, kind: input, shape index: {}]
  %s5 = inlined_call_operand.vmem [shape: f32[1,8], index: 5, kind: input, shape index: {}]
  %s6 = inlined_call_operand.vmem [shape: bf16[8,16], index: 6, kind: input, shape index: {}]
  %s7 = inlined_call_operand.vmem [shape: f32[1,16], index: 7, kind: input, shape index: {}]
  %s8 = inlined_call_operand.vmem [shape: bf16[4,16], index: 8, kind: input, shape index: {}]
  %s9 = inlined_call_operand.vmem [shape: f32[1,16], index: 9, kind: input, shape index: {}]
  %s10 = inlined_call_operand.hbm [shape: bf16[2,8,8,16], index: 10, kind: output, shape index: {}]
  %s11 = sld [smem:[#allocation0]]
  $region73: #{_lambda_.1} parent=0
    _
  %s13 = ssub.s32 1, %s11
  %s14 = scalar_select 0, %s13, %s11
  $region1: #{_lambda_.1} parent=0
    #allocation2 [shape = 'u8[32768]{0}', space=vmem, size = 0x8000, scoped, tag = 'output window, operand 0']
    #allocation3 [shape = 's32[2]{0}', space=sflag, size = 0x8, scoped, tag = 'scoped memory for _lambda_.1']
    %15 = vsyncpa [#allocation3], 0
    %s16 = scalar_lea.sflag [#allocation3], 1
    %17 = vsyncpa %s16, 0
    loop: start=0, step=1, limit=4
    $region2: #{_lambda_.1} parent=1 // loop_pre_header
      _
    $region3: #{_lambda_.1} parent=1 // loop_header
      %s19 = sphi 0, %s23
      %p20 = scmp.ge.s32.totalorder %s19, 4
      %s26 = sphi 0, %s38
      %s27 = sphi 0, %s34
      %s28 = sphi 0, %s26
      %s29 = sphi 0, %s27
      %s30 = sphi 0, %s28
      %s31 = sphi 0, %s29
      %s43 = sphi 0, %s45
      %s46 = sphi 0, %s43
      %s47 = sphi 0, %s46
      %s63 = sphi 0, %s47
      %s75 = sphi 0, %s77
      %s78 = sphi 0, %s75
      %s79 = sphi 0, %s78
      %s95 = sphi 0, %s79
      %s99 = sphi 0, %s99
      %s101 = sphi 0, %s99
      %s102 = sphi 0, %s101
      %s116 = sphi 0, %s102
      %s120 = sphi 0, %s120
      %s122 = sphi 0, %s120
      %s123 = sphi 0, %s122
      %s137 = sphi 0, %s123
      %s141 = sphi 0, %s141
      %s143 = sphi 0, %s141
      %s144 = sphi 0, %s143
      %s158 = sphi 0, %s144
      %s162 = sphi 0, %s162
      %s164 = sphi 0, %s162
      %s165 = sphi 0, %s164
      %s179 = sphi 0, %s165
      %s183 = sphi 0, %s183
      %s185 = sphi 0, %s183
      %s186 = sphi 0, %s185
      %s200 = sphi 0, %s186
      %s204 = sphi 0, %s204
      %s206 = sphi 0, %s204
      %s207 = sphi 0, %s206
      %s221 = sphi 0, %s207
      %s225 = sphi 0, %s225
      %s227 = sphi 0, %s225
      %s228 = sphi 0, %s227
      %s242 = sphi 0, %s228
      %s246 = sphi 0, %s246
      %s248 = sphi 0, %s246
      %s249 = sphi 0, %s248
      %s263 = sphi 0, %s249
      %s271 = sphi 0, %s273
      %s274 = sphi 0, %s271
      %s275 = sphi 0, %s274
      %s291 = sphi 0, %s275
    $region4: #{_lambda_.1} parent=1 // loop_header_branch
      %22 = sbr.rel (%p20) target = $region8
    $region5: #{_lambda_.1} parent=1 // loop_body
      %s24 = ssub.s32 %s19, 1
      %s25 = ssub.s32 %s19, 2
      %s32 = sadd.s32 1, %s27
      %p33 = scmp.ge.s32.totalorder %s32, 1
      %s34 = scalar_select %p33, 0, %s32
      %s35 = sadd.s32 1, %s26
      %s36 = scalar_select %p33, %s35, %s26
      %p37 = scmp.ge.s32.totalorder %s36, 2
      %s38 = scalar_select %p37, 0, %s36
      %s39 = ssub.s32 %s26, %s38
      %s40 = ssub.s32 %s27, %s34
      %s41 = sor.u32 %s39, %s40
      %p42 = scmp.eq.s32.totalorder %s41, 0
      %s44 = sadd.s32 %s43, 1
      %s45 = scalar_select %p42, %s43, %s44
      %p48 = pneg %p42
      %p49 = scmp.eq.s32.totalorder %s19, 1
      %p50 = por %p48, %p49
      %p51 = scmp.ne.s32.totalorder %s43, %s46
      %p52 = scmp.eq.s32.totalorder %s19, 0
      %p53 = por %p51, %p52
      %p54 = scmp.ne.s32.totalorder %s43, %s46
      %p55 = scmp.eq.s32.totalorder %s24, 1
      %p56 = por %p54, %p55
      %p57 = scmp.ne.s32.totalorder %s46, %s47
      %p58 = scmp.eq.s32.totalorder %s24, 0
      %p59 = por %p57, %p58
      %p60 = scmp.ne.s32.totalorder %s46, %s47
      %p61 = scmp.eq.s32.totalorder %s25, 1
      %p62 = por %p60, %p61
      %p64 = scmp.ne.s32.totalorder %s47, %s63
      %p65 = scmp.eq.s32.totalorder %s25, 0
      %p66 = por %p64, %p65
      %s67 = smul.u32 %s27, 8
      %s68 = sadd.s32 %s67, 8
      %s69 = smul.u32 %s34, 8
      %s70 = sadd.s32 %s69, 8
      %s71 = ssub.s32 %s26, %s38
      %s72 = ssub.s32 %s68, %s70
      %s73 = sor.u32 %s71, %s72
      %p74 = scmp.eq.s32.totalorder %s73, 0
      %s76 = sadd.s32 %s75, 1
      %s77 = scalar_select %p74, %s75, %s76
      %p80 = pneg %p74
      %p81 = scmp.eq.s32.totalorder %s19, 1
      %p82 = por %p80, %p81
      %p83 = scmp.ne.s32.totalorder %s75, %s78
      %p84 = scmp.eq.s32.totalorder %s19, 0
      %p85 = por %p83, %p84
      %p86 = scmp.ne.s32.totalorder %s75, %s78
      %p87 = scmp.eq.s32.totalorder %s24, 1
      %p88 = por %p86, %p87
      %p89 = scmp.ne.s32.totalorder %s78, %s79
      %p90 = scmp.eq.s32.totalorder %s24, 0
      %p91 = por %p89, %p90
      %p92 = scmp.ne.s32.totalorder %s78, %s79
      %p93 = scmp.eq.s32.totalorder %s25, 1
      %p94 = por %p92, %p93
      %p96 = scmp.ne.s32.totalorder %s79, %s95
      %p97 = scmp.eq.s32.totalorder %s25, 0
      %p98 = por %p96, %p97
      %s100 = sadd.s32 %s99, 1
      %p103 = scmp.eq.s32.totalorder %s19, 1
      %p104 = scmp.ne.s32.totalorder %s99, %s101
      %p105 = scmp.eq.s32.totalorder %s19, 0
      %p106 = por %p104, %p105
      %p107 = scmp.ne.s32.totalorder %s99, %s101
      %p108 = scmp.eq.s32.totalorder %s24, 1
      %p109 = por %p107, %p108
      %p110 = scmp.ne.s32.totalorder %s101, %s102
      %p111 = scmp.eq.s32.totalorder %s24, 0
      %p112 = por %p110, %p111
      %p113 = scmp.ne.s32.totalorder %s101, %s102
      %p114 = scmp.eq.s32.totalorder %s25, 1
      %p115 = por %p113, %p114
      %p117 = scmp.ne.s32.totalorder %s102, %s116
      %p118 = scmp.eq.s32.totalorder %s25, 0
      %p119 = por %p117, %p118
      %s121 = sadd.s32 %s120, 1
      %p124 = scmp.eq.s32.totalorder %s19, 1
      %p125 = scmp.ne.s32.totalorder %s120, %s122
      %p126 = scmp.eq.s32.totalorder %s19, 0
      %p127 = por %p125, %p126
      %p128 = scmp.ne.s32.totalorder %s120, %s122
      %p129 = scmp.eq.s32.totalorder %s24, 1
      %p130 = por %p128, %p129
      %p131 = scmp.ne.s32.totalorder %s122, %s123
      %p132 = scmp.eq.s32.totalorder %s24, 0
      %p133 = por %p131, %p132
      %p134 = scmp.ne.s32.totalorder %s122, %s123
      %p135 = scmp.eq.s32.totalorder %s25, 1
      %p136 = por %p134, %p135
      %p138 = scmp.ne.s32.totalorder %s123, %s137
      %p139 = scmp.eq.s32.totalorder %s25, 0
      %p140 = por %p138, %p139
      %s142 = sadd.s32 %s141, 1
      %p145 = scmp.eq.s32.totalorder %s19, 1
      %p146 = scmp.ne.s32.totalorder %s141, %s143
      %p147 = scmp.eq.s32.totalorder %s19, 0
      %p148 = por %p146, %p147
      %p149 = scmp.ne.s32.totalorder %s141, %s143
      %p150 = scmp.eq.s32.totalorder %s24, 1
      %p151 = por %p149, %p150
      %p152 = scmp.ne.s32.totalorder %s143, %s144
      %p153 = scmp.eq.s32.totalorder %s24, 0
      %p154 = por %p152, %p153
      %p155 = scmp.ne.s32.totalorder %s143, %s144
      %p156 = scmp.eq.s32.totalorder %s25, 1
      %p157 = por %p155, %p156
      %p159 = scmp.ne.s32.totalorder %s144, %s158
      %p160 = scmp.eq.s32.totalorder %s25, 0
      %p161 = por %p159, %p160
      %s163 = sadd.s32 %s162, 1
      %p166 = scmp.eq.s32.totalorder %s19, 1
      %p167 = scmp.ne.s32.totalorder %s162, %s164
      %p168 = scmp.eq.s32.totalorder %s19, 0
      %p169 = por %p167, %p168
      %p170 = scmp.ne.s32.totalorder %s162, %s164
      %p171 = scmp.eq.s32.totalorder %s24, 1
      %p172 = por %p170, %p171
      %p173 = scmp.ne.s32.totalorder %s164, %s165
      %p174 = scmp.eq.s32.totalorder %s24, 0
      %p175 = por %p173, %p174
      %p176 = scmp.ne.s32.totalorder %s164, %s165
      %p177 = scmp.eq.s32.totalorder %s25, 1
      %p178 = por %p176, %p177
      %p180 = scmp.ne.s32.totalorder %s165, %s179
      %p181 = scmp.eq.s32.totalorder %s25, 0
      %p182 = por %p180, %p181
      %s184 = sadd.s32 %s183, 1
      %p187 = scmp.eq.s32.totalorder %s19, 1
      %p188 = scmp.ne.s32.totalorder %s183, %s185
      %p189 = scmp.eq.s32.totalorder %s19, 0
      %p190 = por %p188, %p189
      %p191 = scmp.ne.s32.totalorder %s183, %s185
      %p192 = scmp.eq.s32.totalorder %s24, 1
      %p193 = por %p191, %p192
      %p194 = scmp.ne.s32.totalorder %s185, %s186
      %p195 = scmp.eq.s32.totalorder %s24, 0
      %p196 = por %p194, %p195
      %p197 = scmp.ne.s32.totalorder %s185, %s186
      %p198 = scmp.eq.s32.totalorder %s25, 1
      %p199 = por %p197, %p198
      %p201 = scmp.ne.s32.totalorder %s186, %s200
      %p202 = scmp.eq.s32.totalorder %s25, 0
      %p203 = por %p201, %p202
      %s205 = sadd.s32 %s204, 1
      %p208 = scmp.eq.s32.totalorder %s19, 1
      %p209 = scmp.ne.s32.totalorder %s204, %s206
      %p210 = scmp.eq.s32.totalorder %s19, 0
      %p211 = por %p209, %p210
      %p212 = scmp.ne.s32.totalorder %s204, %s206
      %p213 = scmp.eq.s32.totalorder %s24, 1
      %p214 = por %p212, %p213
      %p215 = scmp.ne.s32.totalorder %s206, %s207
      %p216 = scmp.eq.s32.totalorder %s24, 0
      %p217 = por %p215, %p216
      %p218 = scmp.ne.s32.totalorder %s206, %s207
      %p219 = scmp.eq.s32.totalorder %s25, 1
      %p220 = por %p218, %p219
      %p222 = scmp.ne.s32.totalorder %s207, %s221
      %p223 = scmp.eq.s32.totalorder %s25, 0
      %p224 = por %p222, %p223
      %s226 = sadd.s32 %s225, 1
      %p229 = scmp.eq.s32.totalorder %s19, 1
      %p230 = scmp.ne.s32.totalorder %s225, %s227
      %p231 = scmp.eq.s32.totalorder %s19, 0
      %p232 = por %p230, %p231
      %p233 = scmp.ne.s32.totalorder %s225, %s227
      %p234 = scmp.eq.s32.totalorder %s24, 1
      %p235 = por %p233, %p234
      %p236 = scmp.ne.s32.totalorder %s227, %s228
      %p237 = scmp.eq.s32.totalorder %s24, 0
      %p238 = por %p236, %p237
      %p239 = scmp.ne.s32.totalorder %s227, %s228
      %p240 = scmp.eq.s32.totalorder %s25, 1
      %p241 = por %p239, %p240
      %p243 = scmp.ne.s32.totalorder %s228, %s242
      %p244 = scmp.eq.s32.totalorder %s25, 0
      %p245 = por %p243, %p244
      %s247 = sadd.s32 %s246, 1
      %p250 = scmp.eq.s32.totalorder %s19, 1
      %p251 = scmp.ne.s32.totalorder %s246, %s248
      %p252 = scmp.eq.s32.totalorder %s19, 0
      %p253 = por %p251, %p252
      %p254 = scmp.ne.s32.totalorder %s246, %s248
      %p255 = scmp.eq.s32.totalorder %s24, 1
      %p256 = por %p254, %p255
      %p257 = scmp.ne.s32.totalorder %s248, %s249
      %p258 = scmp.eq.s32.totalorder %s24, 0
      %p259 = por %p257, %p258
      %p260 = scmp.ne.s32.totalorder %s248, %s249
      %p261 = scmp.eq.s32.totalorder %s25, 1
      %p262 = por %p260, %p261
      %p264 = scmp.ne.s32.totalorder %s249, %s263
      %p265 = scmp.eq.s32.totalorder %s25, 0
      %p266 = por %p264, %p265
      %s267 = ssub.s32 %s26, %s38
      %s268 = ssub.s32 %s27, %s34
      %s269 = sor.u32 %s267, %s268
      %p270 = scmp.eq.s32.totalorder %s269, 0
      %s272 = sadd.s32 %s271, 1
      %s273 = scalar_select %p270, %s271, %s272
      %p276 = pneg %p270
      %p277 = scmp.eq.s32.totalorder %s19, 1
      %p278 = por %p276, %p277
      %p279 = scmp.ne.s32.totalorder %s271, %s274
      %p280 = scmp.eq.s32.totalorder %s19, 0
      %p281 = por %p279, %p280
      %p282 = scmp.ne.s32.totalorder %s271, %s274
      %p283 = scmp.eq.s32.totalorder %s24, 1
      %p284 = por %p282, %p283
      %p285 = scmp.ne.s32.totalorder %s274, %s275
      %p286 = scmp.eq.s32.totalorder %s24, 0
      %p287 = por %p285, %p286
      %p288 = scmp.ne.s32.totalorder %s274, %s275
      %p289 = scmp.eq.s32.totalorder %s25, 1
      %p290 = por %p288, %p289
      %p292 = scmp.ne.s32.totalorder %s275, %s291
      %p293 = scmp.eq.s32.totalorder %s25, 0
      %p294 = por %p292, %p293
      %p295 = scmp.le.s32.totalorder 1, %s19
      %p296 = scmp.lt.s32.totalorder %s19, 3
      %p297 = pnand %p295, %p296
      %p298 = pneg %p297
      // Predicated region
      $region9: #{_lambda_.1} parent=5 // pred_check
        _
      $region10: #{_lambda_.1} parent=5 // pred_check_branch
        %300 = sbr.rel (%p297) target = $region12
      $region11: #{_lambda_.1} parent=5 // pred_region
        %s301 = ssub.s32 %s19, 1
        // Predicated region
        $region13: #{_lambda_.1} parent=11 // pred_check
          %p302 = pneg %p112
        $region14: #{_lambda_.1} parent=11 // pred_check_branch
          %304 = sbr.rel (%p302) target = $region16
        $region15: #{_lambda_.1} parent=11 // pred_region
          _
        $region16: #{_lambda_.1} parent=11 // pred_fallthru
          _
        // Predicated region
        $region17: #{_lambda_.1} parent=11 // pred_check
          %p305 = pneg %p133
        $region18: #{_lambda_.1} parent=11 // pred_check_branch
          %307 = sbr.rel (%p305) target = $region20
        $region19: #{_lambda_.1} parent=11 // pred_region
          _
        $region20: #{_lambda_.1} parent=11 // pred_fallthru
          _
        // Predicated region
        $region21: #{_lambda_.1} parent=11 // pred_check
          %p308 = pneg %p154
        $region22: #{_lambda_.1} parent=11 // pred_check_branch
          %310 = sbr.rel (%p308) target = $region24
        $region23: #{_lambda_.1} parent=11 // pred_region
          _
        $region24: #{_lambda_.1} parent=11 // pred_fallthru
          _
        // Predicated region
        $region25: #{_lambda_.1} parent=11 // pred_check
          %p311 = pneg %p175
        $region26: #{_lambda_.1} parent=11 // pred_check_branch
          %313 = sbr.rel (%p311) target = $region28
        $region27: #{_lambda_.1} parent=11 // pred_region
          _
        $region28: #{_lambda_.1} parent=11 // pred_fallthru
          _
        // Predicated region
        $region29: #{_lambda_.1} parent=11 // pred_check
          %p314 = pneg %p196
        $region30: #{_lambda_.1} parent=11 // pred_check_branch
          %316 = sbr.rel (%p314) target = $region32
        $region31: #{_lambda_.1} parent=11 // pred_region
          _
        $region32: #{_lambda_.1} parent=11 // pred_fallthru
          _
        // Predicated region
        $region33: #{_lambda_.1} parent=11 // pred_check
          %p317 = pneg %p217
        $region34: #{_lambda_.1} parent=11 // pred_check_branch
          %319 = sbr.rel (%p317) target = $region36
        $region35: #{_lambda_.1} parent=11 // pred_region
          _
        $region36: #{_lambda_.1} parent=11 // pred_fallthru
          _
        // Predicated region
        $region37: #{_lambda_.1} parent=11 // pred_check
          %p320 = pneg %p238
        $region38: #{_lambda_.1} parent=11 // pred_check_branch
          %322 = sbr.rel (%p320) target = $region40
        $region39: #{_lambda_.1} parent=11 // pred_region
          _
        $region40: #{_lambda_.1} parent=11 // pred_fallthru
          _
        // Predicated region
        $region41: #{_lambda_.1} parent=11 // pred_check
          %p323 = pneg %p259
        $region42: #{_lambda_.1} parent=11 // pred_check_branch
          %325 = sbr.rel (%p323) target = $region44
        $region43: #{_lambda_.1} parent=11 // pred_region
          _
        $region44: #{_lambda_.1} parent=11 // pred_fallthru
          _
      $region12: #{_lambda_.1} parent=5 // pred_fallthru
        _
      %p326 = scmp.lt.s32.totalorder %s19, 2
      // Predicated region
      $region45: #{_lambda_.1} parent=5 // pred_check
        %p327 = pneg %p326
      $region46: #{_lambda_.1} parent=5 // pred_check_branch
        %329 = sbr.rel (%p327) target = $region48
      $region47: #{_lambda_.1} parent=5 // pred_region
        // Predicated region
        $region49: #{_lambda_.1} parent=47 // pred_check
          %p330 = pneg %p53
        $region50: #{_lambda_.1} parent=47 // pred_check_branch
          %332 = sbr.rel (%p330) target = $region52
        $region51: #{_lambda_.1} parent=47 // pred_region
          %s333 = smul.u32 8, %s27
          %s334 = ssub.s32 9, %s333
          %p335 = scmp.lt.s32.totalorder %s334, 8
          %s336 = scalar_select %p335, %s334, 8
          %s337 = smul.u32 64, %s336
          %s338 = smul.u32 %s337, 2
          %p339 = scmp.lt.s32.totalorder %s26, 1
          %s340 = scalar_select %p339, %s26, 1
          %p341 = scmp.lt.s32.totalorder %s333, 8
          %s342 = scalar_select %p341, %s333, 8
          %s343 = smul.addr %s342, 2
          %s344 = smul.addr %s340, 18
          %s345 = sadd.s32 %s343, %s344
          %s346 = smul.addr %s345, 4
          %s347 = scalar_lea.vmem %s0, %s346
          %s348 = smul.u32 8, %s27
          %s349 = ssub.s32 9, %s348
          %p350 = scmp.lt.s32.totalorder %s349, 8
          %s351 = scalar_select %p350, %s349, 8
          %s352 = smul.u32 64, %s351
          %s353 = smul.u32 %s352, 2
        $region52: #{_lambda_.1} parent=47 // pred_fallthru
          _
        // Predicated region
        $region53: #{_lambda_.1} parent=47 // pred_check
          %p354 = pneg %p85
        $region54: #{_lambda_.1} parent=47 // pred_check_branch
          %356 = sbr.rel (%p354) target = $region56
        $region55: #{_lambda_.1} parent=47 // pred_region
          %s357 = smul.u32 %s27, 8
          %s358 = sadd.s32 %s357, 8
          %p359 = scmp.lt.s32.totalorder %s26, 1
          %s360 = scalar_select %p359, %s26, 1
          %p361 = scmp.lt.s32.totalorder %s358, 8
          %s362 = scalar_select %p361, %s358, 8
          %s363 = smul.addr %s362, 2
          %s364 = smul.addr %s360, 18
          %s365 = sadd.s32 %s363, %s364
          %s366 = smul.addr %s365, 4
          %s367 = scalar_lea.vmem %s1, %s366
          %s368 = smul.u32 %s27, 8
          %s369 = sadd.s32 %s368, 8
        $region56: #{_lambda_.1} parent=47 // pred_fallthru
          _
      $region48: #{_lambda_.1} parent=5 // pred_fallthru
        _
      %p370 = scmp.le.s32.totalorder 1, %s19
      %p371 = scmp.lt.s32.totalorder %s19, 3
      %p372 = pnand %p370, %p371
      %p373 = pneg %p372
      // Predicated region
      $region57: #{_lambda_.1} parent=5 // pred_check
        _
      $region58: #{_lambda_.1} parent=5 // pred_check_branch
        %375 = sbr.rel (%p372) target = $region60
      $region59: #{_lambda_.1} parent=5 // pred_region
        %s376 = ssub.s32 %s19, 1
        %s377 = smul.u32 8, %s29
        %s378 = ssub.s32 9, %s377
        %p379 = scmp.lt.s32.totalorder %s378, 8
        %s380 = scalar_select %p379, %s378, 8
        %s381 = smul.u32 64, %s380
        %s382 = smul.u32 %s381, 2
        %p383 = scmp.lt.s32.totalorder %s28, 1
        %s384 = scalar_select %p383, %s28, 1
        %p385 = scmp.lt.s32.totalorder %s377, 8
        %s386 = scalar_select %p385, %s377, 8
        %s387 = smul.addr %s386, 2
        %s388 = smul.addr %s384, 18
        %s389 = sadd.s32 %s387, %s388
        %s390 = smul.addr %s389, 4
        %s391 = scalar_lea.vmem %s0, %s390
        %p392 = pneg %p59
        %p393 = pneg %p56
        %s394 = smul.u32 %s29, 8
        %s395 = sadd.s32 %s394, 8
        %p396 = scmp.lt.s32.totalorder %s28, 1
        %s397 = scalar_select %p396, %s28, 1
        %p398 = scmp.lt.s32.totalorder %s395, 8
        %s399 = scalar_select %p398, %s395, 8
        %s400 = smul.addr %s399, 2
        %s401 = smul.addr %s397, 18
        %s402 = sadd.s32 %s400, %s401
        %s403 = smul.addr %s402, 4
        %s404 = scalar_lea.vmem %s1, %s403
        %p405 = pneg %p91
        %p406 = pneg %p88
        %p407 = pneg %p112
        %p408 = pneg %p109
        %p409 = pneg %p133
        %p410 = pneg %p130
        %p411 = pneg %p154
        %p412 = pneg %p151
        %p413 = pneg %p175
        %p414 = pneg %p172
        %p415 = pneg %p196
        %p416 = pneg %p193
        %p417 = pneg %p217
        %p418 = pneg %p214
        %p419 = pneg %p238
        %p420 = pneg %p235
        %p421 = pneg %p259
        %p422 = pneg %p256
        %p423 = pneg %p287
        %p424 = pneg %p284
        %s425 = sand.u32 %s274, 1
        %s426 = scalar_lea.sflag [#allocation3], %s425
        %s427 = sand.u32 %s274, 1
        %s428 = smul.addr %s427, 32
        %s429 = scalar_lea.vmem [#allocation2], %s428
        %s430 = smul.u32 8, %s29
        %s431 = ssub.s32 9, %s430
        %p432 = scmp.lt.s32.totalorder %s431, 8
        %s433 = scalar_select %p432, %s431, 8
        %s434 = smul.u32 64, %s433
        %s435 = smul.u32 %s434, 2
        %p436 = scmp.lt.s32.totalorder %s28, 1
        %s437 = scalar_select %p436, %s28, 1
        %p438 = scmp.lt.s32.totalorder %s430, 8
        %s439 = scalar_select %p438, %s430, 8
        %s440 = smul.addr %s439, 2
        %s441 = smul.addr %s437, 18
        %s442 = sadd.s32 %s440, %s441
        %s443 = smul.addr %s442, 4
        %s444 = scalar_lea.vmem %s0, %s443
        %s445 = smul.u32 8, %s29
        %s446 = ssub.s32 9, %s445
        %p447 = scmp.lt.s32.totalorder %s446, 8
        %s448 = scalar_select %p447, %s446, 8
        %s449 = smul.u32 64, %s448
        %s450 = smul.u32 %s449, 2
        %s451 = smul.u32 %s29, 8
        %s452 = sadd.s32 %s451, 8
        %p453 = scmp.lt.s32.totalorder %s28, 1
        %s454 = scalar_select %p453, %s28, 1
        %p455 = scmp.lt.s32.totalorder %s452, 8
        %s456 = scalar_select %p455, %s452, 8
        %s457 = smul.addr %s456, 2
        %s458 = smul.addr %s454, 18
        %s459 = sadd.s32 %s457, %s458
        %s460 = smul.addr %s459, 4
        %s461 = scalar_lea.vmem %s1, %s460
        %s462 = smul.u32 %s29, 8
        %s463 = sadd.s32 %s462, 8
        %s464 = smul.u32 8, %s29
        %v466 = vld [vmem:[%s2] sm:$0x3]
        %v467 = vld [vmem:[%s3] sm:$0x1]
        %v468 = vlaneseq
        %v469 = vshrl.u32 %v468, 7
        %v470 = vadd.s32 %v469, 8
        %vm471 = vcmp.gt.s32.totalorder %v469, 0
        %vm472 = vcmp.gt.s32.totalorder %v470, 0
        %s473 = smul.u32 %s29, 8
        %v474 = vstv %s473
        %v475 = vadd.s32 %v474, 1
        %v476 = vadd.s32 %v474, 2
        %v477 = vadd.s32 %v474, 3
        %v478 = vadd.s32 %v474, 4
        %v479 = vadd.s32 %v474, 5
        %v480 = vadd.s32 %v474, 6
        %v481 = vadd.s32 %v474, 7
        %vm482 = vcmp.gt.s32.totalorder %v474, 0
        %vm483 = vcmp.gt.s32.totalorder %v475, 0
        %vm484 = vcmp.gt.s32.totalorder %v476, 0
        %vm485 = vcmp.gt.s32.totalorder %v477, 0
        %vm486 = vcmp.gt.s32.totalorder %v478, 0
        %vm487 = vcmp.gt.s32.totalorder %v479, 0
        %vm488 = vcmp.gt.s32.totalorder %v480, 0
        %vm489 = vcmp.gt.s32.totalorder %v481, 0
        %v490 = vld [vmem:[%s444] sm:$0xf]
        %v491 = vld [vmem:[%s444 + $0x4] sm:$0x1]
        %v492 = vld [vmem:[%s444 + $0x8] sm:$0xf]
        %v493 = vld [vmem:[%s444 + $0xc] sm:$0x1]
        %v494 = vld [vmem:[%s444 + $0x10] sm:$0xf]
        %v495 = vld [vmem:[%s444 + $0x14] sm:$0x1]
        %v496 = vld [vmem:[%s444 + $0x18] sm:$0xf]
        %v497 = vld [vmem:[%s444 + $0x1c] sm:$0x1]
        %v498 = vld [vmem:[%s444 + $0x20] sm:$0xf]
        %v499 = vld [vmem:[%s444 + $0x24] sm:$0x1]
        %v500 = vld [vmem:[%s444 + $0x28] sm:$0xf]
        %v501 = vld [vmem:[%s444 + $0x2c] sm:$0x1]
        %v502 = vld [vmem:[%s444 + $0x30] sm:$0xf]
        %v503 = vld [vmem:[%s444 + $0x34] sm:$0x1]
        %v504 = vld [vmem:[%s444 + $0x38] sm:$0xf]
        %v505 = vld [vmem:[%s444 + $0x3c] sm:$0x1]
        %v506 = vld [vmem:[%s461] sm:$0xf]
        %v507 = vld [vmem:[%s461 + $0x4] sm:$0x1]
        %v527 = vunpack.c.l.s4 1966171168
        %v528 = vunpack.c.0.s8 %v527
        %v529 = vlaneseq
        %v530 = vshrl.u32 %v529, 7
        %v531 = vsub.s32 %v528, %v530
        %v532 = vrot.slane %v490, %v531
        %v533 = vcombine.high %v532, %v532
        %v535 = vunpack.c.l.s4 1966171168
        %v536 = vunpack.c.0.s8 %v535
        %v537 = vlaneseq
        %v538 = vshrl.u32 %v537, 7
        %v539 = vsub.s32 %v536, %v538
        %v540 = vrot.slane %v532, %v539
        %v542 = vunpack.c.l.s4 1966171168
        %v543 = vunpack.c.0.s8 %v542
        %v544 = vlaneseq
        %v545 = vshrl.u32 %v544, 7
        %v546 = vsub.s32 %v543, %v545
        %v547 = vrot.slane %v533, %v546
        %v548 = vcombine.high %v540, %v540
        %v549 = vcombine.high %v547, %v547
        %v551 = vunpack.c.l.s4 1966171168
        %v552 = vunpack.c.0.s8 %v551
        %v553 = vlaneseq
        %v554 = vshrl.u32 %v553, 7
        %v555 = vsub.s32 %v552, %v554
        %v556 = vrot.slane %v491, %v555
        %v558 = vunpack.c.l.s4 1966171168
        %v559 = vunpack.c.0.s8 %v558
        %v560 = vlaneseq
        %v561 = vshrl.u32 %v560, 7
        %v562 = vsub.s32 %v559, %v561
        %v563 = vrot.slane %v556, %v562
        %v565 = vunpack.c.l.s4 1966171168
        %v566 = vunpack.c.0.s8 %v565
        %v567 = vlaneseq
        %v568 = vshrl.u32 %v567, 7
        %v569 = vsub.s32 %v566, %v568
        %v570 = vrot.slane %v492, %v569
        %v571 = vcombine.high %v570, %v570
        %v573 = vunpack.c.l.s4 1966171168
        %v574 = vunpack.c.0.s8 %v573
        %v575 = vlaneseq
        %v576 = vshrl.u32 %v575, 7
        %v577 = vsub.s32 %v574, %v576
        %v578 = vrot.slane %v570, %v577
        %v580 = vunpack.c.l.s4 1966171168
        %v581 = vunpack.c.0.s8 %v580
        %v582 = vlaneseq
        %v583 = vshrl.u32 %v582, 7
        %v584 = vsub.s32 %v581, %v583
        %v585 = vrot.slane %v571, %v584
        %v586 = vcombine.high %v578, %v578
        %v587 = vcombine.high %v585, %v585
        %v589 = vunpack.c.l.s4 1966171168
        %v590 = vunpack.c.0.s8 %v589
        %v591 = vlaneseq
        %v592 = vshrl.u32 %v591, 7
        %v593 = vsub.s32 %v590, %v592
        %v594 = vrot.slane %v493, %v593
        %v596 = vunpack.c.l.s4 1966171168
        %v597 = vunpack.c.0.s8 %v596
        %v598 = vlaneseq
        %v599 = vshrl.u32 %v598, 7
        %v600 = vsub.s32 %v597, %v599
        %v601 = vrot.slane %v594, %v600
        %v603 = vunpack.c.l.s4 1966171168
        %v604 = vunpack.c.0.s8 %v603
        %v605 = vlaneseq
        %v606 = vshrl.u32 %v605, 7
        %v607 = vsub.s32 %v604, %v606
        %v608 = vrot.slane %v494, %v607
        %v609 = vcombine.high %v608, %v608
        %v611 = vunpack.c.l.s4 1966171168
        %v612 = vunpack.c.0.s8 %v611
        %v613 = vlaneseq
        %v614 = vshrl.u32 %v613, 7
        %v615 = vsub.s32 %v612, %v614
        %v616 = vrot.slane %v608, %v615
        %v618 = vunpack.c.l.s4 1966171168
        %v619 = vunpack.c.0.s8 %v618
        %v620 = vlaneseq
        %v621 = vshrl.u32 %v620, 7
        %v622 = vsub.s32 %v619, %v621
        %v623 = vrot.slane %v609, %v622
        %v624 = vcombine.high %v616, %v616
        %v625 = vcombine.high %v623, %v623
        %v627 = vunpack.c.l.s4 1966171168
        %v628 = vunpack.c.0.s8 %v627
        %v629 = vlaneseq
        %v630 = vshrl.u32 %v629, 7
        %v631 = vsub.s32 %v628, %v630
        %v632 = vrot.slane %v495, %v631
        %v634 = vunpack.c.l.s4 1966171168
        %v635 = vunpack.c.0.s8 %v634
        %v636 = vlaneseq
        %v637 = vshrl.u32 %v636, 7
        %v638 = vsub.s32 %v635, %v637
        %v639 = vrot.slane %v632, %v638
        %v641 = vunpack.c.l.s4 1966171168
        %v642 = vunpack.c.0.s8 %v641
        %v643 = vlaneseq
        %v644 = vshrl.u32 %v643, 7
        %v645 = vsub.s32 %v642, %v644
        %v646 = vrot.slane %v496, %v645
        %v647 = vcombine.high %v646, %v646
        %v649 = vunpack.c.l.s4 1966171168
        %v650 = vunpack.c.0.s8 %v649
        %v651 = vlaneseq
        %v652 = vshrl.u32 %v651, 7
        %v653 = vsub.s32 %v650, %v652
        %v654 = vrot.slane %v646, %v653
        %v656 = vunpack.c.l.s4 1966171168
        %v657 = vunpack.c.0.s8 %v656
        %v658 = vlaneseq
        %v659 = vshrl.u32 %v658, 7
        %v660 = vsub.s32 %v657, %v659
        %v661 = vrot.slane %v647, %v660
        %v662 = vcombine.high %v654, %v654
        %v663 = vcombine.high %v661, %v661
        %v665 = vunpack.c.l.s4 1966171168
        %v666 = vunpack.c.0.s8 %v665
        %v667 = vlaneseq
        %v668 = vshrl.u32 %v667, 7
        %v669 = vsub.s32 %v666, %v668
        %v670 = vrot.slane %v497, %v669
        %v672 = vunpack.c.l.s4 1966171168
        %v673 = vunpack.c.0.s8 %v672
        %v674 = vlaneseq
        %v675 = vshrl.u32 %v674, 7
        %v676 = vsub.s32 %v673, %v675
        %v677 = vrot.slane %v670, %v676
        %v679 = vunpack.c.l.s4 1966171168
        %v680 = vunpack.c.0.s8 %v679
        %v681 = vlaneseq
        %v682 = vshrl.u32 %v681, 7
        %v683 = vsub.s32 %v680, %v682
        %v684 = vrot.slane %v498, %v683
        %v685 = vcombine.high %v684, %v684
        %v687 = vunpack.c.l.s4 1966171168
        %v688 = vunpack.c.0.s8 %v687
        %v689 = vlaneseq
        %v690 = vshrl.u32 %v689, 7
        %v691 = vsub.s32 %v688, %v690
        %v692 = vrot.slane %v684, %v691
        %v694 = vunpack.c.l.s4 1966171168
        %v695 = vunpack.c.0.s8 %v694
        %v696 = vlaneseq
        %v697 = vshrl.u32 %v696, 7
        %v698 = vsub.s32 %v695, %v697
        %v699 = vrot.slane %v685, %v698
        %v700 = vcombine.high %v692, %v692
        %v701 = vcombine.high %v699, %v699
        %v703 = vunpack.c.l.s4 1966171168
        %v704 = vunpack.c.0.s8 %v703
        %v705 = vlaneseq
        %v706 = vshrl.u32 %v705, 7
        %v707 = vsub.s32 %v704, %v706
        %v708 = vrot.slane %v499, %v707
        %v710 = vunpack.c.l.s4 1966171168
        %v711 = vunpack.c.0.s8 %v710
        %v712 = vlaneseq
        %v713 = vshrl.u32 %v712, 7
        %v714 = vsub.s32 %v711, %v713
        %v715 = vrot.slane %v708, %v714
        %v717 = vunpack.c.l.s4 1966171168
        %v718 = vunpack.c.0.s8 %v717
        %v719 = vlaneseq
        %v720 = vshrl.u32 %v719, 7
        %v721 = vsub.s32 %v718, %v720
        %v722 = vrot.slane %v500, %v721
        %v723 = vcombine.high %v722, %v722
        %v725 = vunpack.c.l.s4 1966171168
        %v726 = vunpack.c.0.s8 %v725
        %v727 = vlaneseq
        %v728 = vshrl.u32 %v727, 7
        %v729 = vsub.s32 %v726, %v728
        %v730 = vrot.slane %v722, %v729
        %v732 = vunpack.c.l.s4 1966171168
        %v733 = vunpack.c.0.s8 %v732
        %v734 = vlaneseq
        %v735 = vshrl.u32 %v734, 7
        %v736 = vsub.s32 %v733, %v735
        %v737 = vrot.slane %v723, %v736
        %v738 = vcombine.high %v730, %v730
        %v739 = vcombine.high %v737, %v737
        %v741 = vunpack.c.l.s4 1966171168
        %v742 = vunpack.c.0.s8 %v741
        %v743 = vlaneseq
        %v744 = vshrl.u32 %v743, 7
        %v745 = vsub.s32 %v742, %v744
        %v746 = vrot.slane %v501, %v745
        %v748 = vunpack.c.l.s4 1966171168
        %v749 = vunpack.c.0.s8 %v748
        %v750 = vlaneseq
        %v751 = vshrl.u32 %v750, 7
        %v752 = vsub.s32 %v749, %v751
        %v753 = vrot.slane %v746, %v752
        %v755 = vunpack.c.l.s4 1966171168
        %v756 = vunpack.c.0.s8 %v755
        %v757 = vlaneseq
        %v758 = vshrl.u32 %v757, 7
        %v759 = vsub.s32 %v756, %v758
        %v760 = vrot.slane %v502, %v759
        %v761 = vcombine.high %v760, %v760
        %v763 = vunpack.c.l.s4 1966171168
        %v764 = vunpack.c.0.s8 %v763
        %v765 = vlaneseq
        %v766 = vshrl.u32 %v765, 7
        %v767 = vsub.s32 %v764, %v766
        %v768 = vrot.slane %v760, %v767
        %v770 = vunpack.c.l.s4 1966171168
        %v771 = vunpack.c.0.s8 %v770
        %v772 = vlaneseq
        %v773 = vshrl.u32 %v772, 7
        %v774 = vsub.s32 %v771, %v773
        %v775 = vrot.slane %v761, %v774
        %v776 = vcombine.high %v768, %v768
        %v777 = vcombine.high %v775, %v775
        %v779 = vunpack.c.l.s4 1966171168
        %v780 = vunpack.c.0.s8 %v779
        %v781 = vlaneseq
        %v782 = vshrl.u32 %v781, 7
        %v783 = vsub.s32 %v780, %v782
        %v784 = vrot.slane %v503, %v783
        %v786 = vunpack.c.l.s4 1966171168
        %v787 = vunpack.c.0.s8 %v786
        %v788 = vlaneseq
        %v789 = vshrl.u32 %v788, 7
        %v790 = vsub.s32 %v787, %v789
        %v791 = vrot.slane %v784, %v790
        %v793 = vunpack.c.l.s4 1966171168
        %v794 = vunpack.c.0.s8 %v793
        %v795 = vlaneseq
        %v796 = vshrl.u32 %v795, 7
        %v797 = vsub.s32 %v794, %v796
        %v798 = vrot.slane %v504, %v797
        %v799 = vcombine.high %v798, %v798
        %v801 = vunpack.c.l.s4 1966171168
        %v802 = vunpack.c.0.s8 %v801
        %v803 = vlaneseq
        %v804 = vshrl.u32 %v803, 7
        %v805 = vsub.s32 %v802, %v804
        %v806 = vrot.slane %v798, %v805
        %v808 = vunpack.c.l.s4 1966171168
        %v809 = vunpack.c.0.s8 %v808
        %v810 = vlaneseq
        %v811 = vshrl.u32 %v810, 7
        %v812 = vsub.s32 %v809, %v811
        %v813 = vrot.slane %v799, %v812
        %v814 = vcombine.high %v806, %v806
        %v815 = vcombine.high %v813, %v813
        %v817 = vunpack.c.l.s4 1966171168
        %v818 = vunpack.c.0.s8 %v817
        %v819 = vlaneseq
        %v820 = vshrl.u32 %v819, 7
        %v821 = vsub.s32 %v818, %v820
        %v822 = vrot.slane %v505, %v821
        %v824 = vunpack.c.l.s4 1966171168
        %v825 = vunpack.c.0.s8 %v824
        %v826 = vlaneseq
        %v827 = vshrl.u32 %v826, 7
        %v828 = vsub.s32 %v825, %v827
        %v829 = vrot.slane %v822, %v828
        %v831 = vunpack.c.l.s4 1966171168
        %v832 = vunpack.c.0.s8 %v831
        %v833 = vlaneseq
        %v834 = vshrl.u32 %v833, 7
        %v835 = vsub.s32 %v832, %v834
        %v836 = vrot.slane %v506, %v835
        %v837 = vcombine.high %v836, %v836
        %v839 = vunpack.c.l.s4 1966171168
        %v840 = vunpack.c.0.s8 %v839
        %v841 = vlaneseq
        %v842 = vshrl.u32 %v841, 7
        %v843 = vsub.s32 %v840, %v842
        %v844 = vrot.slane %v836, %v843
        %v846 = vunpack.c.l.s4 1966171168
        %v847 = vunpack.c.0.s8 %v846
        %v848 = vlaneseq
        %v849 = vshrl.u32 %v848, 7
        %v850 = vsub.s32 %v847, %v849
        %v851 = vrot.slane %v837, %v850
        %v852 = vcombine.high %v844, %v844
        %v853 = vcombine.high %v851, %v851
        %v855 = vunpack.c.l.s4 1966171168
        %v856 = vunpack.c.0.s8 %v855
        %v857 = vlaneseq
        %v858 = vshrl.u32 %v857, 7
        %v859 = vsub.s32 %v856, %v858
        %v860 = vrot.slane %v507, %v859
        %v862 = vunpack.c.l.s4 1966171168
        %v863 = vunpack.c.0.s8 %v862
        %v864 = vlaneseq
        %v865 = vshrl.u32 %v864, 7
        %v866 = vsub.s32 %v863, %v865
        %v867 = vrot.slane %v860, %v866
        %v868 = vunpack.i.l.s16 %v540
        %v869 = vunpack.i.h.s16 %v540
        %v870 = vunpack.i.l.s16 %v547
        %v871 = vunpack.i.h.s16 %v547
        %v872 = vunpack.i.l.s16 %v548
        %v873 = vunpack.i.h.s16 %v548
        %v874 = vunpack.i.l.s16 %v549
        %v875 = vunpack.i.h.s16 %v549
        %v876 = vunpack.i.l.s16 %v563
        %v877 = vunpack.i.l.s16 %v578
        %v878 = vunpack.i.h.s16 %v578
        %v879 = vunpack.i.l.s16 %v585
        %v880 = vunpack.i.h.s16 %v585
        %v881 = vunpack.i.l.s16 %v586
        %v882 = vunpack.i.h.s16 %v586
        %v883 = vunpack.i.l.s16 %v587
        %v884 = vunpack.i.h.s16 %v587
        %v885 = vunpack.i.l.s16 %v601
        %v886 = vunpack.i.l.s16 %v616
        %v887 = vunpack.i.h.s16 %v616
        %v888 = vunpack.i.l.s16 %v623
        %v889 = vunpack.i.h.s16 %v623
        %v890 = vunpack.i.l.s16 %v624
        %v891 = vunpack.i.h.s16 %v624
        %v892 = vunpack.i.l.s16 %v625
        %v893 = vunpack.i.h.s16 %v625
        %v894 = vunpack.i.l.s16 %v639
        %v895 = vunpack.i.l.s16 %v654
        %v896 = vunpack.i.h.s16 %v654
        %v897 = vunpack.i.l.s16 %v661
        %v898 = vunpack.i.h.s16 %v661
        %v899 = vunpack.i.l.s16 %v662
        %v900 = vunpack.i.h.s16 %v662
        %v901 = vunpack.i.l.s16 %v663
        %v902 = vunpack.i.h.s16 %v663
        %v903 = vunpack.i.l.s16 %v677
        %v904 = vunpack.i.l.s16 %v692
        %v905 = vunpack.i.h.s16 %v692
        %v906 = vunpack.i.l.s16 %v699
        %v907 = vunpack.i.h.s16 %v699
        %v908 = vunpack.i.l.s16 %v700
        %v909 = vunpack.i.h.s16 %v700
        %v910 = vunpack.i.l.s16 %v701
        %v911 = vunpack.i.h.s16 %v701
        %v912 = vunpack.i.l.s16 %v715
        %v913 = vunpack.i.l.s16 %v730
        %v914 = vunpack.i.h.s16 %v730
        %v915 = vunpack.i.l.s16 %v737
        %v916 = vunpack.i.h.s16 %v737
        %v917 = vunpack.i.l.s16 %v738
        %v918 = vunpack.i.h.s16 %v738
        %v919 = vunpack.i.l.s16 %v739
        %v920 = vunpack.i.h.s16 %v739
        %v921 = vunpack.i.l.s16 %v753
        %v922 = vunpack.i.l.s16 %v768
        %v923 = vunpack.i.h.s16 %v768
        %v924 = vunpack.i.l.s16 %v775
        %v925 = vunpack.i.h.s16 %v775
        %v926 = vunpack.i.l.s16 %v776
        %v927 = vunpack.i.h.s16 %v776
        %v928 = vunpack.i.l.s16 %v777
        %v929 = vunpack.i.h.s16 %v777
        %v930 = vunpack.i.l.s16 %v791
        %v931 = vunpack.i.l.s16 %v806
        %v932 = vunpack.i.h.s16 %v806
        %v933 = vunpack.i.l.s16 %v813
        %v934 = vunpack.i.h.s16 %v813
        %v935 = vunpack.i.l.s16 %v814
        %v936 = vunpack.i.h.s16 %v814
        %v937 = vunpack.i.l.s16 %v815
        %v938 = vunpack.i.h.s16 %v815
        %v939 = vunpack.i.l.s16 %v829
        %v940 = vunpack.i.l.s16 %v844
        %v941 = vunpack.i.h.s16 %v844
        %v942 = vunpack.i.l.s16 %v851
        %v943 = vunpack.i.h.s16 %v851
        %v944 = vunpack.i.l.s16 %v852
        %v945 = vunpack.i.h.s16 %v852
        %v946 = vunpack.i.l.s16 %v853
        %v947 = vunpack.i.h.s16 %v853
        %v948 = vunpack.i.l.s16 %v867
        %v950 = vlaneseq
        %v951 = vshrl.u32 %v950, 7
        %v952 = vsub.s32 0, %v951
        %v953 = vrot.slane %v467, %v952
        %v955 = vpack.i.b16 %v869, %v868
        %v956 = vpack.i.b16 %v871, %v870
        %v957 = vpack.i.b16 %v873, %v872
        %v958 = vpack.i.b16 %v875, %v874
        %v959 = vpack.i.b16 %v877, %v876
        %v960 = vpack.i.b16 %v879, %v878
        %v961 = vpack.i.b16 %v881, %v880
        %v962 = vpack.i.b16 %v883, %v882
        %v963 = vpack.i.b16 %v885, %v884
        %v964 = vpack.i.b16 %v887, %v886
        %v965 = vpack.i.b16 %v889, %v888
        %v966 = vpack.i.b16 %v891, %v890
        %v967 = vpack.i.b16 %v893, %v892
        %v968 = vpack.i.b16 %v895, %v894
        %v969 = vpack.i.b16 %v897, %v896
        %v970 = vpack.i.b16 %v899, %v898
        %v971 = vpack.i.b16 %v901, %v900
        %v972 = vpack.i.b16 %v903, %v902
        %v973 = vpack.i.b16 %v905, %v904
        %v974 = vpack.i.b16 %v907, %v906
        %v975 = vpack.i.b16 %v909, %v908
        %v976 = vpack.i.b16 %v911, %v910
        %v977 = vpack.i.b16 %v913, %v912
        %v978 = vpack.i.b16 %v915, %v914
        %v979 = vpack.i.b16 %v917, %v916
        %v980 = vpack.i.b16 %v919, %v918
        %v981 = vpack.i.b16 %v921, %v920
        %v982 = vpack.i.b16 %v923, %v922
        %v983 = vpack.i.b16 %v925, %v924
        %v984 = vpack.i.b16 %v927, %v926
        %v985 = vpack.i.b16 %v929, %v928
        %v986 = vpack.i.b16 %v931, %v930
        %v987 = vpack.i.b16 %v933, %v932
        %v988 = vpack.i.b16 %v935, %v934
        %v989 = vpack.i.b16 %v937, %v936
        %v990 = vpack.i.b16 %v939, %v938
        %v991 = vpack.i.b16 %v941, %v940
        %v992 = vpack.i.b16 %v943, %v942
        %v993 = vpack.i.b16 %v945, %v944
        %v994 = vpack.i.b16 %v947, %v946
        %v996 = vcombine.low %v955, %v956
        %v997 = vcombine.low %v957, %v958
        %v998 = vcombine.low %v959, %v960
        %v999 = vcombine.low %v961, %v962
        %v1001 = vunpack.c.l.s4 1966171168
        %v1002 = vunpack.c.0.s8 %v1001
        %v1003 = vlaneseq
        %v1004 = vshrl.u32 %v1003, 7
        %v1005 = vsub.s32 %v1002, %v1004
        %v1006 = vrot.slane %v996, %v1005
        %v1008 = vunpack.c.l.s4 1966171168
        %v1009 = vunpack.c.0.s8 %v1008
        %v1010 = vlaneseq
        %v1011 = vshrl.u32 %v1010, 7
        %v1012 = vsub.s32 %v1009, %v1011
        %v1013 = vrot.slane %v997, %v1012
        %v1015 = vunpack.c.l.s4 1966171168
        %v1016 = vunpack.c.0.s8 %v1015
        %v1017 = vlaneseq
        %v1018 = vshrl.u32 %v1017, 7
        %v1019 = vsub.s32 %v1016, %v1018
        %v1020 = vrot.slane %v998, %v1019
        %v1022 = vunpack.c.l.s4 1966171168
        %v1023 = vunpack.c.0.s8 %v1022
        %v1024 = vlaneseq
        %v1025 = vshrl.u32 %v1024, 7
        %v1026 = vsub.s32 %v1023, %v1025
        %v1027 = vrot.slane %v999, %v1026
        %v1028 = vcombine.low %v1006, %v1013
        %v1029 = vcombine.low %v1020, %v1027
        %v1031 = vunpack.c.l.s4 1966171168
        %v1032 = vunpack.c.0.s8 %v1031
        %v1033 = vlaneseq
        %v1034 = vshrl.u32 %v1033, 7
        %v1035 = vsub.s32 %v1032, %v1034
        %v1036 = vrot.slane %v1028, %v1035
        %v1038 = vunpack.c.l.s4 1966171168
        %v1039 = vunpack.c.0.s8 %v1038
        %v1040 = vlaneseq
        %v1041 = vshrl.u32 %v1040, 7
        %v1042 = vsub.s32 %v1039, %v1041
        %v1043 = vrot.slane %v1029, %v1042
        %v1044 = vcombine.low %v1036, %v1043
        %v1045 = vcombine.low %v963, %v964
        %v1046 = vcombine.low %v965, %v966
        %v1047 = vcombine.low %v967, %v968
        %v1048 = vcombine.low %v969, %v970
        %v1050 = vunpack.c.l.s4 1966171168
        %v1051 = vunpack.c.0.s8 %v1050
        %v1052 = vlaneseq
        %v1053 = vshrl.u32 %v1052, 7
        %v1054 = vsub.s32 %v1051, %v1053
        %v1055 = vrot.slane %v1045, %v1054
        %v1057 = vunpack.c.l.s4 1966171168
        %v1058 = vunpack.c.0.s8 %v1057
        %v1059 = vlaneseq
        %v1060 = vshrl.u32 %v1059, 7
        %v1061 = vsub.s32 %v1058, %v1060
        %v1062 = vrot.slane %v1046, %v1061
        %v1064 = vunpack.c.l.s4 1966171168
        %v1065 = vunpack.c.0.s8 %v1064
        %v1066 = vlaneseq
        %v1067 = vshrl.u32 %v1066, 7
        %v1068 = vsub.s32 %v1065, %v1067
        %v1069 = vrot.slane %v1047, %v1068
        %v1071 = vunpack.c.l.s4 1966171168
        %v1072 = vunpack.c.0.s8 %v1071
        %v1073 = vlaneseq
        %v1074 = vshrl.u32 %v1073, 7
        %v1075 = vsub.s32 %v1072, %v1074
        %v1076 = vrot.slane %v1048, %v1075
        %v1077 = vcombine.low %v1055, %v1062
        %v1078 = vcombine.low %v1069, %v1076
        %v1080 = vunpack.c.l.s4 1966171168
        %v1081 = vunpack.c.0.s8 %v1080
        %v1082 = vlaneseq
        %v1083 = vshrl.u32 %v1082, 7
        %v1084 = vsub.s32 %v1081, %v1083
        %v1085 = vrot.slane %v1077, %v1084
        %v1087 = vunpack.c.l.s4 1966171168
        %v1088 = vunpack.c.0.s8 %v1087
        %v1089 = vlaneseq
        %v1090 = vshrl.u32 %v1089, 7
        %v1091 = vsub.s32 %v1088, %v1090
        %v1092 = vrot.slane %v1078, %v1091
        %v1093 = vcombine.low %v1085, %v1092
        %v1094 = vcombine.low %v971, %v972
        %v1095 = vcombine.low %v973, %v974
        %v1096 = vcombine.low %v975, %v976
        %v1097 = vcombine.low %v977, %v978
        %v1099 = vunpack.c.l.s4 1966171168
        %v1100 = vunpack.c.0.s8 %v1099
        %v1101 = vlaneseq
        %v1102 = vshrl.u32 %v1101, 7
        %v1103 = vsub.s32 %v1100, %v1102
        %v1104 = vrot.slane %v1094, %v1103
        %v1106 = vunpack.c.l.s4 1966171168
        %v1107 = vunpack.c.0.s8 %v1106
        %v1108 = vlaneseq
        %v1109 = vshrl.u32 %v1108, 7
        %v1110 = vsub.s32 %v1107, %v1109
        %v1111 = vrot.slane %v1095, %v1110
        %v1113 = vunpack.c.l.s4 1966171168
        %v1114 = vunpack.c.0.s8 %v1113
        %v1115 = vlaneseq
        %v1116 = vshrl.u32 %v1115, 7
        %v1117 = vsub.s32 %v1114, %v1116
        %v1118 = vrot.slane %v1096, %v1117
        %v1120 = vunpack.c.l.s4 1966171168
        %v1121 = vunpack.c.0.s8 %v1120
        %v1122 = vlaneseq
        %v1123 = vshrl.u32 %v1122, 7
        %v1124 = vsub.s32 %v1121, %v1123
        %v1125 = vrot.slane %v1097, %v1124
        %v1126 = vcombine.low %v1104, %v1111
        %v1127 = vcombine.low %v1118, %v1125
        %v1129 = vunpack.c.l.s4 1966171168
        %v1130 = vunpack.c.0.s8 %v1129
        %v1131 = vlaneseq
        %v1132 = vshrl.u32 %v1131, 7
        %v1133 = vsub.s32 %v1130, %v1132
        %v1134 = vrot.slane %v1126, %v1133
        %v1136 = vunpack.c.l.s4 1966171168
        %v1137 = vunpack.c.0.s8 %v1136
        %v1138 = vlaneseq
        %v1139 = vshrl.u32 %v1138, 7
        %v1140 = vsub.s32 %v1137, %v1139
        %v1141 = vrot.slane %v1127, %v1140
        %v1142 = vcombine.low %v1134, %v1141
        %v1143 = vcombine.low %v979, %v980
        %v1144 = vcombine.low %v981, %v982
        %v1145 = vcombine.low %v983, %v984
        %v1146 = vcombine.low %v985, %v986
        %v1148 = vunpack.c.l.s4 1966171168
        %v1149 = vunpack.c.0.s8 %v1148
        %v1150 = vlaneseq
        %v1151 = vshrl.u32 %v1150, 7
        %v1152 = vsub.s32 %v1149, %v1151
        %v1153 = vrot.slane %v1143, %v1152
        %v1155 = vunpack.c.l.s4 1966171168
        %v1156 = vunpack.c.0.s8 %v1155
        %v1157 = vlaneseq
        %v1158 = vshrl.u32 %v1157, 7
        %v1159 = vsub.s32 %v1156, %v1158
        %v1160 = vrot.slane %v1144, %v1159
        %v1162 = vunpack.c.l.s4 1966171168
        %v1163 = vunpack.c.0.s8 %v1162
        %v1164 = vlaneseq
        %v1165 = vshrl.u32 %v1164, 7
        %v1166 = vsub.s32 %v1163, %v1165
        %v1167 = vrot.slane %v1145, %v1166
        %v1169 = vunpack.c.l.s4 1966171168
        %v1170 = vunpack.c.0.s8 %v1169
        %v1171 = vlaneseq
        %v1172 = vshrl.u32 %v1171, 7
        %v1173 = vsub.s32 %v1170, %v1172
        %v1174 = vrot.slane %v1146, %v1173
        %v1175 = vcombine.low %v1153, %v1160
        %v1176 = vcombine.low %v1167, %v1174
        %v1178 = vunpack.c.l.s4 1966171168
        %v1179 = vunpack.c.0.s8 %v1178
        %v1180 = vlaneseq
        %v1181 = vshrl.u32 %v1180, 7
        %v1182 = vsub.s32 %v1179, %v1181
        %v1183 = vrot.slane %v1175, %v1182
        %v1185 = vunpack.c.l.s4 1966171168
        %v1186 = vunpack.c.0.s8 %v1185
        %v1187 = vlaneseq
        %v1188 = vshrl.u32 %v1187, 7
        %v1189 = vsub.s32 %v1186, %v1188
        %v1190 = vrot.slane %v1176, %v1189
        %v1191 = vcombine.low %v1183, %v1190
        %v1192 = vcombine.low %v987, %v988
        %v1193 = vcombine.low %v989, %v990
        %v1194 = vcombine.low %v991, %v992
        %v1195 = vcombine.low %v993, %v994
        %v1197 = vunpack.c.l.s4 1966171168
        %v1198 = vunpack.c.0.s8 %v1197
        %v1199 = vlaneseq
        %v1200 = vshrl.u32 %v1199, 7
        %v1201 = vsub.s32 %v1198, %v1200
        %v1202 = vrot.slane %v1192, %v1201
        %v1204 = vunpack.c.l.s4 1966171168
        %v1205 = vunpack.c.0.s8 %v1204
        %v1206 = vlaneseq
        %v1207 = vshrl.u32 %v1206, 7
        %v1208 = vsub.s32 %v1205, %v1207
        %v1209 = vrot.slane %v1193, %v1208
        %v1211 = vunpack.c.l.s4 1966171168
        %v1212 = vunpack.c.0.s8 %v1211
        %v1213 = vlaneseq
        %v1214 = vshrl.u32 %v1213, 7
        %v1215 = vsub.s32 %v1212, %v1214
        %v1216 = vrot.slane %v1194, %v1215
        %v1218 = vunpack.c.l.s4 1966171168
        %v1219 = vunpack.c.0.s8 %v1218
        %v1220 = vlaneseq
        %v1221 = vshrl.u32 %v1220, 7
        %v1222 = vsub.s32 %v1219, %v1221
        %v1223 = vrot.slane %v1195, %v1222
        %v1224 = vcombine.low %v1202, %v1209
        %v1225 = vcombine.low %v1216, %v1223
        %v1227 = vunpack.c.l.s4 1966171168
        %v1228 = vunpack.c.0.s8 %v1227
        %v1229 = vlaneseq
        %v1230 = vshrl.u32 %v1229, 7
        %v1231 = vsub.s32 %v1228, %v1230
        %v1232 = vrot.slane %v1224, %v1231
        %v1234 = vunpack.c.l.s4 1966171168
        %v1235 = vunpack.c.0.s8 %v1234
        %v1236 = vlaneseq
        %v1237 = vshrl.u32 %v1236, 7
        %v1238 = vsub.s32 %v1235, %v1237
        %v1239 = vrot.slane %v1225, %v1238
        %v1240 = vcombine.low %v1232, %v1239
        %v1242 = vunpack.c.l.s4 1966171168
        %v1243 = vunpack.c.0.s8 %v1242
        %v1244 = vlaneseq
        %v1245 = vshrl.u32 %v1244, 7
        %v1246 = vsub.s32 %v1243, %v1245
        %v1247 = vrot.slane %v948, %v1246
        %v1249 = vunpack.c.l.s4 1966171168
        %v1250 = vunpack.c.0.s8 %v1249
        %v1251 = vlaneseq
        %v1252 = vshrl.u32 %v1251, 7
        %v1253 = vsub.s32 %v1250, %v1252
        %v1254 = vrot.slane %v1247, %v1253
        %vm1255 = vcmask 31744
        %v1257 = vsel %vm1255, %v1044, 0
        %v1260 = vsel %vm1255, %v1093, 0
        %v1263 = vsel %vm1255, %v1142, 0
        %v1266 = vsel %vm1255, %v1191, 0
        %v1269 = vsel %vm1255, %v1240, 0
        %v1272 = vsel %vm1255, %v1254, 0
        %vm1274 = vcmask 1041408
        %v1276 = vsel %vm1274, %v466, 0
        %1278 = vmatprep.subr.bf16.mxu0 0
        %1279 = vmatpush1.bf16.msra.mxu0 %v1276
        %1280 = vmatprep.subr.bf16.mxu0 0
        %1281 = vmatpush1.bf16.msra.mxu0 0
        %1282 = vmatprep.subr.bf16.mxu0 0
        %1283 = vmatpush1.bf16.msra.mxu0 0
        %1284 = vmatprep.subr.bf16.mxu0 0
        %1285 = vmatpush1.bf16.msra.mxu0 0
        %1286 = vmatprep.subr.bf16.mxu0 0
        %1287 = vmatpush1.bf16.msra.mxu0 0
        %1288 = vmatprep.subr.bf16.mxu0 0
        %1289 = vmatpush1.bf16.msra.mxu0 0
        %1290 = vmatprep.subr.bf16.mxu0 0
        %1291 = vmatpush1.bf16.msra.mxu0 0
        %1292 = vmatprep.subr.bf16.mxu0 0
        %1293 = vmatpush1.bf16.msra.mxu0 0
        %1294 = vmatprep.subr.bf16.mxu0 0
        %1295 = vmatpush1.bf16.msra.mxu0 0
        %1296 = vmatprep.subr.bf16.mxu0 0
        %1297 = vmatpush1.bf16.msra.mxu0 0
        %1298 = vmatprep.subr.bf16.mxu0 0
        %1299 = vmatpush1.bf16.msra.mxu0 0
        %1300 = vmatprep.subr.bf16.mxu0 0
        %1301 = vmatpush1.bf16.msra.mxu0 0
        %1302 = vmatprep.subr.bf16.mxu0 0
        %1303 = vmatpush1.bf16.msra.mxu0 0
        %1304 = vmatprep.subr.bf16.mxu0 0
        %1305 = vmatpush1.bf16.msra.mxu0 0
        %1306 = vmatprep.subr.bf16.mxu0 0
        %1307 = vmatpush1.bf16.msra.mxu0 0
        %1308 = vmatprep.subr.bf16.mxu0 0
        %1309 = vmatpush1.bf16.msra.mxu0 0
        %1310 = vmatprep.mubr.bf16.mxu0 0
        %1311 = vmatmul.mubr.bf16.gmra.mrb[0].mxu0 %v1257
        %v1312 = vpop.f32.mrb[0].mxu0
        %v1313 = vpop.f32.mrb[0].mxu0
        %v1314 = vpop.f32.mrb[0].mxu0
        %v1315 = vadd.f32 %v953, %v1314
        %v1316 = vpop.f32.mrb[0].mxu0
        %1317 = vmatprep.mubr.bf16.mxu0 0
        %1318 = vmatmul.mubr.bf16.gmra.mrb[0].mxu0 %v1260
        %v1319 = vpop.f32.mrb[0].mxu0
        %v1320 = vadd.f32 %v953, %v1319
        %v1321 = vpop.f32.mrb[0].mxu0
        %v1322 = vpop.f32.mrb[0].mxu0
        %v1323 = vadd.f32 %v953, %v1322
        %v1324 = vpop.f32.mrb[0].mxu0
        %1325 = vmatprep.mubr.bf16.mxu0 0
        %1326 = vmatmul.mubr.bf16.gmra.mrb[0].mxu0 %v1263
        %v1327 = vpop.f32.mrb[0].mxu0
        %v1328 = vadd.f32 %v953, %v1327
        %v1329 = vpop.f32.mrb[0].mxu0
        %v1330 = vpop.f32.mrb[0].mxu0
        %v1331 = vadd.f32 %v953, %v1330
        %v1332 = vpop.f32.mrb[0].mxu0
        %1333 = vmatprep.mubr.bf16.mxu0 0
        %1334 = vmatmul.mubr.bf16.gmra.mrb[0].mxu0 %v1266
        %v1335 = vpop.f32.mrb[0].mxu0
        %v1336 = vadd.f32 %v953, %v1335
        %v1337 = vpop.f32.mrb[0].mxu0
        %v1338 = vpop.f32.mrb[0].mxu0
        %v1339 = vadd.f32 %v953, %v1338
        %v1340 = vpop.f32.mrb[0].mxu0
        %1341 = vmatprep.mubr.bf16.mxu0 0
        %1342 = vmatmul.mubr.bf16.gmra.mrb[0].mxu0 %v1269
        %v1343 = vpop.f32.mrb[0].mxu0
        %v1344 = vadd.f32 %v953, %v1343
        %v1345 = vpop.f32.mrb[0].mxu0
        %v1346 = vpop.f32.mrb[0].mxu0
        %v1347 = vadd.f32 %v953, %v1346
        %v1348 = vpop.f32.mrb[0].mxu0
        %1349 = vmatprep.mubr.bf16.mxu0 0
        %1350 = vmatmul.mubr.bf16.gmra.mrb[0].mxu0 %v1272
        %v1351 = vpop.f32.mrb[0].mxu0
        %v1352 = vadd.f32 %v953, %v1351
        %v1353 = vpop.f32.mrb[0].mxu0
        %v1354 = vpop.f32.mrb[0].mxu0
        %v1355 = vpop.f32.mrb[0].mxu0
        %1356 = vdwg.mxu0
        %v1357 = vmax.f32 %v1315, 0.0
        %v1358 = vmax.f32 %v1320, 0.0
        %v1359 = vmax.f32 %v1323, 0.0
        %v1360 = vmax.f32 %v1328, 0.0
        %v1361 = vmax.f32 %v1331, 0.0
        %v1362 = vmax.f32 %v1336, 0.0
        %v1363 = vmax.f32 %v1339, 0.0
        %v1364 = vmax.f32 %v1344, 0.0
        %v1365 = vmax.f32 %v1347, 0.0
        %v1366 = vmax.f32 %v1352, 0.0
        %v1377 = vcombine.high %v1357, %v1357
        %v1379 = vunpack.c.l.s4 1966171168
        %v1380 = vunpack.c.0.s8 %v1379
        %v1381 = vlaneseq
        %v1382 = vshrl.u32 %v1381, 7
        %v1383 = vsub.s32 %v1380, %v1382
        %v1384 = vrot.slane %v1357, %v1383
        %v1386 = vunpack.c.l.s4 1966171168
        %v1387 = vunpack.c.0.s8 %v1386
        %v1388 = vlaneseq
        %v1389 = vshrl.u32 %v1388, 7
        %v1390 = vsub.s32 %v1387, %v1389
        %v1391 = vrot.slane %v1377, %v1390
        %v1392 = vcombine.high %v1384, %v1384
        %v1393 = vcombine.high %v1391, %v1391
        %v1395 = vunpack.c.l.s4 1966171168
        %v1396 = vunpack.c.0.s8 %v1395
        %v1397 = vlaneseq
        %v1398 = vshrl.u32 %v1397, 7
        %v1399 = vsub.s32 %v1396, %v1398
        %v1400 = vrot.slane %v1384, %v1399
        %v1402 = vunpack.c.l.s4 1966171168
        %v1403 = vunpack.c.0.s8 %v1402
        %v1404 = vlaneseq
        %v1405 = vshrl.u32 %v1404, 7
        %v1406 = vsub.s32 %v1403, %v1405
        %v1407 = vrot.slane %v1391, %v1406
        %v1409 = vunpack.c.l.s4 1966171168
        %v1410 = vunpack.c.0.s8 %v1409
        %v1411 = vlaneseq
        %v1412 = vshrl.u32 %v1411, 7
        %v1413 = vsub.s32 %v1410, %v1412
        %v1414 = vrot.slane %v1392, %v1413
        %v1416 = vunpack.c.l.s4 1966171168
        %v1417 = vunpack.c.0.s8 %v1416
        %v1418 = vlaneseq
        %v1419 = vshrl.u32 %v1418, 7
        %v1420 = vsub.s32 %v1417, %v1419
        %v1421 = vrot.slane %v1393, %v1420
        %v1422 = vcombine.high %v1400, %v1400
        %v1423 = vcombine.high %v1407, %v1407
        %v1424 = vcombine.high %v1414, %v1414
        %v1425 = vcombine.high %v1421, %v1421
        %v1426 = vcombine.high %v1358, %v1358
        %v1428 = vunpack.c.l.s4 1966171168
        %v1429 = vunpack.c.0.s8 %v1428
        %v1430 = vlaneseq
        %v1431 = vshrl.u32 %v1430, 7
        %v1432 = vsub.s32 %v1429, %v1431
        %v1433 = vrot.slane %v1358, %v1432
        %v1435 = vunpack.c.l.s4 1966171168
        %v1436 = vunpack.c.0.s8 %v1435
        %v1437 = vlaneseq
        %v1438 = vshrl.u32 %v1437, 7
        %v1439 = vsub.s32 %v1436, %v1438
        %v1440 = vrot.slane %v1426, %v1439
        %v1441 = vcombine.high %v1433, %v1433
        %v1442 = vcombine.high %v1440, %v1440
        %v1444 = vunpack.c.l.s4 1966171168
        %v1445 = vunpack.c.0.s8 %v1444
        %v1446 = vlaneseq
        %v1447 = vshrl.u32 %v1446, 7
        %v1448 = vsub.s32 %v1445, %v1447
        %v1449 = vrot.slane %v1433, %v1448
        %v1451 = vunpack.c.l.s4 1966171168
        %v1452 = vunpack.c.0.s8 %v1451
        %v1453 = vlaneseq
        %v1454 = vshrl.u32 %v1453, 7
        %v1455 = vsub.s32 %v1452, %v1454
        %v1456 = vrot.slane %v1440, %v1455
        %v1458 = vunpack.c.l.s4 1966171168
        %v1459 = vunpack.c.0.s8 %v1458
        %v1460 = vlaneseq
        %v1461 = vshrl.u32 %v1460, 7
        %v1462 = vsub.s32 %v1459, %v1461
        %v1463 = vrot.slane %v1441, %v1462
        %v1465 = vunpack.c.l.s4 1966171168
        %v1466 = vunpack.c.0.s8 %v1465
        %v1467 = vlaneseq
        %v1468 = vshrl.u32 %v1467, 7
        %v1469 = vsub.s32 %v1466, %v1468
        %v1470 = vrot.slane %v1442, %v1469
        %v1471 = vcombine.high %v1449, %v1449
        %v1472 = vcombine.high %v1456, %v1456
        %v1473 = vcombine.high %v1463, %v1463
        %v1474 = vcombine.high %v1470, %v1470
        %v1475 = vcombine.high %v1359, %v1359
        %v1477 = vunpack.c.l.s4 1966171168
        %v1478 = vunpack.c.0.s8 %v1477
        %v1479 = vlaneseq
        %v1480 = vshrl.u32 %v1479, 7
        %v1481 = vsub.s32 %v1478, %v1480
        %v1482 = vrot.slane %v1359, %v1481
        %v1484 = vunpack.c.l.s4 1966171168
        %v1485 = vunpack.c.0.s8 %v1484
        %v1486 = vlaneseq
        %v1487 = vshrl.u32 %v1486, 7
        %v1488 = vsub.s32 %v1485, %v1487
        %v1489 = vrot.slane %v1475, %v1488
        %v1490 = vcombine.high %v1482, %v1482
        %v1491 = vcombine.high %v1489, %v1489
        %v1493 = vunpack.c.l.s4 1966171168
        %v1494 = vunpack.c.0.s8 %v1493
        %v1495 = vlaneseq
        %v1496 = vshrl.u32 %v1495, 7
        %v1497 = vsub.s32 %v1494, %v1496
        %v1498 = vrot.slane %v1482, %v1497
        %v1500 = vunpack.c.l.s4 1966171168
        %v1501 = vunpack.c.0.s8 %v1500
        %v1502 = vlaneseq
        %v1503 = vshrl.u32 %v1502, 7
        %v1504 = vsub.s32 %v1501, %v1503
        %v1505 = vrot.slane %v1489, %v1504
        %v1507 = vunpack.c.l.s4 1966171168
        %v1508 = vunpack.c.0.s8 %v1507
        %v1509 = vlaneseq
        %v1510 = vshrl.u32 %v1509, 7
        %v1511 = vsub.s32 %v1508, %v1510
        %v1512 = vrot.slane %v1490, %v1511
        %v1514 = vunpack.c.l.s4 1966171168
        %v1515 = vunpack.c.0.s8 %v1514
        %v1516 = vlaneseq
        %v1517 = vshrl.u32 %v1516, 7
        %v1518 = vsub.s32 %v1515, %v1517
        %v1519 = vrot.slane %v1491, %v1518
        %v1520 = vcombine.high %v1498, %v1498
        %v1521 = vcombine.high %v1505, %v1505
        %v1522 = vcombine.high %v1512, %v1512
        %v1523 = vcombine.high %v1519, %v1519
        %v1524 = vcombine.high %v1360, %v1360
        %v1526 = vunpack.c.l.s4 1966171168
        %v1527 = vunpack.c.0.s8 %v1526
        %v1528 = vlaneseq
        %v1529 = vshrl.u32 %v1528, 7
        %v1530 = vsub.s32 %v1527, %v1529
        %v1531 = vrot.slane %v1360, %v1530
        %v1533 = vunpack.c.l.s4 1966171168
        %v1534 = vunpack.c.0.s8 %v1533
        %v1535 = vlaneseq
        %v1536 = vshrl.u32 %v1535, 7
        %v1537 = vsub.s32 %v1534, %v1536
        %v1538 = vrot.slane %v1524, %v1537
        %v1539 = vcombine.high %v1531, %v1531
        %v1540 = vcombine.high %v1538, %v1538
        %v1542 = vunpack.c.l.s4 1966171168
        %v1543 = vunpack.c.0.s8 %v1542
        %v1544 = vlaneseq
        %v1545 = vshrl.u32 %v1544, 7
        %v1546 = vsub.s32 %v1543, %v1545
        %v1547 = vrot.slane %v1531, %v1546
        %v1549 = vunpack.c.l.s4 1966171168
        %v1550 = vunpack.c.0.s8 %v1549
        %v1551 = vlaneseq
        %v1552 = vshrl.u32 %v1551, 7
        %v1553 = vsub.s32 %v1550, %v1552
        %v1554 = vrot.slane %v1538, %v1553
        %v1556 = vunpack.c.l.s4 1966171168
        %v1557 = vunpack.c.0.s8 %v1556
        %v1558 = vlaneseq
        %v1559 = vshrl.u32 %v1558, 7
        %v1560 = vsub.s32 %v1557, %v1559
        %v1561 = vrot.slane %v1539, %v1560
        %v1563 = vunpack.c.l.s4 1966171168
        %v1564 = vunpack.c.0.s8 %v1563
        %v1565 = vlaneseq
        %v1566 = vshrl.u32 %v1565, 7
        %v1567 = vsub.s32 %v1564, %v1566
        %v1568 = vrot.slane %v1540, %v1567
        %v1569 = vcombine.high %v1547, %v1547
        %v1570 = vcombine.high %v1554, %v1554
        %v1571 = vcombine.high %v1561, %v1561
        %v1572 = vcombine.high %v1568, %v1568
        %v1573 = vcombine.high %v1361, %v1361
        %v1575 = vunpack.c.l.s4 1966171168
        %v1576 = vunpack.c.0.s8 %v1575
        %v1577 = vlaneseq
        %v1578 = vshrl.u32 %v1577, 7
        %v1579 = vsub.s32 %v1576, %v1578
        %v1580 = vrot.slane %v1361, %v1579
        %v1582 = vunpack.c.l.s4 1966171168
        %v1583 = vunpack.c.0.s8 %v1582
        %v1584 = vlaneseq
        %v1585 = vshrl.u32 %v1584, 7
        %v1586 = vsub.s32 %v1583, %v1585
        %v1587 = vrot.slane %v1573, %v1586
        %v1588 = vcombine.high %v1580, %v1580
        %v1589 = vcombine.high %v1587, %v1587
        %v1591 = vunpack.c.l.s4 1966171168
        %v1592 = vunpack.c.0.s8 %v1591
        %v1593 = vlaneseq
        %v1594 = vshrl.u32 %v1593, 7
        %v1595 = vsub.s32 %v1592, %v1594
        %v1596 = vrot.slane %v1580, %v1595
        %v1598 = vunpack.c.l.s4 1966171168
        %v1599 = vunpack.c.0.s8 %v1598
        %v1600 = vlaneseq
        %v1601 = vshrl.u32 %v1600, 7
        %v1602 = vsub.s32 %v1599, %v1601
        %v1603 = vrot.slane %v1587, %v1602
        %v1605 = vunpack.c.l.s4 1966171168
        %v1606 = vunpack.c.0.s8 %v1605
        %v1607 = vlaneseq
        %v1608 = vshrl.u32 %v1607, 7
        %v1609 = vsub.s32 %v1606, %v1608
        %v1610 = vrot.slane %v1588, %v1609
        %v1612 = vunpack.c.l.s4 1966171168
        %v1613 = vunpack.c.0.s8 %v1612
        %v1614 = vlaneseq
        %v1615 = vshrl.u32 %v1614, 7
        %v1616 = vsub.s32 %v1613, %v1615
        %v1617 = vrot.slane %v1589, %v1616
        %v1618 = vcombine.high %v1596, %v1596
        %v1619 = vcombine.high %v1603, %v1603
        %v1620 = vcombine.high %v1610, %v1610
        %v1621 = vcombine.high %v1617, %v1617
        %v1622 = vcombine.high %v1362, %v1362
        %v1624 = vunpack.c.l.s4 1966171168
        %v1625 = vunpack.c.0.s8 %v1624
        %v1626 = vlaneseq
        %v1627 = vshrl.u32 %v1626, 7
        %v1628 = vsub.s32 %v1625, %v1627
        %v1629 = vrot.slane %v1362, %v1628
        %v1631 = vunpack.c.l.s4 1966171168
        %v1632 = vunpack.c.0.s8 %v1631
        %v1633 = vlaneseq
        %v1634 = vshrl.u32 %v1633, 7
        %v1635 = vsub.s32 %v1632, %v1634
        %v1636 = vrot.slane %v1622, %v1635
        %v1637 = vcombine.high %v1629, %v1629
        %v1638 = vcombine.high %v1636, %v1636
        %v1640 = vunpack.c.l.s4 1966171168
        %v1641 = vunpack.c.0.s8 %v1640
        %v1642 = vlaneseq
        %v1643 = vshrl.u32 %v1642, 7
        %v1644 = vsub.s32 %v1641, %v1643
        %v1645 = vrot.slane %v1629, %v1644
        %v1647 = vunpack.c.l.s4 1966171168
        %v1648 = vunpack.c.0.s8 %v1647
        %v1649 = vlaneseq
        %v1650 = vshrl.u32 %v1649, 7
        %v1651 = vsub.s32 %v1648, %v1650
        %v1652 = vrot.slane %v1636, %v1651
        %v1654 = vunpack.c.l.s4 1966171168
        %v1655 = vunpack.c.0.s8 %v1654
        %v1656 = vlaneseq
        %v1657 = vshrl.u32 %v1656, 7
        %v1658 = vsub.s32 %v1655, %v1657
        %v1659 = vrot.slane %v1637, %v1658
        %v1661 = vunpack.c.l.s4 1966171168
        %v1662 = vunpack.c.0.s8 %v1661
        %v1663 = vlaneseq
        %v1664 = vshrl.u32 %v1663, 7
        %v1665 = vsub.s32 %v1662, %v1664
        %v1666 = vrot.slane %v1638, %v1665
        %v1667 = vcombine.high %v1645, %v1645
        %v1668 = vcombine.high %v1652, %v1652
        %v1669 = vcombine.high %v1659, %v1659
        %v1670 = vcombine.high %v1666, %v1666
        %v1671 = vcombine.high %v1363, %v1363
        %v1673 = vunpack.c.l.s4 1966171168
        %v1674 = vunpack.c.0.s8 %v1673
        %v1675 = vlaneseq
        %v1676 = vshrl.u32 %v1675, 7
        %v1677 = vsub.s32 %v1674, %v1676
        %v1678 = vrot.slane %v1363, %v1677
        %v1680 = vunpack.c.l.s4 1966171168
        %v1681 = vunpack.c.0.s8 %v1680
        %v1682 = vlaneseq
        %v1683 = vshrl.u32 %v1682, 7
        %v1684 = vsub.s32 %v1681, %v1683
        %v1685 = vrot.slane %v1671, %v1684
        %v1686 = vcombine.high %v1678, %v1678
        %v1687 = vcombine.high %v1685, %v1685
        %v1689 = vunpack.c.l.s4 1966171168
        %v1690 = vunpack.c.0.s8 %v1689
        %v1691 = vlaneseq
        %v1692 = vshrl.u32 %v1691, 7
        %v1693 = vsub.s32 %v1690, %v1692
        %v1694 = vrot.slane %v1678, %v1693
        %v1696 = vunpack.c.l.s4 1966171168
        %v1697 = vunpack.c.0.s8 %v1696
        %v1698 = vlaneseq
        %v1699 = vshrl.u32 %v1698, 7
        %v1700 = vsub.s32 %v1697, %v1699
        %v1701 = vrot.slane %v1685, %v1700
        %v1703 = vunpack.c.l.s4 1966171168
        %v1704 = vunpack.c.0.s8 %v1703
        %v1705 = vlaneseq
        %v1706 = vshrl.u32 %v1705, 7
        %v1707 = vsub.s32 %v1704, %v1706
        %v1708 = vrot.slane %v1686, %v1707
        %v1710 = vunpack.c.l.s4 1966171168
        %v1711 = vunpack.c.0.s8 %v1710
        %v1712 = vlaneseq
        %v1713 = vshrl.u32 %v1712, 7
        %v1714 = vsub.s32 %v1711, %v1713
        %v1715 = vrot.slane %v1687, %v1714
        %v1716 = vcombine.high %v1694, %v1694
        %v1717 = vcombine.high %v1701, %v1701
        %v1718 = vcombine.high %v1708, %v1708
        %v1719 = vcombine.high %v1715, %v1715
        %v1720 = vcombine.high %v1364, %v1364
        %v1722 = vunpack.c.l.s4 1966171168
        %v1723 = vunpack.c.0.s8 %v1722
        %v1724 = vlaneseq
        %v1725 = vshrl.u32 %v1724, 7
        %v1726 = vsub.s32 %v1723, %v1725
        %v1727 = vrot.slane %v1364, %v1726
        %v1729 = vunpack.c.l.s4 1966171168
        %v1730 = vunpack.c.0.s8 %v1729
        %v1731 = vlaneseq
        %v1732 = vshrl.u32 %v1731, 7
        %v1733 = vsub.s32 %v1730, %v1732
        %v1734 = vrot.slane %v1720, %v1733
        %v1735 = vcombine.high %v1727, %v1727
        %v1736 = vcombine.high %v1734, %v1734
        %v1738 = vunpack.c.l.s4 1966171168
        %v1739 = vunpack.c.0.s8 %v1738
        %v1740 = vlaneseq
        %v1741 = vshrl.u32 %v1740, 7
        %v1742 = vsub.s32 %v1739, %v1741
        %v1743 = vrot.slane %v1727, %v1742
        %v1745 = vunpack.c.l.s4 1966171168
        %v1746 = vunpack.c.0.s8 %v1745
        %v1747 = vlaneseq
        %v1748 = vshrl.u32 %v1747, 7
        %v1749 = vsub.s32 %v1746, %v1748
        %v1750 = vrot.slane %v1734, %v1749
        %v1752 = vunpack.c.l.s4 1966171168
        %v1753 = vunpack.c.0.s8 %v1752
        %v1754 = vlaneseq
        %v1755 = vshrl.u32 %v1754, 7
        %v1756 = vsub.s32 %v1753, %v1755
        %v1757 = vrot.slane %v1735, %v1756
        %v1759 = vunpack.c.l.s4 1966171168
        %v1760 = vunpack.c.0.s8 %v1759
        %v1761 = vlaneseq
        %v1762 = vshrl.u32 %v1761, 7
        %v1763 = vsub.s32 %v1760, %v1762
        %v1764 = vrot.slane %v1736, %v1763
        %v1765 = vcombine.high %v1743, %v1743
        %v1766 = vcombine.high %v1750, %v1750
        %v1767 = vcombine.high %v1757, %v1757
        %v1768 = vcombine.high %v1764, %v1764
        %v1769 = vcombine.high %v1365, %v1365
        %v1771 = vunpack.c.l.s4 1966171168
        %v1772 = vunpack.c.0.s8 %v1771
        %v1773 = vlaneseq
        %v1774 = vshrl.u32 %v1773, 7
        %v1775 = vsub.s32 %v1772, %v1774
        %v1776 = vrot.slane %v1365, %v1775
        %v1778 = vunpack.c.l.s4 1966171168
        %v1779 = vunpack.c.0.s8 %v1778
        %v1780 = vlaneseq
        %v1781 = vshrl.u32 %v1780, 7
        %v1782 = vsub.s32 %v1779, %v1781
        %v1783 = vrot.slane %v1769, %v1782
        %v1784 = vcombine.high %v1776, %v1776
        %v1785 = vcombine.high %v1783, %v1783
        %v1787 = vunpack.c.l.s4 1966171168
        %v1788 = vunpack.c.0.s8 %v1787
        %v1789 = vlaneseq
        %v1790 = vshrl.u32 %v1789, 7
        %v1791 = vsub.s32 %v1788, %v1790
        %v1792 = vrot.slane %v1776, %v1791
        %v1794 = vunpack.c.l.s4 1966171168
        %v1795 = vunpack.c.0.s8 %v1794
        %v1796 = vlaneseq
        %v1797 = vshrl.u32 %v1796, 7
        %v1798 = vsub.s32 %v1795, %v1797
        %v1799 = vrot.slane %v1783, %v1798
        %v1801 = vunpack.c.l.s4 1966171168
        %v1802 = vunpack.c.0.s8 %v1801
        %v1803 = vlaneseq
        %v1804 = vshrl.u32 %v1803, 7
        %v1805 = vsub.s32 %v1802, %v1804
        %v1806 = vrot.slane %v1784, %v1805
        %v1808 = vunpack.c.l.s4 1966171168
        %v1809 = vunpack.c.0.s8 %v1808
        %v1810 = vlaneseq
        %v1811 = vshrl.u32 %v1810, 7
        %v1812 = vsub.s32 %v1809, %v1811
        %v1813 = vrot.slane %v1785, %v1812
        %v1814 = vcombine.high %v1792, %v1792
        %v1815 = vcombine.high %v1799, %v1799
        %v1816 = vcombine.high %v1806, %v1806
        %v1817 = vcombine.high %v1813, %v1813
        %v1819 = vunpack.c.l.s4 1966171168
        %v1820 = vunpack.c.0.s8 %v1819
        %v1821 = vlaneseq
        %v1822 = vshrl.u32 %v1821, 7
        %v1823 = vsub.s32 %v1820, %v1822
        %v1824 = vrot.slane %v1366, %v1823
        %v1826 = vunpack.c.l.s4 1966171168
        %v1827 = vunpack.c.0.s8 %v1826
        %v1828 = vlaneseq
        %v1829 = vshrl.u32 %v1828, 7
        %v1830 = vsub.s32 %v1827, %v1829
        %v1831 = vrot.slane %v1824, %v1830
        %v1832 = vcombine.low %v1414, %v1422
        %v1833 = vcombine.low %v1424, %v1407
        %v1834 = vcombine.low %v1421, %v1423
        %v1835 = vcombine.low %v1425, %v1449
        %v1837 = vunpack.c.l.s4 1966171168
        %v1838 = vunpack.c.0.s8 %v1837
        %v1839 = vlaneseq
        %v1840 = vshrl.u32 %v1839, 7
        %v1841 = vsub.s32 %v1838, %v1840
        %v1842 = vrot.slane %v1832, %v1841
        %v1844 = vunpack.c.l.s4 1966171168
        %v1845 = vunpack.c.0.s8 %v1844
        %v1846 = vlaneseq
        %v1847 = vshrl.u32 %v1846, 7
        %v1848 = vsub.s32 %v1845, %v1847
        %v1849 = vrot.slane %v1833, %v1848
        %v1851 = vunpack.c.l.s4 1966171168
        %v1852 = vunpack.c.0.s8 %v1851
        %v1853 = vlaneseq
        %v1854 = vshrl.u32 %v1853, 7
        %v1855 = vsub.s32 %v1852, %v1854
        %v1856 = vrot.slane %v1834, %v1855
        %v1858 = vunpack.c.l.s4 1966171168
        %v1859 = vunpack.c.0.s8 %v1858
        %v1860 = vlaneseq
        %v1861 = vshrl.u32 %v1860, 7
        %v1862 = vsub.s32 %v1859, %v1861
        %v1863 = vrot.slane %v1835, %v1862
        %v1864 = vcombine.low %v1842, %v1849
        %v1865 = vcombine.low %v1856, %v1863
        %v1867 = vunpack.c.l.s4 1966171168
        %v1868 = vunpack.c.0.s8 %v1867
        %v1869 = vlaneseq
        %v1870 = vshrl.u32 %v1869, 7
        %v1871 = vsub.s32 %v1868, %v1870
        %v1872 = vrot.slane %v1864, %v1871
        %v1874 = vunpack.c.l.s4 1966171168
        %v1875 = vunpack.c.0.s8 %v1874
        %v1876 = vlaneseq
        %v1877 = vshrl.u32 %v1876, 7
        %v1878 = vsub.s32 %v1875, %v1877
        %v1879 = vrot.slane %v1865, %v1878
        %v1880 = vcombine.low %v1872, %v1879
        %v1882 = vunpack.c.l.s4 1966171168
        %v1883 = vunpack.c.0.s8 %v1882
        %v1884 = vlaneseq
        %v1885 = vshrl.u32 %v1884, 7
        %v1886 = vsub.s32 %v1883, %v1885
        %v1887 = vrot.slane %v1463, %v1886
        %v1889 = vunpack.c.l.s4 1966171168
        %v1890 = vunpack.c.0.s8 %v1889
        %v1891 = vlaneseq
        %v1892 = vshrl.u32 %v1891, 7
        %v1893 = vsub.s32 %v1890, %v1892
        %v1894 = vrot.slane %v1887, %v1893
        %v1895 = vcombine.low %v1471, %v1473
        %v1896 = vcombine.low %v1456, %v1470
        %v1897 = vcombine.low %v1472, %v1474
        %v1898 = vcombine.low %v1498, %v1512
        %v1900 = vunpack.c.l.s4 1966171168
        %v1901 = vunpack.c.0.s8 %v1900
        %v1902 = vlaneseq
        %v1903 = vshrl.u32 %v1902, 7
        %v1904 = vsub.s32 %v1901, %v1903
        %v1905 = vrot.slane %v1895, %v1904
        %v1907 = vunpack.c.l.s4 1966171168
        %v1908 = vunpack.c.0.s8 %v1907
        %v1909 = vlaneseq
        %v1910 = vshrl.u32 %v1909, 7
        %v1911 = vsub.s32 %v1908, %v1910
        %v1912 = vrot.slane %v1896, %v1911
        %v1914 = vunpack.c.l.s4 1966171168
        %v1915 = vunpack.c.0.s8 %v1914
        %v1916 = vlaneseq
        %v1917 = vshrl.u32 %v1916, 7
        %v1918 = vsub.s32 %v1915, %v1917
        %v1919 = vrot.slane %v1897, %v1918
        %v1921 = vunpack.c.l.s4 1966171168
        %v1922 = vunpack.c.0.s8 %v1921
        %v1923 = vlaneseq
        %v1924 = vshrl.u32 %v1923, 7
        %v1925 = vsub.s32 %v1922, %v1924
        %v1926 = vrot.slane %v1898, %v1925
        %v1927 = vcombine.low %v1905, %v1912
        %v1928 = vcombine.low %v1919, %v1926
        %v1930 = vunpack.c.l.s4 1966171168
        %v1931 = vunpack.c.0.s8 %v1930
        %v1932 = vlaneseq
        %v1933 = vshrl.u32 %v1932, 7
        %v1934 = vsub.s32 %v1931, %v1933
        %v1935 = vrot.slane %v1927, %v1934
        %v1937 = vunpack.c.l.s4 1966171168
        %v1938 = vunpack.c.0.s8 %v1937
        %v1939 = vlaneseq
        %v1940 = vshrl.u32 %v1939, 7
        %v1941 = vsub.s32 %v1938, %v1940
        %v1942 = vrot.slane %v1928, %v1941
        %v1943 = vcombine.low %v1935, %v1942
        %v1945 = vunpack.c.l.s4 1966171168
        %v1946 = vunpack.c.0.s8 %v1945
        %v1947 = vlaneseq
        %v1948 = vshrl.u32 %v1947, 7
        %v1949 = vsub.s32 %v1946, %v1948
        %v1950 = vrot.slane %v1520, %v1949
        %v1952 = vunpack.c.l.s4 1966171168
        %v1953 = vunpack.c.0.s8 %v1952
        %v1954 = vlaneseq
        %v1955 = vshrl.u32 %v1954, 7
        %v1956 = vsub.s32 %v1953, %v1955
        %v1957 = vrot.slane %v1950, %v1956
        %v1958 = vcombine.low %v1522, %v1505
        %v1959 = vcombine.low %v1519, %v1521
        %v1960 = vcombine.low %v1523, %v1547
        %v1961 = vcombine.low %v1561, %v1569
        %v1963 = vunpack.c.l.s4 1966171168
        %v1964 = vunpack.c.0.s8 %v1963
        %v1965 = vlaneseq
        %v1966 = vshrl.u32 %v1965, 7
        %v1967 = vsub.s32 %v1964, %v1966
        %v1968 = vrot.slane %v1958, %v1967
        %v1970 = vunpack.c.l.s4 1966171168
        %v1971 = vunpack.c.0.s8 %v1970
        %v1972 = vlaneseq
        %v1973 = vshrl.u32 %v1972, 7
        %v1974 = vsub.s32 %v1971, %v1973
        %v1975 = vrot.slane %v1959, %v1974
        %v1977 = vunpack.c.l.s4 1966171168
        %v1978 = vunpack.c.0.s8 %v1977
        %v1979 = vlaneseq
        %v1980 = vshrl.u32 %v1979, 7
        %v1981 = vsub.s32 %v1978, %v1980
        %v1982 = vrot.slane %v1960, %v1981
        %v1984 = vunpack.c.l.s4 1966171168
        %v1985 = vunpack.c.0.s8 %v1984
        %v1986 = vlaneseq
        %v1987 = vshrl.u32 %v1986, 7
        %v1988 = vsub.s32 %v1985, %v1987
        %v1989 = vrot.slane %v1961, %v1988
        %v1990 = vcombine.low %v1968, %v1975
        %v1991 = vcombine.low %v1982, %v1989
        %v1993 = vunpack.c.l.s4 1966171168
        %v1994 = vunpack.c.0.s8 %v1993
        %v1995 = vlaneseq
        %v1996 = vshrl.u32 %v1995, 7
        %v1997 = vsub.s32 %v1994, %v1996
        %v1998 = vrot.slane %v1990, %v1997
        %v2000 = vunpack.c.l.s4 1966171168
        %v2001 = vunpack.c.0.s8 %v2000
        %v2002 = vlaneseq
        %v2003 = vshrl.u32 %v2002, 7
        %v2004 = vsub.s32 %v2001, %v2003
        %v2005 = vrot.slane %v1991, %v2004
        %v2006 = vcombine.low %v1998, %v2005
        %v2008 = vunpack.c.l.s4 1966171168
        %v2009 = vunpack.c.0.s8 %v2008
        %v2010 = vlaneseq
        %v2011 = vshrl.u32 %v2010, 7
        %v2012 = vsub.s32 %v2009, %v2011
        %v2013 = vrot.slane %v1571, %v2012
        %v2015 = vunpack.c.l.s4 1966171168
        %v2016 = vunpack.c.0.s8 %v2015
        %v2017 = vlaneseq
        %v2018 = vshrl.u32 %v2017, 7
        %v2019 = vsub.s32 %v2016, %v2018
        %v2020 = vrot.slane %v2013, %v2019
        %v2021 = vcombine.low %v1554, %v1568
        %v2022 = vcombine.low %v1570, %v1572
        %v2023 = vcombine.low %v1596, %v1610
        %v2024 = vcombine.low %v1618, %v1620
        %v2026 = vunpack.c.l.s4 1966171168
        %v2027 = vunpack.c.0.s8 %v2026
        %v2028 = vlaneseq
        %v2029 = vshrl.u32 %v2028, 7
        %v2030 = vsub.s32 %v2027, %v2029
        %v2031 = vrot.slane %v2021, %v2030
        %v2033 = vunpack.c.l.s4 1966171168
        %v2034 = vunpack.c.0.s8 %v2033
        %v2035 = vlaneseq
        %v2036 = vshrl.u32 %v2035, 7
        %v2037 = vsub.s32 %v2034, %v2036
        %v2038 = vrot.slane %v2022, %v2037
        %v2040 = vunpack.c.l.s4 1966171168
        %v2041 = vunpack.c.0.s8 %v2040
        %v2042 = vlaneseq
        %v2043 = vshrl.u32 %v2042, 7
        %v2044 = vsub.s32 %v2041, %v2043
        %v2045 = vrot.slane %v2023, %v2044
        %v2047 = vunpack.c.l.s4 1966171168
        %v2048 = vunpack.c.0.s8 %v2047
        %v2049 = vlaneseq
        %v2050 = vshrl.u32 %v2049, 7
        %v2051 = vsub.s32 %v2048, %v2050
        %v2052 = vrot.slane %v2024, %v2051
        %v2053 = vcombine.low %v2031, %v2038
        %v2054 = vcombine.low %v2045, %v2052
        %v2056 = vunpack.c.l.s4 1966171168
        %v2057 = vunpack.c.0.s8 %v2056
        %v2058 = vlaneseq
        %v2059 = vshrl.u32 %v2058, 7
        %v2060 = vsub.s32 %v2057, %v2059
        %v2061 = vrot.slane %v2053, %v2060
        %v2063 = vunpack.c.l.s4 1966171168
        %v2064 = vunpack.c.0.s8 %v2063
        %v2065 = vlaneseq
        %v2066 = vshrl.u32 %v2065, 7
        %v2067 = vsub.s32 %v2064, %v2066
        %v2068 = vrot.slane %v2054, %v2067
        %v2069 = vcombine.low %v2061, %v2068
        %v2071 = vunpack.c.l.s4 1966171168
        %v2072 = vunpack.c.0.s8 %v2071
        %v2073 = vlaneseq
        %v2074 = vshrl.u32 %v2073, 7
        %v2075 = vsub.s32 %v2072, %v2074
        %v2076 = vrot.slane %v1603, %v2075
        %v2078 = vunpack.c.l.s4 1966171168
        %v2079 = vunpack.c.0.s8 %v2078
        %v2080 = vlaneseq
        %v2081 = vshrl.u32 %v2080, 7
        %v2082 = vsub.s32 %v2079, %v2081
        %v2083 = vrot.slane %v2076, %v2082
        %v2084 = vcombine.low %v1617, %v1619
        %v2085 = vcombine.low %v1621, %v1645
        %v2086 = vcombine.low %v1659, %v1667
        %v2087 = vcombine.low %v1669, %v1652
        %v2089 = vunpack.c.l.s4 1966171168
        %v2090 = vunpack.c.0.s8 %v2089
        %v2091 = vlaneseq
        %v2092 = vshrl.u32 %v2091, 7
        %v2093 = vsub.s32 %v2090, %v2092
        %v2094 = vrot.slane %v2084, %v2093
        %v2096 = vunpack.c.l.s4 1966171168
        %v2097 = vunpack.c.0.s8 %v2096
        %v2098 = vlaneseq
        %v2099 = vshrl.u32 %v2098, 7
        %v2100 = vsub.s32 %v2097, %v2099
        %v2101 = vrot.slane %v2085, %v2100
        %v2103 = vunpack.c.l.s4 1966171168
        %v2104 = vunpack.c.0.s8 %v2103
        %v2105 = vlaneseq
        %v2106 = vshrl.u32 %v2105, 7
        %v2107 = vsub.s32 %v2104, %v2106
        %v2108 = vrot.slane %v2086, %v2107
        %v2110 = vunpack.c.l.s4 1966171168
        %v2111 = vunpack.c.0.s8 %v2110
        %v2112 = vlaneseq
        %v2113 = vshrl.u32 %v2112, 7
        %v2114 = vsub.s32 %v2111, %v2113
        %v2115 = vrot.slane %v2087, %v2114
        %v2116 = vcombine.low %v2094, %v2101
        %v2117 = vcombine.low %v2108, %v2115
        %v2119 = vunpack.c.l.s4 1966171168
        %v2120 = vunpack.c.0.s8 %v2119
        %v2121 = vlaneseq
        %v2122 = vshrl.u32 %v2121, 7
        %v2123 = vsub.s32 %v2120, %v2122
        %v2124 = vrot.slane %v2116, %v2123
        %v2126 = vunpack.c.l.s4 1966171168
        %v2127 = vunpack.c.0.s8 %v2126
        %v2128 = vlaneseq
        %v2129 = vshrl.u32 %v2128, 7
        %v2130 = vsub.s32 %v2127, %v2129
        %v2131 = vrot.slane %v2117, %v2130
        %v2132 = vcombine.low %v2124, %v2131
        %v2134 = vunpack.c.l.s4 1966171168
        %v2135 = vunpack.c.0.s8 %v2134
        %v2136 = vlaneseq
        %v2137 = vshrl.u32 %v2136, 7
        %v2138 = vsub.s32 %v2135, %v2137
        %v2139 = vrot.slane %v1666, %v2138
        %v2141 = vunpack.c.l.s4 1966171168
        %v2142 = vunpack.c.0.s8 %v2141
        %v2143 = vlaneseq
        %v2144 = vshrl.u32 %v2143, 7
        %v2145 = vsub.s32 %v2142, %v2144
        %v2146 = vrot.slane %v2139, %v2145
        %v2147 = vcombine.low %v1668, %v1670
        %v2148 = vcombine.low %v1694, %v1708
        %v2149 = vcombine.low %v1716, %v1718
        %v2150 = vcombine.low %v1701, %v1715
        %v2152 = vunpack.c.l.s4 1966171168
        %v2153 = vunpack.c.0.s8 %v2152
        %v2154 = vlaneseq
        %v2155 = vshrl.u32 %v2154, 7
        %v2156 = vsub.s32 %v2153, %v2155
        %v2157 = vrot.slane %v2147, %v2156
        %v2159 = vunpack.c.l.s4 1966171168
        %v2160 = vunpack.c.0.s8 %v2159
        %v2161 = vlaneseq
        %v2162 = vshrl.u32 %v2161, 7
        %v2163 = vsub.s32 %v2160, %v2162
        %v2164 = vrot.slane %v2148, %v2163
        %v2166 = vunpack.c.l.s4 1966171168
        %v2167 = vunpack.c.0.s8 %v2166
        %v2168 = vlaneseq
        %v2169 = vshrl.u32 %v2168, 7
        %v2170 = vsub.s32 %v2167, %v2169
        %v2171 = vrot.slane %v2149, %v2170
        %v2173 = vunpack.c.l.s4 1966171168
        %v2174 = vunpack.c.0.s8 %v2173
        %v2175 = vlaneseq
        %v2176 = vshrl.u32 %v2175, 7
        %v2177 = vsub.s32 %v2174, %v2176
        %v2178 = vrot.slane %v2150, %v2177
        %v2179 = vcombine.low %v2157, %v2164
        %v2180 = vcombine.low %v2171, %v2178
        %v2182 = vunpack.c.l.s4 1966171168
        %v2183 = vunpack.c.0.s8 %v2182
        %v2184 = vlaneseq
        %v2185 = vshrl.u32 %v2184, 7
        %v2186 = vsub.s32 %v2183, %v2185
        %v2187 = vrot.slane %v2179, %v2186
        %v2189 = vunpack.c.l.s4 1966171168
        %v2190 = vunpack.c.0.s8 %v2189
        %v2191 = vlaneseq
        %v2192 = vshrl.u32 %v2191, 7
        %v2193 = vsub.s32 %v2190, %v2192
        %v2194 = vrot.slane %v2180, %v2193
        %v2195 = vcombine.low %v2187, %v2194
        %v2197 = vunpack.c.l.s4 1966171168
        %v2198 = vunpack.c.0.s8 %v2197
        %v2199 = vlaneseq
        %v2200 = vshrl.u32 %v2199, 7
        %v2201 = vsub.s32 %v2198, %v2200
        %v2202 = vrot.slane %v1717, %v2201
        %v2204 = vunpack.c.l.s4 1966171168
        %v2205 = vunpack.c.0.s8 %v2204
        %v2206 = vlaneseq
        %v2207 = vshrl.u32 %v2206, 7
        %v2208 = vsub.s32 %v2205, %v2207
        %v2209 = vrot.slane %v2202, %v2208
        %v2210 = vcombine.low %v1719, %v1743
        %v2211 = vcombine.low %v1757, %v1765
        %v2212 = vcombine.low %v1767, %v1750
        %v2213 = vcombine.low %v1764, %v1766
        %v2215 = vunpack.c.l.s4 1966171168
        %v2216 = vunpack.c.0.s8 %v2215
        %v2217 = vlaneseq
        %v2218 = vshrl.u32 %v2217, 7
        %v2219 = vsub.s32 %v2216, %v2218
        %v2220 = vrot.slane %v2210, %v2219
        %v2222 = vunpack.c.l.s4 1966171168
        %v2223 = vunpack.c.0.s8 %v2222
        %v2224 = vlaneseq
        %v2225 = vshrl.u32 %v2224, 7
        %v2226 = vsub.s32 %v2223, %v2225
        %v2227 = vrot.slane %v2211, %v2226
        %v2229 = vunpack.c.l.s4 1966171168
        %v2230 = vunpack.c.0.s8 %v2229
        %v2231 = vlaneseq
        %v2232 = vshrl.u32 %v2231, 7
        %v2233 = vsub.s32 %v2230, %v2232
        %v2234 = vrot.slane %v2212, %v2233
        %v2236 = vunpack.c.l.s4 1966171168
        %v2237 = vunpack.c.0.s8 %v2236
        %v2238 = vlaneseq
        %v2239 = vshrl.u32 %v2238, 7
        %v2240 = vsub.s32 %v2237, %v2239
        %v2241 = vrot.slane %v2213, %v2240
        %v2242 = vcombine.low %v2220, %v2227
        %v2243 = vcombine.low %v2234, %v2241
        %v2245 = vunpack.c.l.s4 1966171168
        %v2246 = vunpack.c.0.s8 %v2245
        %v2247 = vlaneseq
        %v2248 = vshrl.u32 %v2247, 7
        %v2249 = vsub.s32 %v2246, %v2248
        %v2250 = vrot.slane %v2242, %v2249
        %v2252 = vunpack.c.l.s4 1966171168
        %v2253 = vunpack.c.0.s8 %v2252
        %v2254 = vlaneseq
        %v2255 = vshrl.u32 %v2254, 7
        %v2256 = vsub.s32 %v2253, %v2255
        %v2257 = vrot.slane %v2243, %v2256
        %v2258 = vcombine.low %v2250, %v2257
        %v2260 = vunpack.c.l.s4 1966171168
        %v2261 = vunpack.c.0.s8 %v2260
        %v2262 = vlaneseq
        %v2263 = vshrl.u32 %v2262, 7
        %v2264 = vsub.s32 %v2261, %v2263
        %v2265 = vrot.slane %v1768, %v2264
        %v2267 = vunpack.c.l.s4 1966171168
        %v2268 = vunpack.c.0.s8 %v2267
        %v2269 = vlaneseq
        %v2270 = vshrl.u32 %v2269, 7
        %v2271 = vsub.s32 %v2268, %v2270
        %v2272 = vrot.slane %v2265, %v2271
        %v2273 = vcombine.low %v1792, %v1806
        %v2274 = vcombine.low %v1814, %v1816
        %v2275 = vcombine.low %v1799, %v1813
        %v2276 = vcombine.low %v1815, %v1817
        %v2278 = vunpack.c.l.s4 1966171168
        %v2279 = vunpack.c.0.s8 %v2278
        %v2280 = vlaneseq
        %v2281 = vshrl.u32 %v2280, 7
        %v2282 = vsub.s32 %v2279, %v2281
        %v2283 = vrot.slane %v2273, %v2282
        %v2285 = vunpack.c.l.s4 1966171168
        %v2286 = vunpack.c.0.s8 %v2285
        %v2287 = vlaneseq
        %v2288 = vshrl.u32 %v2287, 7
        %v2289 = vsub.s32 %v2286, %v2288
        %v2290 = vrot.slane %v2274, %v2289
        %v2292 = vunpack.c.l.s4 1966171168
        %v2293 = vunpack.c.0.s8 %v2292
        %v2294 = vlaneseq
        %v2295 = vshrl.u32 %v2294, 7
        %v2296 = vsub.s32 %v2293, %v2295
        %v2297 = vrot.slane %v2275, %v2296
        %v2299 = vunpack.c.l.s4 1966171168
        %v2300 = vunpack.c.0.s8 %v2299
        %v2301 = vlaneseq
        %v2302 = vshrl.u32 %v2301, 7
        %v2303 = vsub.s32 %v2300, %v2302
        %v2304 = vrot.slane %v2276, %v2303
        %v2305 = vcombine.low %v2283, %v2290
        %v2306 = vcombine.low %v2297, %v2304
        %v2308 = vunpack.c.l.s4 1966171168
        %v2309 = vunpack.c.0.s8 %v2308
        %v2310 = vlaneseq
        %v2311 = vshrl.u32 %v2310, 7
        %v2312 = vsub.s32 %v2309, %v2311
        %v2313 = vrot.slane %v2305, %v2312
        %v2315 = vunpack.c.l.s4 1966171168
        %v2316 = vunpack.c.0.s8 %v2315
        %v2317 = vlaneseq
        %v2318 = vshrl.u32 %v2317, 7
        %v2319 = vsub.s32 %v2316, %v2318
        %v2320 = vrot.slane %v2306, %v2319
        %v2321 = vcombine.low %v2313, %v2320
        %v2323 = vunpack.c.l.s4 1966171168
        %v2324 = vunpack.c.0.s8 %v2323
        %v2325 = vlaneseq
        %v2326 = vshrl.u32 %v2325, 7
        %v2327 = vsub.s32 %v2324, %v2326
        %v2328 = vrot.slane %v1831, %v2327
        %v2330 = vunpack.c.l.s4 1966171168
        %v2331 = vunpack.c.0.s8 %v2330
        %v2332 = vlaneseq
        %v2333 = vshrl.u32 %v2332, 7
        %v2334 = vsub.s32 %v2331, %v2333
        %v2335 = vrot.slane %v2328, %v2334
        %v2352 = vpack.c.bf16 %v1894, %v1880
        %v2353 = vpack.c.bf16 %v1957, %v1943
        %v2354 = vpack.c.bf16 %v2020, %v2006
        %v2355 = vpack.c.bf16 %v2083, %v2069
        %v2356 = vpack.c.bf16 %v2146, %v2132
        %v2357 = vpack.c.bf16 %v2209, %v2195
        %v2358 = vpack.c.bf16 %v2272, %v2258
        %v2359 = vpack.c.bf16 %v2335, %v2321
        %2360 = vrot.lane.b32.xlu0 %v1044, 124
        %v2361 = vpop.permute.xlu0 %2360
        %2362 = vrot.lane.b32.xlu0 %v1093, 124
        %v2363 = vpop.permute.xlu0 %2362
        %2364 = vrot.lane.b32.xlu0 %v1142, 124
        %v2365 = vpop.permute.xlu0 %2364
        %2366 = vrot.lane.b32.xlu0 %v1191, 124
        %v2367 = vpop.permute.xlu0 %2366
        %2368 = vrot.lane.b32.xlu0 %v1232, 124
        %v2369 = vpop.permute.xlu0 %2368
        %v2371 = vsel %vm1255, %v2361, 0
        %v2374 = vsel %vm1255, %v2363, 0
        %v2377 = vsel %vm1255, %v2365, 0
        %v2380 = vsel %vm1255, %v2367, 0
        %v2383 = vsel %vm1255, %v2369, 0
        %2385 = vmatprep.subr.bf16.mxu0 0
        %2386 = vmatpush1.bf16.msra.mxu0 %v1276
        %2387 = vmatprep.subr.bf16.mxu0 0
        %2388 = vmatpush1.bf16.msra.mxu0 0
        %2389 = vmatprep.subr.bf16.mxu0 0
        %2390 = vmatpush1.bf16.msra.mxu0 0
        %2391 = vmatprep.subr.bf16.mxu0 0
        %2392 = vmatpush1.bf16.msra.mxu0 0
        %2393 = vmatprep.subr.bf16.mxu0 0
        %2394 = vmatpush1.bf16.msra.mxu0 0
        %2395 = vmatprep.subr.bf16.mxu0 0
        %2396 = vmatpush1.bf16.msra.mxu0 0
        %2397 = vmatprep.subr.bf16.mxu0 0
        %2398 = vmatpush1.bf16.msra.mxu0 0
        %2399 = vmatprep.subr.bf16.mxu0 0
        %2400 = vmatpush1.bf16.msra.mxu0 0
        %2401 = vmatprep.subr.bf16.mxu0 0
        %2402 = vmatpush1.bf16.msra.mxu0 0
        %2403 = vmatprep.subr.bf16.mxu0 0
        %2404 = vmatpush1.bf16.msra.mxu0 0
        %2405 = vmatprep.subr.bf16.mxu0 0
        %2406 = vmatpush1.bf16.msra.mxu0 0
        %2407 = vmatprep.subr.bf16.mxu0 0
        %2408 = vmatpush1.bf16.msra.mxu0 0
        %2409 = vmatprep.subr.bf16.mxu0 0
        %2410 = vmatpush1.bf16.msra.mxu0 0
        %2411 = vmatprep.subr.bf16.mxu0 0
        %2412 = vmatpush1.bf16.msra.mxu0 0
        %2413 = vmatprep.subr.bf16.mxu0 0
        %2414 = vmatpush1.bf16.msra.mxu0 0
        %2415 = vmatprep.subr.bf16.mxu0 0
        %2416 = vmatpush1.bf16.msra.mxu0 0
        %2417 = vmatprep.mubr.bf16.mxu0 0
        %2418 = vmatmul.mubr.bf16.gmra.mrb[0].mxu0 %v2371
        %v2419 = vpop.f32.mrb[0].mxu0
        %v2420 = vpop.f32.mrb[0].mxu0
        %v2421 = vpop.f32.mrb[0].mxu0
        %v2422 = vadd.f32 %v953, %v2421
        %v2423 = vpop.f32.mrb[0].mxu0
        %2424 = vmatprep.mubr.bf16.mxu0 0
        %2425 = vmatmul.mubr.bf16.gmra.mrb[0].mxu0 %v2374
        %v2426 = vpop.f32.mrb[0].mxu0
        %v2427 = vadd.f32 %v953, %v2426
        %v2428 = vpop.f32.mrb[0].mxu0
        %v2429 = vpop.f32.mrb[0].mxu0
        %v2430 = vadd.f32 %v953, %v2429
        %v2431 = vpop.f32.mrb[0].mxu0
        %2432 = vmatprep.mubr.bf16.mxu0 0
        %2433 = vmatmul.mubr.bf16.gmra.mrb[0].mxu0 %v2377
        %v2434 = vpop.f32.mrb[0].mxu0
        %v2435 = vadd.f32 %v953, %v2434
        %v2436 = vpop.f32.mrb[0].mxu0
        %v2437 = vpop.f32.mrb[0].mxu0
        %v2438 = vadd.f32 %v953, %v2437
        %v2439 = vpop.f32.mrb[0].mxu0
        %2440 = vmatprep.mubr.bf16.mxu0 0
        %2441 = vmatmul.mubr.bf16.gmra.mrb[0].mxu0 %v2380
        %v2442 = vpop.f32.mrb[0].mxu0
        %v2443 = vadd.f32 %v953, %v2442
        %v2444 = vpop.f32.mrb[0].mxu0
        %v2445 = vpop.f32.mrb[0].mxu0
        %v2446 = vadd.f32 %v953, %v2445
        %v2447 = vpop.f32.mrb[0].mxu0
        %2448 = vmatprep.mubr.bf16.mxu0 0
        %2449 = vmatmul.mubr.bf16.gmra.mrb[0].mxu0 %v2383
        %v2450 = vpop.f32.mrb[0].mxu0
        %v2451 = vadd.f32 %v953, %v2450
        %v2452 = vpop.f32.mrb[0].mxu0
        %v2453 = vpop.f32.mrb[0].mxu0
        %v2454 = vpop.f32.mrb[0].mxu0
        %2455 = vdwg.mxu0
        %v2456 = vmax.f32 %v2422, 0.0
        %v2457 = vmax.f32 %v2427, 0.0
        %v2458 = vmax.f32 %v2430, 0.0
        %v2459 = vmax.f32 %v2435, 0.0
        %v2460 = vmax.f32 %v2438, 0.0
        %v2461 = vmax.f32 %v2443, 0.0
        %v2462 = vmax.f32 %v2446, 0.0
        %v2463 = vmax.f32 %v2451, 0.0
        %v2472 = vcombine.high %v2456, %v2456
        %v2474 = vunpack.c.l.s4 1966171168
        %v2475 = vunpack.c.0.s8 %v2474
        %v2476 = vlaneseq
        %v2477 = vshrl.u32 %v2476, 7
        %v2478 = vsub.s32 %v2475, %v2477
        %v2479 = vrot.slane %v2456, %v2478
        %v2481 = vunpack.c.l.s4 1966171168
        %v2482 = vunpack.c.0.s8 %v2481
        %v2483 = vlaneseq
        %v2484 = vshrl.u32 %v2483, 7
        %v2485 = vsub.s32 %v2482, %v2484
        %v2486 = vrot.slane %v2472, %v2485
        %v2487 = vcombine.high %v2479, %v2479
        %v2488 = vcombine.high %v2486, %v2486
        %v2490 = vunpack.c.l.s4 1966171168
        %v2491 = vunpack.c.0.s8 %v2490
        %v2492 = vlaneseq
        %v2493 = vshrl.u32 %v2492, 7
        %v2494 = vsub.s32 %v2491, %v2493
        %v2495 = vrot.slane %v2479, %v2494
        %v2497 = vunpack.c.l.s4 1966171168
        %v2498 = vunpack.c.0.s8 %v2497
        %v2499 = vlaneseq
        %v2500 = vshrl.u32 %v2499, 7
        %v2501 = vsub.s32 %v2498, %v2500
        %v2502 = vrot.slane %v2486, %v2501
        %v2504 = vunpack.c.l.s4 1966171168
        %v2505 = vunpack.c.0.s8 %v2504
        %v2506 = vlaneseq
        %v2507 = vshrl.u32 %v2506, 7
        %v2508 = vsub.s32 %v2505, %v2507
        %v2509 = vrot.slane %v2487, %v2508
        %v2511 = vunpack.c.l.s4 1966171168
        %v2512 = vunpack.c.0.s8 %v2511
        %v2513 = vlaneseq
        %v2514 = vshrl.u32 %v2513, 7
        %v2515 = vsub.s32 %v2512, %v2514
        %v2516 = vrot.slane %v2488, %v2515
        %v2517 = vcombine.high %v2495, %v2495
        %v2518 = vcombine.high %v2502, %v2502
        %v2519 = vcombine.high %v2509, %v2509
        %v2520 = vcombine.high %v2516, %v2516
        %v2521 = vcombine.high %v2457, %v2457
        %v2523 = vunpack.c.l.s4 1966171168
        %v2524 = vunpack.c.0.s8 %v2523
        %v2525 = vlaneseq
        %v2526 = vshrl.u32 %v2525, 7
        %v2527 = vsub.s32 %v2524, %v2526
        %v2528 = vrot.slane %v2457, %v2527
        %v2530 = vunpack.c.l.s4 1966171168
        %v2531 = vunpack.c.0.s8 %v2530
        %v2532 = vlaneseq
        %v2533 = vshrl.u32 %v2532, 7
        %v2534 = vsub.s32 %v2531, %v2533
        %v2535 = vrot.slane %v2521, %v2534
        %v2536 = vcombine.high %v2528, %v2528
        %v2537 = vcombine.high %v2535, %v2535
        %v2539 = vunpack.c.l.s4 1966171168
        %v2540 = vunpack.c.0.s8 %v2539
        %v2541 = vlaneseq
        %v2542 = vshrl.u32 %v2541, 7
        %v2543 = vsub.s32 %v2540, %v2542
        %v2544 = vrot.slane %v2528, %v2543
        %v2546 = vunpack.c.l.s4 1966171168
        %v2547 = vunpack.c.0.s8 %v2546
        %v2548 = vlaneseq
        %v2549 = vshrl.u32 %v2548, 7
        %v2550 = vsub.s32 %v2547, %v2549
        %v2551 = vrot.slane %v2535, %v2550
        %v2553 = vunpack.c.l.s4 1966171168
        %v2554 = vunpack.c.0.s8 %v2553
        %v2555 = vlaneseq
        %v2556 = vshrl.u32 %v2555, 7
        %v2557 = vsub.s32 %v2554, %v2556
        %v2558 = vrot.slane %v2536, %v2557
        %v2560 = vunpack.c.l.s4 1966171168
        %v2561 = vunpack.c.0.s8 %v2560
        %v2562 = vlaneseq
        %v2563 = vshrl.u32 %v2562, 7
        %v2564 = vsub.s32 %v2561, %v2563
        %v2565 = vrot.slane %v2537, %v2564
        %v2566 = vcombine.high %v2544, %v2544
        %v2567 = vcombine.high %v2551, %v2551
        %v2568 = vcombine.high %v2558, %v2558
        %v2569 = vcombine.high %v2565, %v2565
        %v2570 = vcombine.high %v2458, %v2458
        %v2572 = vunpack.c.l.s4 1966171168
        %v2573 = vunpack.c.0.s8 %v2572
        %v2574 = vlaneseq
        %v2575 = vshrl.u32 %v2574, 7
        %v2576 = vsub.s32 %v2573, %v2575
        %v2577 = vrot.slane %v2458, %v2576
        %v2579 = vunpack.c.l.s4 1966171168
        %v2580 = vunpack.c.0.s8 %v2579
        %v2581 = vlaneseq
        %v2582 = vshrl.u32 %v2581, 7
        %v2583 = vsub.s32 %v2580, %v2582
        %v2584 = vrot.slane %v2570, %v2583
        %v2585 = vcombine.high %v2577, %v2577
        %v2586 = vcombine.high %v2584, %v2584
        %v2588 = vunpack.c.l.s4 1966171168
        %v2589 = vunpack.c.0.s8 %v2588
        %v2590 = vlaneseq
        %v2591 = vshrl.u32 %v2590, 7
        %v2592 = vsub.s32 %v2589, %v2591
        %v2593 = vrot.slane %v2577, %v2592
        %v2595 = vunpack.c.l.s4 1966171168
        %v2596 = vunpack.c.0.s8 %v2595
        %v2597 = vlaneseq
        %v2598 = vshrl.u32 %v2597, 7
        %v2599 = vsub.s32 %v2596, %v2598
        %v2600 = vrot.slane %v2584, %v2599
        %v2602 = vunpack.c.l.s4 1966171168
        %v2603 = vunpack.c.0.s8 %v2602
        %v2604 = vlaneseq
        %v2605 = vshrl.u32 %v2604, 7
        %v2606 = vsub.s32 %v2603, %v2605
        %v2607 = vrot.slane %v2585, %v2606
        %v2609 = vunpack.c.l.s4 1966171168
        %v2610 = vunpack.c.0.s8 %v2609
        %v2611 = vlaneseq
        %v2612 = vshrl.u32 %v2611, 7
        %v2613 = vsub.s32 %v2610, %v2612
        %v2614 = vrot.slane %v2586, %v2613
        %v2615 = vcombine.high %v2593, %v2593
        %v2616 = vcombine.high %v2600, %v2600
        %v2617 = vcombine.high %v2607, %v2607
        %v2618 = vcombine.high %v2614, %v2614
        %v2619 = vcombine.high %v2459, %v2459
        %v2621 = vunpack.c.l.s4 1966171168
        %v2622 = vunpack.c.0.s8 %v2621
        %v2623 = vlaneseq
        %v2624 = vshrl.u32 %v2623, 7
        %v2625 = vsub.s32 %v2622, %v2624
        %v2626 = vrot.slane %v2459, %v2625
        %v2628 = vunpack.c.l.s4 1966171168
        %v2629 = vunpack.c.0.s8 %v2628
        %v2630 = vlaneseq
        %v2631 = vshrl.u32 %v2630, 7
        %v2632 = vsub.s32 %v2629, %v2631
        %v2633 = vrot.slane %v2619, %v2632
        %v2634 = vcombine.high %v2626, %v2626
        %v2635 = vcombine.high %v2633, %v2633
        %v2637 = vunpack.c.l.s4 1966171168
        %v2638 = vunpack.c.0.s8 %v2637
        %v2639 = vlaneseq
        %v2640 = vshrl.u32 %v2639, 7
        %v2641 = vsub.s32 %v2638, %v2640
        %v2642 = vrot.slane %v2626, %v2641
        %v2644 = vunpack.c.l.s4 1966171168
        %v2645 = vunpack.c.0.s8 %v2644
        %v2646 = vlaneseq
        %v2647 = vshrl.u32 %v2646, 7
        %v2648 = vsub.s32 %v2645, %v2647
        %v2649 = vrot.slane %v2633, %v2648
        %v2651 = vunpack.c.l.s4 1966171168
        %v2652 = vunpack.c.0.s8 %v2651
        %v2653 = vlaneseq
        %v2654 = vshrl.u32 %v2653, 7
        %v2655 = vsub.s32 %v2652, %v2654
        %v2656 = vrot.slane %v2634, %v2655
        %v2658 = vunpack.c.l.s4 1966171168
        %v2659 = vunpack.c.0.s8 %v2658
        %v2660 = vlaneseq
        %v2661 = vshrl.u32 %v2660, 7
        %v2662 = vsub.s32 %v2659, %v2661
        %v2663 = vrot.slane %v2635, %v2662
        %v2664 = vcombine.high %v2642, %v2642
        %v2665 = vcombine.high %v2649, %v2649
        %v2666 = vcombine.high %v2656, %v2656
        %v2667 = vcombine.high %v2663, %v2663
        %v2668 = vcombine.high %v2460, %v2460
        %v2670 = vunpack.c.l.s4 1966171168
        %v2671 = vunpack.c.0.s8 %v2670
        %v2672 = vlaneseq
        %v2673 = vshrl.u32 %v2672, 7
        %v2674 = vsub.s32 %v2671, %v2673
        %v2675 = vrot.slane %v2460, %v2674
        %v2677 = vunpack.c.l.s4 1966171168
        %v2678 = vunpack.c.0.s8 %v2677
        %v2679 = vlaneseq
        %v2680 = vshrl.u32 %v2679, 7
        %v2681 = vsub.s32 %v2678, %v2680
        %v2682 = vrot.slane %v2668, %v2681
        %v2683 = vcombine.high %v2675, %v2675
        %v2684 = vcombine.high %v2682, %v2682
        %v2686 = vunpack.c.l.s4 1966171168
        %v2687 = vunpack.c.0.s8 %v2686
        %v2688 = vlaneseq
        %v2689 = vshrl.u32 %v2688, 7
        %v2690 = vsub.s32 %v2687, %v2689
        %v2691 = vrot.slane %v2675, %v2690
        %v2693 = vunpack.c.l.s4 1966171168
        %v2694 = vunpack.c.0.s8 %v2693
        %v2695 = vlaneseq
        %v2696 = vshrl.u32 %v2695, 7
        %v2697 = vsub.s32 %v2694, %v2696
        %v2698 = vrot.slane %v2682, %v2697
        %v2700 = vunpack.c.l.s4 1966171168
        %v2701 = vunpack.c.0.s8 %v2700
        %v2702 = vlaneseq
        %v2703 = vshrl.u32 %v2702, 7
        %v2704 = vsub.s32 %v2701, %v2703
        %v2705 = vrot.slane %v2683, %v2704
        %v2707 = vunpack.c.l.s4 1966171168
        %v2708 = vunpack.c.0.s8 %v2707
        %v2709 = vlaneseq
        %v2710 = vshrl.u32 %v2709, 7
        %v2711 = vsub.s32 %v2708, %v2710
        %v2712 = vrot.slane %v2684, %v2711
        %v2713 = vcombine.high %v2691, %v2691
        %v2714 = vcombine.high %v2698, %v2698
        %v2715 = vcombine.high %v2705, %v2705
        %v2716 = vcombine.high %v2712, %v2712
        %v2717 = vcombine.high %v2461, %v2461
        %v2719 = vunpack.c.l.s4 1966171168
        %v2720 = vunpack.c.0.s8 %v2719
        %v2721 = vlaneseq
        %v2722 = vshrl.u32 %v2721, 7
        %v2723 = vsub.s32 %v2720, %v2722
        %v2724 = vrot.slane %v2461, %v2723
        %v2726 = vunpack.c.l.s4 1966171168
        %v2727 = vunpack.c.0.s8 %v2726
        %v2728 = vlaneseq
        %v2729 = vshrl.u32 %v2728, 7
        %v2730 = vsub.s32 %v2727, %v2729
        %v2731 = vrot.slane %v2717, %v2730
        %v2732 = vcombine.high %v2724, %v2724
        %v2733 = vcombine.high %v2731, %v2731
        %v2735 = vunpack.c.l.s4 1966171168
        %v2736 = vunpack.c.0.s8 %v2735
        %v2737 = vlaneseq
        %v2738 = vshrl.u32 %v2737, 7
        %v2739 = vsub.s32 %v2736, %v2738
        %v2740 = vrot.slane %v2724, %v2739
        %v2742 = vunpack.c.l.s4 1966171168
        %v2743 = vunpack.c.0.s8 %v2742
        %v2744 = vlaneseq
        %v2745 = vshrl.u32 %v2744, 7
        %v2746 = vsub.s32 %v2743, %v2745
        %v2747 = vrot.slane %v2731, %v2746
        %v2749 = vunpack.c.l.s4 1966171168
        %v2750 = vunpack.c.0.s8 %v2749
        %v2751 = vlaneseq
        %v2752 = vshrl.u32 %v2751, 7
        %v2753 = vsub.s32 %v2750, %v2752
        %v2754 = vrot.slane %v2732, %v2753
        %v2756 = vunpack.c.l.s4 1966171168
        %v2757 = vunpack.c.0.s8 %v2756
        %v2758 = vlaneseq
        %v2759 = vshrl.u32 %v2758, 7
        %v2760 = vsub.s32 %v2757, %v2759
        %v2761 = vrot.slane %v2733, %v2760
        %v2762 = vcombine.high %v2740, %v2740
        %v2763 = vcombine.high %v2747, %v2747
        %v2764 = vcombine.high %v2754, %v2754
        %v2765 = vcombine.high %v2761, %v2761
        %v2766 = vcombine.high %v2462, %v2462
        %v2768 = vunpack.c.l.s4 1966171168
        %v2769 = vunpack.c.0.s8 %v2768
        %v2770 = vlaneseq
        %v2771 = vshrl.u32 %v2770, 7
        %v2772 = vsub.s32 %v2769, %v2771
        %v2773 = vrot.slane %v2462, %v2772
        %v2775 = vunpack.c.l.s4 1966171168
        %v2776 = vunpack.c.0.s8 %v2775
        %v2777 = vlaneseq
        %v2778 = vshrl.u32 %v2777, 7
        %v2779 = vsub.s32 %v2776, %v2778
        %v2780 = vrot.slane %v2766, %v2779
        %v2781 = vcombine.high %v2773, %v2773
        %v2782 = vcombine.high %v2780, %v2780
        %v2784 = vunpack.c.l.s4 1966171168
        %v2785 = vunpack.c.0.s8 %v2784
        %v2786 = vlaneseq
        %v2787 = vshrl.u32 %v2786, 7
        %v2788 = vsub.s32 %v2785, %v2787
        %v2789 = vrot.slane %v2773, %v2788
        %v2791 = vunpack.c.l.s4 1966171168
        %v2792 = vunpack.c.0.s8 %v2791
        %v2793 = vlaneseq
        %v2794 = vshrl.u32 %v2793, 7
        %v2795 = vsub.s32 %v2792, %v2794
        %v2796 = vrot.slane %v2780, %v2795
        %v2798 = vunpack.c.l.s4 1966171168
        %v2799 = vunpack.c.0.s8 %v2798
        %v2800 = vlaneseq
        %v2801 = vshrl.u32 %v2800, 7
        %v2802 = vsub.s32 %v2799, %v2801
        %v2803 = vrot.slane %v2781, %v2802
        %v2805 = vunpack.c.l.s4 1966171168
        %v2806 = vunpack.c.0.s8 %v2805
        %v2807 = vlaneseq
        %v2808 = vshrl.u32 %v2807, 7
        %v2809 = vsub.s32 %v2806, %v2808
        %v2810 = vrot.slane %v2782, %v2809
        %v2811 = vcombine.high %v2789, %v2789
        %v2812 = vcombine.high %v2796, %v2796
        %v2813 = vcombine.high %v2803, %v2803
        %v2814 = vcombine.high %v2810, %v2810
        %v2815 = vcombine.high %v2463, %v2463
        %v2817 = vunpack.c.l.s4 1966171168
        %v2818 = vunpack.c.0.s8 %v2817
        %v2819 = vlaneseq
        %v2820 = vshrl.u32 %v2819, 7
        %v2821 = vsub.s32 %v2818, %v2820
        %v2822 = vrot.slane %v2463, %v2821
        %v2824 = vunpack.c.l.s4 1966171168
        %v2825 = vunpack.c.0.s8 %v2824
        %v2826 = vlaneseq
        %v2827 = vshrl.u32 %v2826, 7
        %v2828 = vsub.s32 %v2825, %v2827
        %v2829 = vrot.slane %v2815, %v2828
        %v2830 = vcombine.high %v2822, %v2822
        %v2831 = vcombine.high %v2829, %v2829
        %v2833 = vunpack.c.l.s4 1966171168
        %v2834 = vunpack.c.0.s8 %v2833
        %v2835 = vlaneseq
        %v2836 = vshrl.u32 %v2835, 7
        %v2837 = vsub.s32 %v2834, %v2836
        %v2838 = vrot.slane %v2822, %v2837
        %v2840 = vunpack.c.l.s4 1966171168
        %v2841 = vunpack.c.0.s8 %v2840
        %v2842 = vlaneseq
        %v2843 = vshrl.u32 %v2842, 7
        %v2844 = vsub.s32 %v2841, %v2843
        %v2845 = vrot.slane %v2829, %v2844
        %v2847 = vunpack.c.l.s4 1966171168
        %v2848 = vunpack.c.0.s8 %v2847
        %v2849 = vlaneseq
        %v2850 = vshrl.u32 %v2849, 7
        %v2851 = vsub.s32 %v2848, %v2850
        %v2852 = vrot.slane %v2830, %v2851
        %v2854 = vunpack.c.l.s4 1966171168
        %v2855 = vunpack.c.0.s8 %v2854
        %v2856 = vlaneseq
        %v2857 = vshrl.u32 %v2856, 7
        %v2858 = vsub.s32 %v2855, %v2857
        %v2859 = vrot.slane %v2831, %v2858
        %v2860 = vcombine.high %v2838, %v2838
        %v2861 = vcombine.high %v2845, %v2845
        %v2862 = vcombine.high %v2852, %v2852
        %v2863 = vcombine.high %v2859, %v2859
        %v2864 = vsel %vm471, 1, 0
        %v2865 = vsel %vm472, 1, 0
        %vm2866 = vcmp.eq.s32.totalorder %v2864, 1
        %vm2867 = vcmp.eq.s32.totalorder %v2865, 1
        %v2868 = vcombine.low %v2509, %v2517
        %v2869 = vcombine.low %v2519, %v2502
        %v2870 = vcombine.low %v2516, %v2518
        %v2871 = vcombine.low %v2520, %v2544
        %v2873 = vunpack.c.l.s4 1966171168
        %v2874 = vunpack.c.0.s8 %v2873
        %v2875 = vlaneseq
        %v2876 = vshrl.u32 %v2875, 7
        %v2877 = vsub.s32 %v2874, %v2876
        %v2878 = vrot.slane %v2868, %v2877
        %v2880 = vunpack.c.l.s4 1966171168
        %v2881 = vunpack.c.0.s8 %v2880
        %v2882 = vlaneseq
        %v2883 = vshrl.u32 %v2882, 7
        %v2884 = vsub.s32 %v2881, %v2883
        %v2885 = vrot.slane %v2869, %v2884
        %v2887 = vunpack.c.l.s4 1966171168
        %v2888 = vunpack.c.0.s8 %v2887
        %v2889 = vlaneseq
        %v2890 = vshrl.u32 %v2889, 7
        %v2891 = vsub.s32 %v2888, %v2890
        %v2892 = vrot.slane %v2870, %v2891
        %v2894 = vunpack.c.l.s4 1966171168
        %v2895 = vunpack.c.0.s8 %v2894
        %v2896 = vlaneseq
        %v2897 = vshrl.u32 %v2896, 7
        %v2898 = vsub.s32 %v2895, %v2897
        %v2899 = vrot.slane %v2871, %v2898
        %v2900 = vcombine.low %v2878, %v2885
        %v2901 = vcombine.low %v2892, %v2899
        %v2903 = vunpack.c.l.s4 1966171168
        %v2904 = vunpack.c.0.s8 %v2903
        %v2905 = vlaneseq
        %v2906 = vshrl.u32 %v2905, 7
        %v2907 = vsub.s32 %v2904, %v2906
        %v2908 = vrot.slane %v2900, %v2907
        %v2910 = vunpack.c.l.s4 1966171168
        %v2911 = vunpack.c.0.s8 %v2910
        %v2912 = vlaneseq
        %v2913 = vshrl.u32 %v2912, 7
        %v2914 = vsub.s32 %v2911, %v2913
        %v2915 = vrot.slane %v2901, %v2914
        %v2916 = vcombine.low %v2908, %v2915
        %v2918 = vunpack.c.l.s4 1966171168
        %v2919 = vunpack.c.0.s8 %v2918
        %v2920 = vlaneseq
        %v2921 = vshrl.u32 %v2920, 7
        %v2922 = vsub.s32 %v2919, %v2921
        %v2923 = vrot.slane %v2558, %v2922
        %v2925 = vunpack.c.l.s4 1966171168
        %v2926 = vunpack.c.0.s8 %v2925
        %v2927 = vlaneseq
        %v2928 = vshrl.u32 %v2927, 7
        %v2929 = vsub.s32 %v2926, %v2928
        %v2930 = vrot.slane %v2923, %v2929
        %v2931 = vcombine.low %v2566, %v2568
        %v2932 = vcombine.low %v2551, %v2565
        %v2933 = vcombine.low %v2567, %v2569
        %v2934 = vcombine.low %v2593, %v2607
        %v2936 = vunpack.c.l.s4 1966171168
        %v2937 = vunpack.c.0.s8 %v2936
        %v2938 = vlaneseq
        %v2939 = vshrl.u32 %v2938, 7
        %v2940 = vsub.s32 %v2937, %v2939
        %v2941 = vrot.slane %v2931, %v2940
        %v2943 = vunpack.c.l.s4 1966171168
        %v2944 = vunpack.c.0.s8 %v2943
        %v2945 = vlaneseq
        %v2946 = vshrl.u32 %v2945, 7
        %v2947 = vsub.s32 %v2944, %v2946
        %v2948 = vrot.slane %v2932, %v2947
        %v2950 = vunpack.c.l.s4 1966171168
        %v2951 = vunpack.c.0.s8 %v2950
        %v2952 = vlaneseq
        %v2953 = vshrl.u32 %v2952, 7
        %v2954 = vsub.s32 %v2951, %v2953
        %v2955 = vrot.slane %v2933, %v2954
        %v2957 = vunpack.c.l.s4 1966171168
        %v2958 = vunpack.c.0.s8 %v2957
        %v2959 = vlaneseq
        %v2960 = vshrl.u32 %v2959, 7
        %v2961 = vsub.s32 %v2958, %v2960
        %v2962 = vrot.slane %v2934, %v2961
        %v2963 = vcombine.low %v2941, %v2948
        %v2964 = vcombine.low %v2955, %v2962
        %v2966 = vunpack.c.l.s4 1966171168
        %v2967 = vunpack.c.0.s8 %v2966
        %v2968 = vlaneseq
        %v2969 = vshrl.u32 %v2968, 7
        %v2970 = vsub.s32 %v2967, %v2969
        %v2971 = vrot.slane %v2963, %v2970
        %v2973 = vunpack.c.l.s4 1966171168
        %v2974 = vunpack.c.0.s8 %v2973
        %v2975 = vlaneseq
        %v2976 = vshrl.u32 %v2975, 7
        %v2977 = vsub.s32 %v2974, %v2976
        %v2978 = vrot.slane %v2964, %v2977
        %v2979 = vcombine.low %v2971, %v2978
        %v2981 = vunpack.c.l.s4 1966171168
        %v2982 = vunpack.c.0.s8 %v2981
        %v2983 = vlaneseq
        %v2984 = vshrl.u32 %v2983, 7
        %v2985 = vsub.s32 %v2982, %v2984
        %v2986 = vrot.slane %v2615, %v2985
        %v2988 = vunpack.c.l.s4 1966171168
        %v2989 = vunpack.c.0.s8 %v2988
        %v2990 = vlaneseq
        %v2991 = vshrl.u32 %v2990, 7
        %v2992 = vsub.s32 %v2989, %v2991
        %v2993 = vrot.slane %v2986, %v2992
        %v2994 = vcombine.low %v2617, %v2600
        %v2995 = vcombine.low %v2614, %v2616
        %v2996 = vcombine.low %v2618, %v2642
        %v2997 = vcombine.low %v2656, %v2664
        %v2999 = vunpack.c.l.s4 1966171168
        %v3000 = vunpack.c.0.s8 %v2999
        %v3001 = vlaneseq
        %v3002 = vshrl.u32 %v3001, 7
        %v3003 = vsub.s32 %v3000, %v3002
        %v3004 = vrot.slane %v2994, %v3003
        %v3006 = vunpack.c.l.s4 1966171168
        %v3007 = vunpack.c.0.s8 %v3006
        %v3008 = vlaneseq
        %v3009 = vshrl.u32 %v3008, 7
        %v3010 = vsub.s32 %v3007, %v3009
        %v3011 = vrot.slane %v2995, %v3010
        %v3013 = vunpack.c.l.s4 1966171168
        %v3014 = vunpack.c.0.s8 %v3013
        %v3015 = vlaneseq
        %v3016 = vshrl.u32 %v3015, 7
        %v3017 = vsub.s32 %v3014, %v3016
        %v3018 = vrot.slane %v2996, %v3017
        %v3020 = vunpack.c.l.s4 1966171168
        %v3021 = vunpack.c.0.s8 %v3020
        %v3022 = vlaneseq
        %v3023 = vshrl.u32 %v3022, 7
        %v3024 = vsub.s32 %v3021, %v3023
        %v3025 = vrot.slane %v2997, %v3024
        %v3026 = vcombine.low %v3004, %v3011
        %v3027 = vcombine.low %v3018, %v3025
        %v3029 = vunpack.c.l.s4 1966171168
        %v3030 = vunpack.c.0.s8 %v3029
        %v3031 = vlaneseq
        %v3032 = vshrl.u32 %v3031, 7
        %v3033 = vsub.s32 %v3030, %v3032
        %v3034 = vrot.slane %v3026, %v3033
        %v3036 = vunpack.c.l.s4 1966171168
        %v3037 = vunpack.c.0.s8 %v3036
        %v3038 = vlaneseq
        %v3039 = vshrl.u32 %v3038, 7
        %v3040 = vsub.s32 %v3037, %v3039
        %v3041 = vrot.slane %v3027, %v3040
        %v3042 = vcombine.low %v3034, %v3041
        %v3044 = vunpack.c.l.s4 1966171168
        %v3045 = vunpack.c.0.s8 %v3044
        %v3046 = vlaneseq
        %v3047 = vshrl.u32 %v3046, 7
        %v3048 = vsub.s32 %v3045, %v3047
        %v3049 = vrot.slane %v2666, %v3048
        %v3051 = vunpack.c.l.s4 1966171168
        %v3052 = vunpack.c.0.s8 %v3051
        %v3053 = vlaneseq
        %v3054 = vshrl.u32 %v3053, 7
        %v3055 = vsub.s32 %v3052, %v3054
        %v3056 = vrot.slane %v3049, %v3055
        %v3057 = vcombine.low %v2649, %v2663
        %v3058 = vcombine.low %v2665, %v2667
        %v3059 = vcombine.low %v2691, %v2705
        %v3060 = vcombine.low %v2713, %v2715
        %v3062 = vunpack.c.l.s4 1966171168
        %v3063 = vunpack.c.0.s8 %v3062
        %v3064 = vlaneseq
        %v3065 = vshrl.u32 %v3064, 7
        %v3066 = vsub.s32 %v3063, %v3065
        %v3067 = vrot.slane %v3057, %v3066
        %v3069 = vunpack.c.l.s4 1966171168
        %v3070 = vunpack.c.0.s8 %v3069
        %v3071 = vlaneseq
        %v3072 = vshrl.u32 %v3071, 7
        %v3073 = vsub.s32 %v3070, %v3072
        %v3074 = vrot.slane %v3058, %v3073
        %v3076 = vunpack.c.l.s4 1966171168
        %v3077 = vunpack.c.0.s8 %v3076
        %v3078 = vlaneseq
        %v3079 = vshrl.u32 %v3078, 7
        %v3080 = vsub.s32 %v3077, %v3079
        %v3081 = vrot.slane %v3059, %v3080
        %v3083 = vunpack.c.l.s4 1966171168
        %v3084 = vunpack.c.0.s8 %v3083
        %v3085 = vlaneseq
        %v3086 = vshrl.u32 %v3085, 7
        %v3087 = vsub.s32 %v3084, %v3086
        %v3088 = vrot.slane %v3060, %v3087
        %v3089 = vcombine.low %v3067, %v3074
        %v3090 = vcombine.low %v3081, %v3088
        %v3092 = vunpack.c.l.s4 1966171168
        %v3093 = vunpack.c.0.s8 %v3092
        %v3094 = vlaneseq
        %v3095 = vshrl.u32 %v3094, 7
        %v3096 = vsub.s32 %v3093, %v3095
        %v3097 = vrot.slane %v3089, %v3096
        %v3099 = vunpack.c.l.s4 1966171168
        %v3100 = vunpack.c.0.s8 %v3099
        %v3101 = vlaneseq
        %v3102 = vshrl.u32 %v3101, 7
        %v3103 = vsub.s32 %v3100, %v3102
        %v3104 = vrot.slane %v3090, %v3103
        %v3105 = vcombine.low %v3097, %v3104
        %v3107 = vunpack.c.l.s4 1966171168
        %v3108 = vunpack.c.0.s8 %v3107
        %v3109 = vlaneseq
        %v3110 = vshrl.u32 %v3109, 7
        %v3111 = vsub.s32 %v3108, %v3110
        %v3112 = vrot.slane %v2698, %v3111
        %v3114 = vunpack.c.l.s4 1966171168
        %v3115 = vunpack.c.0.s8 %v3114
        %v3116 = vlaneseq
        %v3117 = vshrl.u32 %v3116, 7
        %v3118 = vsub.s32 %v3115, %v3117
        %v3119 = vrot.slane %v3112, %v3118
        %v3120 = vcombine.low %v2712, %v2714
        %v3121 = vcombine.low %v2716, %v2740
        %v3122 = vcombine.low %v2754, %v2762
        %v3123 = vcombine.low %v2764, %v2747
        %v3125 = vunpack.c.l.s4 1966171168
        %v3126 = vunpack.c.0.s8 %v3125
        %v3127 = vlaneseq
        %v3128 = vshrl.u32 %v3127, 7
        %v3129 = vsub.s32 %v3126, %v3128
        %v3130 = vrot.slane %v3120, %v3129
        %v3132 = vunpack.c.l.s4 1966171168
        %v3133 = vunpack.c.0.s8 %v3132
        %v3134 = vlaneseq
        %v3135 = vshrl.u32 %v3134, 7
        %v3136 = vsub.s32 %v3133, %v3135
        %v3137 = vrot.slane %v3121, %v3136
        %v3139 = vunpack.c.l.s4 1966171168
        %v3140 = vunpack.c.0.s8 %v3139
        %v3141 = vlaneseq
        %v3142 = vshrl.u32 %v3141, 7
        %v3143 = vsub.s32 %v3140, %v3142
        %v3144 = vrot.slane %v3122, %v3143
        %v3146 = vunpack.c.l.s4 1966171168
        %v3147 = vunpack.c.0.s8 %v3146
        %v3148 = vlaneseq
        %v3149 = vshrl.u32 %v3148, 7
        %v3150 = vsub.s32 %v3147, %v3149
        %v3151 = vrot.slane %v3123, %v3150
        %v3152 = vcombine.low %v3130, %v3137
        %v3153 = vcombine.low %v3144, %v3151
        %v3155 = vunpack.c.l.s4 1966171168
        %v3156 = vunpack.c.0.s8 %v3155
        %v3157 = vlaneseq
        %v3158 = vshrl.u32 %v3157, 7
        %v3159 = vsub.s32 %v3156, %v3158
        %v3160 = vrot.slane %v3152, %v3159
        %v3162 = vunpack.c.l.s4 1966171168
        %v3163 = vunpack.c.0.s8 %v3162
        %v3164 = vlaneseq
        %v3165 = vshrl.u32 %v3164, 7
        %v3166 = vsub.s32 %v3163, %v3165
        %v3167 = vrot.slane %v3153, %v3166
        %v3168 = vcombine.low %v3160, %v3167
        %v3170 = vunpack.c.l.s4 1966171168
        %v3171 = vunpack.c.0.s8 %v3170
        %v3172 = vlaneseq
        %v3173 = vshrl.u32 %v3172, 7
        %v3174 = vsub.s32 %v3171, %v3173
        %v3175 = vrot.slane %v2761, %v3174
        %v3177 = vunpack.c.l.s4 1966171168
        %v3178 = vunpack.c.0.s8 %v3177
        %v3179 = vlaneseq
        %v3180 = vshrl.u32 %v3179, 7
        %v3181 = vsub.s32 %v3178, %v3180
        %v3182 = vrot.slane %v3175, %v3181
        %v3183 = vcombine.low %v2763, %v2765
        %v3184 = vcombine.low %v2789, %v2803
        %v3185 = vcombine.low %v2811, %v2813
        %v3186 = vcombine.low %v2796, %v2810
        %v3188 = vunpack.c.l.s4 1966171168
        %v3189 = vunpack.c.0.s8 %v3188
        %v3190 = vlaneseq
        %v3191 = vshrl.u32 %v3190, 7
        %v3192 = vsub.s32 %v3189, %v3191
        %v3193 = vrot.slane %v3183, %v3192
        %v3195 = vunpack.c.l.s4 1966171168
        %v3196 = vunpack.c.0.s8 %v3195
        %v3197 = vlaneseq
        %v3198 = vshrl.u32 %v3197, 7
        %v3199 = vsub.s32 %v3196, %v3198
        %v3200 = vrot.slane %v3184, %v3199
        %v3202 = vunpack.c.l.s4 1966171168
        %v3203 = vunpack.c.0.s8 %v3202
        %v3204 = vlaneseq
        %v3205 = vshrl.u32 %v3204, 7
        %v3206 = vsub.s32 %v3203, %v3205
        %v3207 = vrot.slane %v3185, %v3206
        %v3209 = vunpack.c.l.s4 1966171168
        %v3210 = vunpack.c.0.s8 %v3209
        %v3211 = vlaneseq
        %v3212 = vshrl.u32 %v3211, 7
        %v3213 = vsub.s32 %v3210, %v3212
        %v3214 = vrot.slane %v3186, %v3213
        %v3215 = vcombine.low %v3193, %v3200
        %v3216 = vcombine.low %v3207, %v3214
        %v3218 = vunpack.c.l.s4 1966171168
        %v3219 = vunpack.c.0.s8 %v3218
        %v3220 = vlaneseq
        %v3221 = vshrl.u32 %v3220, 7
        %v3222 = vsub.s32 %v3219, %v3221
        %v3223 = vrot.slane %v3215, %v3222
        %v3225 = vunpack.c.l.s4 1966171168
        %v3226 = vunpack.c.0.s8 %v3225
        %v3227 = vlaneseq
        %v3228 = vshrl.u32 %v3227, 7
        %v3229 = vsub.s32 %v3226, %v3228
        %v3230 = vrot.slane %v3216, %v3229
        %v3231 = vcombine.low %v3223, %v3230
        %v3233 = vunpack.c.l.s4 1966171168
        %v3234 = vunpack.c.0.s8 %v3233
        %v3235 = vlaneseq
        %v3236 = vshrl.u32 %v3235, 7
        %v3237 = vsub.s32 %v3234, %v3236
        %v3238 = vrot.slane %v2812, %v3237
        %v3240 = vunpack.c.l.s4 1966171168
        %v3241 = vunpack.c.0.s8 %v3240
        %v3242 = vlaneseq
        %v3243 = vshrl.u32 %v3242, 7
        %v3244 = vsub.s32 %v3241, %v3243
        %v3245 = vrot.slane %v3238, %v3244
        %v3246 = vcombine.low %v2814, %v2838
        %v3247 = vcombine.low %v2852, %v2860
        %v3248 = vcombine.low %v2862, %v2845
        %v3249 = vcombine.low %v2859, %v2861
        %v3251 = vunpack.c.l.s4 1966171168
        %v3252 = vunpack.c.0.s8 %v3251
        %v3253 = vlaneseq
        %v3254 = vshrl.u32 %v3253, 7
        %v3255 = vsub.s32 %v3252, %v3254
        %v3256 = vrot.slane %v3246, %v3255
        %v3258 = vunpack.c.l.s4 1966171168
        %v3259 = vunpack.c.0.s8 %v3258
        %v3260 = vlaneseq
        %v3261 = vshrl.u32 %v3260, 7
        %v3262 = vsub.s32 %v3259, %v3261
        %v3263 = vrot.slane %v3247, %v3262
        %v3265 = vunpack.c.l.s4 1966171168
        %v3266 = vunpack.c.0.s8 %v3265
        %v3267 = vlaneseq
        %v3268 = vshrl.u32 %v3267, 7
        %v3269 = vsub.s32 %v3266, %v3268
        %v3270 = vrot.slane %v3248, %v3269
        %v3272 = vunpack.c.l.s4 1966171168
        %v3273 = vunpack.c.0.s8 %v3272
        %v3274 = vlaneseq
        %v3275 = vshrl.u32 %v3274, 7
        %v3276 = vsub.s32 %v3273, %v3275
        %v3277 = vrot.slane %v3249, %v3276
        %v3278 = vcombine.low %v3256, %v3263
        %v3279 = vcombine.low %v3270, %v3277
        %v3281 = vunpack.c.l.s4 1966171168
        %v3282 = vunpack.c.0.s8 %v3281
        %v3283 = vlaneseq
        %v3284 = vshrl.u32 %v3283, 7
        %v3285 = vsub.s32 %v3282, %v3284
        %v3286 = vrot.slane %v3278, %v3285
        %v3288 = vunpack.c.l.s4 1966171168
        %v3289 = vunpack.c.0.s8 %v3288
        %v3290 = vlaneseq
        %v3291 = vshrl.u32 %v3290, 7
        %v3292 = vsub.s32 %v3289, %v3291
        %v3293 = vrot.slane %v3279, %v3292
        %v3294 = vcombine.low %v3286, %v3293
        %v3296 = vunpack.c.l.s4 1966171168
        %v3297 = vunpack.c.0.s8 %v3296
        %v3298 = vlaneseq
        %v3299 = vshrl.u32 %v3298, 7
        %v3300 = vsub.s32 %v3297, %v3299
        %v3301 = vrot.slane %v2863, %v3300
        %v3303 = vunpack.c.l.s4 1966171168
        %v3304 = vunpack.c.0.s8 %v3303
        %v3305 = vlaneseq
        %v3306 = vshrl.u32 %v3305, 7
        %v3307 = vsub.s32 %v3304, %v3306
        %v3308 = vrot.slane %v3301, %v3307
        %v3323 = vsel %vm2866, %v2916, 0.0
        %v3324 = vsel %vm2867, %v2930, 0.0
        %v3325 = vsel %vm2866, %v2979, 0.0
        %v3326 = vsel %vm2867, %v2993, 0.0
        %v3327 = vsel %vm2866, %v3042, 0.0
        %v3328 = vsel %vm2867, %v3056, 0.0
        %v3329 = vsel %vm2866, %v3105, 0.0
        %v3330 = vsel %vm2867, %v3119, 0.0
        %v3331 = vsel %vm2866, %v3168, 0.0
        %v3332 = vsel %vm2867, %v3182, 0.0
        %v3333 = vsel %vm2866, %v3231, 0.0
        %v3334 = vsel %vm2867, %v3245, 0.0
        %v3335 = vsel %vm2866, %v3294, 0.0
        %v3336 = vsel %vm2867, %v3308, 0.0
        %v3337 = vunpack.c.l.b16 %v506
        %v3338 = vunpack.c.l.b16 %v507
        %v3339 = vpack.c.b16 %v3338, %v3337
        %3340 = vrot.lane.b32.xlu0 %v3339, 124
        %v3341 = vpop.permute.xlu0 %3340
        %v3343 = vsel %vm1255, %v3341, 0
        %3345 = vmatprep.subr.bf16.mxu0 0
        %3346 = vmatpush1.bf16.msra.mxu0 %v1276
        %3347 = vmatprep.subr.bf16.mxu0 0
        %3348 = vmatpush1.bf16.msra.mxu0 0
        %3349 = vmatprep.subr.bf16.mxu0 0
        %3350 = vmatpush1.bf16.msra.mxu0 0
        %3351 = vmatprep.subr.bf16.mxu0 0
        %3352 = vmatpush1.bf16.msra.mxu0 0
        %3353 = vmatprep.subr.bf16.mxu0 0
        %3354 = vmatpush1.bf16.msra.mxu0 0
        %3355 = vmatprep.subr.bf16.mxu0 0
        %3356 = vmatpush1.bf16.msra.mxu0 0
        %3357 = vmatprep.subr.bf16.mxu0 0
        %3358 = vmatpush1.bf16.msra.mxu0 0
        %3359 = vmatprep.subr.bf16.mxu0 0
        %3360 = vmatpush1.bf16.msra.mxu0 0
        %3361 = vmatprep.subr.bf16.mxu0 0
        %3362 = vmatpush1.bf16.msra.mxu0 0
        %3363 = vmatprep.subr.bf16.mxu0 0
        %3364 = vmatpush1.bf16.msra.mxu0 0
        %3365 = vmatprep.subr.bf16.mxu0 0
        %3366 = vmatpush1.bf16.msra.mxu0 0
        %3367 = vmatprep.subr.bf16.mxu0 0
        %3368 = vmatpush1.bf16.msra.mxu0 0
        %3369 = vmatprep.subr.bf16.mxu0 0
        %3370 = vmatpush1.bf16.msra.mxu0 0
        %3371 = vmatprep.subr.bf16.mxu0 0
        %3372 = vmatpush1.bf16.msra.mxu0 0
        %3373 = vmatprep.subr.bf16.mxu0 0
        %3374 = vmatpush1.bf16.msra.mxu0 0
        %3375 = vmatprep.subr.bf16.mxu0 0
        %3376 = vmatpush1.bf16.msra.mxu0 0
        %3377 = vmatprep.mubr.bf16.mxu0 0
        %3378 = vmatmul.mubr.bf16.gmra.mrb[0].mxu0 %v3343
        %v3379 = vpop.f32.mrb[0].mxu0
        %v3380 = vadd.f32 %v953, %v3379
        %v3381 = vpop.f32.mrb[0].mxu0
        %v3382 = vpop.f32.mrb[0].mxu0
        %v3383 = vadd.f32 %v953, %v3382
        %v3384 = vpop.f32.mrb[0].mxu0
        %3385 = vdwg.mxu0
        %v3386 = vmax.f32 %v3380, 0.0
        %v3387 = vmax.f32 %v3383, 0.0
        %v3388 = vsel %vm2866, %v3386, 0.0
        %v3389 = vsel %vm2867, %v3387, 0.0
        %v3390 = vpack.c.bf16 %v3324, %v3323
        %v3391 = vpack.c.bf16 %v3326, %v3325
        %v3392 = vpack.c.bf16 %v3328, %v3327
        %v3393 = vpack.c.bf16 %v3330, %v3329
        %v3394 = vpack.c.bf16 %v3332, %v3331
        %v3395 = vpack.c.bf16 %v3334, %v3333
        %v3396 = vpack.c.bf16 %v3336, %v3335
        %v3397 = vpack.c.bf16 %v3389, %v3388
        %3398 = vrot.lane.b32.xlu0 %v1044, 120
        %v3399 = vpop.permute.xlu0 %3398
        %3400 = vrot.lane.b32.xlu0 %v1093, 120
        %v3401 = vpop.permute.xlu0 %3400
        %3402 = vrot.lane.b32.xlu0 %v1142, 120
        %v3403 = vpop.permute.xlu0 %3402
        %3404 = vrot.lane.b32.xlu0 %v1191, 120
        %v3405 = vpop.permute.xlu0 %3404
        %3406 = vrot.lane.b32.xlu0 %v1232, 120
        %v3407 = vpop.permute.xlu0 %3406
        %v3409 = vsel %vm1255, %v3399, 0
        %v3412 = vsel %vm1255, %v3401, 0
        %v3415 = vsel %vm1255, %v3403, 0
        %v3418 = vsel %vm1255, %v3405, 0
        %v3421 = vsel %vm1255, %v3407, 0
        %3423 = vmatprep.subr.bf16.mxu0 0
        %3424 = vmatpush1.bf16.msra.mxu0 %v1276
        %3425 = vmatprep.subr.bf16.mxu0 0
        %3426 = vmatpush1.bf16.msra.mxu0 0
        %3427 = vmatprep.subr.bf16.mxu0 0
        %3428 = vmatpush1.bf16.msra.mxu0 0
        %3429 = vmatprep.subr.bf16.mxu0 0
        %3430 = vmatpush1.bf16.msra.mxu0 0
        %3431 = vmatprep.subr.bf16.mxu0 0
        %3432 = vmatpush1.bf16.msra.mxu0 0
        %3433 = vmatprep.subr.bf16.mxu0 0
        %3434 = vmatpush1.bf16.msra.mxu0 0
        %3435 = vmatprep.subr.bf16.mxu0 0
        %3436 = vmatpush1.bf16.msra.mxu0 0
        %3437 = vmatprep.subr.bf16.mxu0 0
        %3438 = vmatpush1.bf16.msra.mxu0 0
        %3439 = vmatprep.subr.bf16.mxu0 0
        %3440 = vmatpush1.bf16.msra.mxu0 0
        %3441 = vmatprep.subr.bf16.mxu0 0
        %3442 = vmatpush1.bf16.msra.mxu0 0
        %3443 = vmatprep.subr.bf16.mxu0 0
        %3444 = vmatpush1.bf16.msra.mxu0 0
        %3445 = vmatprep.subr.bf16.mxu0 0
        %3446 = vmatpush1.bf16.msra.mxu0 0
        %3447 = vmatprep.subr.bf16.mxu0 0
        %3448 = vmatpush1.bf16.msra.mxu0 0
        %3449 = vmatprep.subr.bf16.mxu0 0
        %3450 = vmatpush1.bf16.msra.mxu0 0
        %3451 = vmatprep.subr.bf16.mxu0 0
        %3452 = vmatpush1.bf16.msra.mxu0 0
        %3453 = vmatprep.subr.bf16.mxu0 0
        %3454 = vmatpush1.bf16.msra.mxu0 0
        %3455 = vmatprep.mubr.bf16.mxu0 0
        %3456 = vmatmul.mubr.bf16.gmra.mrb[0].mxu0 %v3409
        %v3457 = vpop.f32.mrb[0].mxu0
        %v3458 = vadd.f32 %v953, %v3457
        %v3459 = vpop.f32.mrb[0].mxu0
        %v3460 = vpop.f32.mrb[0].mxu0
        %v3461 = vadd.f32 %v953, %v3460
        %v3462 = vpop.f32.mrb[0].mxu0
        %3463 = vmatprep.mubr.bf16.mxu0 0
        %3464 = vmatmul.mubr.bf16.gmra.mrb[0].mxu0 %v3412
        %v3465 = vpop.f32.mrb[0].mxu0
        %v3466 = vadd.f32 %v953, %v3465
        %v3467 = vpop.f32.mrb[0].mxu0
        %v3468 = vpop.f32.mrb[0].mxu0
        %v3469 = vadd.f32 %v953, %v3468
        %v3470 = vpop.f32.mrb[0].mxu0
        %3471 = vmatprep.mubr.bf16.mxu0 0
        %3472 = vmatmul.mubr.bf16.gmra.mrb[0].mxu0 %v3415
        %v3473 = vpop.f32.mrb[0].mxu0
        %v3474 = vadd.f32 %v953, %v3473
        %v3475 = vpop.f32.mrb[0].mxu0
        %v3476 = vpop.f32.mrb[0].mxu0
        %v3477 = vadd.f32 %v953, %v3476
        %v3478 = vpop.f32.mrb[0].mxu0
        %3479 = vmatprep.mubr.bf16.mxu0 0
        %3480 = vmatmul.mubr.bf16.gmra.mrb[0].mxu0 %v3418
        %v3481 = vpop.f32.mrb[0].mxu0
        %v3482 = vadd.f32 %v953, %v3481
        %v3483 = vpop.f32.mrb[0].mxu0
        %v3484 = vpop.f32.mrb[0].mxu0
        %v3485 = vadd.f32 %v953, %v3484
        %v3486 = vpop.f32.mrb[0].mxu0
        %3487 = vmatprep.mubr.bf16.mxu0 0
        %3488 = vmatmul.mubr.bf16.gmra.mrb[0].mxu0 %v3421
        %v3489 = vpop.f32.mrb[0].mxu0
        %v3490 = vadd.f32 %v953, %v3489
        %v3491 = vpop.f32.mrb[0].mxu0
        %v3492 = vpop.f32.mrb[0].mxu0
        %v3493 = vpop.f32.mrb[0].mxu0
        %3494 = vdwg.mxu0
        %v3495 = vmax.f32 %v3458, 0.0
        %v3496 = vmax.f32 %v3461, 0.0
        %v3497 = vmax.f32 %v3466, 0.0
        %v3498 = vmax.f32 %v3469, 0.0
        %v3499 = vmax.f32 %v3474, 0.0
        %v3500 = vmax.f32 %v3477, 0.0
        %v3501 = vmax.f32 %v3482, 0.0
        %v3502 = vmax.f32 %v3485, 0.0
        %v3503 = vmax.f32 %v3490, 0.0
        %v3513 = vcombine.high %v3495, %v3495
        %v3515 = vunpack.c.l.s4 1966171168
        %v3516 = vunpack.c.0.s8 %v3515
        %v3517 = vlaneseq
        %v3518 = vshrl.u32 %v3517, 7
        %v3519 = vsub.s32 %v3516, %v3518
        %v3520 = vrot.slane %v3495, %v3519
        %v3522 = vunpack.c.l.s4 1966171168
        %v3523 = vunpack.c.0.s8 %v3522
        %v3524 = vlaneseq
        %v3525 = vshrl.u32 %v3524, 7
        %v3526 = vsub.s32 %v3523, %v3525
        %v3527 = vrot.slane %v3513, %v3526
        %v3528 = vcombine.high %v3520, %v3520
        %v3529 = vcombine.high %v3527, %v3527
        %v3531 = vunpack.c.l.s4 1966171168
        %v3532 = vunpack.c.0.s8 %v3531
        %v3533 = vlaneseq
        %v3534 = vshrl.u32 %v3533, 7
        %v3535 = vsub.s32 %v3532, %v3534
        %v3536 = vrot.slane %v3520, %v3535
        %v3538 = vunpack.c.l.s4 1966171168
        %v3539 = vunpack.c.0.s8 %v3538
        %v3540 = vlaneseq
        %v3541 = vshrl.u32 %v3540, 7
        %v3542 = vsub.s32 %v3539, %v3541
        %v3543 = vrot.slane %v3527, %v3542
        %v3545 = vunpack.c.l.s4 1966171168
        %v3546 = vunpack.c.0.s8 %v3545
        %v3547 = vlaneseq
        %v3548 = vshrl.u32 %v3547, 7
        %v3549 = vsub.s32 %v3546, %v3548
        %v3550 = vrot.slane %v3528, %v3549
        %v3552 = vunpack.c.l.s4 1966171168
        %v3553 = vunpack.c.0.s8 %v3552
        %v3554 = vlaneseq
        %v3555 = vshrl.u32 %v3554, 7
        %v3556 = vsub.s32 %v3553, %v3555
        %v3557 = vrot.slane %v3529, %v3556
        %v3558 = vcombine.high %v3536, %v3536
        %v3559 = vcombine.high %v3543, %v3543
        %v3560 = vcombine.high %v3550, %v3550
        %v3561 = vcombine.high %v3557, %v3557
        %v3562 = vcombine.high %v3496, %v3496
        %v3564 = vunpack.c.l.s4 1966171168
        %v3565 = vunpack.c.0.s8 %v3564
        %v3566 = vlaneseq
        %v3567 = vshrl.u32 %v3566, 7
        %v3568 = vsub.s32 %v3565, %v3567
        %v3569 = vrot.slane %v3496, %v3568
        %v3571 = vunpack.c.l.s4 1966171168
        %v3572 = vunpack.c.0.s8 %v3571
        %v3573 = vlaneseq
        %v3574 = vshrl.u32 %v3573, 7
        %v3575 = vsub.s32 %v3572, %v3574
        %v3576 = vrot.slane %v3562, %v3575
        %v3577 = vcombine.high %v3569, %v3569
        %v3578 = vcombine.high %v3576, %v3576
        %v3580 = vunpack.c.l.s4 1966171168
        %v3581 = vunpack.c.0.s8 %v3580
        %v3582 = vlaneseq
        %v3583 = vshrl.u32 %v3582, 7
        %v3584 = vsub.s32 %v3581, %v3583
        %v3585 = vrot.slane %v3569, %v3584
        %v3587 = vunpack.c.l.s4 1966171168
        %v3588 = vunpack.c.0.s8 %v3587
        %v3589 = vlaneseq
        %v3590 = vshrl.u32 %v3589, 7
        %v3591 = vsub.s32 %v3588, %v3590
        %v3592 = vrot.slane %v3576, %v3591
        %v3594 = vunpack.c.l.s4 1966171168
        %v3595 = vunpack.c.0.s8 %v3594
        %v3596 = vlaneseq
        %v3597 = vshrl.u32 %v3596, 7
        %v3598 = vsub.s32 %v3595, %v3597
        %v3599 = vrot.slane %v3577, %v3598
        %v3601 = vunpack.c.l.s4 1966171168
        %v3602 = vunpack.c.0.s8 %v3601
        %v3603 = vlaneseq
        %v3604 = vshrl.u32 %v3603, 7
        %v3605 = vsub.s32 %v3602, %v3604
        %v3606 = vrot.slane %v3578, %v3605
        %v3607 = vcombine.high %v3585, %v3585
        %v3608 = vcombine.high %v3592, %v3592
        %v3609 = vcombine.high %v3599, %v3599
        %v3610 = vcombine.high %v3606, %v3606
        %v3611 = vcombine.high %v3497, %v3497
        %v3613 = vunpack.c.l.s4 1966171168
        %v3614 = vunpack.c.0.s8 %v3613
        %v3615 = vlaneseq
        %v3616 = vshrl.u32 %v3615, 7
        %v3617 = vsub.s32 %v3614, %v3616
        %v3618 = vrot.slane %v3497, %v3617
        %v3620 = vunpack.c.l.s4 1966171168
        %v3621 = vunpack.c.0.s8 %v3620
        %v3622 = vlaneseq
        %v3623 = vshrl.u32 %v3622, 7
        %v3624 = vsub.s32 %v3621, %v3623
        %v3625 = vrot.slane %v3611, %v3624
        %v3626 = vcombine.high %v3618, %v3618
        %v3627 = vcombine.high %v3625, %v3625
        %v3629 = vunpack.c.l.s4 1966171168
        %v3630 = vunpack.c.0.s8 %v3629
        %v3631 = vlaneseq
        %v3632 = vshrl.u32 %v3631, 7
        %v3633 = vsub.s32 %v3630, %v3632
        %v3634 = vrot.slane %v3618, %v3633
        %v3636 = vunpack.c.l.s4 1966171168
        %v3637 = vunpack.c.0.s8 %v3636
        %v3638 = vlaneseq
        %v3639 = vshrl.u32 %v3638, 7
        %v3640 = vsub.s32 %v3637, %v3639
        %v3641 = vrot.slane %v3625, %v3640
        %v3643 = vunpack.c.l.s4 1966171168
        %v3644 = vunpack.c.0.s8 %v3643
        %v3645 = vlaneseq
        %v3646 = vshrl.u32 %v3645, 7
        %v3647 = vsub.s32 %v3644, %v3646
        %v3648 = vrot.slane %v3626, %v3647
        %v3650 = vunpack.c.l.s4 1966171168
        %v3651 = vunpack.c.0.s8 %v3650
        %v3652 = vlaneseq
        %v3653 = vshrl.u32 %v3652, 7
        %v3654 = vsub.s32 %v3651, %v3653
        %v3655 = vrot.slane %v3627, %v3654
        %v3656 = vcombine.high %v3634, %v3634
        %v3657 = vcombine.high %v3641, %v3641
        %v3658 = vcombine.high %v3648, %v3648
        %v3659 = vcombine.high %v3655, %v3655
        %v3660 = vcombine.high %v3498, %v3498
        %v3662 = vunpack.c.l.s4 1966171168
        %v3663 = vunpack.c.0.s8 %v3662
        %v3664 = vlaneseq
        %v3665 = vshrl.u32 %v3664, 7
        %v3666 = vsub.s32 %v3663, %v3665
        %v3667 = vrot.slane %v3498, %v3666
        %v3669 = vunpack.c.l.s4 1966171168
        %v3670 = vunpack.c.0.s8 %v3669
        %v3671 = vlaneseq
        %v3672 = vshrl.u32 %v3671, 7
        %v3673 = vsub.s32 %v3670, %v3672
        %v3674 = vrot.slane %v3660, %v3673
        %v3675 = vcombine.high %v3667, %v3667
        %v3676 = vcombine.high %v3674, %v3674
        %v3678 = vunpack.c.l.s4 1966171168
        %v3679 = vunpack.c.0.s8 %v3678
        %v3680 = vlaneseq
        %v3681 = vshrl.u32 %v3680, 7
        %v3682 = vsub.s32 %v3679, %v3681
        %v3683 = vrot.slane %v3667, %v3682
        %v3685 = vunpack.c.l.s4 1966171168
        %v3686 = vunpack.c.0.s8 %v3685
        %v3687 = vlaneseq
        %v3688 = vshrl.u32 %v3687, 7
        %v3689 = vsub.s32 %v3686, %v3688
        %v3690 = vrot.slane %v3674, %v3689
        %v3692 = vunpack.c.l.s4 1966171168
        %v3693 = vunpack.c.0.s8 %v3692
        %v3694 = vlaneseq
        %v3695 = vshrl.u32 %v3694, 7
        %v3696 = vsub.s32 %v3693, %v3695
        %v3697 = vrot.slane %v3675, %v3696
        %v3699 = vunpack.c.l.s4 1966171168
        %v3700 = vunpack.c.0.s8 %v3699
        %v3701 = vlaneseq
        %v3702 = vshrl.u32 %v3701, 7
        %v3703 = vsub.s32 %v3700, %v3702
        %v3704 = vrot.slane %v3676, %v3703
        %v3705 = vcombine.high %v3683, %v3683
        %v3706 = vcombine.high %v3690, %v3690
        %v3707 = vcombine.high %v3697, %v3697
        %v3708 = vcombine.high %v3704, %v3704
        %v3709 = vcombine.high %v3499, %v3499
        %v3711 = vunpack.c.l.s4 1966171168
        %v3712 = vunpack.c.0.s8 %v3711
        %v3713 = vlaneseq
        %v3714 = vshrl.u32 %v3713, 7
        %v3715 = vsub.s32 %v3712, %v3714
        %v3716 = vrot.slane %v3499, %v3715
        %v3718 = vunpack.c.l.s4 1966171168
        %v3719 = vunpack.c.0.s8 %v3718
        %v3720 = vlaneseq
        %v3721 = vshrl.u32 %v3720, 7
        %v3722 = vsub.s32 %v3719, %v3721
        %v3723 = vrot.slane %v3709, %v3722
        %v3724 = vcombine.high %v3716, %v3716
        %v3725 = vcombine.high %v3723, %v3723
        %v3727 = vunpack.c.l.s4 1966171168
        %v3728 = vunpack.c.0.s8 %v3727
        %v3729 = vlaneseq
        %v3730 = vshrl.u32 %v3729, 7
        %v3731 = vsub.s32 %v3728, %v3730
        %v3732 = vrot.slane %v3716, %v3731
        %v3734 = vunpack.c.l.s4 1966171168
        %v3735 = vunpack.c.0.s8 %v3734
        %v3736 = vlaneseq
        %v3737 = vshrl.u32 %v3736, 7
        %v3738 = vsub.s32 %v3735, %v3737
        %v3739 = vrot.slane %v3723, %v3738
        %v3741 = vunpack.c.l.s4 1966171168
        %v3742 = vunpack.c.0.s8 %v3741
        %v3743 = vlaneseq
        %v3744 = vshrl.u32 %v3743, 7
        %v3745 = vsub.s32 %v3742, %v3744
        %v3746 = vrot.slane %v3724, %v3745
        %v3748 = vunpack.c.l.s4 1966171168
        %v3749 = vunpack.c.0.s8 %v3748
        %v3750 = vlaneseq
        %v3751 = vshrl.u32 %v3750, 7
        %v3752 = vsub.s32 %v3749, %v3751
        %v3753 = vrot.slane %v3725, %v3752
        %v3754 = vcombine.high %v3732, %v3732
        %v3755 = vcombine.high %v3739, %v3739
        %v3756 = vcombine.high %v3746, %v3746
        %v3757 = vcombine.high %v3753, %v3753
        %v3758 = vcombine.high %v3500, %v3500
        %v3760 = vunpack.c.l.s4 1966171168
        %v3761 = vunpack.c.0.s8 %v3760
        %v3762 = vlaneseq
        %v3763 = vshrl.u32 %v3762, 7
        %v3764 = vsub.s32 %v3761, %v3763
        %v3765 = vrot.slane %v3500, %v3764
        %v3767 = vunpack.c.l.s4 1966171168
        %v3768 = vunpack.c.0.s8 %v3767
        %v3769 = vlaneseq
        %v3770 = vshrl.u32 %v3769, 7
        %v3771 = vsub.s32 %v3768, %v3770
        %v3772 = vrot.slane %v3758, %v3771
        %v3773 = vcombine.high %v3765, %v3765
        %v3774 = vcombine.high %v3772, %v3772
        %v3776 = vunpack.c.l.s4 1966171168
        %v3777 = vunpack.c.0.s8 %v3776
        %v3778 = vlaneseq
        %v3779 = vshrl.u32 %v3778, 7
        %v3780 = vsub.s32 %v3777, %v3779
        %v3781 = vrot.slane %v3765, %v3780
        %v3783 = vunpack.c.l.s4 1966171168
        %v3784 = vunpack.c.0.s8 %v3783
        %v3785 = vlaneseq
        %v3786 = vshrl.u32 %v3785, 7
        %v3787 = vsub.s32 %v3784, %v3786
        %v3788 = vrot.slane %v3772, %v3787
        %v3790 = vunpack.c.l.s4 1966171168
        %v3791 = vunpack.c.0.s8 %v3790
        %v3792 = vlaneseq
        %v3793 = vshrl.u32 %v3792, 7
        %v3794 = vsub.s32 %v3791, %v3793
        %v3795 = vrot.slane %v3773, %v3794
        %v3797 = vunpack.c.l.s4 1966171168
        %v3798 = vunpack.c.0.s8 %v3797
        %v3799 = vlaneseq
        %v3800 = vshrl.u32 %v3799, 7
        %v3801 = vsub.s32 %v3798, %v3800
        %v3802 = vrot.slane %v3774, %v3801
        %v3803 = vcombine.high %v3781, %v3781
        %v3804 = vcombine.high %v3788, %v3788
        %v3805 = vcombine.high %v3795, %v3795
        %v3806 = vcombine.high %v3802, %v3802
        %v3807 = vcombine.high %v3501, %v3501
        %v3809 = vunpack.c.l.s4 1966171168
        %v3810 = vunpack.c.0.s8 %v3809
        %v3811 = vlaneseq
        %v3812 = vshrl.u32 %v3811, 7
        %v3813 = vsub.s32 %v3810, %v3812
        %v3814 = vrot.slane %v3501, %v3813
        %v3816 = vunpack.c.l.s4 1966171168
        %v3817 = vunpack.c.0.s8 %v3816
        %v3818 = vlaneseq
        %v3819 = vshrl.u32 %v3818, 7
        %v3820 = vsub.s32 %v3817, %v3819
        %v3821 = vrot.slane %v3807, %v3820
        %v3822 = vcombine.high %v3814, %v3814
        %v3823 = vcombine.high %v3821, %v3821
        %v3825 = vunpack.c.l.s4 1966171168
        %v3826 = vunpack.c.0.s8 %v3825
        %v3827 = vlaneseq
        %v3828 = vshrl.u32 %v3827, 7
        %v3829 = vsub.s32 %v3826, %v3828
        %v3830 = vrot.slane %v3814, %v3829
        %v3832 = vunpack.c.l.s4 1966171168
        %v3833 = vunpack.c.0.s8 %v3832
        %v3834 = vlaneseq
        %v3835 = vshrl.u32 %v3834, 7
        %v3836 = vsub.s32 %v3833, %v3835
        %v3837 = vrot.slane %v3821, %v3836
        %v3839 = vunpack.c.l.s4 1966171168
        %v3840 = vunpack.c.0.s8 %v3839
        %v3841 = vlaneseq
        %v3842 = vshrl.u32 %v3841, 7
        %v3843 = vsub.s32 %v3840, %v3842
        %v3844 = vrot.slane %v3822, %v3843
        %v3846 = vunpack.c.l.s4 1966171168
        %v3847 = vunpack.c.0.s8 %v3846
        %v3848 = vlaneseq
        %v3849 = vshrl.u32 %v3848, 7
        %v3850 = vsub.s32 %v3847, %v3849
        %v3851 = vrot.slane %v3823, %v3850
        %v3852 = vcombine.high %v3830, %v3830
        %v3853 = vcombine.high %v3837, %v3837
        %v3854 = vcombine.high %v3844, %v3844
        %v3855 = vcombine.high %v3851, %v3851
        %v3856 = vcombine.high %v3502, %v3502
        %v3858 = vunpack.c.l.s4 1966171168
        %v3859 = vunpack.c.0.s8 %v3858
        %v3860 = vlaneseq
        %v3861 = vshrl.u32 %v3860, 7
        %v3862 = vsub.s32 %v3859, %v3861
        %v3863 = vrot.slane %v3502, %v3862
        %v3865 = vunpack.c.l.s4 1966171168
        %v3866 = vunpack.c.0.s8 %v3865
        %v3867 = vlaneseq
        %v3868 = vshrl.u32 %v3867, 7
        %v3869 = vsub.s32 %v3866, %v3868
        %v3870 = vrot.slane %v3856, %v3869
        %v3871 = vcombine.high %v3863, %v3863
        %v3872 = vcombine.high %v3870, %v3870
        %v3874 = vunpack.c.l.s4 1966171168
        %v3875 = vunpack.c.0.s8 %v3874
        %v3876 = vlaneseq
        %v3877 = vshrl.u32 %v3876, 7
        %v3878 = vsub.s32 %v3875, %v3877
        %v3879 = vrot.slane %v3863, %v3878
        %v3881 = vunpack.c.l.s4 1966171168
        %v3882 = vunpack.c.0.s8 %v3881
        %v3883 = vlaneseq
        %v3884 = vshrl.u32 %v3883, 7
        %v3885 = vsub.s32 %v3882, %v3884
        %v3886 = vrot.slane %v3870, %v3885
        %v3888 = vunpack.c.l.s4 1966171168
        %v3889 = vunpack.c.0.s8 %v3888
        %v3890 = vlaneseq
        %v3891 = vshrl.u32 %v3890, 7
        %v3892 = vsub.s32 %v3889, %v3891
        %v3893 = vrot.slane %v3871, %v3892
        %v3895 = vunpack.c.l.s4 1966171168
        %v3896 = vunpack.c.0.s8 %v3895
        %v3897 = vlaneseq
        %v3898 = vshrl.u32 %v3897, 7
        %v3899 = vsub.s32 %v3896, %v3898
        %v3900 = vrot.slane %v3872, %v3899
        %v3901 = vcombine.high %v3879, %v3879
        %v3902 = vcombine.high %v3886, %v3886
        %v3903 = vcombine.high %v3893, %v3893
        %v3904 = vcombine.high %v3900, %v3900
        %v3905 = vcombine.high %v3503, %v3503
        %v3907 = vunpack.c.l.s4 1966171168
        %v3908 = vunpack.c.0.s8 %v3907
        %v3909 = vlaneseq
        %v3910 = vshrl.u32 %v3909, 7
        %v3911 = vsub.s32 %v3908, %v3910
        %v3912 = vrot.slane %v3503, %v3911
        %v3914 = vunpack.c.l.s4 1966171168
        %v3915 = vunpack.c.0.s8 %v3914
        %v3916 = vlaneseq
        %v3917 = vshrl.u32 %v3916, 7
        %v3918 = vsub.s32 %v3915, %v3917
        %v3919 = vrot.slane %v3905, %v3918
        %v3920 = vcombine.high %v3912, %v3912
        %v3921 = vcombine.high %v3919, %v3919
        %v3923 = vunpack.c.l.s4 1966171168
        %v3924 = vunpack.c.0.s8 %v3923
        %v3925 = vlaneseq
        %v3926 = vshrl.u32 %v3925, 7
        %v3927 = vsub.s32 %v3924, %v3926
        %v3928 = vrot.slane %v3912, %v3927
        %v3930 = vunpack.c.l.s4 1966171168
        %v3931 = vunpack.c.0.s8 %v3930
        %v3932 = vlaneseq
        %v3933 = vshrl.u32 %v3932, 7
        %v3934 = vsub.s32 %v3931, %v3933
        %v3935 = vrot.slane %v3919, %v3934
        %v3937 = vunpack.c.l.s4 1966171168
        %v3938 = vunpack.c.0.s8 %v3937
        %v3939 = vlaneseq
        %v3940 = vshrl.u32 %v3939, 7
        %v3941 = vsub.s32 %v3938, %v3940
        %v3942 = vrot.slane %v3920, %v3941
        %v3944 = vunpack.c.l.s4 1966171168
        %v3945 = vunpack.c.0.s8 %v3944
        %v3946 = vlaneseq
        %v3947 = vshrl.u32 %v3946, 7
        %v3948 = vsub.s32 %v3945, %v3947
        %v3949 = vrot.slane %v3921, %v3948
        %v3950 = vcombine.high %v3928, %v3928
        %v3951 = vcombine.high %v3935, %v3935
        %v3952 = vcombine.high %v3942, %v3942
        %v3953 = vcombine.high %v3949, %v3949
        %v4026 = vsel %vm482, 1, 0
        %v4027 = vsel %vm483, 1, 0
        %v4028 = vsel %vm484, 1, 0
        %v4029 = vsel %vm485, 1, 0
        %v4030 = vsel %vm486, 1, 0
        %v4031 = vsel %vm487, 1, 0
        %v4032 = vsel %vm488, 1, 0
        %v4033 = vsel %vm489, 1, 0
        %vm4034 = vcmp.eq.s32.totalorder %v4026, 1
        %vm4035 = vcmp.eq.s32.totalorder %v4027, 1
        %vm4036 = vcmp.eq.s32.totalorder %v4028, 1
        %vm4037 = vcmp.eq.s32.totalorder %v4029, 1
        %vm4038 = vcmp.eq.s32.totalorder %v4030, 1
        %vm4039 = vcmp.eq.s32.totalorder %v4031, 1
        %vm4040 = vcmp.eq.s32.totalorder %v4032, 1
        %vm4041 = vcmp.eq.s32.totalorder %v4033, 1
        %v4042 = vsel %vm4034, %v3536, 0.0
        %v4043 = vsel %vm4034, %v3550, 0.0
        %v4044 = vsel %vm4034, %v3558, 0.0
        %v4045 = vsel %vm4034, %v3560, 0.0
        %v4046 = vsel %vm4034, %v3543, 0.0
        %v4047 = vsel %vm4034, %v3557, 0.0
        %v4048 = vsel %vm4034, %v3559, 0.0
        %v4049 = vsel %vm4034, %v3561, 0.0
        %v4050 = vsel %vm4034, %v3585, 0.0
        %v4051 = vsel %vm4035, %v3599, 0.0
        %v4052 = vsel %vm4035, %v3607, 0.0
        %v4053 = vsel %vm4035, %v3609, 0.0
        %v4054 = vsel %vm4035, %v3592, 0.0
        %v4055 = vsel %vm4035, %v3606, 0.0
        %v4056 = vsel %vm4035, %v3608, 0.0
        %v4057 = vsel %vm4035, %v3610, 0.0
        %v4058 = vsel %vm4035, %v3634, 0.0
        %v4059 = vsel %vm4035, %v3648, 0.0
        %v4060 = vsel %vm4036, %v3656, 0.0
        %v4061 = vsel %vm4036, %v3658, 0.0
        %v4062 = vsel %vm4036, %v3641, 0.0
        %v4063 = vsel %vm4036, %v3655, 0.0
        %v4064 = vsel %vm4036, %v3657, 0.0
        %v4065 = vsel %vm4036, %v3659, 0.0
        %v4066 = vsel %vm4036, %v3683, 0.0
        %v4067 = vsel %vm4036, %v3697, 0.0
        %v4068 = vsel %vm4036, %v3705, 0.0
        %v4069 = vsel %vm4037, %v3707, 0.0
        %v4070 = vsel %vm4037, %v3690, 0.0
        %v4071 = vsel %vm4037, %v3704, 0.0
        %v4072 = vsel %vm4037, %v3706, 0.0
        %v4073 = vsel %vm4037, %v3708, 0.0
        %v4074 = vsel %vm4037, %v3732, 0.0
        %v4075 = vsel %vm4037, %v3746, 0.0
        %v4076 = vsel %vm4037, %v3754, 0.0
        %v4077 = vsel %vm4037, %v3756, 0.0
        %v4078 = vsel %vm4038, %v3739, 0.0
        %v4079 = vsel %vm4038, %v3753, 0.0
        %v4080 = vsel %vm4038, %v3755, 0.0
        %v4081 = vsel %vm4038, %v3757, 0.0
        %v4082 = vsel %vm4038, %v3781, 0.0
        %v4083 = vsel %vm4038, %v3795, 0.0
        %v4084 = vsel %vm4038, %v3803, 0.0
        %v4085 = vsel %vm4038, %v3805, 0.0
        %v4086 = vsel %vm4038, %v3788, 0.0
        %v4087 = vsel %vm4039, %v3802, 0.0
        %v4088 = vsel %vm4039, %v3804, 0.0
        %v4089 = vsel %vm4039, %v3806, 0.0
        %v4090 = vsel %vm4039, %v3830, 0.0
        %v4091 = vsel %vm4039, %v3844, 0.0
        %v4092 = vsel %vm4039, %v3852, 0.0
        %v4093 = vsel %vm4039, %v3854, 0.0
        %v4094 = vsel %vm4039, %v3837, 0.0
        %v4095 = vsel %vm4039, %v3851, 0.0
        %v4096 = vsel %vm4040, %v3853, 0.0
        %v4097 = vsel %vm4040, %v3855, 0.0
        %v4098 = vsel %vm4040, %v3879, 0.0
        %v4099 = vsel %vm4040, %v3893, 0.0
        %v4100 = vsel %vm4040, %v3901, 0.0
        %v4101 = vsel %vm4040, %v3903, 0.0
        %v4102 = vsel %vm4040, %v3886, 0.0
        %v4103 = vsel %vm4040, %v3900, 0.0
        %v4104 = vsel %vm4040, %v3902, 0.0
        %v4105 = vsel %vm4041, %v3904, 0.0
        %v4106 = vsel %vm4041, %v3928, 0.0
        %v4107 = vsel %vm4041, %v3942, 0.0
        %v4108 = vsel %vm4041, %v3950, 0.0
        %v4109 = vsel %vm4041, %v3952, 0.0
        %v4110 = vsel %vm4041, %v3935, 0.0
        %v4111 = vsel %vm4041, %v3949, 0.0
        %v4112 = vsel %vm4041, %v3951, 0.0
        %v4113 = vsel %vm4041, %v3953, 0.0
        %4114 = vrot.lane.b32.xlu0 %v3339, 120
        %v4115 = vpop.permute.xlu0 %4114
        %v4117 = vsel %vm1255, %v4115, 0
        %4119 = vmatprep.subr.bf16.mxu0 0
        %4120 = vmatpush1.bf16.msra.mxu0 %v1276
        %4121 = vmatprep.subr.bf16.mxu0 0
        %4122 = vmatpush1.bf16.msra.mxu0 0
        %4123 = vmatprep.subr.bf16.mxu0 0
        %4124 = vmatpush1.bf16.msra.mxu0 0
        %4125 = vmatprep.subr.bf16.mxu0 0
        %4126 = vmatpush1.bf16.msra.mxu0 0
        %4127 = vmatprep.subr.bf16.mxu0 0
        %4128 = vmatpush1.bf16.msra.mxu0 0
        %4129 = vmatprep.subr.bf16.mxu0 0
        %4130 = vmatpush1.bf16.msra.mxu0 0
        %4131 = vmatprep.subr.bf16.mxu0 0
        %4132 = vmatpush1.bf16.msra.mxu0 0
        %4133 = vmatprep.subr.bf16.mxu0 0
        %4134 = vmatpush1.bf16.msra.mxu0 0
        %4135 = vmatprep.subr.bf16.mxu0 0
        %4136 = vmatpush1.bf16.msra.mxu0 0
        %4137 = vmatprep.subr.bf16.mxu0 0
        %4138 = vmatpush1.bf16.msra.mxu0 0
        %4139 = vmatprep.subr.bf16.mxu0 0
        %4140 = vmatpush1.bf16.msra.mxu0 0
        %4141 = vmatprep.subr.bf16.mxu0 0
        %4142 = vmatpush1.bf16.msra.mxu0 0
        %4143 = vmatprep.subr.bf16.mxu0 0
        %4144 = vmatpush1.bf16.msra.mxu0 0
        %4145 = vmatprep.subr.bf16.mxu0 0
        %4146 = vmatpush1.bf16.msra.mxu0 0
        %4147 = vmatprep.subr.bf16.mxu0 0
        %4148 = vmatpush1.bf16.msra.mxu0 0
        %4149 = vmatprep.subr.bf16.mxu0 0
        %4150 = vmatpush1.bf16.msra.mxu0 0
        %4151 = vmatprep.mubr.bf16.mxu0 0
        %4152 = vmatmul.mubr.bf16.gmra.mrb[0].mxu0 %v4117
        %v4153 = vpop.f32.mrb[0].mxu0
        %v4154 = vadd.f32 %v953, %v4153
        %v4155 = vpop.f32.mrb[0].mxu0
        %v4156 = vpop.f32.mrb[0].mxu0
        %v4157 = vadd.f32 %v953, %v4156
        %v4158 = vpop.f32.mrb[0].mxu0
        %4159 = vdwg.mxu0
        %v4160 = vmax.f32 %v4154, 0.0
        %v4161 = vmax.f32 %v4157, 0.0
        %v4234 = vcombine.low %v4042, %v4043
        %v4235 = vcombine.low %v4044, %v4045
        %v4236 = vcombine.low %v4046, %v4047
        %v4237 = vcombine.low %v4048, %v4049
        %v4239 = vunpack.c.l.s4 1966171168
        %v4240 = vunpack.c.0.s8 %v4239
        %v4241 = vlaneseq
        %v4242 = vshrl.u32 %v4241, 7
        %v4243 = vsub.s32 %v4240, %v4242
        %v4244 = vrot.slane %v4234, %v4243
        %v4246 = vunpack.c.l.s4 1966171168
        %v4247 = vunpack.c.0.s8 %v4246
        %v4248 = vlaneseq
        %v4249 = vshrl.u32 %v4248, 7
        %v4250 = vsub.s32 %v4247, %v4249
        %v4251 = vrot.slane %v4235, %v4250
        %v4253 = vunpack.c.l.s4 1966171168
        %v4254 = vunpack.c.0.s8 %v4253
        %v4255 = vlaneseq
        %v4256 = vshrl.u32 %v4255, 7
        %v4257 = vsub.s32 %v4254, %v4256
        %v4258 = vrot.slane %v4236, %v4257
        %v4260 = vunpack.c.l.s4 1966171168
        %v4261 = vunpack.c.0.s8 %v4260
        %v4262 = vlaneseq
        %v4263 = vshrl.u32 %v4262, 7
        %v4264 = vsub.s32 %v4261, %v4263
        %v4265 = vrot.slane %v4237, %v4264
        %v4266 = vcombine.low %v4244, %v4251
        %v4267 = vcombine.low %v4258, %v4265
        %v4269 = vunpack.c.l.s4 1966171168
        %v4270 = vunpack.c.0.s8 %v4269
        %v4271 = vlaneseq
        %v4272 = vshrl.u32 %v4271, 7
        %v4273 = vsub.s32 %v4270, %v4272
        %v4274 = vrot.slane %v4266, %v4273
        %v4276 = vunpack.c.l.s4 1966171168
        %v4277 = vunpack.c.0.s8 %v4276
        %v4278 = vlaneseq
        %v4279 = vshrl.u32 %v4278, 7
        %v4280 = vsub.s32 %v4277, %v4279
        %v4281 = vrot.slane %v4267, %v4280
        %v4282 = vcombine.low %v4274, %v4281
        %v4284 = vunpack.c.l.s4 1966171168
        %v4285 = vunpack.c.0.s8 %v4284
        %v4286 = vlaneseq
        %v4287 = vshrl.u32 %v4286, 7
        %v4288 = vsub.s32 %v4285, %v4287
        %v4289 = vrot.slane %v4050, %v4288
        %v4291 = vunpack.c.l.s4 1966171168
        %v4292 = vunpack.c.0.s8 %v4291
        %v4293 = vlaneseq
        %v4294 = vshrl.u32 %v4293, 7
        %v4295 = vsub.s32 %v4292, %v4294
        %v4296 = vrot.slane %v4289, %v4295
        %v4297 = vcombine.low %v4051, %v4052
        %v4298 = vcombine.low %v4053, %v4054
        %v4299 = vcombine.low %v4055, %v4056
        %v4300 = vcombine.low %v4057, %v4058
        %v4302 = vunpack.c.l.s4 1966171168
        %v4303 = vunpack.c.0.s8 %v4302
        %v4304 = vlaneseq
        %v4305 = vshrl.u32 %v4304, 7
        %v4306 = vsub.s32 %v4303, %v4305
        %v4307 = vrot.slane %v4297, %v4306
        %v4309 = vunpack.c.l.s4 1966171168
        %v4310 = vunpack.c.0.s8 %v4309
        %v4311 = vlaneseq
        %v4312 = vshrl.u32 %v4311, 7
        %v4313 = vsub.s32 %v4310, %v4312
        %v4314 = vrot.slane %v4298, %v4313
        %v4316 = vunpack.c.l.s4 1966171168
        %v4317 = vunpack.c.0.s8 %v4316
        %v4318 = vlaneseq
        %v4319 = vshrl.u32 %v4318, 7
        %v4320 = vsub.s32 %v4317, %v4319
        %v4321 = vrot.slane %v4299, %v4320
        %v4323 = vunpack.c.l.s4 1966171168
        %v4324 = vunpack.c.0.s8 %v4323
        %v4325 = vlaneseq
        %v4326 = vshrl.u32 %v4325, 7
        %v4327 = vsub.s32 %v4324, %v4326
        %v4328 = vrot.slane %v4300, %v4327
        %v4329 = vcombine.low %v4307, %v4314
        %v4330 = vcombine.low %v4321, %v4328
        %v4332 = vunpack.c.l.s4 1966171168
        %v4333 = vunpack.c.0.s8 %v4332
        %v4334 = vlaneseq
        %v4335 = vshrl.u32 %v4334, 7
        %v4336 = vsub.s32 %v4333, %v4335
        %v4337 = vrot.slane %v4329, %v4336
        %v4339 = vunpack.c.l.s4 1966171168
        %v4340 = vunpack.c.0.s8 %v4339
        %v4341 = vlaneseq
        %v4342 = vshrl.u32 %v4341, 7
        %v4343 = vsub.s32 %v4340, %v4342
        %v4344 = vrot.slane %v4330, %v4343
        %v4345 = vcombine.low %v4337, %v4344
        %v4347 = vunpack.c.l.s4 1966171168
        %v4348 = vunpack.c.0.s8 %v4347
        %v4349 = vlaneseq
        %v4350 = vshrl.u32 %v4349, 7
        %v4351 = vsub.s32 %v4348, %v4350
        %v4352 = vrot.slane %v4059, %v4351
        %v4354 = vunpack.c.l.s4 1966171168
        %v4355 = vunpack.c.0.s8 %v4354
        %v4356 = vlaneseq
        %v4357 = vshrl.u32 %v4356, 7
        %v4358 = vsub.s32 %v4355, %v4357
        %v4359 = vrot.slane %v4352, %v4358
        %v4360 = vcombine.low %v4060, %v4061
        %v4361 = vcombine.low %v4062, %v4063
        %v4362 = vcombine.low %v4064, %v4065
        %v4363 = vcombine.low %v4066, %v4067
        %v4365 = vunpack.c.l.s4 1966171168
        %v4366 = vunpack.c.0.s8 %v4365
        %v4367 = vlaneseq
        %v4368 = vshrl.u32 %v4367, 7
        %v4369 = vsub.s32 %v4366, %v4368
        %v4370 = vrot.slane %v4360, %v4369
        %v4372 = vunpack.c.l.s4 1966171168
        %v4373 = vunpack.c.0.s8 %v4372
        %v4374 = vlaneseq
        %v4375 = vshrl.u32 %v4374, 7
        %v4376 = vsub.s32 %v4373, %v4375
        %v4377 = vrot.slane %v4361, %v4376
        %v4379 = vunpack.c.l.s4 1966171168
        %v4380 = vunpack.c.0.s8 %v4379
        %v4381 = vlaneseq
        %v4382 = vshrl.u32 %v4381, 7
        %v4383 = vsub.s32 %v4380, %v4382
        %v4384 = vrot.slane %v4362, %v4383
        %v4386 = vunpack.c.l.s4 1966171168
        %v4387 = vunpack.c.0.s8 %v4386
        %v4388 = vlaneseq
        %v4389 = vshrl.u32 %v4388, 7
        %v4390 = vsub.s32 %v4387, %v4389
        %v4391 = vrot.slane %v4363, %v4390
        %v4392 = vcombine.low %v4370, %v4377
        %v4393 = vcombine.low %v4384, %v4391
        %v4395 = vunpack.c.l.s4 1966171168
        %v4396 = vunpack.c.0.s8 %v4395
        %v4397 = vlaneseq
        %v4398 = vshrl.u32 %v4397, 7
        %v4399 = vsub.s32 %v4396, %v4398
        %v4400 = vrot.slane %v4392, %v4399
        %v4402 = vunpack.c.l.s4 1966171168
        %v4403 = vunpack.c.0.s8 %v4402
        %v4404 = vlaneseq
        %v4405 = vshrl.u32 %v4404, 7
        %v4406 = vsub.s32 %v4403, %v4405
        %v4407 = vrot.slane %v4393, %v4406
        %v4408 = vcombine.low %v4400, %v4407
        %v4410 = vunpack.c.l.s4 1966171168
        %v4411 = vunpack.c.0.s8 %v4410
        %v4412 = vlaneseq
        %v4413 = vshrl.u32 %v4412, 7
        %v4414 = vsub.s32 %v4411, %v4413
        %v4415 = vrot.slane %v4068, %v4414
        %v4417 = vunpack.c.l.s4 1966171168
        %v4418 = vunpack.c.0.s8 %v4417
        %v4419 = vlaneseq
        %v4420 = vshrl.u32 %v4419, 7
        %v4421 = vsub.s32 %v4418, %v4420
        %v4422 = vrot.slane %v4415, %v4421
        %v4423 = vcombine.low %v4069, %v4070
        %v4424 = vcombine.low %v4071, %v4072
        %v4425 = vcombine.low %v4073, %v4074
        %v4426 = vcombine.low %v4075, %v4076
        %v4428 = vunpack.c.l.s4 1966171168
        %v4429 = vunpack.c.0.s8 %v4428
        %v4430 = vlaneseq
        %v4431 = vshrl.u32 %v4430, 7
        %v4432 = vsub.s32 %v4429, %v4431
        %v4433 = vrot.slane %v4423, %v4432
        %v4435 = vunpack.c.l.s4 1966171168
        %v4436 = vunpack.c.0.s8 %v4435
        %v4437 = vlaneseq
        %v4438 = vshrl.u32 %v4437, 7
        %v4439 = vsub.s32 %v4436, %v4438
        %v4440 = vrot.slane %v4424, %v4439
        %v4442 = vunpack.c.l.s4 1966171168
        %v4443 = vunpack.c.0.s8 %v4442
        %v4444 = vlaneseq
        %v4445 = vshrl.u32 %v4444, 7
        %v4446 = vsub.s32 %v4443, %v4445
        %v4447 = vrot.slane %v4425, %v4446
        %v4449 = vunpack.c.l.s4 1966171168
        %v4450 = vunpack.c.0.s8 %v4449
        %v4451 = vlaneseq
        %v4452 = vshrl.u32 %v4451, 7
        %v4453 = vsub.s32 %v4450, %v4452
        %v4454 = vrot.slane %v4426, %v4453
        %v4455 = vcombine.low %v4433, %v4440
        %v4456 = vcombine.low %v4447, %v4454
        %v4458 = vunpack.c.l.s4 1966171168
        %v4459 = vunpack.c.0.s8 %v4458
        %v4460 = vlaneseq
        %v4461 = vshrl.u32 %v4460, 7
        %v4462 = vsub.s32 %v4459, %v4461
        %v4463 = vrot.slane %v4455, %v4462
        %v4465 = vunpack.c.l.s4 1966171168
        %v4466 = vunpack.c.0.s8 %v4465
        %v4467 = vlaneseq
        %v4468 = vshrl.u32 %v4467, 7
        %v4469 = vsub.s32 %v4466, %v4468
        %v4470 = vrot.slane %v4456, %v4469
        %v4471 = vcombine.low %v4463, %v4470
        %v4473 = vunpack.c.l.s4 1966171168
        %v4474 = vunpack.c.0.s8 %v4473
        %v4475 = vlaneseq
        %v4476 = vshrl.u32 %v4475, 7
        %v4477 = vsub.s32 %v4474, %v4476
        %v4478 = vrot.slane %v4077, %v4477
        %v4480 = vunpack.c.l.s4 1966171168
        %v4481 = vunpack.c.0.s8 %v4480
        %v4482 = vlaneseq
        %v4483 = vshrl.u32 %v4482, 7
        %v4484 = vsub.s32 %v4481, %v4483
        %v4485 = vrot.slane %v4478, %v4484
        %v4486 = vcombine.low %v4078, %v4079
        %v4487 = vcombine.low %v4080, %v4081
        %v4488 = vcombine.low %v4082, %v4083
        %v4489 = vcombine.low %v4084, %v4085
        %v4491 = vunpack.c.l.s4 1966171168
        %v4492 = vunpack.c.0.s8 %v4491
        %v4493 = vlaneseq
        %v4494 = vshrl.u32 %v4493, 7
        %v4495 = vsub.s32 %v4492, %v4494
        %v4496 = vrot.slane %v4486, %v4495
        %v4498 = vunpack.c.l.s4 1966171168
        %v4499 = vunpack.c.0.s8 %v4498
        %v4500 = vlaneseq
        %v4501 = vshrl.u32 %v4500, 7
        %v4502 = vsub.s32 %v4499, %v4501
        %v4503 = vrot.slane %v4487, %v4502
        %v4505 = vunpack.c.l.s4 1966171168
        %v4506 = vunpack.c.0.s8 %v4505
        %v4507 = vlaneseq
        %v4508 = vshrl.u32 %v4507, 7
        %v4509 = vsub.s32 %v4506, %v4508
        %v4510 = vrot.slane %v4488, %v4509
        %v4512 = vunpack.c.l.s4 1966171168
        %v4513 = vunpack.c.0.s8 %v4512
        %v4514 = vlaneseq
        %v4515 = vshrl.u32 %v4514, 7
        %v4516 = vsub.s32 %v4513, %v4515
        %v4517 = vrot.slane %v4489, %v4516
        %v4518 = vcombine.low %v4496, %v4503
        %v4519 = vcombine.low %v4510, %v4517
        %v4521 = vunpack.c.l.s4 1966171168
        %v4522 = vunpack.c.0.s8 %v4521
        %v4523 = vlaneseq
        %v4524 = vshrl.u32 %v4523, 7
        %v4525 = vsub.s32 %v4522, %v4524
        %v4526 = vrot.slane %v4518, %v4525
        %v4528 = vunpack.c.l.s4 1966171168
        %v4529 = vunpack.c.0.s8 %v4528
        %v4530 = vlaneseq
        %v4531 = vshrl.u32 %v4530, 7
        %v4532 = vsub.s32 %v4529, %v4531
        %v4533 = vrot.slane %v4519, %v4532
        %v4534 = vcombine.low %v4526, %v4533
        %v4536 = vunpack.c.l.s4 1966171168
        %v4537 = vunpack.c.0.s8 %v4536
        %v4538 = vlaneseq
        %v4539 = vshrl.u32 %v4538, 7
        %v4540 = vsub.s32 %v4537, %v4539
        %v4541 = vrot.slane %v4086, %v4540
        %v4543 = vunpack.c.l.s4 1966171168
        %v4544 = vunpack.c.0.s8 %v4543
        %v4545 = vlaneseq
        %v4546 = vshrl.u32 %v4545, 7
        %v4547 = vsub.s32 %v4544, %v4546
        %v4548 = vrot.slane %v4541, %v4547
        %v4549 = vcombine.low %v4087, %v4088
        %v4550 = vcombine.low %v4089, %v4090
        %v4551 = vcombine.low %v4091, %v4092
        %v4552 = vcombine.low %v4093, %v4094
        %v4554 = vunpack.c.l.s4 1966171168
        %v4555 = vunpack.c.0.s8 %v4554
        %v4556 = vlaneseq
        %v4557 = vshrl.u32 %v4556, 7
        %v4558 = vsub.s32 %v4555, %v4557
        %v4559 = vrot.slane %v4549, %v4558
        %v4561 = vunpack.c.l.s4 1966171168
        %v4562 = vunpack.c.0.s8 %v4561
        %v4563 = vlaneseq
        %v4564 = vshrl.u32 %v4563, 7
        %v4565 = vsub.s32 %v4562, %v4564
        %v4566 = vrot.slane %v4550, %v4565
        %v4568 = vunpack.c.l.s4 1966171168
        %v4569 = vunpack.c.0.s8 %v4568
        %v4570 = vlaneseq
        %v4571 = vshrl.u32 %v4570, 7
        %v4572 = vsub.s32 %v4569, %v4571
        %v4573 = vrot.slane %v4551, %v4572
        %v4575 = vunpack.c.l.s4 1966171168
        %v4576 = vunpack.c.0.s8 %v4575
        %v4577 = vlaneseq
        %v4578 = vshrl.u32 %v4577, 7
        %v4579 = vsub.s32 %v4576, %v4578
        %v4580 = vrot.slane %v4552, %v4579
        %v4581 = vcombine.low %v4559, %v4566
        %v4582 = vcombine.low %v4573, %v4580
        %v4584 = vunpack.c.l.s4 1966171168
        %v4585 = vunpack.c.0.s8 %v4584
        %v4586 = vlaneseq
        %v4587 = vshrl.u32 %v4586, 7
        %v4588 = vsub.s32 %v4585, %v4587
        %v4589 = vrot.slane %v4581, %v4588
        %v4591 = vunpack.c.l.s4 1966171168
        %v4592 = vunpack.c.0.s8 %v4591
        %v4593 = vlaneseq
        %v4594 = vshrl.u32 %v4593, 7
        %v4595 = vsub.s32 %v4592, %v4594
        %v4596 = vrot.slane %v4582, %v4595
        %v4597 = vcombine.low %v4589, %v4596
        %v4599 = vunpack.c.l.s4 1966171168
        %v4600 = vunpack.c.0.s8 %v4599
        %v4601 = vlaneseq
        %v4602 = vshrl.u32 %v4601, 7
        %v4603 = vsub.s32 %v4600, %v4602
        %v4604 = vrot.slane %v4095, %v4603
        %v4606 = vunpack.c.l.s4 1966171168
        %v4607 = vunpack.c.0.s8 %v4606
        %v4608 = vlaneseq
        %v4609 = vshrl.u32 %v4608, 7
        %v4610 = vsub.s32 %v4607, %v4609
        %v4611 = vrot.slane %v4604, %v4610
        %v4612 = vcombine.low %v4096, %v4097
        %v4613 = vcombine.low %v4098, %v4099
        %v4614 = vcombine.low %v4100, %v4101
        %v4615 = vcombine.low %v4102, %v4103
        %v4617 = vunpack.c.l.s4 1966171168
        %v4618 = vunpack.c.0.s8 %v4617
        %v4619 = vlaneseq
        %v4620 = vshrl.u32 %v4619, 7
        %v4621 = vsub.s32 %v4618, %v4620
        %v4622 = vrot.slane %v4612, %v4621
        %v4624 = vunpack.c.l.s4 1966171168
        %v4625 = vunpack.c.0.s8 %v4624
        %v4626 = vlaneseq
        %v4627 = vshrl.u32 %v4626, 7
        %v4628 = vsub.s32 %v4625, %v4627
        %v4629 = vrot.slane %v4613, %v4628
        %v4631 = vunpack.c.l.s4 1966171168
        %v4632 = vunpack.c.0.s8 %v4631
        %v4633 = vlaneseq
        %v4634 = vshrl.u32 %v4633, 7
        %v4635 = vsub.s32 %v4632, %v4634
        %v4636 = vrot.slane %v4614, %v4635
        %v4638 = vunpack.c.l.s4 1966171168
        %v4639 = vunpack.c.0.s8 %v4638
        %v4640 = vlaneseq
        %v4641 = vshrl.u32 %v4640, 7
        %v4642 = vsub.s32 %v4639, %v4641
        %v4643 = vrot.slane %v4615, %v4642
        %v4644 = vcombine.low %v4622, %v4629
        %v4645 = vcombine.low %v4636, %v4643
        %v4647 = vunpack.c.l.s4 1966171168
        %v4648 = vunpack.c.0.s8 %v4647
        %v4649 = vlaneseq
        %v4650 = vshrl.u32 %v4649, 7
        %v4651 = vsub.s32 %v4648, %v4650
        %v4652 = vrot.slane %v4644, %v4651
        %v4654 = vunpack.c.l.s4 1966171168
        %v4655 = vunpack.c.0.s8 %v4654
        %v4656 = vlaneseq
        %v4657 = vshrl.u32 %v4656, 7
        %v4658 = vsub.s32 %v4655, %v4657
        %v4659 = vrot.slane %v4645, %v4658
        %v4660 = vcombine.low %v4652, %v4659
        %v4662 = vunpack.c.l.s4 1966171168
        %v4663 = vunpack.c.0.s8 %v4662
        %v4664 = vlaneseq
        %v4665 = vshrl.u32 %v4664, 7
        %v4666 = vsub.s32 %v4663, %v4665
        %v4667 = vrot.slane %v4104, %v4666
        %v4669 = vunpack.c.l.s4 1966171168
        %v4670 = vunpack.c.0.s8 %v4669
        %v4671 = vlaneseq
        %v4672 = vshrl.u32 %v4671, 7
        %v4673 = vsub.s32 %v4670, %v4672
        %v4674 = vrot.slane %v4667, %v4673
        %v4675 = vcombine.low %v4105, %v4106
        %v4676 = vcombine.low %v4107, %v4108
        %v4677 = vcombine.low %v4109, %v4110
        %v4678 = vcombine.low %v4111, %v4112
        %v4680 = vunpack.c.l.s4 1966171168
        %v4681 = vunpack.c.0.s8 %v4680
        %v4682 = vlaneseq
        %v4683 = vshrl.u32 %v4682, 7
        %v4684 = vsub.s32 %v4681, %v4683
        %v4685 = vrot.slane %v4675, %v4684
        %v4687 = vunpack.c.l.s4 1966171168
        %v4688 = vunpack.c.0.s8 %v4687
        %v4689 = vlaneseq
        %v4690 = vshrl.u32 %v4689, 7
        %v4691 = vsub.s32 %v4688, %v4690
        %v4692 = vrot.slane %v4676, %v4691
        %v4694 = vunpack.c.l.s4 1966171168
        %v4695 = vunpack.c.0.s8 %v4694
        %v4696 = vlaneseq
        %v4697 = vshrl.u32 %v4696, 7
        %v4698 = vsub.s32 %v4695, %v4697
        %v4699 = vrot.slane %v4677, %v4698
        %v4701 = vunpack.c.l.s4 1966171168
        %v4702 = vunpack.c.0.s8 %v4701
        %v4703 = vlaneseq
        %v4704 = vshrl.u32 %v4703, 7
        %v4705 = vsub.s32 %v4702, %v4704
        %v4706 = vrot.slane %v4678, %v4705
        %v4707 = vcombine.low %v4685, %v4692
        %v4708 = vcombine.low %v4699, %v4706
        %v4710 = vunpack.c.l.s4 1966171168
        %v4711 = vunpack.c.0.s8 %v4710
        %v4712 = vlaneseq
        %v4713 = vshrl.u32 %v4712, 7
        %v4714 = vsub.s32 %v4711, %v4713
        %v4715 = vrot.slane %v4707, %v4714
        %v4717 = vunpack.c.l.s4 1966171168
        %v4718 = vunpack.c.0.s8 %v4717
        %v4719 = vlaneseq
        %v4720 = vshrl.u32 %v4719, 7
        %v4721 = vsub.s32 %v4718, %v4720
        %v4722 = vrot.slane %v4708, %v4721
        %v4723 = vcombine.low %v4715, %v4722
        %v4725 = vunpack.c.l.s4 1966171168
        %v4726 = vunpack.c.0.s8 %v4725
        %v4727 = vlaneseq
        %v4728 = vshrl.u32 %v4727, 7
        %v4729 = vsub.s32 %v4726, %v4728
        %v4730 = vrot.slane %v4113, %v4729
        %v4732 = vunpack.c.l.s4 1966171168
        %v4733 = vunpack.c.0.s8 %v4732
        %v4734 = vlaneseq
        %v4735 = vshrl.u32 %v4734, 7
        %v4736 = vsub.s32 %v4733, %v4735
        %v4737 = vrot.slane %v4730, %v4736
        %v4754 = vpack.c.bf16 %v4296, %v4282
        %v4755 = vpack.c.bf16 %v4359, %v4345
        %v4756 = vpack.c.bf16 %v4422, %v4408
        %v4757 = vpack.c.bf16 %v4485, %v4471
        %v4758 = vpack.c.bf16 %v4548, %v4534
        %v4759 = vpack.c.bf16 %v4611, %v4597
        %v4760 = vpack.c.bf16 %v4674, %v4660
        %v4761 = vpack.c.bf16 %v4737, %v4723
        %v4762 = vpack.c.bf16 %v4161, %v4160
        %4763 = vrot.lane.b32.xlu0 %v1044, 116
        %v4764 = vpop.permute.xlu0 %4763
        %4765 = vrot.lane.b32.xlu0 %v1093, 116
        %v4766 = vpop.permute.xlu0 %4765
        %4767 = vrot.lane.b32.xlu0 %v1142, 116
        %v4768 = vpop.permute.xlu0 %4767
        %4769 = vrot.lane.b32.xlu0 %v1191, 116
        %v4770 = vpop.permute.xlu0 %4769
        %4771 = vrot.lane.b32.xlu0 %v1232, 116
        %v4772 = vpop.permute.xlu0 %4771
        %v4774 = vsel %vm1255, %v4764, 0
        %v4777 = vsel %vm1255, %v4766, 0
        %v4780 = vsel %vm1255, %v4768, 0
        %v4783 = vsel %vm1255, %v4770, 0
        %v4786 = vsel %vm1255, %v4772, 0
        %4788 = vmatprep.subr.bf16.mxu0 0
        %4789 = vmatpush1.bf16.msra.mxu0 %v1276
        %4790 = vmatprep.subr.bf16.mxu0 0
        %4791 = vmatpush1.bf16.msra.mxu0 0
        %4792 = vmatprep.subr.bf16.mxu0 0
        %4793 = vmatpush1.bf16.msra.mxu0 0
        %4794 = vmatprep.subr.bf16.mxu0 0
        %4795 = vmatpush1.bf16.msra.mxu0 0
        %4796 = vmatprep.subr.bf16.mxu0 0
        %4797 = vmatpush1.bf16.msra.mxu0 0
        %4798 = vmatprep.subr.bf16.mxu0 0
        %4799 = vmatpush1.bf16.msra.mxu0 0
        %4800 = vmatprep.subr.bf16.mxu0 0
        %4801 = vmatpush1.bf16.msra.mxu0 0
        %4802 = vmatprep.subr.bf16.mxu0 0
        %4803 = vmatpush1.bf16.msra.mxu0 0
        %4804 = vmatprep.subr.bf16.mxu0 0
        %4805 = vmatpush1.bf16.msra.mxu0 0
        %4806 = vmatprep.subr.bf16.mxu0 0
        %4807 = vmatpush1.bf16.msra.mxu0 0
        %4808 = vmatprep.subr.bf16.mxu0 0
        %4809 = vmatpush1.bf16.msra.mxu0 0
        %4810 = vmatprep.subr.bf16.mxu0 0
        %4811 = vmatpush1.bf16.msra.mxu0 0
        %4812 = vmatprep.subr.bf16.mxu0 0
        %4813 = vmatpush1.bf16.msra.mxu0 0
        %4814 = vmatprep.subr.bf16.mxu0 0
        %4815 = vmatpush1.bf16.msra.mxu0 0
        %4816 = vmatprep.subr.bf16.mxu0 0
        %4817 = vmatpush1.bf16.msra.mxu0 0
        %4818 = vmatprep.subr.bf16.mxu0 0
        %4819 = vmatpush1.bf16.msra.mxu0 0
        %4820 = vmatprep.mubr.bf16.mxu0 0
        %4821 = vmatmul.mubr.bf16.gmra.mrb[0].mxu0 %v4774
        %v4822 = vpop.f32.mrb[0].mxu0
        %v4823 = vadd.f32 %v953, %v4822
        %v4824 = vpop.f32.mrb[0].mxu0
        %v4825 = vpop.f32.mrb[0].mxu0
        %v4826 = vadd.f32 %v953, %v4825
        %v4827 = vpop.f32.mrb[0].mxu0
        %4828 = vmatprep.mubr.bf16.mxu0 0
        %4829 = vmatmul.mubr.bf16.gmra.mrb[0].mxu0 %v4777
        %v4830 = vpop.f32.mrb[0].mxu0
        %v4831 = vadd.f32 %v953, %v4830
        %v4832 = vpop.f32.mrb[0].mxu0
        %v4833 = vpop.f32.mrb[0].mxu0
        %v4834 = vadd.f32 %v953, %v4833
        %v4835 = vpop.f32.mrb[0].mxu0
        %4836 = vmatprep.mubr.bf16.mxu0 0
        %4837 = vmatmul.mubr.bf16.gmra.mrb[0].mxu0 %v4780
        %v4838 = vpop.f32.mrb[0].mxu0
        %v4839 = vadd.f32 %v953, %v4838
        %v4840 = vpop.f32.mrb[0].mxu0
        %v4841 = vpop.f32.mrb[0].mxu0
        %v4842 = vadd.f32 %v953, %v4841
        %v4843 = vpop.f32.mrb[0].mxu0
        %4844 = vmatprep.mubr.bf16.mxu0 0
        %4845 = vmatmul.mubr.bf16.gmra.mrb[0].mxu0 %v4783
        %v4846 = vpop.f32.mrb[0].mxu0
        %v4847 = vadd.f32 %v953, %v4846
        %v4848 = vpop.f32.mrb[0].mxu0
        %v4849 = vpop.f32.mrb[0].mxu0
        %v4850 = vadd.f32 %v953, %v4849
        %v4851 = vpop.f32.mrb[0].mxu0
        %4852 = vmatprep.mubr.bf16.mxu0 0
        %4853 = vmatmul.mubr.bf16.gmra.mrb[0].mxu0 %v4786
        %v4854 = vpop.f32.mrb[0].mxu0
        %v4855 = vadd.f32 %v953, %v4854
        %v4856 = vpop.f32.mrb[0].mxu0
        %v4857 = vpop.f32.mrb[0].mxu0
        %v4858 = vpop.f32.mrb[0].mxu0
        %4859 = vdwg.mxu0
        %v4860 = vmax.f32 %v4823, 0.0
        %v4861 = vmax.f32 %v4826, 0.0
        %v4862 = vmax.f32 %v4831, 0.0
        %v4863 = vmax.f32 %v4834, 0.0
        %v4864 = vmax.f32 %v4839, 0.0
        %v4865 = vmax.f32 %v4842, 0.0
        %v4866 = vmax.f32 %v4847, 0.0
        %v4867 = vmax.f32 %v4850, 0.0
        %v4868 = vmax.f32 %v4855, 0.0
        %v4878 = vcombine.high %v4860, %v4860
        %v4880 = vunpack.c.l.s4 1966171168
        %v4881 = vunpack.c.0.s8 %v4880
        %v4882 = vlaneseq
        %v4883 = vshrl.u32 %v4882, 7
        %v4884 = vsub.s32 %v4881, %v4883
        %v4885 = vrot.slane %v4860, %v4884
        %v4887 = vunpack.c.l.s4 1966171168
        %v4888 = vunpack.c.0.s8 %v4887
        %v4889 = vlaneseq
        %v4890 = vshrl.u32 %v4889, 7
        %v4891 = vsub.s32 %v4888, %v4890
        %v4892 = vrot.slane %v4878, %v4891
        %v4893 = vcombine.high %v4885, %v4885
        %v4894 = vcombine.high %v4892, %v4892
        %v4896 = vunpack.c.l.s4 1966171168
        %v4897 = vunpack.c.0.s8 %v4896
        %v4898 = vlaneseq
        %v4899 = vshrl.u32 %v4898, 7
        %v4900 = vsub.s32 %v4897, %v4899
        %v4901 = vrot.slane %v4885, %v4900
        %v4903 = vunpack.c.l.s4 1966171168
        %v4904 = vunpack.c.0.s8 %v4903
        %v4905 = vlaneseq
        %v4906 = vshrl.u32 %v4905, 7
        %v4907 = vsub.s32 %v4904, %v4906
        %v4908 = vrot.slane %v4892, %v4907
        %v4910 = vunpack.c.l.s4 1966171168
        %v4911 = vunpack.c.0.s8 %v4910
        %v4912 = vlaneseq
        %v4913 = vshrl.u32 %v4912, 7
        %v4914 = vsub.s32 %v4911, %v4913
        %v4915 = vrot.slane %v4893, %v4914
        %v4917 = vunpack.c.l.s4 1966171168
        %v4918 = vunpack.c.0.s8 %v4917
        %v4919 = vlaneseq
        %v4920 = vshrl.u32 %v4919, 7
        %v4921 = vsub.s32 %v4918, %v4920
        %v4922 = vrot.slane %v4894, %v4921
        %v4923 = vcombine.high %v4901, %v4901
        %v4924 = vcombine.high %v4908, %v4908
        %v4925 = vcombine.high %v4915, %v4915
        %v4926 = vcombine.high %v4922, %v4922
        %v4927 = vcombine.high %v4861, %v4861
        %v4929 = vunpack.c.l.s4 1966171168
        %v4930 = vunpack.c.0.s8 %v4929
        %v4931 = vlaneseq
        %v4932 = vshrl.u32 %v4931, 7
        %v4933 = vsub.s32 %v4930, %v4932
        %v4934 = vrot.slane %v4861, %v4933
        %v4936 = vunpack.c.l.s4 1966171168
        %v4937 = vunpack.c.0.s8 %v4936
        %v4938 = vlaneseq
        %v4939 = vshrl.u32 %v4938, 7
        %v4940 = vsub.s32 %v4937, %v4939
        %v4941 = vrot.slane %v4927, %v4940
        %v4942 = vcombine.high %v4934, %v4934
        %v4943 = vcombine.high %v4941, %v4941
        %v4945 = vunpack.c.l.s4 1966171168
        %v4946 = vunpack.c.0.s8 %v4945
        %v4947 = vlaneseq
        %v4948 = vshrl.u32 %v4947, 7
        %v4949 = vsub.s32 %v4946, %v4948
        %v4950 = vrot.slane %v4934, %v4949
        %v4952 = vunpack.c.l.s4 1966171168
        %v4953 = vunpack.c.0.s8 %v4952
        %v4954 = vlaneseq
        %v4955 = vshrl.u32 %v4954, 7
        %v4956 = vsub.s32 %v4953, %v4955
        %v4957 = vrot.slane %v4941, %v4956
        %v4959 = vunpack.c.l.s4 1966171168
        %v4960 = vunpack.c.0.s8 %v4959
        %v4961 = vlaneseq
        %v4962 = vshrl.u32 %v4961, 7
        %v4963 = vsub.s32 %v4960, %v4962
        %v4964 = vrot.slane %v4942, %v4963
        %v4966 = vunpack.c.l.s4 1966171168
        %v4967 = vunpack.c.0.s8 %v4966
        %v4968 = vlaneseq
        %v4969 = vshrl.u32 %v4968, 7
        %v4970 = vsub.s32 %v4967, %v4969
        %v4971 = vrot.slane %v4943, %v4970
        %v4972 = vcombine.high %v4950, %v4950
        %v4973 = vcombine.high %v4957, %v4957
        %v4974 = vcombine.high %v4964, %v4964
        %v4975 = vcombine.high %v4971, %v4971
        %v4976 = vcombine.high %v4862, %v4862
        %v4978 = vunpack.c.l.s4 1966171168
        %v4979 = vunpack.c.0.s8 %v4978
        %v4980 = vlaneseq
        %v4981 = vshrl.u32 %v4980, 7
        %v4982 = vsub.s32 %v4979, %v4981
        %v4983 = vrot.slane %v4862, %v4982
        %v4985 = vunpack.c.l.s4 1966171168
        %v4986 = vunpack.c.0.s8 %v4985
        %v4987 = vlaneseq
        %v4988 = vshrl.u32 %v4987, 7
        %v4989 = vsub.s32 %v4986, %v4988
        %v4990 = vrot.slane %v4976, %v4989
        %v4991 = vcombine.high %v4983, %v4983
        %v4992 = vcombine.high %v4990, %v4990
        %v4994 = vunpack.c.l.s4 1966171168
        %v4995 = vunpack.c.0.s8 %v4994
        %v4996 = vlaneseq
        %v4997 = vshrl.u32 %v4996, 7
        %v4998 = vsub.s32 %v4995, %v4997
        %v4999 = vrot.slane %v4983, %v4998
        %v5001 = vunpack.c.l.s4 1966171168
        %v5002 = vunpack.c.0.s8 %v5001
        %v5003 = vlaneseq
        %v5004 = vshrl.u32 %v5003, 7
        %v5005 = vsub.s32 %v5002, %v5004
        %v5006 = vrot.slane %v4990, %v5005
        %v5008 = vunpack.c.l.s4 1966171168
        %v5009 = vunpack.c.0.s8 %v5008
        %v5010 = vlaneseq
        %v5011 = vshrl.u32 %v5010, 7
        %v5012 = vsub.s32 %v5009, %v5011
        %v5013 = vrot.slane %v4991, %v5012
        %v5015 = vunpack.c.l.s4 1966171168
        %v5016 = vunpack.c.0.s8 %v5015
        %v5017 = vlaneseq
        %v5018 = vshrl.u32 %v5017, 7
        %v5019 = vsub.s32 %v5016, %v5018
        %v5020 = vrot.slane %v4992, %v5019
        %v5021 = vcombine.high %v4999, %v4999
        %v5022 = vcombine.high %v5006, %v5006
        %v5023 = vcombine.high %v5013, %v5013
        %v5024 = vcombine.high %v5020, %v5020
        %v5025 = vcombine.high %v4863, %v4863
        %v5027 = vunpack.c.l.s4 1966171168
        %v5028 = vunpack.c.0.s8 %v5027
        %v5029 = vlaneseq
        %v5030 = vshrl.u32 %v5029, 7
        %v5031 = vsub.s32 %v5028, %v5030
        %v5032 = vrot.slane %v4863, %v5031
        %v5034 = vunpack.c.l.s4 1966171168
        %v5035 = vunpack.c.0.s8 %v5034
        %v5036 = vlaneseq
        %v5037 = vshrl.u32 %v5036, 7
        %v5038 = vsub.s32 %v5035, %v5037
        %v5039 = vrot.slane %v5025, %v5038
        %v5040 = vcombine.high %v5032, %v5032
        %v5041 = vcombine.high %v5039, %v5039
        %v5043 = vunpack.c.l.s4 1966171168
        %v5044 = vunpack.c.0.s8 %v5043
        %v5045 = vlaneseq
        %v5046 = vshrl.u32 %v5045, 7
        %v5047 = vsub.s32 %v5044, %v5046
        %v5048 = vrot.slane %v5032, %v5047
        %v5050 = vunpack.c.l.s4 1966171168
        %v5051 = vunpack.c.0.s8 %v5050
        %v5052 = vlaneseq
        %v5053 = vshrl.u32 %v5052, 7
        %v5054 = vsub.s32 %v5051, %v5053
        %v5055 = vrot.slane %v5039, %v5054
        %v5057 = vunpack.c.l.s4 1966171168
        %v5058 = vunpack.c.0.s8 %v5057
        %v5059 = vlaneseq
        %v5060 = vshrl.u32 %v5059, 7
        %v5061 = vsub.s32 %v5058, %v5060
        %v5062 = vrot.slane %v5040, %v5061
        %v5064 = vunpack.c.l.s4 1966171168
        %v5065 = vunpack.c.0.s8 %v5064
        %v5066 = vlaneseq
        %v5067 = vshrl.u32 %v5066, 7
        %v5068 = vsub.s32 %v5065, %v5067
        %v5069 = vrot.slane %v5041, %v5068
        %v5070 = vcombine.high %v5048, %v5048
        %v5071 = vcombine.high %v5055, %v5055
        %v5072 = vcombine.high %v5062, %v5062
        %v5073 = vcombine.high %v5069, %v5069
        %v5074 = vcombine.high %v4864, %v4864
        %v5076 = vunpack.c.l.s4 1966171168
        %v5077 = vunpack.c.0.s8 %v5076
        %v5078 = vlaneseq
        %v5079 = vshrl.u32 %v5078, 7
        %v5080 = vsub.s32 %v5077, %v5079
        %v5081 = vrot.slane %v4864, %v5080
        %v5083 = vunpack.c.l.s4 1966171168
        %v5084 = vunpack.c.0.s8 %v5083
        %v5085 = vlaneseq
        %v5086 = vshrl.u32 %v5085, 7
        %v5087 = vsub.s32 %v5084, %v5086
        %v5088 = vrot.slane %v5074, %v5087
        %v5089 = vcombine.high %v5081, %v5081
        %v5090 = vcombine.high %v5088, %v5088
        %v5092 = vunpack.c.l.s4 1966171168
        %v5093 = vunpack.c.0.s8 %v5092
        %v5094 = vlaneseq
        %v5095 = vshrl.u32 %v5094, 7
        %v5096 = vsub.s32 %v5093, %v5095
        %v5097 = vrot.slane %v5081, %v5096
        %v5099 = vunpack.c.l.s4 1966171168
        %v5100 = vunpack.c.0.s8 %v5099
        %v5101 = vlaneseq
        %v5102 = vshrl.u32 %v5101, 7
        %v5103 = vsub.s32 %v5100, %v5102
        %v5104 = vrot.slane %v5088, %v5103
        %v5106 = vunpack.c.l.s4 1966171168
        %v5107 = vunpack.c.0.s8 %v5106
        %v5108 = vlaneseq
        %v5109 = vshrl.u32 %v5108, 7
        %v5110 = vsub.s32 %v5107, %v5109
        %v5111 = vrot.slane %v5089, %v5110
        %v5113 = vunpack.c.l.s4 1966171168
        %v5114 = vunpack.c.0.s8 %v5113
        %v5115 = vlaneseq
        %v5116 = vshrl.u32 %v5115, 7
        %v5117 = vsub.s32 %v5114, %v5116
        %v5118 = vrot.slane %v5090, %v5117
        %v5119 = vcombine.high %v5097, %v5097
        %v5120 = vcombine.high %v5104, %v5104
        %v5121 = vcombine.high %v5111, %v5111
        %v5122 = vcombine.high %v5118, %v5118
        %v5123 = vcombine.high %v4865, %v4865
        %v5125 = vunpack.c.l.s4 1966171168
        %v5126 = vunpack.c.0.s8 %v5125
        %v5127 = vlaneseq
        %v5128 = vshrl.u32 %v5127, 7
        %v5129 = vsub.s32 %v5126, %v5128
        %v5130 = vrot.slane %v4865, %v5129
        %v5132 = vunpack.c.l.s4 1966171168
        %v5133 = vunpack.c.0.s8 %v5132
        %v5134 = vlaneseq
        %v5135 = vshrl.u32 %v5134, 7
        %v5136 = vsub.s32 %v5133, %v5135
        %v5137 = vrot.slane %v5123, %v5136
        %v5138 = vcombine.high %v5130, %v5130
        %v5139 = vcombine.high %v5137, %v5137
        %v5141 = vunpack.c.l.s4 1966171168
        %v5142 = vunpack.c.0.s8 %v5141
        %v5143 = vlaneseq
        %v5144 = vshrl.u32 %v5143, 7
        %v5145 = vsub.s32 %v5142, %v5144
        %v5146 = vrot.slane %v5130, %v5145
        %v5148 = vunpack.c.l.s4 1966171168
        %v5149 = vunpack.c.0.s8 %v5148
        %v5150 = vlaneseq
        %v5151 = vshrl.u32 %v5150, 7
        %v5152 = vsub.s32 %v5149, %v5151
        %v5153 = vrot.slane %v5137, %v5152
        %v5155 = vunpack.c.l.s4 1966171168
        %v5156 = vunpack.c.0.s8 %v5155
        %v5157 = vlaneseq
        %v5158 = vshrl.u32 %v5157, 7
        %v5159 = vsub.s32 %v5156, %v5158
        %v5160 = vrot.slane %v5138, %v5159
        %v5162 = vunpack.c.l.s4 1966171168
        %v5163 = vunpack.c.0.s8 %v5162
        %v5164 = vlaneseq
        %v5165 = vshrl.u32 %v5164, 7
        %v5166 = vsub.s32 %v5163, %v5165
        %v5167 = vrot.slane %v5139, %v5166
        %v5168 = vcombine.high %v5146, %v5146
        %v5169 = vcombine.high %v5153, %v5153
        %v5170 = vcombine.high %v5160, %v5160
        %v5171 = vcombine.high %v5167, %v5167
        %v5172 = vcombine.high %v4866, %v4866
        %v5174 = vunpack.c.l.s4 1966171168
        %v5175 = vunpack.c.0.s8 %v5174
        %v5176 = vlaneseq
        %v5177 = vshrl.u32 %v5176, 7
        %v5178 = vsub.s32 %v5175, %v5177
        %v5179 = vrot.slane %v4866, %v5178
        %v5181 = vunpack.c.l.s4 1966171168
        %v5182 = vunpack.c.0.s8 %v5181
        %v5183 = vlaneseq
        %v5184 = vshrl.u32 %v5183, 7
        %v5185 = vsub.s32 %v5182, %v5184
        %v5186 = vrot.slane %v5172, %v5185
        %v5187 = vcombine.high %v5179, %v5179
        %v5188 = vcombine.high %v5186, %v5186
        %v5190 = vunpack.c.l.s4 1966171168
        %v5191 = vunpack.c.0.s8 %v5190
        %v5192 = vlaneseq
        %v5193 = vshrl.u32 %v5192, 7
        %v5194 = vsub.s32 %v5191, %v5193
        %v5195 = vrot.slane %v5179, %v5194
        %v5197 = vunpack.c.l.s4 1966171168
        %v5198 = vunpack.c.0.s8 %v5197
        %v5199 = vlaneseq
        %v5200 = vshrl.u32 %v5199, 7
        %v5201 = vsub.s32 %v5198, %v5200
        %v5202 = vrot.slane %v5186, %v5201
        %v5204 = vunpack.c.l.s4 1966171168
        %v5205 = vunpack.c.0.s8 %v5204
        %v5206 = vlaneseq
        %v5207 = vshrl.u32 %v5206, 7
        %v5208 = vsub.s32 %v5205, %v5207
        %v5209 = vrot.slane %v5187, %v5208
        %v5211 = vunpack.c.l.s4 1966171168
        %v5212 = vunpack.c.0.s8 %v5211
        %v5213 = vlaneseq
        %v5214 = vshrl.u32 %v5213, 7
        %v5215 = vsub.s32 %v5212, %v5214
        %v5216 = vrot.slane %v5188, %v5215
        %v5217 = vcombine.high %v5195, %v5195
        %v5218 = vcombine.high %v5202, %v5202
        %v5219 = vcombine.high %v5209, %v5209
        %v5220 = vcombine.high %v5216, %v5216
        %v5221 = vcombine.high %v4867, %v4867
        %v5223 = vunpack.c.l.s4 1966171168
        %v5224 = vunpack.c.0.s8 %v5223
        %v5225 = vlaneseq
        %v5226 = vshrl.u32 %v5225, 7
        %v5227 = vsub.s32 %v5224, %v5226
        %v5228 = vrot.slane %v4867, %v5227
        %v5230 = vunpack.c.l.s4 1966171168
        %v5231 = vunpack.c.0.s8 %v5230
        %v5232 = vlaneseq
        %v5233 = vshrl.u32 %v5232, 7
        %v5234 = vsub.s32 %v5231, %v5233
        %v5235 = vrot.slane %v5221, %v5234
        %v5236 = vcombine.high %v5228, %v5228
        %v5237 = vcombine.high %v5235, %v5235
        %v5239 = vunpack.c.l.s4 1966171168
        %v5240 = vunpack.c.0.s8 %v5239
        %v5241 = vlaneseq
        %v5242 = vshrl.u32 %v5241, 7
        %v5243 = vsub.s32 %v5240, %v5242
        %v5244 = vrot.slane %v5228, %v5243
        %v5246 = vunpack.c.l.s4 1966171168
        %v5247 = vunpack.c.0.s8 %v5246
        %v5248 = vlaneseq
        %v5249 = vshrl.u32 %v5248, 7
        %v5250 = vsub.s32 %v5247, %v5249
        %v5251 = vrot.slane %v5235, %v5250
        %v5253 = vunpack.c.l.s4 1966171168
        %v5254 = vunpack.c.0.s8 %v5253
        %v5255 = vlaneseq
        %v5256 = vshrl.u32 %v5255, 7
        %v5257 = vsub.s32 %v5254, %v5256
        %v5258 = vrot.slane %v5236, %v5257
        %v5260 = vunpack.c.l.s4 1966171168
        %v5261 = vunpack.c.0.s8 %v5260
        %v5262 = vlaneseq
        %v5263 = vshrl.u32 %v5262, 7
        %v5264 = vsub.s32 %v5261, %v5263
        %v5265 = vrot.slane %v5237, %v5264
        %v5266 = vcombine.high %v5244, %v5244
        %v5267 = vcombine.high %v5251, %v5251
        %v5268 = vcombine.high %v5258, %v5258
        %v5269 = vcombine.high %v5265, %v5265
        %v5270 = vcombine.high %v4868, %v4868
        %v5272 = vunpack.c.l.s4 1966171168
        %v5273 = vunpack.c.0.s8 %v5272
        %v5274 = vlaneseq
        %v5275 = vshrl.u32 %v5274, 7
        %v5276 = vsub.s32 %v5273, %v5275
        %v5277 = vrot.slane %v4868, %v5276
        %v5279 = vunpack.c.l.s4 1966171168
        %v5280 = vunpack.c.0.s8 %v5279
        %v5281 = vlaneseq
        %v5282 = vshrl.u32 %v5281, 7
        %v5283 = vsub.s32 %v5280, %v5282
        %v5284 = vrot.slane %v5270, %v5283
        %v5285 = vcombine.high %v5277, %v5277
        %v5286 = vcombine.high %v5284, %v5284
        %v5288 = vunpack.c.l.s4 1966171168
        %v5289 = vunpack.c.0.s8 %v5288
        %v5290 = vlaneseq
        %v5291 = vshrl.u32 %v5290, 7
        %v5292 = vsub.s32 %v5289, %v5291
        %v5293 = vrot.slane %v5277, %v5292
        %v5295 = vunpack.c.l.s4 1966171168
        %v5296 = vunpack.c.0.s8 %v5295
        %v5297 = vlaneseq
        %v5298 = vshrl.u32 %v5297, 7
        %v5299 = vsub.s32 %v5296, %v5298
        %v5300 = vrot.slane %v5284, %v5299
        %v5302 = vunpack.c.l.s4 1966171168
        %v5303 = vunpack.c.0.s8 %v5302
        %v5304 = vlaneseq
        %v5305 = vshrl.u32 %v5304, 7
        %v5306 = vsub.s32 %v5303, %v5305
        %v5307 = vrot.slane %v5285, %v5306
        %v5309 = vunpack.c.l.s4 1966171168
        %v5310 = vunpack.c.0.s8 %v5309
        %v5311 = vlaneseq
        %v5312 = vshrl.u32 %v5311, 7
        %v5313 = vsub.s32 %v5310, %v5312
        %v5314 = vrot.slane %v5286, %v5313
        %v5315 = vcombine.high %v5293, %v5293
        %v5316 = vcombine.high %v5300, %v5300
        %v5317 = vcombine.high %v5307, %v5307
        %v5318 = vcombine.high %v5314, %v5314
        %v5391 = vsel %vm4034, %v4901, 0.0
        %v5392 = vsel %vm4034, %v4915, 0.0
        %v5393 = vsel %vm4034, %v4923, 0.0
        %v5394 = vsel %vm4034, %v4925, 0.0
        %v5395 = vsel %vm4034, %v4908, 0.0
        %v5396 = vsel %vm4034, %v4922, 0.0
        %v5397 = vsel %vm4034, %v4924, 0.0
        %v5398 = vsel %vm4034, %v4926, 0.0
        %v5399 = vsel %vm4034, %v4950, 0.0
        %v5400 = vsel %vm4035, %v4964, 0.0
        %v5401 = vsel %vm4035, %v4972, 0.0
        %v5402 = vsel %vm4035, %v4974, 0.0
        %v5403 = vsel %vm4035, %v4957, 0.0
        %v5404 = vsel %vm4035, %v4971, 0.0
        %v5405 = vsel %vm4035, %v4973, 0.0
        %v5406 = vsel %vm4035, %v4975, 0.0
        %v5407 = vsel %vm4035, %v4999, 0.0
        %v5408 = vsel %vm4035, %v5013, 0.0
        %v5409 = vsel %vm4036, %v5021, 0.0
        %v5410 = vsel %vm4036, %v5023, 0.0
        %v5411 = vsel %vm4036, %v5006, 0.0
        %v5412 = vsel %vm4036, %v5020, 0.0
        %v5413 = vsel %vm4036, %v5022, 0.0
        %v5414 = vsel %vm4036, %v5024, 0.0
        %v5415 = vsel %vm4036, %v5048, 0.0
        %v5416 = vsel %vm4036, %v5062, 0.0
        %v5417 = vsel %vm4036, %v5070, 0.0
        %v5418 = vsel %vm4037, %v5072, 0.0
        %v5419 = vsel %vm4037, %v5055, 0.0
        %v5420 = vsel %vm4037, %v5069, 0.0
        %v5421 = vsel %vm4037, %v5071, 0.0
        %v5422 = vsel %vm4037, %v5073, 0.0
        %v5423 = vsel %vm4037, %v5097, 0.0
        %v5424 = vsel %vm4037, %v5111, 0.0
        %v5425 = vsel %vm4037, %v5119, 0.0
        %v5426 = vsel %vm4037, %v5121, 0.0
        %v5427 = vsel %vm4038, %v5104, 0.0
        %v5428 = vsel %vm4038, %v5118, 0.0
        %v5429 = vsel %vm4038, %v5120, 0.0
        %v5430 = vsel %vm4038, %v5122, 0.0
        %v5431 = vsel %vm4038, %v5146, 0.0
        %v5432 = vsel %vm4038, %v5160, 0.0
        %v5433 = vsel %vm4038, %v5168, 0.0
        %v5434 = vsel %vm4038, %v5170, 0.0
        %v5435 = vsel %vm4038, %v5153, 0.0
        %v5436 = vsel %vm4039, %v5167, 0.0
        %v5437 = vsel %vm4039, %v5169, 0.0
        %v5438 = vsel %vm4039, %v5171, 0.0
        %v5439 = vsel %vm4039, %v5195, 0.0
        %v5440 = vsel %vm4039, %v5209, 0.0
        %v5441 = vsel %vm4039, %v5217, 0.0
        %v5442 = vsel %vm4039, %v5219, 0.0
        %v5443 = vsel %vm4039, %v5202, 0.0
        %v5444 = vsel %vm4039, %v5216, 0.0
        %v5445 = vsel %vm4040, %v5218, 0.0
        %v5446 = vsel %vm4040, %v5220, 0.0
        %v5447 = vsel %vm4040, %v5244, 0.0
        %v5448 = vsel %vm4040, %v5258, 0.0
        %v5449 = vsel %vm4040, %v5266, 0.0
        %v5450 = vsel %vm4040, %v5268, 0.0
        %v5451 = vsel %vm4040, %v5251, 0.0
        %v5452 = vsel %vm4040, %v5265, 0.0
        %v5453 = vsel %vm4040, %v5267, 0.0
        %v5454 = vsel %vm4041, %v5269, 0.0
        %v5455 = vsel %vm4041, %v5293, 0.0
        %v5456 = vsel %vm4041, %v5307, 0.0
        %v5457 = vsel %vm4041, %v5315, 0.0
        %v5458 = vsel %vm4041, %v5317, 0.0
        %v5459 = vsel %vm4041, %v5300, 0.0
        %v5460 = vsel %vm4041, %v5314, 0.0
        %v5461 = vsel %vm4041, %v5316, 0.0
        %v5462 = vsel %vm4041, %v5318, 0.0
        %v5535 = vcombine.low %v5391, %v5392
        %v5536 = vcombine.low %v5393, %v5394
        %v5537 = vcombine.low %v5395, %v5396
        %v5538 = vcombine.low %v5397, %v5398
        %v5540 = vunpack.c.l.s4 1966171168
        %v5541 = vunpack.c.0.s8 %v5540
        %v5542 = vlaneseq
        %v5543 = vshrl.u32 %v5542, 7
        %v5544 = vsub.s32 %v5541, %v5543
        %v5545 = vrot.slane %v5535, %v5544
        %v5547 = vunpack.c.l.s4 1966171168
        %v5548 = vunpack.c.0.s8 %v5547
        %v5549 = vlaneseq
        %v5550 = vshrl.u32 %v5549, 7
        %v5551 = vsub.s32 %v5548, %v5550
        %v5552 = vrot.slane %v5536, %v5551
        %v5554 = vunpack.c.l.s4 1966171168
        %v5555 = vunpack.c.0.s8 %v5554
        %v5556 = vlaneseq
        %v5557 = vshrl.u32 %v5556, 7
        %v5558 = vsub.s32 %v5555, %v5557
        %v5559 = vrot.slane %v5537, %v5558
        %v5561 = vunpack.c.l.s4 1966171168
        %v5562 = vunpack.c.0.s8 %v5561
        %v5563 = vlaneseq
        %v5564 = vshrl.u32 %v5563, 7
        %v5565 = vsub.s32 %v5562, %v5564
        %v5566 = vrot.slane %v5538, %v5565
        %v5567 = vcombine.low %v5545, %v5552
        %v5568 = vcombine.low %v5559, %v5566
        %v5570 = vunpack.c.l.s4 1966171168
        %v5571 = vunpack.c.0.s8 %v5570
        %v5572 = vlaneseq
        %v5573 = vshrl.u32 %v5572, 7
        %v5574 = vsub.s32 %v5571, %v5573
        %v5575 = vrot.slane %v5567, %v5574
        %v5577 = vunpack.c.l.s4 1966171168
        %v5578 = vunpack.c.0.s8 %v5577
        %v5579 = vlaneseq
        %v5580 = vshrl.u32 %v5579, 7
        %v5581 = vsub.s32 %v5578, %v5580
        %v5582 = vrot.slane %v5568, %v5581
        %v5583 = vcombine.low %v5575, %v5582
        %v5585 = vunpack.c.l.s4 1966171168
        %v5586 = vunpack.c.0.s8 %v5585
        %v5587 = vlaneseq
        %v5588 = vshrl.u32 %v5587, 7
        %v5589 = vsub.s32 %v5586, %v5588
        %v5590 = vrot.slane %v5399, %v5589
        %v5592 = vunpack.c.l.s4 1966171168
        %v5593 = vunpack.c.0.s8 %v5592
        %v5594 = vlaneseq
        %v5595 = vshrl.u32 %v5594, 7
        %v5596 = vsub.s32 %v5593, %v5595
        %v5597 = vrot.slane %v5590, %v5596
        %v5598 = vcombine.low %v5400, %v5401
        %v5599 = vcombine.low %v5402, %v5403
        %v5600 = vcombine.low %v5404, %v5405
        %v5601 = vcombine.low %v5406, %v5407
        %v5603 = vunpack.c.l.s4 1966171168
        %v5604 = vunpack.c.0.s8 %v5603
        %v5605 = vlaneseq
        %v5606 = vshrl.u32 %v5605, 7
        %v5607 = vsub.s32 %v5604, %v5606
        %v5608 = vrot.slane %v5598, %v5607
        %v5610 = vunpack.c.l.s4 1966171168
        %v5611 = vunpack.c.0.s8 %v5610
        %v5612 = vlaneseq
        %v5613 = vshrl.u32 %v5612, 7
        %v5614 = vsub.s32 %v5611, %v5613
        %v5615 = vrot.slane %v5599, %v5614
        %v5617 = vunpack.c.l.s4 1966171168
        %v5618 = vunpack.c.0.s8 %v5617
        %v5619 = vlaneseq
        %v5620 = vshrl.u32 %v5619, 7
        %v5621 = vsub.s32 %v5618, %v5620
        %v5622 = vrot.slane %v5600, %v5621
        %v5624 = vunpack.c.l.s4 1966171168
        %v5625 = vunpack.c.0.s8 %v5624
        %v5626 = vlaneseq
        %v5627 = vshrl.u32 %v5626, 7
        %v5628 = vsub.s32 %v5625, %v5627
        %v5629 = vrot.slane %v5601, %v5628
        %v5630 = vcombine.low %v5608, %v5615
        %v5631 = vcombine.low %v5622, %v5629
        %v5633 = vunpack.c.l.s4 1966171168
        %v5634 = vunpack.c.0.s8 %v5633
        %v5635 = vlaneseq
        %v5636 = vshrl.u32 %v5635, 7
        %v5637 = vsub.s32 %v5634, %v5636
        %v5638 = vrot.slane %v5630, %v5637
        %v5640 = vunpack.c.l.s4 1966171168
        %v5641 = vunpack.c.0.s8 %v5640
        %v5642 = vlaneseq
        %v5643 = vshrl.u32 %v5642, 7
        %v5644 = vsub.s32 %v5641, %v5643
        %v5645 = vrot.slane %v5631, %v5644
        %v5646 = vcombine.low %v5638, %v5645
        %v5648 = vunpack.c.l.s4 1966171168
        %v5649 = vunpack.c.0.s8 %v5648
        %v5650 = vlaneseq
        %v5651 = vshrl.u32 %v5650, 7
        %v5652 = vsub.s32 %v5649, %v5651
        %v5653 = vrot.slane %v5408, %v5652
        %v5655 = vunpack.c.l.s4 1966171168
        %v5656 = vunpack.c.0.s8 %v5655
        %v5657 = vlaneseq
        %v5658 = vshrl.u32 %v5657, 7
        %v5659 = vsub.s32 %v5656, %v5658
        %v5660 = vrot.slane %v5653, %v5659
        %v5661 = vcombine.low %v5409, %v5410
        %v5662 = vcombine.low %v5411, %v5412
        %v5663 = vcombine.low %v5413, %v5414
        %v5664 = vcombine.low %v5415, %v5416
        %v5666 = vunpack.c.l.s4 1966171168
        %v5667 = vunpack.c.0.s8 %v5666
        %v5668 = vlaneseq
        %v5669 = vshrl.u32 %v5668, 7
        %v5670 = vsub.s32 %v5667, %v5669
        %v5671 = vrot.slane %v5661, %v5670
        %v5673 = vunpack.c.l.s4 1966171168
        %v5674 = vunpack.c.0.s8 %v5673
        %v5675 = vlaneseq
        %v5676 = vshrl.u32 %v5675, 7
        %v5677 = vsub.s32 %v5674, %v5676
        %v5678 = vrot.slane %v5662, %v5677
        %v5680 = vunpack.c.l.s4 1966171168
        %v5681 = vunpack.c.0.s8 %v5680
        %v5682 = vlaneseq
        %v5683 = vshrl.u32 %v5682, 7
        %v5684 = vsub.s32 %v5681, %v5683
        %v5685 = vrot.slane %v5663, %v5684
        %v5687 = vunpack.c.l.s4 1966171168
        %v5688 = vunpack.c.0.s8 %v5687
        %v5689 = vlaneseq
        %v5690 = vshrl.u32 %v5689, 7
        %v5691 = vsub.s32 %v5688, %v5690
        %v5692 = vrot.slane %v5664, %v5691
        %v5693 = vcombine.low %v5671, %v5678
        %v5694 = vcombine.low %v5685, %v5692
        %v5696 = vunpack.c.l.s4 1966171168
        %v5697 = vunpack.c.0.s8 %v5696
        %v5698 = vlaneseq
        %v5699 = vshrl.u32 %v5698, 7
        %v5700 = vsub.s32 %v5697, %v5699
        %v5701 = vrot.slane %v5693, %v5700
        %v5703 = vunpack.c.l.s4 1966171168
        %v5704 = vunpack.c.0.s8 %v5703
        %v5705 = vlaneseq
        %v5706 = vshrl.u32 %v5705, 7
        %v5707 = vsub.s32 %v5704, %v5706
        %v5708 = vrot.slane %v5694, %v5707
        %v5709 = vcombine.low %v5701, %v5708
        %v5711 = vunpack.c.l.s4 1966171168
        %v5712 = vunpack.c.0.s8 %v5711
        %v5713 = vlaneseq
        %v5714 = vshrl.u32 %v5713, 7
        %v5715 = vsub.s32 %v5712, %v5714
        %v5716 = vrot.slane %v5417, %v5715
        %v5718 = vunpack.c.l.s4 1966171168
        %v5719 = vunpack.c.0.s8 %v5718
        %v5720 = vlaneseq
        %v5721 = vshrl.u32 %v5720, 7
        %v5722 = vsub.s32 %v5719, %v5721
        %v5723 = vrot.slane %v5716, %v5722
        %v5724 = vcombine.low %v5418, %v5419
        %v5725 = vcombine.low %v5420, %v5421
        %v5726 = vcombine.low %v5422, %v5423
        %v5727 = vcombine.low %v5424, %v5425
        %v5729 = vunpack.c.l.s4 1966171168
        %v5730 = vunpack.c.0.s8 %v5729
        %v5731 = vlaneseq
        %v5732 = vshrl.u32 %v5731, 7
        %v5733 = vsub.s32 %v5730, %v5732
        %v5734 = vrot.slane %v5724, %v5733
        %v5736 = vunpack.c.l.s4 1966171168
        %v5737 = vunpack.c.0.s8 %v5736
        %v5738 = vlaneseq
        %v5739 = vshrl.u32 %v5738, 7
        %v5740 = vsub.s32 %v5737, %v5739
        %v5741 = vrot.slane %v5725, %v5740
        %v5743 = vunpack.c.l.s4 1966171168
        %v5744 = vunpack.c.0.s8 %v5743
        %v5745 = vlaneseq
        %v5746 = vshrl.u32 %v5745, 7
        %v5747 = vsub.s32 %v5744, %v5746
        %v5748 = vrot.slane %v5726, %v5747
        %v5750 = vunpack.c.l.s4 1966171168
        %v5751 = vunpack.c.0.s8 %v5750
        %v5752 = vlaneseq
        %v5753 = vshrl.u32 %v5752, 7
        %v5754 = vsub.s32 %v5751, %v5753
        %v5755 = vrot.slane %v5727, %v5754
        %v5756 = vcombine.low %v5734, %v5741
        %v5757 = vcombine.low %v5748, %v5755
        %v5759 = vunpack.c.l.s4 1966171168
        %v5760 = vunpack.c.0.s8 %v5759
        %v5761 = vlaneseq
        %v5762 = vshrl.u32 %v5761, 7
        %v5763 = vsub.s32 %v5760, %v5762
        %v5764 = vrot.slane %v5756, %v5763
        %v5766 = vunpack.c.l.s4 1966171168
        %v5767 = vunpack.c.0.s8 %v5766
        %v5768 = vlaneseq
        %v5769 = vshrl.u32 %v5768, 7
        %v5770 = vsub.s32 %v5767, %v5769
        %v5771 = vrot.slane %v5757, %v5770
        %v5772 = vcombine.low %v5764, %v5771
        %v5774 = vunpack.c.l.s4 1966171168
        %v5775 = vunpack.c.0.s8 %v5774
        %v5776 = vlaneseq
        %v5777 = vshrl.u32 %v5776, 7
        %v5778 = vsub.s32 %v5775, %v5777
        %v5779 = vrot.slane %v5426, %v5778
        %v5781 = vunpack.c.l.s4 1966171168
        %v5782 = vunpack.c.0.s8 %v5781
        %v5783 = vlaneseq
        %v5784 = vshrl.u32 %v5783, 7
        %v5785 = vsub.s32 %v5782, %v5784
        %v5786 = vrot.slane %v5779, %v5785
        %v5787 = vcombine.low %v5427, %v5428
        %v5788 = vcombine.low %v5429, %v5430
        %v5789 = vcombine.low %v5431, %v5432
        %v5790 = vcombine.low %v5433, %v5434
        %v5792 = vunpack.c.l.s4 1966171168
        %v5793 = vunpack.c.0.s8 %v5792
        %v5794 = vlaneseq
        %v5795 = vshrl.u32 %v5794, 7
        %v5796 = vsub.s32 %v5793, %v5795
        %v5797 = vrot.slane %v5787, %v5796
        %v5799 = vunpack.c.l.s4 1966171168
        %v5800 = vunpack.c.0.s8 %v5799
        %v5801 = vlaneseq
        %v5802 = vshrl.u32 %v5801, 7
        %v5803 = vsub.s32 %v5800, %v5802
        %v5804 = vrot.slane %v5788, %v5803
        %v5806 = vunpack.c.l.s4 1966171168
        %v5807 = vunpack.c.0.s8 %v5806
        %v5808 = vlaneseq
        %v5809 = vshrl.u32 %v5808, 7
        %v5810 = vsub.s32 %v5807, %v5809
        %v5811 = vrot.slane %v5789, %v5810
        %v5813 = vunpack.c.l.s4 1966171168
        %v5814 = vunpack.c.0.s8 %v5813
        %v5815 = vlaneseq
        %v5816 = vshrl.u32 %v5815, 7
        %v5817 = vsub.s32 %v5814, %v5816
        %v5818 = vrot.slane %v5790, %v5817
        %v5819 = vcombine.low %v5797, %v5804
        %v5820 = vcombine.low %v5811, %v5818
        %v5822 = vunpack.c.l.s4 1966171168
        %v5823 = vunpack.c.0.s8 %v5822
        %v5824 = vlaneseq
        %v5825 = vshrl.u32 %v5824, 7
        %v5826 = vsub.s32 %v5823, %v5825
        %v5827 = vrot.slane %v5819, %v5826
        %v5829 = vunpack.c.l.s4 1966171168
        %v5830 = vunpack.c.0.s8 %v5829
        %v5831 = vlaneseq
        %v5832 = vshrl.u32 %v5831, 7
        %v5833 = vsub.s32 %v5830, %v5832
        %v5834 = vrot.slane %v5820, %v5833
        %v5835 = vcombine.low %v5827, %v5834
        %v5837 = vunpack.c.l.s4 1966171168
        %v5838 = vunpack.c.0.s8 %v5837
        %v5839 = vlaneseq
        %v5840 = vshrl.u32 %v5839, 7
        %v5841 = vsub.s32 %v5838, %v5840
        %v5842 = vrot.slane %v5435, %v5841
        %v5844 = vunpack.c.l.s4 1966171168
        %v5845 = vunpack.c.0.s8 %v5844
        %v5846 = vlaneseq
        %v5847 = vshrl.u32 %v5846, 7
        %v5848 = vsub.s32 %v5845, %v5847
        %v5849 = vrot.slane %v5842, %v5848
        %v5850 = vcombine.low %v5436, %v5437
        %v5851 = vcombine.low %v5438, %v5439
        %v5852 = vcombine.low %v5440, %v5441
        %v5853 = vcombine.low %v5442, %v5443
        %v5855 = vunpack.c.l.s4 1966171168
        %v5856 = vunpack.c.0.s8 %v5855
        %v5857 = vlaneseq
        %v5858 = vshrl.u32 %v5857, 7
        %v5859 = vsub.s32 %v5856, %v5858
        %v5860 = vrot.slane %v5850, %v5859
        %v5862 = vunpack.c.l.s4 1966171168
        %v5863 = vunpack.c.0.s8 %v5862
        %v5864 = vlaneseq
        %v5865 = vshrl.u32 %v5864, 7
        %v5866 = vsub.s32 %v5863, %v5865
        %v5867 = vrot.slane %v5851, %v5866
        %v5869 = vunpack.c.l.s4 1966171168
        %v5870 = vunpack.c.0.s8 %v5869
        %v5871 = vlaneseq
        %v5872 = vshrl.u32 %v5871, 7
        %v5873 = vsub.s32 %v5870, %v5872
        %v5874 = vrot.slane %v5852, %v5873
        %v5876 = vunpack.c.l.s4 1966171168
        %v5877 = vunpack.c.0.s8 %v5876
        %v5878 = vlaneseq
        %v5879 = vshrl.u32 %v5878, 7
        %v5880 = vsub.s32 %v5877, %v5879
        %v5881 = vrot.slane %v5853, %v5880
        %v5882 = vcombine.low %v5860, %v5867
        %v5883 = vcombine.low %v5874, %v5881
        %v5885 = vunpack.c.l.s4 1966171168
        %v5886 = vunpack.c.0.s8 %v5885
        %v5887 = vlaneseq
        %v5888 = vshrl.u32 %v5887, 7
        %v5889 = vsub.s32 %v5886, %v5888
        %v5890 = vrot.slane %v5882, %v5889
        %v5892 = vunpack.c.l.s4 1966171168
        %v5893 = vunpack.c.0.s8 %v5892
        %v5894 = vlaneseq
        %v5895 = vshrl.u32 %v5894, 7
        %v5896 = vsub.s32 %v5893, %v5895
        %v5897 = vrot.slane %v5883, %v5896
        %v5898 = vcombine.low %v5890, %v5897
        %v5900 = vunpack.c.l.s4 1966171168
        %v5901 = vunpack.c.0.s8 %v5900
        %v5902 = vlaneseq
        %v5903 = vshrl.u32 %v5902, 7
        %v5904 = vsub.s32 %v5901, %v5903
        %v5905 = vrot.slane %v5444, %v5904
        %v5907 = vunpack.c.l.s4 1966171168
        %v5908 = vunpack.c.0.s8 %v5907
        %v5909 = vlaneseq
        %v5910 = vshrl.u32 %v5909, 7
        %v5911 = vsub.s32 %v5908, %v5910
        %v5912 = vrot.slane %v5905, %v5911
        %v5913 = vcombine.low %v5445, %v5446
        %v5914 = vcombine.low %v5447, %v5448
        %v5915 = vcombine.low %v5449, %v5450
        %v5916 = vcombine.low %v5451, %v5452
        %v5918 = vunpack.c.l.s4 1966171168
        %v5919 = vunpack.c.0.s8 %v5918
        %v5920 = vlaneseq
        %v5921 = vshrl.u32 %v5920, 7
        %v5922 = vsub.s32 %v5919, %v5921
        %v5923 = vrot.slane %v5913, %v5922
        %v5925 = vunpack.c.l.s4 1966171168
        %v5926 = vunpack.c.0.s8 %v5925
        %v5927 = vlaneseq
        %v5928 = vshrl.u32 %v5927, 7
        %v5929 = vsub.s32 %v5926, %v5928
        %v5930 = vrot.slane %v5914, %v5929
        %v5932 = vunpack.c.l.s4 1966171168
        %v5933 = vunpack.c.0.s8 %v5932
        %v5934 = vlaneseq
        %v5935 = vshrl.u32 %v5934, 7
        %v5936 = vsub.s32 %v5933, %v5935
        %v5937 = vrot.slane %v5915, %v5936
        %v5939 = vunpack.c.l.s4 1966171168
        %v5940 = vunpack.c.0.s8 %v5939
        %v5941 = vlaneseq
        %v5942 = vshrl.u32 %v5941, 7
        %v5943 = vsub.s32 %v5940, %v5942
        %v5944 = vrot.slane %v5916, %v5943
        %v5945 = vcombine.low %v5923, %v5930
        %v5946 = vcombine.low %v5937, %v5944
        %v5948 = vunpack.c.l.s4 1966171168
        %v5949 = vunpack.c.0.s8 %v5948
        %v5950 = vlaneseq
        %v5951 = vshrl.u32 %v5950, 7
        %v5952 = vsub.s32 %v5949, %v5951
        %v5953 = vrot.slane %v5945, %v5952
        %v5955 = vunpack.c.l.s4 1966171168
        %v5956 = vunpack.c.0.s8 %v5955
        %v5957 = vlaneseq
        %v5958 = vshrl.u32 %v5957, 7
        %v5959 = vsub.s32 %v5956, %v5958
        %v5960 = vrot.slane %v5946, %v5959
        %v5961 = vcombine.low %v5953, %v5960
        %v5963 = vunpack.c.l.s4 1966171168
        %v5964 = vunpack.c.0.s8 %v5963
        %v5965 = vlaneseq
        %v5966 = vshrl.u32 %v5965, 7
        %v5967 = vsub.s32 %v5964, %v5966
        %v5968 = vrot.slane %v5453, %v5967
        %v5970 = vunpack.c.l.s4 1966171168
        %v5971 = vunpack.c.0.s8 %v5970
        %v5972 = vlaneseq
        %v5973 = vshrl.u32 %v5972, 7
        %v5974 = vsub.s32 %v5971, %v5973
        %v5975 = vrot.slane %v5968, %v5974
        %v5976 = vcombine.low %v5454, %v5455
        %v5977 = vcombine.low %v5456, %v5457
        %v5978 = vcombine.low %v5458, %v5459
        %v5979 = vcombine.low %v5460, %v5461
        %v5981 = vunpack.c.l.s4 1966171168
        %v5982 = vunpack.c.0.s8 %v5981
        %v5983 = vlaneseq
        %v5984 = vshrl.u32 %v5983, 7
        %v5985 = vsub.s32 %v5982, %v5984
        %v5986 = vrot.slane %v5976, %v5985
        %v5988 = vunpack.c.l.s4 1966171168
        %v5989 = vunpack.c.0.s8 %v5988
        %v5990 = vlaneseq
        %v5991 = vshrl.u32 %v5990, 7
        %v5992 = vsub.s32 %v5989, %v5991
        %v5993 = vrot.slane %v5977, %v5992
        %v5995 = vunpack.c.l.s4 1966171168
        %v5996 = vunpack.c.0.s8 %v5995
        %v5997 = vlaneseq
        %v5998 = vshrl.u32 %v5997, 7
        %v5999 = vsub.s32 %v5996, %v5998
        %v6000 = vrot.slane %v5978, %v5999
        %v6002 = vunpack.c.l.s4 1966171168
        %v6003 = vunpack.c.0.s8 %v6002
        %v6004 = vlaneseq
        %v6005 = vshrl.u32 %v6004, 7
        %v6006 = vsub.s32 %v6003, %v6005
        %v6007 = vrot.slane %v5979, %v6006
        %v6008 = vcombine.low %v5986, %v5993
        %v6009 = vcombine.low %v6000, %v6007
        %v6011 = vunpack.c.l.s4 1966171168
        %v6012 = vunpack.c.0.s8 %v6011
        %v6013 = vlaneseq
        %v6014 = vshrl.u32 %v6013, 7
        %v6015 = vsub.s32 %v6012, %v6014
        %v6016 = vrot.slane %v6008, %v6015
        %v6018 = vunpack.c.l.s4 1966171168
        %v6019 = vunpack.c.0.s8 %v6018
        %v6020 = vlaneseq
        %v6021 = vshrl.u32 %v6020, 7
        %v6022 = vsub.s32 %v6019, %v6021
        %v6023 = vrot.slane %v6009, %v6022
        %v6024 = vcombine.low %v6016, %v6023
        %v6026 = vunpack.c.l.s4 1966171168
        %v6027 = vunpack.c.0.s8 %v6026
        %v6028 = vlaneseq
        %v6029 = vshrl.u32 %v6028, 7
        %v6030 = vsub.s32 %v6027, %v6029
        %v6031 = vrot.slane %v5462, %v6030
        %v6033 = vunpack.c.l.s4 1966171168
        %v6034 = vunpack.c.0.s8 %v6033
        %v6035 = vlaneseq
        %v6036 = vshrl.u32 %v6035, 7
        %v6037 = vsub.s32 %v6034, %v6036
        %v6038 = vrot.slane %v6031, %v6037
        %v6055 = vsel %vm2866, %v5583, 0.0
        %v6056 = vsel %vm2867, %v5597, 0.0
        %v6057 = vsel %vm2866, %v5646, 0.0
        %v6058 = vsel %vm2867, %v5660, 0.0
        %v6059 = vsel %vm2866, %v5709, 0.0
        %v6060 = vsel %vm2867, %v5723, 0.0
        %v6061 = vsel %vm2866, %v5772, 0.0
        %v6062 = vsel %vm2867, %v5786, 0.0
        %v6063 = vsel %vm2866, %v5835, 0.0
        %v6064 = vsel %vm2867, %v5849, 0.0
        %v6065 = vsel %vm2866, %v5898, 0.0
        %v6066 = vsel %vm2867, %v5912, 0.0
        %v6067 = vsel %vm2866, %v5961, 0.0
        %v6068 = vsel %vm2867, %v5975, 0.0
        %v6069 = vsel %vm2866, %v6024, 0.0
        %v6070 = vsel %vm2867, %v6038, 0.0
        %6071 = vrot.lane.b32.xlu0 %v3339, 116
        %v6072 = vpop.permute.xlu0 %6071
        %v6074 = vsel %vm1255, %v6072, 0
        %6076 = vmatprep.subr.bf16.mxu0 0
        %6077 = vmatpush1.bf16.msra.mxu0 %v1276
        %6078 = vmatprep.subr.bf16.mxu0 0
        %6079 = vmatpush1.bf16.msra.mxu0 0
        %6080 = vmatprep.subr.bf16.mxu0 0
        %6081 = vmatpush1.bf16.msra.mxu0 0
        %6082 = vmatprep.subr.bf16.mxu0 0
        %6083 = vmatpush1.bf16.msra.mxu0 0
        %6084 = vmatprep.subr.bf16.mxu0 0
        %6085 = vmatpush1.bf16.msra.mxu0 0
        %6086 = vmatprep.subr.bf16.mxu0 0
        %6087 = vmatpush1.bf16.msra.mxu0 0
        %6088 = vmatprep.subr.bf16.mxu0 0
        %6089 = vmatpush1.bf16.msra.mxu0 0
        %6090 = vmatprep.subr.bf16.mxu0 0
        %6091 = vmatpush1.bf16.msra.mxu0 0
        %6092 = vmatprep.subr.bf16.mxu0 0
        %6093 = vmatpush1.bf16.msra.mxu0 0
        %6094 = vmatprep.subr.bf16.mxu0 0
        %6095 = vmatpush1.bf16.msra.mxu0 0
        %6096 = vmatprep.subr.bf16.mxu0 0
        %6097 = vmatpush1.bf16.msra.mxu0 0
        %6098 = vmatprep.subr.bf16.mxu0 0
        %6099 = vmatpush1.bf16.msra.mxu0 0
        %6100 = vmatprep.subr.bf16.mxu0 0
        %6101 = vmatpush1.bf16.msra.mxu0 0
        %6102 = vmatprep.subr.bf16.mxu0 0
        %6103 = vmatpush1.bf16.msra.mxu0 0
        %6104 = vmatprep.subr.bf16.mxu0 0
        %6105 = vmatpush1.bf16.msra.mxu0 0
        %6106 = vmatprep.subr.bf16.mxu0 0
        %6107 = vmatpush1.bf16.msra.mxu0 0
        %6108 = vmatprep.mubr.bf16.mxu0 0
        %6109 = vmatmul.mubr.bf16.gmra.mrb[0].mxu0 %v6074
        %v6110 = vpop.f32.mrb[0].mxu0
        %v6111 = vadd.f32 %v953, %v6110
        %v6112 = vpop.f32.mrb[0].mxu0
        %v6113 = vpop.f32.mrb[0].mxu0
        %v6114 = vadd.f32 %v953, %v6113
        %v6115 = vpop.f32.mrb[0].mxu0
        %6116 = vdwg.mxu0
        %v6117 = vmax.f32 %v6111, 0.0
        %v6118 = vmax.f32 %v6114, 0.0
        %v6119 = vsel %vm2866, %v6117, 0.0
        %v6120 = vsel %vm2867, %v6118, 0.0
        %v6121 = vpack.c.bf16 %v6056, %v6055
        %v6122 = vpack.c.bf16 %v6058, %v6057
        %v6123 = vpack.c.bf16 %v6060, %v6059
        %v6124 = vpack.c.bf16 %v6062, %v6061
        %v6125 = vpack.c.bf16 %v6064, %v6063
        %v6126 = vpack.c.bf16 %v6066, %v6065
        %v6127 = vpack.c.bf16 %v6068, %v6067
        %v6128 = vpack.c.bf16 %v6070, %v6069
        %v6129 = vpack.c.bf16 %v6120, %v6119
        %v6130 = vld [vmem:[%s4] sm:$0xf]
        %v6139 = vunpack.c.l.b16 %v4754
        %v6140 = vunpack.c.h.b16 %v4754
        %v6141 = vunpack.c.l.b16 %v4755
        %v6142 = vunpack.c.h.b16 %v4755
        %v6143 = vunpack.c.l.b16 %v4756
        %v6144 = vunpack.c.h.b16 %v4756
        %v6145 = vunpack.c.l.b16 %v4757
        %v6146 = vunpack.c.h.b16 %v4757
        %v6147 = vunpack.c.l.b16 %v4758
        %v6148 = vunpack.c.h.b16 %v4758
        %v6149 = vunpack.c.l.b16 %v4759
        %v6150 = vunpack.c.h.b16 %v4759
        %v6151 = vunpack.c.l.b16 %v4760
        %v6152 = vunpack.c.h.b16 %v4760
        %v6153 = vunpack.c.l.b16 %v4761
        %v6154 = vunpack.c.h.b16 %v4761
        %v6155 = vpack.c.b16 %v6139, %v6139
        %v6156 = vpack.c.b16 %v6140, %v6140
        %v6157 = vpack.c.b16 %v6141, %v6141
        %v6158 = vpack.c.b16 %v6142, %v6142
        %v6159 = vpack.c.b16 %v6143, %v6143
        %v6160 = vpack.c.b16 %v6144, %v6144
        %v6161 = vpack.c.b16 %v6145, %v6145
        %v6162 = vpack.c.b16 %v6146, %v6146
        %v6163 = vpack.c.b16 %v6147, %v6147
        %v6164 = vpack.c.b16 %v6148, %v6148
        %v6165 = vpack.c.b16 %v6149, %v6149
        %v6166 = vpack.c.b16 %v6150, %v6150
        %v6167 = vpack.c.b16 %v6151, %v6151
        %v6168 = vpack.c.b16 %v6152, %v6152
        %v6169 = vpack.c.b16 %v6153, %v6153
        %v6170 = vpack.c.b16 %v6154, %v6154
        %vm6171 = vsmask.f32 3328
        %vm6172 = vsmask.f32 7440
        %vm6173 = vmor %vm6171, %vm6172
        %v6175 = vshrl.u32 %v6155, 16
        %v6177 = vrot.slane %v6175, 4
        %v6178 = vshll.u32 %v6155, 16
        %v6180 = vrot.slane %v6178, 5
        %v6181 = vor.u32 %v6177, %v6180
        %v6182 = vrot.slane %v6181, 4
        %v6184 = vshll.u32 %v6156, 16
        %v6186 = vrot.slane %v6184, 5
        %v6187 = vsel %vm6173, %v6182, %v6186
        %v6189 = vshrl.u32 %v6157, 16
        %v6191 = vrot.slane %v6189, 4
        %v6192 = vshll.u32 %v6157, 16
        %v6194 = vrot.slane %v6192, 5
        %v6195 = vor.u32 %v6191, %v6194
        %v6196 = vrot.slane %v6195, 4
        %v6198 = vshll.u32 %v6158, 16
        %v6200 = vrot.slane %v6198, 5
        %v6201 = vsel %vm6173, %v6196, %v6200
        %v6203 = vshrl.u32 %v6159, 16
        %v6205 = vrot.slane %v6203, 4
        %v6206 = vshll.u32 %v6159, 16
        %v6208 = vrot.slane %v6206, 5
        %v6209 = vor.u32 %v6205, %v6208
        %v6210 = vrot.slane %v6209, 4
        %v6212 = vshll.u32 %v6160, 16
        %v6214 = vrot.slane %v6212, 5
        %v6215 = vsel %vm6173, %v6210, %v6214
        %v6217 = vshrl.u32 %v6161, 16
        %v6219 = vrot.slane %v6217, 4
        %v6220 = vshll.u32 %v6161, 16
        %v6222 = vrot.slane %v6220, 5
        %v6223 = vor.u32 %v6219, %v6222
        %v6224 = vrot.slane %v6223, 4
        %v6226 = vshll.u32 %v6162, 16
        %v6228 = vrot.slane %v6226, 5
        %v6229 = vsel %vm6173, %v6224, %v6228
        %v6231 = vshrl.u32 %v6163, 16
        %v6233 = vrot.slane %v6231, 4
        %v6234 = vshll.u32 %v6163, 16
        %v6236 = vrot.slane %v6234, 5
        %v6237 = vor.u32 %v6233, %v6236
        %v6238 = vrot.slane %v6237, 4
        %v6240 = vshll.u32 %v6164, 16
        %v6242 = vrot.slane %v6240, 5
        %v6243 = vsel %vm6173, %v6238, %v6242
        %v6245 = vshrl.u32 %v6165, 16
        %v6247 = vrot.slane %v6245, 4
        %v6248 = vshll.u32 %v6165, 16
        %v6250 = vrot.slane %v6248, 5
        %v6251 = vor.u32 %v6247, %v6250
        %v6252 = vrot.slane %v6251, 4
        %v6254 = vshll.u32 %v6166, 16
        %v6256 = vrot.slane %v6254, 5
        %v6257 = vsel %vm6173, %v6252, %v6256
        %v6259 = vshrl.u32 %v6167, 16
        %v6261 = vrot.slane %v6259, 4
        %v6262 = vshll.u32 %v6167, 16
        %v6264 = vrot.slane %v6262, 5
        %v6265 = vor.u32 %v6261, %v6264
        %v6266 = vrot.slane %v6265, 4
        %v6268 = vshll.u32 %v6168, 16
        %v6270 = vrot.slane %v6268, 5
        %v6271 = vsel %vm6173, %v6266, %v6270
        %v6273 = vshrl.u32 %v6169, 16
        %v6275 = vrot.slane %v6273, 4
        %v6276 = vshll.u32 %v6169, 16
        %v6278 = vrot.slane %v6276, 5
        %v6279 = vor.u32 %v6275, %v6278
        %v6280 = vrot.slane %v6279, 4
        %v6282 = vshll.u32 %v6170, 16
        %v6284 = vrot.slane %v6282, 5
        %v6285 = vsel %vm6173, %v6280, %v6284
        %s6286 = scalar_lea.vmem %s4, 4
        %v6287 = vld [vmem:[%s6286] sm:$0xf]
        %v6288 = vunpack.c.l.b16 %v6187
        %v6289 = vunpack.c.l.b16 %v6201
        %v6290 = vunpack.c.l.b16 %v6215
        %v6291 = vunpack.c.l.b16 %v6229
        %v6292 = vunpack.c.l.b16 %v6243
        %v6293 = vunpack.c.l.b16 %v6257
        %v6294 = vunpack.c.l.b16 %v6271
        %v6295 = vunpack.c.l.b16 %v6285
        %v6296 = vpack.c.b16 %v6289, %v6288
        %v6297 = vpack.c.b16 %v6291, %v6290
        %v6298 = vpack.c.b16 %v6293, %v6292
        %v6299 = vpack.c.b16 %v6295, %v6294
        %vm6300 = vcmask 64512
        %v6302 = vsel %vm6300, %v6296, 0
        %v6305 = vsel %vm6300, %v6297, 0
        %v6308 = vsel %vm6300, %v6298, 0
        %v6311 = vsel %vm6300, %v6299, 0
        %vm6313 = vcmask 1043456
        %v6315 = vsel %vm6313, %v6287, 0
        %6317 = vmatprep.subr.bf16.mxu0 0
        %6318 = vmatpush1.bf16.msra.mxu0 %v6315
        %6319 = vmatprep.subr.bf16.mxu0 0
        %6320 = vmatpush1.bf16.msra.mxu0 0
        %6321 = vmatprep.subr.bf16.mxu0 0
        %6322 = vmatpush1.bf16.msra.mxu0 0
        %6323 = vmatprep.subr.bf16.mxu0 0
        %6324 = vmatpush1.bf16.msra.mxu0 0
        %6325 = vmatprep.subr.bf16.mxu0 0
        %6326 = vmatpush1.bf16.msra.mxu0 0
        %6327 = vmatprep.subr.bf16.mxu0 0
        %6328 = vmatpush1.bf16.msra.mxu0 0
        %6329 = vmatprep.subr.bf16.mxu0 0
        %6330 = vmatpush1.bf16.msra.mxu0 0
        %6331 = vmatprep.subr.bf16.mxu0 0
        %6332 = vmatpush1.bf16.msra.mxu0 0
        %6333 = vmatprep.subr.bf16.mxu0 0
        %6334 = vmatpush1.bf16.msra.mxu0 0
        %6335 = vmatprep.subr.bf16.mxu0 0
        %6336 = vmatpush1.bf16.msra.mxu0 0
        %6337 = vmatprep.subr.bf16.mxu0 0
        %6338 = vmatpush1.bf16.msra.mxu0 0
        %6339 = vmatprep.subr.bf16.mxu0 0
        %6340 = vmatpush1.bf16.msra.mxu0 0
        %6341 = vmatprep.subr.bf16.mxu0 0
        %6342 = vmatpush1.bf16.msra.mxu0 0
        %6343 = vmatprep.subr.bf16.mxu0 0
        %6344 = vmatpush1.bf16.msra.mxu0 0
        %6345 = vmatprep.subr.bf16.mxu0 0
        %6346 = vmatpush1.bf16.msra.mxu0 0
        %6347 = vmatprep.subr.bf16.mxu0 0
        %6348 = vmatpush1.bf16.msra.mxu0 0
        %6349 = vmatprep.mubr.bf16.mxu0 0
        %6350 = vmatmul.mubr.bf16.gmra.mrb[0].mxu0 %v6302
        %v6351 = vpop.f32.mrb[0].mxu0
        %v6352 = vadd.f32 0.0, %v6351
        %v6353 = vpop.f32.mrb[0].mxu0
        %v6354 = vpop.f32.mrb[0].mxu0
        %v6355 = vadd.f32 0.0, %v6354
        %v6356 = vpop.f32.mrb[0].mxu0
        %6357 = vmatprep.mubr.bf16.mxu0 0
        %6358 = vmatmul.mubr.bf16.gmra.mrb[0].mxu0 %v6305
        %v6359 = vpop.f32.mrb[0].mxu0
        %v6360 = vadd.f32 0.0, %v6359
        %v6361 = vpop.f32.mrb[0].mxu0
        %v6362 = vpop.f32.mrb[0].mxu0
        %v6363 = vadd.f32 0.0, %v6362
        %v6364 = vpop.f32.mrb[0].mxu0
        %6365 = vmatprep.mubr.bf16.mxu0 0
        %6366 = vmatmul.mubr.bf16.gmra.mrb[0].mxu0 %v6308
        %v6367 = vpop.f32.mrb[0].mxu0
        %v6368 = vadd.f32 0.0, %v6367
        %v6369 = vpop.f32.mrb[0].mxu0
        %v6370 = vpop.f32.mrb[0].mxu0
        %v6371 = vadd.f32 0.0, %v6370
        %v6372 = vpop.f32.mrb[0].mxu0
        %6373 = vmatprep.mubr.bf16.mxu0 0
        %6374 = vmatmul.mubr.bf16.gmra.mrb[0].mxu0 %v6311
        %v6375 = vpop.f32.mrb[0].mxu0
        %v6376 = vadd.f32 0.0, %v6375
        %v6377 = vpop.f32.mrb[0].mxu0
        %v6378 = vpop.f32.mrb[0].mxu0
        %v6379 = vadd.f32 0.0, %v6378
        %v6380 = vpop.f32.mrb[0].mxu0
        %6381 = vdwg.mxu0
        %v6390 = vunpack.c.l.b16 %v6121
        %v6391 = vunpack.c.l.b16 %v6122
        %v6392 = vunpack.c.l.b16 %v6123
        %v6393 = vunpack.c.l.b16 %v6124
        %v6394 = vunpack.c.l.b16 %v6125
        %v6395 = vunpack.c.l.b16 %v6126
        %v6396 = vunpack.c.l.b16 %v6127
        %v6397 = vunpack.c.l.b16 %v6128
        %v6398 = vpack.c.b16 %v6391, %v6390
        %v6399 = vpack.c.b16 %v6393, %v6392
        %v6400 = vpack.c.b16 %v6395, %v6394
        %v6401 = vpack.c.b16 %v6397, %v6396
        %v6403 = vsel %vm6300, %v6398, 0
        %v6406 = vsel %vm6300, %v6399, 0
        %v6409 = vsel %vm6300, %v6400, 0
        %v6412 = vsel %vm6300, %v6401, 0
        %v6415 = vsel %vm6313, %v6130, 0
        %6417 = vmatprep.subr.bf16.mxu0 0
        %6418 = vmatpush1.bf16.msra.mxu0 %v6415
        %6419 = vmatprep.subr.bf16.mxu0 0
        %6420 = vmatpush1.bf16.msra.mxu0 0
        %6421 = vmatprep.subr.bf16.mxu0 0
        %6422 = vmatpush1.bf16.msra.mxu0 0
        %6423 = vmatprep.subr.bf16.mxu0 0
        %6424 = vmatpush1.bf16.msra.mxu0 0
        %6425 = vmatprep.subr.bf16.mxu0 0
        %6426 = vmatpush1.bf16.msra.mxu0 0
        %6427 = vmatprep.subr.bf16.mxu0 0
        %6428 = vmatpush1.bf16.msra.mxu0 0
        %6429 = vmatprep.subr.bf16.mxu0 0
        %6430 = vmatpush1.bf16.msra.mxu0 0
        %6431 = vmatprep.subr.bf16.mxu0 0
        %6432 = vmatpush1.bf16.msra.mxu0 0
        %6433 = vmatprep.subr.bf16.mxu0 0
        %6434 = vmatpush1.bf16.msra.mxu0 0
        %6435 = vmatprep.subr.bf16.mxu0 0
        %6436 = vmatpush1.bf16.msra.mxu0 0
        %6437 = vmatprep.subr.bf16.mxu0 0
        %6438 = vmatpush1.bf16.msra.mxu0 0
        %6439 = vmatprep.subr.bf16.mxu0 0
        %6440 = vmatpush1.bf16.msra.mxu0 0
        %6441 = vmatprep.subr.bf16.mxu0 0
        %6442 = vmatpush1.bf16.msra.mxu0 0
        %6443 = vmatprep.subr.bf16.mxu0 0
        %6444 = vmatpush1.bf16.msra.mxu0 0
        %6445 = vmatprep.subr.bf16.mxu0 0
        %6446 = vmatpush1.bf16.msra.mxu0 0
        %6447 = vmatprep.subr.bf16.mxu0 0
        %6448 = vmatpush1.bf16.msra.mxu0 0
        %6449 = vmatprep.mubr.bf16.mxu0 0
        %6450 = vmatmul.mubr.bf16.gmra.mrb[0].mxu0 %v6403
        %v6451 = vpop.f32.mrb[0].mxu0
        %v6452 = vadd.f32 %v6352, %v6451
        %v6453 = vpop.f32.mrb[0].mxu0
        %v6454 = vpop.f32.mrb[0].mxu0
        %v6455 = vadd.f32 %v6355, %v6454
        %v6456 = vpop.f32.mrb[0].mxu0
        %6457 = vmatprep.mubr.bf16.mxu0 0
        %6458 = vmatmul.mubr.bf16.gmra.mrb[0].mxu0 %v6406
        %v6459 = vpop.f32.mrb[0].mxu0
        %v6460 = vadd.f32 %v6360, %v6459
        %v6461 = vpop.f32.mrb[0].mxu0
        %v6462 = vpop.f32.mrb[0].mxu0
        %v6463 = vadd.f32 %v6363, %v6462
        %v6464 = vpop.f32.mrb[0].mxu0
        %6465 = vmatprep.mubr.bf16.mxu0 0
        %6466 = vmatmul.mubr.bf16.gmra.mrb[0].mxu0 %v6409
        %v6467 = vpop.f32.mrb[0].mxu0
        %v6468 = vadd.f32 %v6368, %v6467
        %v6469 = vpop.f32.mrb[0].mxu0
        %v6470 = vpop.f32.mrb[0].mxu0
        %v6471 = vadd.f32 %v6371, %v6470
        %v6472 = vpop.f32.mrb[0].mxu0
        %6473 = vmatprep.mubr.bf16.mxu0 0
        %6474 = vmatmul.mubr.bf16.gmra.mrb[0].mxu0 %v6412
        %v6475 = vpop.f32.mrb[0].mxu0
        %v6476 = vadd.f32 %v6376, %v6475
        %v6477 = vpop.f32.mrb[0].mxu0
        %v6478 = vpop.f32.mrb[0].mxu0
        %v6479 = vadd.f32 %v6379, %v6478
        %v6480 = vpop.f32.mrb[0].mxu0
        %6481 = vdwg.mxu0
        %v6482 = vunpack.c.h.b16 %v6121
        %v6483 = vunpack.c.h.b16 %v6122
        %v6484 = vunpack.c.h.b16 %v6123
        %v6485 = vunpack.c.h.b16 %v6124
        %v6486 = vunpack.c.h.b16 %v6125
        %v6487 = vunpack.c.h.b16 %v6126
        %v6488 = vunpack.c.h.b16 %v6127
        %v6489 = vunpack.c.h.b16 %v6128
        %v6490 = vpack.c.b16 %v6390, %v6390
        %v6491 = vpack.c.b16 %v6482, %v6482
        %v6492 = vpack.c.b16 %v6391, %v6391
        %v6493 = vpack.c.b16 %v6483, %v6483
        %v6494 = vpack.c.b16 %v6392, %v6392
        %v6495 = vpack.c.b16 %v6484, %v6484
        %v6496 = vpack.c.b16 %v6393, %v6393
        %v6497 = vpack.c.b16 %v6485, %v6485
        %v6498 = vpack.c.b16 %v6394, %v6394
        %v6499 = vpack.c.b16 %v6486, %v6486
        %v6500 = vpack.c.b16 %v6395, %v6395
        %v6501 = vpack.c.b16 %v6487, %v6487
        %v6502 = vpack.c.b16 %v6396, %v6396
        %v6503 = vpack.c.b16 %v6488, %v6488
        %v6504 = vpack.c.b16 %v6397, %v6397
        %v6505 = vpack.c.b16 %v6489, %v6489
        %v6507 = vshrl.u32 %v6490, 16
        %v6509 = vrot.slane %v6507, 4
        %v6510 = vshll.u32 %v6490, 16
        %v6512 = vrot.slane %v6510, 5
        %v6513 = vor.u32 %v6509, %v6512
        %v6514 = vrot.slane %v6513, 4
        %v6516 = vshll.u32 %v6491, 16
        %v6518 = vrot.slane %v6516, 5
        %v6519 = vsel %vm6173, %v6514, %v6518
        %v6521 = vshrl.u32 %v6492, 16
        %v6523 = vrot.slane %v6521, 4
        %v6524 = vshll.u32 %v6492, 16
        %v6526 = vrot.slane %v6524, 5
        %v6527 = vor.u32 %v6523, %v6526
        %v6528 = vrot.slane %v6527, 4
        %v6530 = vshll.u32 %v6493, 16
        %v6532 = vrot.slane %v6530, 5
        %v6533 = vsel %vm6173, %v6528, %v6532
        %v6535 = vshrl.u32 %v6494, 16
        %v6537 = vrot.slane %v6535, 4
        %v6538 = vshll.u32 %v6494, 16
        %v6540 = vrot.slane %v6538, 5
        %v6541 = vor.u32 %v6537, %v6540
        %v6542 = vrot.slane %v6541, 4
        %v6544 = vshll.u32 %v6495, 16
        %v6546 = vrot.slane %v6544, 5
        %v6547 = vsel %vm6173, %v6542, %v6546
        %v6549 = vshrl.u32 %v6496, 16
        %v6551 = vrot.slane %v6549, 4
        %v6552 = vshll.u32 %v6496, 16
        %v6554 = vrot.slane %v6552, 5
        %v6555 = vor.u32 %v6551, %v6554
        %v6556 = vrot.slane %v6555, 4
        %v6558 = vshll.u32 %v6497, 16
        %v6560 = vrot.slane %v6558, 5
        %v6561 = vsel %vm6173, %v6556, %v6560
        %v6563 = vshrl.u32 %v6498, 16
        %v6565 = vrot.slane %v6563, 4
        %v6566 = vshll.u32 %v6498, 16
        %v6568 = vrot.slane %v6566, 5
        %v6569 = vor.u32 %v6565, %v6568
        %v6570 = vrot.slane %v6569, 4
        %v6572 = vshll.u32 %v6499, 16
        %v6574 = vrot.slane %v6572, 5
        %v6575 = vsel %vm6173, %v6570, %v6574
        %v6577 = vshrl.u32 %v6500, 16
        %v6579 = vrot.slane %v6577, 4
        %v6580 = vshll.u32 %v6500, 16
        %v6582 = vrot.slane %v6580, 5
        %v6583 = vor.u32 %v6579, %v6582
        %v6584 = vrot.slane %v6583, 4
        %v6586 = vshll.u32 %v6501, 16
        %v6588 = vrot.slane %v6586, 5
        %v6589 = vsel %vm6173, %v6584, %v6588
        %v6591 = vshrl.u32 %v6502, 16
        %v6593 = vrot.slane %v6591, 4
        %v6594 = vshll.u32 %v6502, 16
        %v6596 = vrot.slane %v6594, 5
        %v6597 = vor.u32 %v6593, %v6596
        %v6598 = vrot.slane %v6597, 4
        %v6600 = vshll.u32 %v6503, 16
        %v6602 = vrot.slane %v6600, 5
        %v6603 = vsel %vm6173, %v6598, %v6602
        %v6605 = vshrl.u32 %v6504, 16
        %v6607 = vrot.slane %v6605, 4
        %v6608 = vshll.u32 %v6504, 16
        %v6610 = vrot.slane %v6608, 5
        %v6611 = vor.u32 %v6607, %v6610
        %v6612 = vrot.slane %v6611, 4
        %v6614 = vshll.u32 %v6505, 16
        %v6616 = vrot.slane %v6614, 5
        %v6617 = vsel %vm6173, %v6612, %v6616
        %s6618 = scalar_lea.vmem %s4, 8
        %v6619 = vld [vmem:[%s6618] sm:$0xf]
        %v6620 = vunpack.c.l.b16 %v6519
        %v6621 = vunpack.c.l.b16 %v6533
        %v6622 = vunpack.c.l.b16 %v6547
        %v6623 = vunpack.c.l.b16 %v6561
        %v6624 = vunpack.c.l.b16 %v6575
        %v6625 = vunpack.c.l.b16 %v6589
        %v6626 = vunpack.c.l.b16 %v6603
        %v6627 = vunpack.c.l.b16 %v6617
        %v6628 = vpack.c.b16 %v6621, %v6620
        %v6629 = vpack.c.b16 %v6623, %v6622
        %v6630 = vpack.c.b16 %v6625, %v6624
        %v6631 = vpack.c.b16 %v6627, %v6626
        %v6633 = vsel %vm6300, %v6628, 0
        %v6636 = vsel %vm6300, %v6629, 0
        %v6639 = vsel %vm6300, %v6630, 0
        %v6642 = vsel %vm6300, %v6631, 0
        %v6645 = vsel %vm6313, %v6619, 0
        %6647 = vmatprep.subr.bf16.mxu0 0
        %6648 = vmatpush1.bf16.msra.mxu0 %v6645
        %6649 = vmatprep.subr.bf16.mxu0 0
        %6650 = vmatpush1.bf16.msra.mxu0 0
        %6651 = vmatprep.subr.bf16.mxu0 0
        %6652 = vmatpush1.bf16.msra.mxu0 0
        %6653 = vmatprep.subr.bf16.mxu0 0
        %6654 = vmatpush1.bf16.msra.mxu0 0
        %6655 = vmatprep.subr.bf16.mxu0 0
        %6656 = vmatpush1.bf16.msra.mxu0 0
        %6657 = vmatprep.subr.bf16.mxu0 0
        %6658 = vmatpush1.bf16.msra.mxu0 0
        %6659 = vmatprep.subr.bf16.mxu0 0
        %6660 = vmatpush1.bf16.msra.mxu0 0
        %6661 = vmatprep.subr.bf16.mxu0 0
        %6662 = vmatpush1.bf16.msra.mxu0 0
        %6663 = vmatprep.subr.bf16.mxu0 0
        %6664 = vmatpush1.bf16.msra.mxu0 0
        %6665 = vmatprep.subr.bf16.mxu0 0
        %6666 = vmatpush1.bf16.msra.mxu0 0
        %6667 = vmatprep.subr.bf16.mxu0 0
        %6668 = vmatpush1.bf16.msra.mxu0 0
        %6669 = vmatprep.subr.bf16.mxu0 0
        %6670 = vmatpush1.bf16.msra.mxu0 0
        %6671 = vmatprep.subr.bf16.mxu0 0
        %6672 = vmatpush1.bf16.msra.mxu0 0
        %6673 = vmatprep.subr.bf16.mxu0 0
        %6674 = vmatpush1.bf16.msra.mxu0 0
        %6675 = vmatprep.subr.bf16.mxu0 0
        %6676 = vmatpush1.bf16.msra.mxu0 0
        %6677 = vmatprep.subr.bf16.mxu0 0
        %6678 = vmatpush1.bf16.msra.mxu0 0
        %6679 = vmatprep.mubr.bf16.mxu0 0
        %6680 = vmatmul.mubr.bf16.gmra.mrb[0].mxu0 %v6633
        %v6681 = vpop.f32.mrb[0].mxu0
        %v6682 = vadd.f32 0.0, %v6681
        %v6683 = vpop.f32.mrb[0].mxu0
        %v6684 = vpop.f32.mrb[0].mxu0
        %v6685 = vadd.f32 0.0, %v6684
        %v6686 = vpop.f32.mrb[0].mxu0
        %6687 = vmatprep.mubr.bf16.mxu0 0
        %6688 = vmatmul.mubr.bf16.gmra.mrb[0].mxu0 %v6636
        %v6689 = vpop.f32.mrb[0].mxu0
        %v6690 = vadd.f32 0.0, %v6689
        %v6691 = vpop.f32.mrb[0].mxu0
        %v6692 = vpop.f32.mrb[0].mxu0
        %v6693 = vadd.f32 0.0, %v6692
        %v6694 = vpop.f32.mrb[0].mxu0
        %6695 = vmatprep.mubr.bf16.mxu0 0
        %6696 = vmatmul.mubr.bf16.gmra.mrb[0].mxu0 %v6639
        %v6697 = vpop.f32.mrb[0].mxu0
        %v6698 = vadd.f32 0.0, %v6697
        %v6699 = vpop.f32.mrb[0].mxu0
        %v6700 = vpop.f32.mrb[0].mxu0
        %v6701 = vadd.f32 0.0, %v6700
        %v6702 = vpop.f32.mrb[0].mxu0
        %6703 = vmatprep.mubr.bf16.mxu0 0
        %6704 = vmatmul.mubr.bf16.gmra.mrb[0].mxu0 %v6642
        %v6705 = vpop.f32.mrb[0].mxu0
        %v6706 = vadd.f32 0.0, %v6705
        %v6707 = vpop.f32.mrb[0].mxu0
        %v6708 = vpop.f32.mrb[0].mxu0
        %v6709 = vadd.f32 0.0, %v6708
        %v6710 = vpop.f32.mrb[0].mxu0
        %6711 = vdwg.mxu0
        %v6712 = vadd.f32 %v6452, %v6682
        %v6713 = vadd.f32 %v6455, %v6685
        %v6714 = vadd.f32 %v6460, %v6690
        %v6715 = vadd.f32 %v6463, %v6693
        %v6716 = vadd.f32 %v6468, %v6698
        %v6717 = vadd.f32 %v6471, %v6701
        %v6718 = vadd.f32 %v6476, %v6706
        %v6719 = vadd.f32 %v6479, %v6709
        %s6720 = scalar_lea.vmem %s4, 12
        %v6721 = vld [vmem:[%s6720] sm:$0xf]
        %v6730 = vunpack.c.l.b16 %v3390
        %v6731 = vunpack.c.l.b16 %v3391
        %v6732 = vunpack.c.l.b16 %v3392
        %v6733 = vunpack.c.l.b16 %v3393
        %v6734 = vunpack.c.l.b16 %v3394
        %v6735 = vunpack.c.l.b16 %v3395
        %v6736 = vunpack.c.l.b16 %v3396
        %v6737 = vunpack.c.l.b16 %v3397
        %v6738 = vpack.c.b16 %v6731, %v6730
        %v6739 = vpack.c.b16 %v6733, %v6732
        %v6740 = vpack.c.b16 %v6735, %v6734
        %v6741 = vpack.c.b16 %v6737, %v6736
        %v6743 = vsel %vm6300, %v6738, 0
        %v6746 = vsel %vm6300, %v6739, 0
        %v6749 = vsel %vm6300, %v6740, 0
        %v6752 = vsel %vm6300, %v6741, 0
        %v6755 = vsel %vm6313, %v6721, 0
        %6757 = vmatprep.subr.bf16.mxu0 0
        %6758 = vmatpush1.bf16.msra.mxu0 %v6755
        %6759 = vmatprep.subr.bf16.mxu0 0
        %6760 = vmatpush1.bf16.msra.mxu0 0
        %6761 = vmatprep.subr.bf16.mxu0 0
        %6762 = vmatpush1.bf16.msra.mxu0 0
        %6763 = vmatprep.subr.bf16.mxu0 0
        %6764 = vmatpush1.bf16.msra.mxu0 0
        %6765 = vmatprep.subr.bf16.mxu0 0
        %6766 = vmatpush1.bf16.msra.mxu0 0
        %6767 = vmatprep.subr.bf16.mxu0 0
        %6768 = vmatpush1.bf16.msra.mxu0 0
        %6769 = vmatprep.subr.bf16.mxu0 0
        %6770 = vmatpush1.bf16.msra.mxu0 0
        %6771 = vmatprep.subr.bf16.mxu0 0
        %6772 = vmatpush1.bf16.msra.mxu0 0
        %6773 = vmatprep.subr.bf16.mxu0 0
        %6774 = vmatpush1.bf16.msra.mxu0 0
        %6775 = vmatprep.subr.bf16.mxu0 0
        %6776 = vmatpush1.bf16.msra.mxu0 0
        %6777 = vmatprep.subr.bf16.mxu0 0
        %6778 = vmatpush1.bf16.msra.mxu0 0
        %6779 = vmatprep.subr.bf16.mxu0 0
        %6780 = vmatpush1.bf16.msra.mxu0 0
        %6781 = vmatprep.subr.bf16.mxu0 0
        %6782 = vmatpush1.bf16.msra.mxu0 0
        %6783 = vmatprep.subr.bf16.mxu0 0
        %6784 = vmatpush1.bf16.msra.mxu0 0
        %6785 = vmatprep.subr.bf16.mxu0 0
        %6786 = vmatpush1.bf16.msra.mxu0 0
        %6787 = vmatprep.subr.bf16.mxu0 0
        %6788 = vmatpush1.bf16.msra.mxu0 0
        %6789 = vmatprep.mubr.bf16.mxu0 0
        %6790 = vmatmul.mubr.bf16.gmra.mrb[0].mxu0 %v6743
        %v6791 = vpop.f32.mrb[0].mxu0
        %v6792 = vadd.f32 0.0, %v6791
        %v6793 = vpop.f32.mrb[0].mxu0
        %v6794 = vpop.f32.mrb[0].mxu0
        %v6795 = vadd.f32 0.0, %v6794
        %v6796 = vpop.f32.mrb[0].mxu0
        %6797 = vmatprep.mubr.bf16.mxu0 0
        %6798 = vmatmul.mubr.bf16.gmra.mrb[0].mxu0 %v6746
        %v6799 = vpop.f32.mrb[0].mxu0
        %v6800 = vadd.f32 0.0, %v6799
        %v6801 = vpop.f32.mrb[0].mxu0
        %v6802 = vpop.f32.mrb[0].mxu0
        %v6803 = vadd.f32 0.0, %v6802
        %v6804 = vpop.f32.mrb[0].mxu0
        %6805 = vmatprep.mubr.bf16.mxu0 0
        %6806 = vmatmul.mubr.bf16.gmra.mrb[0].mxu0 %v6749
        %v6807 = vpop.f32.mrb[0].mxu0
        %v6808 = vadd.f32 0.0, %v6807
        %v6809 = vpop.f32.mrb[0].mxu0
        %v6810 = vpop.f32.mrb[0].mxu0
        %v6811 = vadd.f32 0.0, %v6810
        %v6812 = vpop.f32.mrb[0].mxu0
        %6813 = vmatprep.mubr.bf16.mxu0 0
        %6814 = vmatmul.mubr.bf16.gmra.mrb[0].mxu0 %v6752
        %v6815 = vpop.f32.mrb[0].mxu0
        %v6816 = vadd.f32 0.0, %v6815
        %v6817 = vpop.f32.mrb[0].mxu0
        %v6818 = vpop.f32.mrb[0].mxu0
        %v6819 = vadd.f32 0.0, %v6818
        %v6820 = vpop.f32.mrb[0].mxu0
        %6821 = vdwg.mxu0
        %v6822 = vadd.f32 %v6712, %v6792
        %v6823 = vadd.f32 %v6713, %v6795
        %v6824 = vadd.f32 %v6714, %v6800
        %v6825 = vadd.f32 %v6715, %v6803
        %v6826 = vadd.f32 %v6716, %v6808
        %v6827 = vadd.f32 %v6717, %v6811
        %v6828 = vadd.f32 %v6718, %v6816
        %v6829 = vadd.f32 %v6719, %v6819
        %v6838 = vunpack.c.l.b16 %v2352
        %v6839 = vunpack.c.h.b16 %v2352
        %v6840 = vunpack.c.l.b16 %v2353
        %v6841 = vunpack.c.h.b16 %v2353
        %v6842 = vunpack.c.l.b16 %v2354
        %v6843 = vunpack.c.h.b16 %v2354
        %v6844 = vunpack.c.l.b16 %v2355
        %v6845 = vunpack.c.h.b16 %v2355
        %v6846 = vunpack.c.l.b16 %v2356
        %v6847 = vunpack.c.h.b16 %v2356
        %v6848 = vunpack.c.l.b16 %v2357
        %v6849 = vunpack.c.h.b16 %v2357
        %v6850 = vunpack.c.l.b16 %v2358
        %v6851 = vunpack.c.h.b16 %v2358
        %v6852 = vunpack.c.l.b16 %v2359
        %v6853 = vunpack.c.h.b16 %v2359
        %v6854 = vpack.c.b16 %v6838, %v6838
        %v6855 = vpack.c.b16 %v6839, %v6839
        %v6856 = vpack.c.b16 %v6840, %v6840
        %v6857 = vpack.c.b16 %v6841, %v6841
        %v6858 = vpack.c.b16 %v6842, %v6842
        %v6859 = vpack.c.b16 %v6843, %v6843
        %v6860 = vpack.c.b16 %v6844, %v6844
        %v6861 = vpack.c.b16 %v6845, %v6845
        %v6862 = vpack.c.b16 %v6846, %v6846
        %v6863 = vpack.c.b16 %v6847, %v6847
        %v6864 = vpack.c.b16 %v6848, %v6848
        %v6865 = vpack.c.b16 %v6849, %v6849
        %v6866 = vpack.c.b16 %v6850, %v6850
        %v6867 = vpack.c.b16 %v6851, %v6851
        %v6868 = vpack.c.b16 %v6852, %v6852
        %v6869 = vpack.c.b16 %v6853, %v6853
        %v6871 = vshrl.u32 %v6854, 16
        %v6873 = vrot.slane %v6871, 4
        %v6874 = vshll.u32 %v6854, 16
        %v6876 = vrot.slane %v6874, 5
        %v6877 = vor.u32 %v6873, %v6876
        %v6878 = vrot.slane %v6877, 4
        %v6880 = vshll.u32 %v6855, 16
        %v6882 = vrot.slane %v6880, 5
        %v6883 = vsel %vm6173, %v6878, %v6882
        %v6885 = vshrl.u32 %v6856, 16
        %v6887 = vrot.slane %v6885, 4
        %v6888 = vshll.u32 %v6856, 16
        %v6890 = vrot.slane %v6888, 5
        %v6891 = vor.u32 %v6887, %v6890
        %v6892 = vrot.slane %v6891, 4
        %v6894 = vshll.u32 %v6857, 16
        %v6896 = vrot.slane %v6894, 5
        %v6897 = vsel %vm6173, %v6892, %v6896
        %v6899 = vshrl.u32 %v6858, 16
        %v6901 = vrot.slane %v6899, 4
        %v6902 = vshll.u32 %v6858, 16
        %v6904 = vrot.slane %v6902, 5
        %v6905 = vor.u32 %v6901, %v6904
        %v6906 = vrot.slane %v6905, 4
        %v6908 = vshll.u32 %v6859, 16
        %v6910 = vrot.slane %v6908, 5
        %v6911 = vsel %vm6173, %v6906, %v6910
        %v6913 = vshrl.u32 %v6860, 16
        %v6915 = vrot.slane %v6913, 4
        %v6916 = vshll.u32 %v6860, 16
        %v6918 = vrot.slane %v6916, 5
        %v6919 = vor.u32 %v6915, %v6918
        %v6920 = vrot.slane %v6919, 4
        %v6922 = vshll.u32 %v6861, 16
        %v6924 = vrot.slane %v6922, 5
        %v6925 = vsel %vm6173, %v6920, %v6924
        %v6927 = vshrl.u32 %v6862, 16
        %v6929 = vrot.slane %v6927, 4
        %v6930 = vshll.u32 %v6862, 16
        %v6932 = vrot.slane %v6930, 5
        %v6933 = vor.u32 %v6929, %v6932
        %v6934 = vrot.slane %v6933, 4
        %v6936 = vshll.u32 %v6863, 16
        %v6938 = vrot.slane %v6936, 5
        %v6939 = vsel %vm6173, %v6934, %v6938
        %v6941 = vshrl.u32 %v6864, 16
        %v6943 = vrot.slane %v6941, 4
        %v6944 = vshll.u32 %v6864, 16
        %v6946 = vrot.slane %v6944, 5
        %v6947 = vor.u32 %v6943, %v6946
        %v6948 = vrot.slane %v6947, 4
        %v6950 = vshll.u32 %v6865, 16
        %v6952 = vrot.slane %v6950, 5
        %v6953 = vsel %vm6173, %v6948, %v6952
        %v6955 = vshrl.u32 %v6866, 16
        %v6957 = vrot.slane %v6955, 4
        %v6958 = vshll.u32 %v6866, 16
        %v6960 = vrot.slane %v6958, 5
        %v6961 = vor.u32 %v6957, %v6960
        %v6962 = vrot.slane %v6961, 4
        %v6964 = vshll.u32 %v6867, 16
        %v6966 = vrot.slane %v6964, 5
        %v6967 = vsel %vm6173, %v6962, %v6966
        %v6969 = vshrl.u32 %v6868, 16
        %v6971 = vrot.slane %v6969, 4
        %v6972 = vshll.u32 %v6868, 16
        %v6974 = vrot.slane %v6972, 5
        %v6975 = vor.u32 %v6971, %v6974
        %v6976 = vrot.slane %v6975, 4
        %v6978 = vshll.u32 %v6869, 16
        %v6980 = vrot.slane %v6978, 5
        %v6981 = vsel %vm6173, %v6976, %v6980
        %s6982 = scalar_lea.vmem %s4, 16
        %v6983 = vld [vmem:[%s6982] sm:$0xf]
        %v6984 = vunpack.c.l.b16 %v6883
        %v6985 = vunpack.c.l.b16 %v6897
        %v6986 = vunpack.c.l.b16 %v6911
        %v6987 = vunpack.c.l.b16 %v6925
        %v6988 = vunpack.c.l.b16 %v6939
        %v6989 = vunpack.c.l.b16 %v6953
        %v6990 = vunpack.c.l.b16 %v6967
        %v6991 = vunpack.c.l.b16 %v6981
        %v6992 = vpack.c.b16 %v6985, %v6984
        %v6993 = vpack.c.b16 %v6987, %v6986
        %v6994 = vpack.c.b16 %v6989, %v6988
        %v6995 = vpack.c.b16 %v6991, %v6990
        %v6997 = vsel %vm6300, %v6992, 0
        %v7000 = vsel %vm6300, %v6993, 0
        %v7003 = vsel %vm6300, %v6994, 0
        %v7006 = vsel %vm6300, %v6995, 0
        %v7009 = vsel %vm6313, %v6983, 0
        %7011 = vmatprep.subr.bf16.mxu0 0
        %7012 = vmatpush1.bf16.msra.mxu0 %v7009
        %7013 = vmatprep.subr.bf16.mxu0 0
        %7014 = vmatpush1.bf16.msra.mxu0 0
        %7015 = vmatprep.subr.bf16.mxu0 0
        %7016 = vmatpush1.bf16.msra.mxu0 0
        %7017 = vmatprep.subr.bf16.mxu0 0
        %7018 = vmatpush1.bf16.msra.mxu0 0
        %7019 = vmatprep.subr.bf16.mxu0 0
        %7020 = vmatpush1.bf16.msra.mxu0 0
        %7021 = vmatprep.subr.bf16.mxu0 0
        %7022 = vmatpush1.bf16.msra.mxu0 0
        %7023 = vmatprep.subr.bf16.mxu0 0
        %7024 = vmatpush1.bf16.msra.mxu0 0
        %7025 = vmatprep.subr.bf16.mxu0 0
        %7026 = vmatpush1.bf16.msra.mxu0 0
        %7027 = vmatprep.subr.bf16.mxu0 0
        %7028 = vmatpush1.bf16.msra.mxu0 0
        %7029 = vmatprep.subr.bf16.mxu0 0
        %7030 = vmatpush1.bf16.msra.mxu0 0
        %7031 = vmatprep.subr.bf16.mxu0 0
        %7032 = vmatpush1.bf16.msra.mxu0 0
        %7033 = vmatprep.subr.bf16.mxu0 0
        %7034 = vmatpush1.bf16.msra.mxu0 0
        %7035 = vmatprep.subr.bf16.mxu0 0
        %7036 = vmatpush1.bf16.msra.mxu0 0
        %7037 = vmatprep.subr.bf16.mxu0 0
        %7038 = vmatpush1.bf16.msra.mxu0 0
        %7039 = vmatprep.subr.bf16.mxu0 0
        %7040 = vmatpush1.bf16.msra.mxu0 0
        %7041 = vmatprep.subr.bf16.mxu0 0
        %7042 = vmatpush1.bf16.msra.mxu0 0
        %7043 = vmatprep.mubr.bf16.mxu0 0
        %7044 = vmatmul.mubr.bf16.gmra.mrb[0].mxu0 %v6997
        %v7045 = vpop.f32.mrb[0].mxu0
        %v7046 = vadd.f32 0.0, %v7045
        %v7047 = vpop.f32.mrb[0].mxu0
        %v7048 = vpop.f32.mrb[0].mxu0
        %v7049 = vadd.f32 0.0, %v7048
        %v7050 = vpop.f32.mrb[0].mxu0
        %7051 = vmatprep.mubr.bf16.mxu0 0
        %7052 = vmatmul.mubr.bf16.gmra.mrb[0].mxu0 %v7000
        %v7053 = vpop.f32.mrb[0].mxu0
        %v7054 = vadd.f32 0.0, %v7053
        %v7055 = vpop.f32.mrb[0].mxu0
        %v7056 = vpop.f32.mrb[0].mxu0
        %v7057 = vadd.f32 0.0, %v7056
        %v7058 = vpop.f32.mrb[0].mxu0
        %7059 = vmatprep.mubr.bf16.mxu0 0
        %7060 = vmatmul.mubr.bf16.gmra.mrb[0].mxu0 %v7003
        %v7061 = vpop.f32.mrb[0].mxu0
        %v7062 = vadd.f32 0.0, %v7061
        %v7063 = vpop.f32.mrb[0].mxu0
        %v7064 = vpop.f32.mrb[0].mxu0
        %v7065 = vadd.f32 0.0, %v7064
        %v7066 = vpop.f32.mrb[0].mxu0
        %7067 = vmatprep.mubr.bf16.mxu0 0
        %7068 = vmatmul.mubr.bf16.gmra.mrb[0].mxu0 %v7006
        %v7069 = vpop.f32.mrb[0].mxu0
        %v7070 = vadd.f32 0.0, %v7069
        %v7071 = vpop.f32.mrb[0].mxu0
        %v7072 = vpop.f32.mrb[0].mxu0
        %v7073 = vadd.f32 0.0, %v7072
        %v7074 = vpop.f32.mrb[0].mxu0
        %7075 = vdwg.mxu0
        %v7076 = vadd.f32 %v6822, %v7046
        %v7077 = vadd.f32 %v6823, %v7049
        %v7078 = vadd.f32 %v6824, %v7054
        %v7079 = vadd.f32 %v6825, %v7057
        %v7080 = vadd.f32 %v6826, %v7062
        %v7081 = vadd.f32 %v6827, %v7065
        %v7082 = vadd.f32 %v6828, %v7070
        %v7083 = vadd.f32 %v6829, %v7073
        %v7084 = vunpack.c.h.b16 %v3390
        %v7085 = vunpack.c.h.b16 %v3391
        %v7086 = vunpack.c.h.b16 %v3392
        %v7087 = vunpack.c.h.b16 %v3393
        %v7088 = vunpack.c.h.b16 %v3394
        %v7089 = vunpack.c.h.b16 %v3395
        %v7090 = vunpack.c.h.b16 %v3396
        %v7091 = vunpack.c.h.b16 %v3397
        %v7092 = vpack.c.b16 %v6730, %v6730
        %v7093 = vpack.c.b16 %v7084, %v7084
        %v7094 = vpack.c.b16 %v6731, %v6731
        %v7095 = vpack.c.b16 %v7085, %v7085
        %v7096 = vpack.c.b16 %v6732, %v6732
        %v7097 = vpack.c.b16 %v7086, %v7086
        %v7098 = vpack.c.b16 %v6733, %v6733
        %v7099 = vpack.c.b16 %v7087, %v7087
        %v7100 = vpack.c.b16 %v6734, %v6734
        %v7101 = vpack.c.b16 %v7088, %v7088
        %v7102 = vpack.c.b16 %v6735, %v6735
        %v7103 = vpack.c.b16 %v7089, %v7089
        %v7104 = vpack.c.b16 %v6736, %v6736
        %v7105 = vpack.c.b16 %v7090, %v7090
        %v7106 = vpack.c.b16 %v6737, %v6737
        %v7107 = vpack.c.b16 %v7091, %v7091
        %v7109 = vshrl.u32 %v7092, 16
        %v7111 = vrot.slane %v7109, 4
        %v7112 = vshll.u32 %v7092, 16
        %v7114 = vrot.slane %v7112, 5
        %v7115 = vor.u32 %v7111, %v7114
        %v7116 = vrot.slane %v7115, 4
        %v7118 = vshll.u32 %v7093, 16
        %v7120 = vrot.slane %v7118, 5
        %v7121 = vsel %vm6173, %v7116, %v7120
        %v7123 = vshrl.u32 %v7094, 16
        %v7125 = vrot.slane %v7123, 4
        %v7126 = vshll.u32 %v7094, 16
        %v7128 = vrot.slane %v7126, 5
        %v7129 = vor.u32 %v7125, %v7128
        %v7130 = vrot.slane %v7129, 4
        %v7132 = vshll.u32 %v7095, 16
        %v7134 = vrot.slane %v7132, 5
        %v7135 = vsel %vm6173, %v7130, %v7134
        %v7137 = vshrl.u32 %v7096, 16
        %v7139 = vrot.slane %v7137, 4
        %v7140 = vshll.u32 %v7096, 16
        %v7142 = vrot.slane %v7140, 5
        %v7143 = vor.u32 %v7139, %v7142
        %v7144 = vrot.slane %v7143, 4
        %v7146 = vshll.u32 %v7097, 16
        %v7148 = vrot.slane %v7146, 5
        %v7149 = vsel %vm6173, %v7144, %v7148
        %v7151 = vshrl.u32 %v7098, 16
        %v7153 = vrot.slane %v7151, 4
        %v7154 = vshll.u32 %v7098, 16
        %v7156 = vrot.slane %v7154, 5
        %v7157 = vor.u32 %v7153, %v7156
        %v7158 = vrot.slane %v7157, 4
        %v7160 = vshll.u32 %v7099, 16
        %v7162 = vrot.slane %v7160, 5
        %v7163 = vsel %vm6173, %v7158, %v7162
        %v7165 = vshrl.u32 %v7100, 16
        %v7167 = vrot.slane %v7165, 4
        %v7168 = vshll.u32 %v7100, 16
        %v7170 = vrot.slane %v7168, 5
        %v7171 = vor.u32 %v7167, %v7170
        %v7172 = vrot.slane %v7171, 4
        %v7174 = vshll.u32 %v7101, 16
        %v7176 = vrot.slane %v7174, 5
        %v7177 = vsel %vm6173, %v7172, %v7176
        %v7179 = vshrl.u32 %v7102, 16
        %v7181 = vrot.slane %v7179, 4
        %v7182 = vshll.u32 %v7102, 16
        %v7184 = vrot.slane %v7182, 5
        %v7185 = vor.u32 %v7181, %v7184
        %v7186 = vrot.slane %v7185, 4
        %v7188 = vshll.u32 %v7103, 16
        %v7190 = vrot.slane %v7188, 5
        %v7191 = vsel %vm6173, %v7186, %v7190
        %v7193 = vshrl.u32 %v7104, 16
        %v7195 = vrot.slane %v7193, 4
        %v7196 = vshll.u32 %v7104, 16
        %v7198 = vrot.slane %v7196, 5
        %v7199 = vor.u32 %v7195, %v7198
        %v7200 = vrot.slane %v7199, 4
        %v7202 = vshll.u32 %v7105, 16
        %v7204 = vrot.slane %v7202, 5
        %v7205 = vsel %vm6173, %v7200, %v7204
        %v7207 = vshrl.u32 %v7106, 16
        %v7209 = vrot.slane %v7207, 4
        %v7210 = vshll.u32 %v7106, 16
        %v7212 = vrot.slane %v7210, 5
        %v7213 = vor.u32 %v7209, %v7212
        %v7214 = vrot.slane %v7213, 4
        %v7216 = vshll.u32 %v7107, 16
        %v7218 = vrot.slane %v7216, 5
        %v7219 = vsel %vm6173, %v7214, %v7218
        %s7220 = scalar_lea.vmem %s4, 20
        %v7221 = vld [vmem:[%s7220] sm:$0xf]
        %v7222 = vunpack.c.l.b16 %v7121
        %v7223 = vunpack.c.l.b16 %v7135
        %v7224 = vunpack.c.l.b16 %v7149
        %v7225 = vunpack.c.l.b16 %v7163
        %v7226 = vunpack.c.l.b16 %v7177
        %v7227 = vunpack.c.l.b16 %v7191
        %v7228 = vunpack.c.l.b16 %v7205
        %v7229 = vunpack.c.l.b16 %v7219
        %v7230 = vpack.c.b16 %v7223, %v7222
        %v7231 = vpack.c.b16 %v7225, %v7224
        %v7232 = vpack.c.b16 %v7227, %v7226
        %v7233 = vpack.c.b16 %v7229, %v7228
        %v7235 = vsel %vm6300, %v7230, 0
        %v7238 = vsel %vm6300, %v7231, 0
        %v7241 = vsel %vm6300, %v7232, 0
        %v7244 = vsel %vm6300, %v7233, 0
        %v7247 = vsel %vm6313, %v7221, 0
        %7249 = vmatprep.subr.bf16.mxu0 0
        %7250 = vmatpush1.bf16.msra.mxu0 %v7247
        %7251 = vmatprep.subr.bf16.mxu0 0
        %7252 = vmatpush1.bf16.msra.mxu0 0
        %7253 = vmatprep.subr.bf16.mxu0 0
        %7254 = vmatpush1.bf16.msra.mxu0 0
        %7255 = vmatprep.subr.bf16.mxu0 0
        %7256 = vmatpush1.bf16.msra.mxu0 0
        %7257 = vmatprep.subr.bf16.mxu0 0
        %7258 = vmatpush1.bf16.msra.mxu0 0
        %7259 = vmatprep.subr.bf16.mxu0 0
        %7260 = vmatpush1.bf16.msra.mxu0 0
        %7261 = vmatprep.subr.bf16.mxu0 0
        %7262 = vmatpush1.bf16.msra.mxu0 0
        %7263 = vmatprep.subr.bf16.mxu0 0
        %7264 = vmatpush1.bf16.msra.mxu0 0
        %7265 = vmatprep.subr.bf16.mxu0 0
        %7266 = vmatpush1.bf16.msra.mxu0 0
        %7267 = vmatprep.subr.bf16.mxu0 0
        %7268 = vmatpush1.bf16.msra.mxu0 0
        %7269 = vmatprep.subr.bf16.mxu0 0
        %7270 = vmatpush1.bf16.msra.mxu0 0
        %7271 = vmatprep.subr.bf16.mxu0 0
        %7272 = vmatpush1.bf16.msra.mxu0 0
        %7273 = vmatprep.subr.bf16.mxu0 0
        %7274 = vmatpush1.bf16.msra.mxu0 0
        %7275 = vmatprep.subr.bf16.mxu0 0
        %7276 = vmatpush1.bf16.msra.mxu0 0
        %7277 = vmatprep.subr.bf16.mxu0 0
        %7278 = vmatpush1.bf16.msra.mxu0 0
        %7279 = vmatprep.subr.bf16.mxu0 0
        %7280 = vmatpush1.bf16.msra.mxu0 0
        %7281 = vmatprep.mubr.bf16.mxu0 0
        %7282 = vmatmul.mubr.bf16.gmra.mrb[0].mxu0 %v7235
        %v7283 = vpop.f32.mrb[0].mxu0
        %v7284 = vadd.f32 0.0, %v7283
        %v7285 = vpop.f32.mrb[0].mxu0
        %v7286 = vpop.f32.mrb[0].mxu0
        %v7287 = vadd.f32 0.0, %v7286
        %v7288 = vpop.f32.mrb[0].mxu0
        %7289 = vmatprep.mubr.bf16.mxu0 0
        %7290 = vmatmul.mubr.bf16.gmra.mrb[0].mxu0 %v7238
        %v7291 = vpop.f32.mrb[0].mxu0
        %v7292 = vadd.f32 0.0, %v7291
        %v7293 = vpop.f32.mrb[0].mxu0
        %v7294 = vpop.f32.mrb[0].mxu0
        %v7295 = vadd.f32 0.0, %v7294
        %v7296 = vpop.f32.mrb[0].mxu0
        %7297 = vmatprep.mubr.bf16.mxu0 0
        %7298 = vmatmul.mubr.bf16.gmra.mrb[0].mxu0 %v7241
        %v7299 = vpop.f32.mrb[0].mxu0
        %v7300 = vadd.f32 0.0, %v7299
        %v7301 = vpop.f32.mrb[0].mxu0
        %v7302 = vpop.f32.mrb[0].mxu0
        %v7303 = vadd.f32 0.0, %v7302
        %v7304 = vpop.f32.mrb[0].mxu0
        %7305 = vmatprep.mubr.bf16.mxu0 0
        %7306 = vmatmul.mubr.bf16.gmra.mrb[0].mxu0 %v7244
        %v7307 = vpop.f32.mrb[0].mxu0
        %v7308 = vadd.f32 0.0, %v7307
        %v7309 = vpop.f32.mrb[0].mxu0
        %v7310 = vpop.f32.mrb[0].mxu0
        %v7311 = vadd.f32 0.0, %v7310
        %v7312 = vpop.f32.mrb[0].mxu0
        %7313 = vdwg.mxu0
        %v7314 = vadd.f32 %v7076, %v7284
        %v7315 = vadd.f32 %v7077, %v7287
        %v7316 = vadd.f32 %v7078, %v7292
        %v7317 = vadd.f32 %v7079, %v7295
        %v7318 = vadd.f32 %v7080, %v7300
        %v7319 = vadd.f32 %v7081, %v7303
        %v7320 = vadd.f32 %v7082, %v7308
        %v7321 = vadd.f32 %v7083, %v7311
        %s7322 = scalar_lea.vmem %s4, 24
        %v7323 = vld [vmem:[%s7322] sm:$0xf]
        %v7325 = vunpack.c.l.b16 %v6129
        %v7326 = vpack.c.b16 %v6392, %v6391
        %v7327 = vpack.c.b16 %v6394, %v6393
        %v7328 = vpack.c.b16 %v6396, %v6395
        %v7329 = vpack.c.b16 %v7325, %v6397
        %v7331 = vsel %vm6300, %v7326, 0
        %v7334 = vsel %vm6300, %v7327, 0
        %v7337 = vsel %vm6300, %v7328, 0
        %v7340 = vsel %vm6300, %v7329, 0
        %v7343 = vsel %vm6313, %v7323, 0
        %7345 = vmatprep.subr.bf16.mxu0 0
        %7346 = vmatpush1.bf16.msra.mxu0 %v7343
        %7347 = vmatprep.subr.bf16.mxu0 0
        %7348 = vmatpush1.bf16.msra.mxu0 0
        %7349 = vmatprep.subr.bf16.mxu0 0
        %7350 = vmatpush1.bf16.msra.mxu0 0
        %7351 = vmatprep.subr.bf16.mxu0 0
        %7352 = vmatpush1.bf16.msra.mxu0 0
        %7353 = vmatprep.subr.bf16.mxu0 0
        %7354 = vmatpush1.bf16.msra.mxu0 0
        %7355 = vmatprep.subr.bf16.mxu0 0
        %7356 = vmatpush1.bf16.msra.mxu0 0
        %7357 = vmatprep.subr.bf16.mxu0 0
        %7358 = vmatpush1.bf16.msra.mxu0 0
        %7359 = vmatprep.subr.bf16.mxu0 0
        %7360 = vmatpush1.bf16.msra.mxu0 0
        %7361 = vmatprep.subr.bf16.mxu0 0
        %7362 = vmatpush1.bf16.msra.mxu0 0
        %7363 = vmatprep.subr.bf16.mxu0 0
        %7364 = vmatpush1.bf16.msra.mxu0 0
        %7365 = vmatprep.subr.bf16.mxu0 0
        %7366 = vmatpush1.bf16.msra.mxu0 0
        %7367 = vmatprep.subr.bf16.mxu0 0
        %7368 = vmatpush1.bf16.msra.mxu0 0
        %7369 = vmatprep.subr.bf16.mxu0 0
        %7370 = vmatpush1.bf16.msra.mxu0 0
        %7371 = vmatprep.subr.bf16.mxu0 0
        %7372 = vmatpush1.bf16.msra.mxu0 0
        %7373 = vmatprep.subr.bf16.mxu0 0
        %7374 = vmatpush1.bf16.msra.mxu0 0
        %7375 = vmatprep.subr.bf16.mxu0 0
        %7376 = vmatpush1.bf16.msra.mxu0 0
        %7377 = vmatprep.mubr.bf16.mxu0 0
        %7378 = vmatmul.mubr.bf16.gmra.mrb[0].mxu0 %v7331
        %v7379 = vpop.f32.mrb[0].mxu0
        %v7380 = vadd.f32 0.0, %v7379
        %v7381 = vpop.f32.mrb[0].mxu0
        %v7382 = vpop.f32.mrb[0].mxu0
        %v7383 = vadd.f32 0.0, %v7382
        %v7384 = vpop.f32.mrb[0].mxu0
        %7385 = vmatprep.mubr.bf16.mxu0 0
        %7386 = vmatmul.mubr.bf16.gmra.mrb[0].mxu0 %v7334
        %v7387 = vpop.f32.mrb[0].mxu0
        %v7388 = vadd.f32 0.0, %v7387
        %v7389 = vpop.f32.mrb[0].mxu0
        %v7390 = vpop.f32.mrb[0].mxu0
        %v7391 = vadd.f32 0.0, %v7390
        %v7392 = vpop.f32.mrb[0].mxu0
        %7393 = vmatprep.mubr.bf16.mxu0 0
        %7394 = vmatmul.mubr.bf16.gmra.mrb[0].mxu0 %v7337
        %v7395 = vpop.f32.mrb[0].mxu0
        %v7396 = vadd.f32 0.0, %v7395
        %v7397 = vpop.f32.mrb[0].mxu0
        %v7398 = vpop.f32.mrb[0].mxu0
        %v7399 = vadd.f32 0.0, %v7398
        %v7400 = vpop.f32.mrb[0].mxu0
        %7401 = vmatprep.mubr.bf16.mxu0 0
        %7402 = vmatmul.mubr.bf16.gmra.mrb[0].mxu0 %v7340
        %v7403 = vpop.f32.mrb[0].mxu0
        %v7404 = vadd.f32 0.0, %v7403
        %v7405 = vpop.f32.mrb[0].mxu0
        %v7406 = vpop.f32.mrb[0].mxu0
        %v7407 = vadd.f32 0.0, %v7406
        %v7408 = vpop.f32.mrb[0].mxu0
        %7409 = vdwg.mxu0
        %v7410 = vadd.f32 %v7314, %v7380
        %v7411 = vadd.f32 %v7315, %v7383
        %v7412 = vadd.f32 %v7316, %v7388
        %v7413 = vadd.f32 %v7317, %v7391
        %v7414 = vadd.f32 %v7318, %v7396
        %v7415 = vadd.f32 %v7319, %v7399
        %v7416 = vadd.f32 %v7320, %v7404
        %v7417 = vadd.f32 %v7321, %v7407
        %v7419 = vunpack.c.l.b16 %v4762
        %v7420 = vunpack.c.h.b16 %v4762
        %v7421 = vpack.c.b16 %v7419, %v7419
        %v7422 = vpack.c.b16 %v7420, %v7420
        %v7424 = vshrl.u32 %v7421, 16
        %v7426 = vrot.slane %v7424, 4
        %v7427 = vshll.u32 %v7421, 16
        %v7429 = vrot.slane %v7427, 5
        %v7430 = vor.u32 %v7426, %v7429
        %v7431 = vrot.slane %v7430, 4
        %v7433 = vshll.u32 %v7422, 16
        %v7435 = vrot.slane %v7433, 5
        %v7436 = vsel %vm6173, %v7431, %v7435
        %s7437 = scalar_lea.vmem %s4, 28
        %v7438 = vld [vmem:[%s7437] sm:$0xf]
        %v7439 = vunpack.c.l.b16 %v7436
        %v7440 = vpack.c.b16 %v6290, %v6289
        %v7441 = vpack.c.b16 %v6292, %v6291
        %v7442 = vpack.c.b16 %v6294, %v6293
        %v7443 = vpack.c.b16 %v7439, %v6295
        %v7445 = vsel %vm6300, %v7440, 0
        %v7448 = vsel %vm6300, %v7441, 0
        %v7451 = vsel %vm6300, %v7442, 0
        %v7454 = vsel %vm6300, %v7443, 0
        %v7457 = vsel %vm6313, %v7438, 0
        %7459 = vmatprep.subr.bf16.mxu0 0
        %7460 = vmatpush1.bf16.msra.mxu0 %v7457
        %7461 = vmatprep.subr.bf16.mxu0 0
        %7462 = vmatpush1.bf16.msra.mxu0 0
        %7463 = vmatprep.subr.bf16.mxu0 0
        %7464 = vmatpush1.bf16.msra.mxu0 0
        %7465 = vmatprep.subr.bf16.mxu0 0
        %7466 = vmatpush1.bf16.msra.mxu0 0
        %7467 = vmatprep.subr.bf16.mxu0 0
        %7468 = vmatpush1.bf16.msra.mxu0 0
        %7469 = vmatprep.subr.bf16.mxu0 0
        %7470 = vmatpush1.bf16.msra.mxu0 0
        %7471 = vmatprep.subr.bf16.mxu0 0
        %7472 = vmatpush1.bf16.msra.mxu0 0
        %7473 = vmatprep.subr.bf16.mxu0 0
        %7474 = vmatpush1.bf16.msra.mxu0 0
        %7475 = vmatprep.subr.bf16.mxu0 0
        %7476 = vmatpush1.bf16.msra.mxu0 0
        %7477 = vmatprep.subr.bf16.mxu0 0
        %7478 = vmatpush1.bf16.msra.mxu0 0
        %7479 = vmatprep.subr.bf16.mxu0 0
        %7480 = vmatpush1.bf16.msra.mxu0 0
        %7481 = vmatprep.subr.bf16.mxu0 0
        %7482 = vmatpush1.bf16.msra.mxu0 0
        %7483 = vmatprep.subr.bf16.mxu0 0
        %7484 = vmatpush1.bf16.msra.mxu0 0
        %7485 = vmatprep.subr.bf16.mxu0 0
        %7486 = vmatpush1.bf16.msra.mxu0 0
        %7487 = vmatprep.subr.bf16.mxu0 0
        %7488 = vmatpush1.bf16.msra.mxu0 0
        %7489 = vmatprep.subr.bf16.mxu0 0
        %7490 = vmatpush1.bf16.msra.mxu0 0
        %7491 = vmatprep.mubr.bf16.mxu0 0
        %7492 = vmatmul.mubr.bf16.gmra.mrb[0].mxu0 %v7445
        %v7493 = vpop.f32.mrb[0].mxu0
        %v7494 = vadd.f32 0.0, %v7493
        %v7495 = vpop.f32.mrb[0].mxu0
        %v7496 = vpop.f32.mrb[0].mxu0
        %v7497 = vadd.f32 0.0, %v7496
        %v7498 = vpop.f32.mrb[0].mxu0
        %7499 = vmatprep.mubr.bf16.mxu0 0
        %7500 = vmatmul.mubr.bf16.gmra.mrb[0].mxu0 %v7448
        %v7501 = vpop.f32.mrb[0].mxu0
        %v7502 = vadd.f32 0.0, %v7501
        %v7503 = vpop.f32.mrb[0].mxu0
        %v7504 = vpop.f32.mrb[0].mxu0
        %v7505 = vadd.f32 0.0, %v7504
        %v7506 = vpop.f32.mrb[0].mxu0
        %7507 = vmatprep.mubr.bf16.mxu0 0
        %7508 = vmatmul.mubr.bf16.gmra.mrb[0].mxu0 %v7451
        %v7509 = vpop.f32.mrb[0].mxu0
        %v7510 = vadd.f32 0.0, %v7509
        %v7511 = vpop.f32.mrb[0].mxu0
        %v7512 = vpop.f32.mrb[0].mxu0
        %v7513 = vadd.f32 0.0, %v7512
        %v7514 = vpop.f32.mrb[0].mxu0
        %7515 = vmatprep.mubr.bf16.mxu0 0
        %7516 = vmatmul.mubr.bf16.gmra.mrb[0].mxu0 %v7454
        %v7517 = vpop.f32.mrb[0].mxu0
        %v7518 = vadd.f32 0.0, %v7517
        %v7519 = vpop.f32.mrb[0].mxu0
        %v7520 = vpop.f32.mrb[0].mxu0
        %v7521 = vadd.f32 0.0, %v7520
        %v7522 = vpop.f32.mrb[0].mxu0
        %7523 = vdwg.mxu0
        %v7524 = vadd.f32 %v7410, %v7494
        %v7525 = vadd.f32 %v7411, %v7497
        %v7526 = vadd.f32 %v7412, %v7502
        %v7527 = vadd.f32 %v7413, %v7505
        %v7528 = vadd.f32 %v7414, %v7510
        %v7529 = vadd.f32 %v7415, %v7513
        %v7530 = vadd.f32 %v7416, %v7518
        %v7531 = vadd.f32 %v7417, %v7521
        %v7532 = vunpack.c.h.b16 %v6129
        %v7533 = vpack.c.b16 %v7325, %v7325
        %v7534 = vpack.c.b16 %v7532, %v7532
        %v7536 = vshrl.u32 %v7533, 16
        %v7538 = vrot.slane %v7536, 4
        %v7539 = vshll.u32 %v7533, 16
        %v7541 = vrot.slane %v7539, 5
        %v7542 = vor.u32 %v7538, %v7541
        %v7543 = vrot.slane %v7542, 4
        %v7545 = vshll.u32 %v7534, 16
        %v7547 = vrot.slane %v7545, 5
        %v7548 = vsel %vm6173, %v7543, %v7547
        %s7549 = scalar_lea.vmem %s4, 32
        %v7550 = vld [vmem:[%s7549] sm:$0xf]
        %v7551 = vunpack.c.l.b16 %v7548
        %v7552 = vpack.c.b16 %v6622, %v6621
        %v7553 = vpack.c.b16 %v6624, %v6623
        %v7554 = vpack.c.b16 %v6626, %v6625
        %v7555 = vpack.c.b16 %v7551, %v6627
        %v7557 = vsel %vm6300, %v7552, 0
        %v7560 = vsel %vm6300, %v7553, 0
        %v7563 = vsel %vm6300, %v7554, 0
        %v7566 = vsel %vm6300, %v7555, 0
        %v7569 = vsel %vm6313, %v7550, 0
        %7571 = vmatprep.subr.bf16.mxu0 0
        %7572 = vmatpush1.bf16.msra.mxu0 %v7569
        %7573 = vmatprep.subr.bf16.mxu0 0
        %7574 = vmatpush1.bf16.msra.mxu0 0
        %7575 = vmatprep.subr.bf16.mxu0 0
        %7576 = vmatpush1.bf16.msra.mxu0 0
        %7577 = vmatprep.subr.bf16.mxu0 0
        %7578 = vmatpush1.bf16.msra.mxu0 0
        %7579 = vmatprep.subr.bf16.mxu0 0
        %7580 = vmatpush1.bf16.msra.mxu0 0
        %7581 = vmatprep.subr.bf16.mxu0 0
        %7582 = vmatpush1.bf16.msra.mxu0 0
        %7583 = vmatprep.subr.bf16.mxu0 0
        %7584 = vmatpush1.bf16.msra.mxu0 0
        %7585 = vmatprep.subr.bf16.mxu0 0
        %7586 = vmatpush1.bf16.msra.mxu0 0
        %7587 = vmatprep.subr.bf16.mxu0 0
        %7588 = vmatpush1.bf16.msra.mxu0 0
        %7589 = vmatprep.subr.bf16.mxu0 0
        %7590 = vmatpush1.bf16.msra.mxu0 0
        %7591 = vmatprep.subr.bf16.mxu0 0
        %7592 = vmatpush1.bf16.msra.mxu0 0
        %7593 = vmatprep.subr.bf16.mxu0 0
        %7594 = vmatpush1.bf16.msra.mxu0 0
        %7595 = vmatprep.subr.bf16.mxu0 0
        %7596 = vmatpush1.bf16.msra.mxu0 0
        %7597 = vmatprep.subr.bf16.mxu0 0
        %7598 = vmatpush1.bf16.msra.mxu0 0
        %7599 = vmatprep.subr.bf16.mxu0 0
        %7600 = vmatpush1.bf16.msra.mxu0 0
        %7601 = vmatprep.subr.bf16.mxu0 0
        %7602 = vmatpush1.bf16.msra.mxu0 0
        %7603 = vmatprep.mubr.bf16.mxu0 0
        %7604 = vmatmul.mubr.bf16.gmra.mrb[0].mxu0 %v7557
        %v7605 = vpop.f32.mrb[0].mxu0
        %v7606 = vadd.f32 0.0, %v7605
        %v7607 = vpop.f32.mrb[0].mxu0
        %v7608 = vpop.f32.mrb[0].mxu0
        %v7609 = vadd.f32 0.0, %v7608
        %v7610 = vpop.f32.mrb[0].mxu0
        %7611 = vmatprep.mubr.bf16.mxu0 0
        %7612 = vmatmul.mubr.bf16.gmra.mrb[0].mxu0 %v7560
        %v7613 = vpop.f32.mrb[0].mxu0
        %v7614 = vadd.f32 0.0, %v7613
        %v7615 = vpop.f32.mrb[0].mxu0
        %v7616 = vpop.f32.mrb[0].mxu0
        %v7617 = vadd.f32 0.0, %v7616
        %v7618 = vpop.f32.mrb[0].mxu0
        %7619 = vmatprep.mubr.bf16.mxu0 0
        %7620 = vmatmul.mubr.bf16.gmra.mrb[0].mxu0 %v7563
        %v7621 = vpop.f32.mrb[0].mxu0
        %v7622 = vadd.f32 0.0, %v7621
        %v7623 = vpop.f32.mrb[0].mxu0
        %v7624 = vpop.f32.mrb[0].mxu0
        %v7625 = vadd.f32 0.0, %v7624
        %v7626 = vpop.f32.mrb[0].mxu0
        %7627 = vmatprep.mubr.bf16.mxu0 0
        %7628 = vmatmul.mubr.bf16.gmra.mrb[0].mxu0 %v7566
        %v7629 = vpop.f32.mrb[0].mxu0
        %v7630 = vadd.f32 0.0, %v7629
        %v7631 = vpop.f32.mrb[0].mxu0
        %v7632 = vpop.f32.mrb[0].mxu0
        %v7633 = vadd.f32 0.0, %v7632
        %v7634 = vpop.f32.mrb[0].mxu0
        %7635 = vdwg.mxu0
        %v7636 = vadd.f32 %v7524, %v7606
        %v7637 = vadd.f32 %v7525, %v7609
        %v7638 = vadd.f32 %v7526, %v7614
        %v7639 = vadd.f32 %v7527, %v7617
        %v7640 = vadd.f32 %v7528, %v7622
        %v7641 = vadd.f32 %v7529, %v7625
        %v7642 = vadd.f32 %v7530, %v7630
        %v7643 = vadd.f32 %v7531, %v7633
        %v7644 = vld [vmem:[%s5] sm:$0x1]
        %v7646 = vlaneseq
        %v7647 = vshrl.u32 %v7646, 7
        %v7648 = vsub.s32 0, %v7647
        %v7649 = vrot.slane %v7644, %v7648
        %v7651 = vadd.f32 %v7636, %v7649
        %v7652 = vadd.f32 %v7637, %v7649
        %v7653 = vadd.f32 %v7638, %v7649
        %v7654 = vadd.f32 %v7639, %v7649
        %v7655 = vadd.f32 %v7640, %v7649
        %v7656 = vadd.f32 %v7641, %v7649
        %v7657 = vadd.f32 %v7642, %v7649
        %v7658 = vadd.f32 %v7643, %v7649
        %v7659 = vmax.f32 %v7651, 0.0
        %v7660 = vmax.f32 %v7652, 0.0
        %v7661 = vmax.f32 %v7653, 0.0
        %v7662 = vmax.f32 %v7654, 0.0
        %v7663 = vmax.f32 %v7655, 0.0
        %v7664 = vmax.f32 %v7656, 0.0
        %v7665 = vmax.f32 %v7657, 0.0
        %v7666 = vmax.f32 %v7658, 0.0
        %v7667 = vpack.c.bf16 %v7660, %v7659
        %v7668 = vpack.c.bf16 %v7662, %v7661
        %v7669 = vpack.c.bf16 %v7664, %v7663
        %v7670 = vpack.c.bf16 %v7666, %v7665
        %v7671 = vld [vmem:[%s6] sm:$0xf]
        %v7672 = vld [vmem:[%s7] sm:$0x1]
        %v7674 = vlaneseq
        %v7675 = vshrl.u32 %v7674, 7
        %v7676 = vsub.s32 0, %v7675
        %v7677 = vrot.slane %v7672, %v7676
        %v7680 = vsel %vm6300, %v7667, 0
        %v7683 = vsel %vm6300, %v7668, 0
        %v7686 = vsel %vm6300, %v7669, 0
        %v7689 = vsel %vm6300, %v7670, 0
        %v7692 = vsel %vm6313, %v7671, 0
        %7694 = vmatprep.subr.bf16.mxu0 0
        %7695 = vmatpush1.bf16.msra.mxu0 %v7692
        %7696 = vmatprep.subr.bf16.mxu0 0
        %7697 = vmatpush1.bf16.msra.mxu0 0
        %7698 = vmatprep.subr.bf16.mxu0 0
        %7699 = vmatpush1.bf16.msra.mxu0 0
        %7700 = vmatprep.subr.bf16.mxu0 0
        %7701 = vmatpush1.bf16.msra.mxu0 0
        %7702 = vmatprep.subr.bf16.mxu0 0
        %7703 = vmatpush1.bf16.msra.mxu0 0
        %7704 = vmatprep.subr.bf16.mxu0 0
        %7705 = vmatpush1.bf16.msra.mxu0 0
        %7706 = vmatprep.subr.bf16.mxu0 0
        %7707 = vmatpush1.bf16.msra.mxu0 0
        %7708 = vmatprep.subr.bf16.mxu0 0
        %7709 = vmatpush1.bf16.msra.mxu0 0
        %7710 = vmatprep.subr.bf16.mxu0 0
        %7711 = vmatpush1.bf16.msra.mxu0 0
        %7712 = vmatprep.subr.bf16.mxu0 0
        %7713 = vmatpush1.bf16.msra.mxu0 0
        %7714 = vmatprep.subr.bf16.mxu0 0
        %7715 = vmatpush1.bf16.msra.mxu0 0
        %7716 = vmatprep.subr.bf16.mxu0 0
        %7717 = vmatpush1.bf16.msra.mxu0 0
        %7718 = vmatprep.subr.bf16.mxu0 0
        %7719 = vmatpush1.bf16.msra.mxu0 0
        %7720 = vmatprep.subr.bf16.mxu0 0
        %7721 = vmatpush1.bf16.msra.mxu0 0
        %7722 = vmatprep.subr.bf16.mxu0 0
        %7723 = vmatpush1.bf16.msra.mxu0 0
        %7724 = vmatprep.subr.bf16.mxu0 0
        %7725 = vmatpush1.bf16.msra.mxu0 0
        %7726 = vmatprep.mubr.bf16.mxu0 0
        %7727 = vmatmul.mubr.bf16.gmra.mrb[0].mxu0 %v7680
        %v7728 = vpop.f32.mrb[0].mxu0
        %v7729 = vadd.f32 %v7677, %v7728
        %v7730 = vpop.f32.mrb[0].mxu0
        %v7731 = vpop.f32.mrb[0].mxu0
        %v7732 = vadd.f32 %v7677, %v7731
        %v7733 = vpop.f32.mrb[0].mxu0
        %7734 = vmatprep.mubr.bf16.mxu0 0
        %7735 = vmatmul.mubr.bf16.gmra.mrb[0].mxu0 %v7683
        %v7736 = vpop.f32.mrb[0].mxu0
        %v7737 = vadd.f32 %v7677, %v7736
        %v7738 = vpop.f32.mrb[0].mxu0
        %v7739 = vpop.f32.mrb[0].mxu0
        %v7740 = vadd.f32 %v7677, %v7739
        %v7741 = vpop.f32.mrb[0].mxu0
        %7742 = vmatprep.mubr.bf16.mxu0 0
        %7743 = vmatmul.mubr.bf16.gmra.mrb[0].mxu0 %v7686
        %v7744 = vpop.f32.mrb[0].mxu0
        %v7745 = vadd.f32 %v7677, %v7744
        %v7746 = vpop.f32.mrb[0].mxu0
        %v7747 = vpop.f32.mrb[0].mxu0
        %v7748 = vadd.f32 %v7677, %v7747
        %v7749 = vpop.f32.mrb[0].mxu0
        %7750 = vmatprep.mubr.bf16.mxu0 0
        %7751 = vmatmul.mubr.bf16.gmra.mrb[0].mxu0 %v7689
        %v7752 = vpop.f32.mrb[0].mxu0
        %v7753 = vadd.f32 %v7677, %v7752
        %v7754 = vpop.f32.mrb[0].mxu0
        %v7755 = vpop.f32.mrb[0].mxu0
        %v7756 = vadd.f32 %v7677, %v7755
        %v7757 = vpop.f32.mrb[0].mxu0
        %7758 = vdwg.mxu0
        %v7759 = vmax.f32 %v7729, 0.0
        %v7760 = vmax.f32 %v7732, 0.0
        %v7761 = vmax.f32 %v7737, 0.0
        %v7762 = vmax.f32 %v7740, 0.0
        %v7763 = vmax.f32 %v7745, 0.0
        %v7764 = vmax.f32 %v7748, 0.0
        %v7765 = vmax.f32 %v7753, 0.0
        %v7766 = vmax.f32 %v7756, 0.0
        %v7768 = vshrl.u32 %v492, 16
        %v7770 = vrot.slane %v7768, 4
        %v7771 = vshll.u32 %v492, 16
        %v7773 = vrot.slane %v7771, 5
        %v7774 = vor.u32 %v7770, %v7773
        %v7775 = vrot.slane %v7774, 4
        %v7777 = vshll.u32 %v493, 16
        %v7779 = vrot.slane %v7777, 5
        %v7780 = vsel %vm6173, %v7775, %v7779
        %v7782 = vshrl.u32 %v494, 16
        %v7784 = vrot.slane %v7782, 4
        %v7785 = vshll.u32 %v494, 16
        %v7787 = vrot.slane %v7785, 5
        %v7788 = vor.u32 %v7784, %v7787
        %v7789 = vrot.slane %v7788, 4
        %v7791 = vshll.u32 %v495, 16
        %v7793 = vrot.slane %v7791, 5
        %v7794 = vsel %vm6173, %v7789, %v7793
        %v7796 = vshrl.u32 %v496, 16
        %v7798 = vrot.slane %v7796, 4
        %v7799 = vshll.u32 %v496, 16
        %v7801 = vrot.slane %v7799, 5
        %v7802 = vor.u32 %v7798, %v7801
        %v7803 = vrot.slane %v7802, 4
        %v7805 = vshll.u32 %v497, 16
        %v7807 = vrot.slane %v7805, 5
        %v7808 = vsel %vm6173, %v7803, %v7807
        %v7810 = vshrl.u32 %v498, 16
        %v7812 = vrot.slane %v7810, 4
        %v7813 = vshll.u32 %v498, 16
        %v7815 = vrot.slane %v7813, 5
        %v7816 = vor.u32 %v7812, %v7815
        %v7817 = vrot.slane %v7816, 4
        %v7819 = vshll.u32 %v499, 16
        %v7821 = vrot.slane %v7819, 5
        %v7822 = vsel %vm6173, %v7817, %v7821
        %v7824 = vshrl.u32 %v500, 16
        %v7826 = vrot.slane %v7824, 4
        %v7827 = vshll.u32 %v500, 16
        %v7829 = vrot.slane %v7827, 5
        %v7830 = vor.u32 %v7826, %v7829
        %v7831 = vrot.slane %v7830, 4
        %v7833 = vshll.u32 %v501, 16
        %v7835 = vrot.slane %v7833, 5
        %v7836 = vsel %vm6173, %v7831, %v7835
        %v7838 = vshrl.u32 %v502, 16
        %v7840 = vrot.slane %v7838, 4
        %v7841 = vshll.u32 %v502, 16
        %v7843 = vrot.slane %v7841, 5
        %v7844 = vor.u32 %v7840, %v7843
        %v7845 = vrot.slane %v7844, 4
        %v7847 = vshll.u32 %v503, 16
        %v7849 = vrot.slane %v7847, 5
        %v7850 = vsel %vm6173, %v7845, %v7849
        %v7852 = vshrl.u32 %v504, 16
        %v7854 = vrot.slane %v7852, 4
        %v7855 = vshll.u32 %v504, 16
        %v7857 = vrot.slane %v7855, 5
        %v7858 = vor.u32 %v7854, %v7857
        %v7859 = vrot.slane %v7858, 4
        %v7861 = vshll.u32 %v505, 16
        %v7863 = vrot.slane %v7861, 5
        %v7864 = vsel %vm6173, %v7859, %v7863
        %v7866 = vshrl.u32 %v506, 16
        %v7868 = vrot.slane %v7866, 4
        %v7869 = vshll.u32 %v506, 16
        %v7871 = vrot.slane %v7869, 5
        %v7872 = vor.u32 %v7868, %v7871
        %v7873 = vrot.slane %v7872, 4
        %v7875 = vshll.u32 %v507, 16
        %v7877 = vrot.slane %v7875, 5
        %v7878 = vsel %vm6173, %v7873, %v7877
        %v7879 = vld [vmem:[%s8] sm:$0x3]
        %v7880 = vld [vmem:[%s9] sm:$0x1]
        %v7882 = vlaneseq
        %v7883 = vshrl.u32 %v7882, 7
        %v7884 = vsub.s32 0, %v7883
        %v7885 = vrot.slane %v7880, %v7884
        %v7887 = vunpack.c.l.b16 %v7780
        %v7888 = vunpack.c.l.b16 %v7794
        %v7889 = vunpack.c.l.b16 %v7808
        %v7890 = vunpack.c.l.b16 %v7822
        %v7891 = vunpack.c.l.b16 %v7836
        %v7892 = vunpack.c.l.b16 %v7850
        %v7893 = vunpack.c.l.b16 %v7864
        %v7894 = vunpack.c.l.b16 %v7878
        %v7895 = vpack.c.b16 %v7888, %v7887
        %v7896 = vpack.c.b16 %v7890, %v7889
        %v7897 = vpack.c.b16 %v7892, %v7891
        %v7898 = vpack.c.b16 %v7894, %v7893
        %v7900 = vsel %vm1255, %v7895, 0
        %v7903 = vsel %vm1255, %v7896, 0
        %v7906 = vsel %vm1255, %v7897, 0
        %v7909 = vsel %vm1255, %v7898, 0
        %v7912 = vsel %vm1274, %v7879, 0
        %7914 = vmatprep.subr.bf16.mxu0 0
        %7915 = vmatpush1.bf16.msra.mxu0 %v7912
        %7916 = vmatprep.subr.bf16.mxu0 0
        %7917 = vmatpush1.bf16.msra.mxu0 0
        %7918 = vmatprep.subr.bf16.mxu0 0
        %7919 = vmatpush1.bf16.msra.mxu0 0
        %7920 = vmatprep.subr.bf16.mxu0 0
        %7921 = vmatpush1.bf16.msra.mxu0 0
        %7922 = vmatprep.subr.bf16.mxu0 0
        %7923 = vmatpush1.bf16.msra.mxu0 0
        %7924 = vmatprep.subr.bf16.mxu0 0
        %7925 = vmatpush1.bf16.msra.mxu0 0
        %7926 = vmatprep.subr.bf16.mxu0 0
        %7927 = vmatpush1.bf16.msra.mxu0 0
        %7928 = vmatprep.subr.bf16.mxu0 0
        %7929 = vmatpush1.bf16.msra.mxu0 0
        %7930 = vmatprep.subr.bf16.mxu0 0
        %7931 = vmatpush1.bf16.msra.mxu0 0
        %7932 = vmatprep.subr.bf16.mxu0 0
        %7933 = vmatpush1.bf16.msra.mxu0 0
        %7934 = vmatprep.subr.bf16.mxu0 0
        %7935 = vmatpush1.bf16.msra.mxu0 0
        %7936 = vmatprep.subr.bf16.mxu0 0
        %7937 = vmatpush1.bf16.msra.mxu0 0
        %7938 = vmatprep.subr.bf16.mxu0 0
        %7939 = vmatpush1.bf16.msra.mxu0 0
        %7940 = vmatprep.subr.bf16.mxu0 0
        %7941 = vmatpush1.bf16.msra.mxu0 0
        %7942 = vmatprep.subr.bf16.mxu0 0
        %7943 = vmatpush1.bf16.msra.mxu0 0
        %7944 = vmatprep.subr.bf16.mxu0 0
        %7945 = vmatpush1.bf16.msra.mxu0 0
        %7946 = vmatprep.mubr.bf16.mxu0 0
        %7947 = vmatmul.mubr.bf16.gmra.mrb[0].mxu0 %v7900
        %v7948 = vpop.f32.mrb[0].mxu0
        %v7949 = vadd.f32 %v7885, %v7948
        %v7950 = vpop.f32.mrb[0].mxu0
        %v7951 = vpop.f32.mrb[0].mxu0
        %v7952 = vadd.f32 %v7885, %v7951
        %v7953 = vpop.f32.mrb[0].mxu0
        %7954 = vmatprep.mubr.bf16.mxu0 0
        %7955 = vmatmul.mubr.bf16.gmra.mrb[0].mxu0 %v7903
        %v7956 = vpop.f32.mrb[0].mxu0
        %v7957 = vadd.f32 %v7885, %v7956
        %v7958 = vpop.f32.mrb[0].mxu0
        %v7959 = vpop.f32.mrb[0].mxu0
        %v7960 = vadd.f32 %v7885, %v7959
        %v7961 = vpop.f32.mrb[0].mxu0
        %7962 = vmatprep.mubr.bf16.mxu0 0
        %7963 = vmatmul.mubr.bf16.gmra.mrb[0].mxu0 %v7906
        %v7964 = vpop.f32.mrb[0].mxu0
        %v7965 = vadd.f32 %v7885, %v7964
        %v7966 = vpop.f32.mrb[0].mxu0
        %v7967 = vpop.f32.mrb[0].mxu0
        %v7968 = vadd.f32 %v7885, %v7967
        %v7969 = vpop.f32.mrb[0].mxu0
        %7970 = vmatprep.mubr.bf16.mxu0 0
        %7971 = vmatmul.mubr.bf16.gmra.mrb[0].mxu0 %v7909
        %v7972 = vpop.f32.mrb[0].mxu0
        %v7973 = vadd.f32 %v7885, %v7972
        %v7974 = vpop.f32.mrb[0].mxu0
        %v7975 = vpop.f32.mrb[0].mxu0
        %v7976 = vadd.f32 %v7885, %v7975
        %v7977 = vpop.f32.mrb[0].mxu0
        %7978 = vdwg.mxu0
        %v7979 = vadd.f32 %v7759, %v7949
        %v7980 = vadd.f32 %v7760, %v7952
        %v7981 = vadd.f32 %v7761, %v7957
        %v7982 = vadd.f32 %v7762, %v7960
        %v7983 = vadd.f32 %v7763, %v7965
        %v7984 = vadd.f32 %v7764, %v7968
        %v7985 = vadd.f32 %v7765, %v7973
        %v7986 = vadd.f32 %v7766, %v7976
        %v7987 = vpack.c.bf16 %v7979, %v7979
        %v7988 = vpack.c.bf16 %v7980, %v7980
        %v7989 = vpack.c.bf16 %v7981, %v7981
        %v7990 = vpack.c.bf16 %v7982, %v7982
        %v7991 = vpack.c.bf16 %v7983, %v7983
        %v7992 = vpack.c.bf16 %v7984, %v7984
        %v7993 = vpack.c.bf16 %v7985, %v7985
        %v7994 = vpack.c.bf16 %v7986, %v7986
        %vm7995 = vcmask 125952
        %7996 = vst.msk [vmem:[%s429] sm:$0xf] %vm7995, %v7987
        %7997 = vst.msk [vmem:[%s429 + $0x4] sm:$0xf] %vm7995, %v7988
        %7998 = vst.msk [vmem:[%s429 + $0x8] sm:$0xf] %vm7995, %v7989
        %7999 = vst.msk [vmem:[%s429 + $0xc] sm:$0xf] %vm7995, %v7990
        %8000 = vst.msk [vmem:[%s429 + $0x10] sm:$0xf] %vm7995, %v7991
        %8001 = vst.msk [vmem:[%s429 + $0x14] sm:$0xf] %vm7995, %v7992
        %8002 = vst.msk [vmem:[%s429 + $0x18] sm:$0xf] %vm7995, %v7993
        %8003 = vst.msk [vmem:[%s429 + $0x1c] sm:$0xf] %vm7995, %v7994
        %s8004 = sand.u32 %s274, 1
        %s8005 = scalar_lea.sflag [#allocation3], %s8004
        %s8006 = sand.u32 %s274, 1
        %s8007 = smul.addr %s8006, 32
        %s8008 = scalar_lea.vmem [#allocation2], %s8007
        // Predicated region
        $region61: #{_lambda_.1} parent=59 // pred_check
          %p8009 = pneg %p284
        $region62: #{_lambda_.1} parent=59 // pred_check_branch
          %8011 = sbr.rel (%p8009) target = $region64
        $region63: #{_lambda_.1} parent=59 // pred_region
          %s8012 = smul.u32 8, %s29
          %s8014 = ssub.s32 512, 512
          %8015 = vsyncadd %s8005, %s8014
          %s8016 = smul.addr %s28, 8
          %s8017 = sadd.s32 %s8012, %s8016
          %s8018 = smul.addr %s8017, 64
          %s8019 = scalar_lea.hbm %s10, %s8018
          %s8020 = sshll.u32 %s8008, 4
          %s8021 = int_to_ptr.vmem [resolvable:$true] %s8020
          %8026 = dma.vmem_to_hbm [thread:$0]  %s8021, 512, %s8019, %s8005, 64, 64, 4
        $region64: #{_lambda_.1} parent=59 // pred_fallthru
          _
      $region60: #{_lambda_.1} parent=5 // pred_fallthru
        _
      %p8027 = scmp.le.s32.totalorder 2, %s19
      // Predicated region
      $region65: #{_lambda_.1} parent=5 // pred_check
        %p8028 = pneg %p8027
      $region66: #{_lambda_.1} parent=5 // pred_check_branch
        %8030 = sbr.rel (%p8028) target = $region68
      $region67: #{_lambda_.1} parent=5 // pred_region
        %s8031 = ssub.s32 %s19, 2
        // Predicated region
        $region69: #{_lambda_.1} parent=67 // pred_check
          %p8032 = pneg %p290
        $region70: #{_lambda_.1} parent=67 // pred_check_branch
          %8034 = sbr.rel (%p8032) target = $region72
        $region71: #{_lambda_.1} parent=67 // pred_region
          %s8035 = sand.u32 %s275, 1
          %s8036 = scalar_lea.sflag [#allocation3], %s8035
          %s8037 = sand.u32 %s275, 1
          %s8038 = smul.addr %s8037, 32
          %s8039 = scalar_lea.vmem [#allocation2], %s8038
          %8040 = dma.done %s8036, 512
        $region72: #{_lambda_.1} parent=67 // pred_fallthru
          _
      $region68: #{_lambda_.1} parent=5 // pred_fallthru
        _
    $region6: #{_lambda_.1} parent=1 // loop_footer
      %s23 = sadd.s32 1, %s19
    $region7: #{_lambda_.1} parent=1 // loop_footer_branch
      %18 = sbr.rel target = $region3
    $region8: #{_lambda_.1} parent=1 // loop_exit
      _
    %8041 = vsyncpa [#allocation3], 1
    %s8042 = scalar_lea.sflag [#allocation3], 1
    %8043 = vsyncpa %s8042, 1

</llo_original>
